<compile_context>
chip_gen: v5e
topology: v5e:2x2
jax: 0.10.0
libtpu: 0.0.40
codegen_flags: <defaults>
</compile_context>

<pallas_src>
import functools

import jax
import jax.numpy as jnp
from jax.experimental import pallas as pl
from jax.experimental.pallas import tpu as pltpu


MODEL_TYPES = {
    "0.5x": dict(repeat=(4, 8, 4), out_channels=(24, 48, 96, 192, 1024)),
    "1x":   dict(repeat=(4, 8, 4), out_channels=(24, 116, 232, 464, 1024)),
    "1.5x": dict(repeat=(4, 8, 4), out_channels=(24, 176, 352, 704, 1024)),
    "2x":   dict(repeat=(4, 8, 4), out_channels=(24, 244, 488, 976, 2048)),
}

_VMEM = pl.BlockSpec(memory_space=pltpu.MemorySpace.VMEM)
_PARALLEL = pltpu.CompilerParams(dimension_semantics=("parallel",))
_MM_TILE_M = 512          # rows per matmul grid step (multiple of 8, VMEM friendly)


# ----------------------------- Pallas kernels ------------------------------

def _mm_bias_kernel(x_ref, w_ref, b_ref, o_ref, *, relu):
    # (TM, K) bf16 @ (K, N) bf16 -> f32 accumulate, + bias, optional ReLU.
    acc = jnp.dot(x_ref[...], w_ref[...], preferred_element_type=jnp.float32)
    acc = acc + b_ref[...]
    if relu:
        acc = jnp.maximum(acc, 0.0)
    o_ref[...] = acc.astype(o_ref.dtype)


def _tree9(t):
    # pairwise accumulation tree (better ILP than a serial chain on 4 VALUs)
    return (((t[0] + t[1]) + (t[2] + t[3]))
            + ((t[4] + t[5]) + (t[6] + t[7]))) + t[8]


def _dw_s1_kernel(xp_ref, w_ref, b_ref, o_ref):
    # xp_ref: (H+2, W+2, C) bf16 padded map for one batch element.
    # w_ref: (9, 1, 1, C) f32, b_ref: (1, 1, C) f32, o_ref: (H, W, C) bf16.
    H, W, _ = o_ref.shape
    taps = []
    for kh in range(3):
        for kw in range(3):
            t = xp_ref[kh:kh + H, kw:kw + W, :].astype(jnp.float32)
            taps.append(t * w_ref[kh * 3 + kw])
    o_ref[...] = (_tree9(taps) + b_ref[...]).astype(o_ref.dtype)


def _dw_s2_kernel(p_ref, w_ref, b_ref, o_ref):
    # p_ref: (4, Ho+1, Wo+1, C) space-to-depth parity phases of the padded map,
    # phase index = (row parity)*2 + (col parity).  All slices are unstrided.
    Ho, Wo, _ = o_ref.shape
    taps = []
    for kh in range(3):
        for kw in range(3):
            ph = (kh % 2) * 2 + (kw % 2)
            t = p_ref[ph, kh // 2:kh // 2 + Ho, kw // 2:kw // 2 + Wo, :]
            taps.append(t.astype(jnp.float32) * w_ref[kh * 3 + kw])
    o_ref[...] = (_tree9(taps) + b_ref[...]).astype(o_ref.dtype)


def _maxpool_s2_kernel(p_ref, o_ref):
    # 3x3 stride-2 max pool over the same phase layout (padding holds -inf).
    Ho, Wo, _ = o_ref.shape
    m = None
    for kh in range(3):
        for kw in range(3):
            ph = (kh % 2) * 2 + (kw % 2)
            t = p_ref[ph, kh // 2:kh // 2 + Ho, kw // 2:kw // 2 + Wo, :]
            m = t if m is None else jnp.maximum(m, t)
    o_ref[...] = m.astype(o_ref.dtype)


def _mean_fc_kernel(x_ref, w_ref, b_ref, o_ref, *, inv_hw):
    # Fused global spatial mean + classifier Linear: (N, HW, C) -> (N, classes).
    feat = jnp.sum(x_ref[...].astype(jnp.float32), axis=1) * inv_hw
    logits = jnp.dot(feat.astype(jnp.bfloat16), w_ref[...],
                     preferred_element_type=jnp.float32)
    o_ref[...] = logits + b_ref[...]


# --------------------------- pallas_call wrappers ---------------------------

def _pick_tile_m(M):
    if M <= _MM_TILE_M:
        return M
    for t in (512, 256, 128, 64, 32, 16, 8):
        if M % t == 0:
            return t
    return M    # irregular M: single full block (still legal per BlockSpec rules)


def matmul_bias(x, w, b, relu):
    # x: (M, K) bf16, w: (K, N) bf16, b: (N,) f32 -> (M, N) bf16.
    M, K = x.shape
    N = w.shape[1]
    tm = _pick_tile_m(M)
    return pl.pallas_call(
        functools.partial(_mm_bias_kernel, relu=relu),
        out_shape=jax.ShapeDtypeStruct((M, N), jnp.bfloat16),
        grid=(pl.cdiv(M, tm),),
        in_specs=[pl.BlockSpec((tm, K), lambda i: (i, 0)),
                  pl.BlockSpec((K, N), lambda i: (0, 0)),
                  pl.BlockSpec((1, N), lambda i: (0, 0))],
        out_specs=pl.BlockSpec((tm, N), lambda i: (i, 0)),
        compiler_params=_PARALLEL,
    )(x, w, b.reshape(1, N))


def dw_s1_apply(xp, w9, b):
    Nb, Hp, Wp, C = xp.shape
    H, W = Hp - 2, Wp - 2
    return pl.pallas_call(
        _dw_s1_kernel,
        out_shape=jax.ShapeDtypeStruct((Nb, H, W, C), jnp.bfloat16),
        grid=(Nb,),
        in_specs=[pl.BlockSpec((None, Hp, Wp, C), lambda n: (n, 0, 0, 0)),
                  pl.BlockSpec((9, 1, 1, C), lambda n: (0, 0, 0, 0)),
                  pl.BlockSpec((1, 1, C), lambda n: (0, 0, 0))],
        out_specs=pl.BlockSpec((None, H, W, C), lambda n: (n, 0, 0, 0)),
        compiler_params=_PARALLEL,
    )(xp, w9.reshape(9, 1, 1, C), b.reshape(1, 1, C))


def dw_s2_apply(phases, w9, b):
    Nb, _, Hh, Wh, C = phases.shape
    Ho, Wo = Hh - 1, Wh - 1
    return pl.pallas_call(
        _dw_s2_kernel,
        out_shape=jax.ShapeDtypeStruct((Nb, Ho, Wo, C), jnp.bfloat16),
        grid=(Nb,),
        in_specs=[pl.BlockSpec((None, 4, Hh, Wh, C), lambda n: (n, 0, 0, 0, 0)),
                  pl.BlockSpec((9, 1, 1, C), lambda n: (0, 0, 0, 0)),
                  pl.BlockSpec((1, 1, C), lambda n: (0, 0, 0))],
        out_specs=pl.BlockSpec((None, Ho, Wo, C), lambda n: (n, 0, 0, 0)),
        compiler_params=_PARALLEL,
    )(phases, w9.reshape(9, 1, 1, C), b.reshape(1, 1, C))


def maxpool_s2_apply(phases):
    Nb, _, Hh, Wh, C = phases.shape
    Ho, Wo = Hh - 1, Wh - 1
    return pl.pallas_call(
        _maxpool_s2_kernel,
        out_shape=jax.ShapeDtypeStruct((Nb, Ho, Wo, C), jnp.bfloat16),
        grid=(Nb,),
        in_specs=[pl.BlockSpec((None, 4, Hh, Wh, C), lambda n: (n, 0, 0, 0, 0))],
        out_specs=pl.BlockSpec((None, Ho, Wo, C), lambda n: (n, 0, 0, 0)),
        compiler_params=_PARALLEL,
    )(phases)


def mean_fc_apply(x3, w, b):
    Nb, HW, C = x3.shape
    nc = w.shape[1]
    return pl.pallas_call(
        functools.partial(_mean_fc_kernel, inv_hw=1.0 / HW),
        out_shape=jax.ShapeDtypeStruct((Nb, nc), jnp.float32),
        in_specs=[_VMEM, _VMEM, _VMEM],
        out_specs=_VMEM,
    )(x3, w, b.reshape(1, nc))


# ------------------------------- XLA glue ----------------------------------

def _space_to_depth_pad(x, pad_value):
    """(N, H, W, C), even H/W -> (N, 4, H//2+1, W//2+1, C): parity phases of the
    spatially padded (padding=1) map.  One map-sized rearrangement in XLA replaces
    the 9x tap-stack of the previous version for all stride-2 windows."""
    N, H, W, C = x.shape
    assert H % 2 == 0 and W % 2 == 0, "stride-2 ops expect even spatial dims"
    xp = jnp.pad(x, ((0, 0), (1, 1), (1, 1), (0, 0)), constant_values=pad_value)
    Hh, Wh = (H + 2) // 2, (W + 2) // 2
    p = xp.reshape(N, Hh, 2, Wh, 2, C).transpose(0, 2, 4, 1, 3, 5)
    return p.reshape(N, 4, Hh, Wh, C)


def conv1x1_bn(x, w, b, relu=True):
    N, H, W, C = x.shape
    y = matmul_bias(x.reshape(N * H * W, C), w, b, relu)   # free reshape (row-major)
    return y.reshape(N, H, W, w.shape[1])


def conv3x3_bn_relu_s2(x, w_cols, b):
    # Stem conv via im2col + gridded MXU matmul.  With only `image_channels`
    # input channels, the expanded cols (K = 9*Cin = 27) are about the size of
    # the conv output, so im2col traffic is not a bottleneck for this layer.
    N, H, W, C = x.shape
    xp = jnp.pad(x, ((0, 0), (1, 1), (1, 1), (0, 0)))
    Ho, Wo = (H - 1) // 2 + 1, (W - 1) // 2 + 1
    cols = [xp[:, kh:kh + 2 * Ho - 1:2, kw:kw + 2 * Wo - 1:2, :]
            for kh in range(3) for kw in range(3)]
    cols = jnp.concatenate(cols, axis=-1).reshape(N * Ho * Wo, 9 * C)
    y = matmul_bias(cols, w_cols, b, True)
    return y.reshape(N, Ho, Wo, w_cols.shape[1])


def dwconv3x3_bn(x, w9, b, stride):
    if stride == 1:
        xp = jnp.pad(x, ((0, 0), (1, 1), (1, 1), (0, 0)))
        return dw_s1_apply(xp, w9, b)
    return dw_s2_apply(_space_to_depth_pad(x, 0.0), w9, b)


def maxpool3x3_s2(x):
    return maxpool_s2_apply(_space_to_depth_pad(x, -jnp.inf))


def channel_shuffle(x, groups=2):
    N, H, W, C = x.shape
    return (x.reshape(N, H, W, groups, C // groups)
             .transpose(0, 1, 2, 4, 3)
             .reshape(N, H, W, C))


# --------------------------- parameter building ----------------------------

class _Keys:
    def __init__(self, key):
        self._k = key

    def __call__(self):
        self._k, sub = jax.random.split(self._k)
        return sub


def _conv_bn(kg, cin, cout, ksize, depthwise=False):
    shape = (cout, 1, ksize, ksize) if depthwise else (cout, cin, ksize, ksize)
    w = 0.1 * jax.random.normal(kg(), shape, jnp.float32)
    gamma = jax.random.uniform(kg(), (cout,), jnp.float32, 0.5, 1.5)
    beta = 0.1 * jax.random.normal(kg(), (cout,), jnp.float32)
    rmean = 0.1 * jax.random.normal(kg(), (cout,), jnp.float32)
    rvar = jax.random.uniform(kg(), (cout,), jnp.float32, 0.5, 1.5)
    s = gamma / jnp.sqrt(rvar + 1e-5)            # fold BN (eval mode) into conv
    b = beta - rmean * s
    return w * s[:, None, None, None], b


def _pw_params(kg, cin, cout):
    w, b = _conv_bn(kg, cin, cout, 1)
    return w[:, :, 0, 0].T.astype(jnp.bfloat16), b          # (cin, cout) bf16, f32 bias


def _dw_params(kg, c):
    w, b = _conv_bn(kg, c, c, 3, depthwise=True)
    return w.reshape(c, 9).T, b                              # (9, c) f32, tap = kh*3+kw


def _full3x3_params(kg, cin, cout):
    w, b = _conv_bn(kg, cin, cout, 3)
    return (w.transpose(2, 3, 1, 0).reshape(9 * cin, cout).astype(jnp.bfloat16), b)


def _unit_params(kg, inp, outp, stride):
    bf = outp // 2
    p = {}
    if stride == 2:
        p["b1_dw"] = _dw_params(kg, inp)
        p["b1_pw"] = _pw_params(kg, inp, bf)
        c_in2 = inp
    else:
        c_in2 = inp // 2
    p["b2_pw1"] = _pw_params(kg, c_in2, bf)
    p["b2_dw"] = _dw_params(kg, bf)
    p["b2_pw2"] = _pw_params(kg, bf, bf)
    return p


def init_params(key, model_type, image_channels, num_classes):
    if model_type not in MODEL_TYPES:
        raise Exception(f"{model_type} not supported select one of {MODEL_TYPES.keys()}")
    cfg = MODEL_TYPES[model_type]
    rep, oc = cfg["repeat"], cfg["out_channels"]
    kg = _Keys(key)
    params = {"conv1": _full3x3_params(kg, image_channels, oc[0])}
    for si, (cin, cout, r) in enumerate(zip(oc[:3], oc[1:4], rep), start=2):
        units = [_unit_params(kg, cin, cout, 2)]
        units += [_unit_params(kg, cout, cout, 1) for _ in range(1, r)]
        params[f"stage{si}"] = units
    params["conv2"] = _pw_params(kg, oc[3], oc[4])
    fw = 0.1 * jax.random.normal(kg(), (num_classes, oc[4]), jnp.float32)
    fb = 0.1 * jax.random.normal(kg(), (num_classes,), jnp.float32)
    params["fc"] = (fw.T.astype(jnp.bfloat16), fb)           # Classifier = Linear
    return params


# ------------------------------ forward pass -------------------------------

def shufflenet_unit_forward(x, p, stride):
    if stride == 2:
        b1 = dwconv3x3_bn(x, *p["b1_dw"], stride=2)
        b1 = conv1x1_bn(b1, *p["b1_pw"], relu=True)
        x2 = x
    else:
        C = x.shape[-1]
        b1, x2 = x[..., :C // 2], x[..., C // 2:]   # torch.chunk(x, 2, dim=1)
    b2 = conv1x1_bn(x2, *p["b2_pw1"], relu=True)
    b2 = dwconv3x3_bn(b2, *p["b2_dw"], stride=stride)
    b2 = conv1x1_bn(b2, *p["b2_pw2"], relu=True)
    return channel_shuffle(jnp.concatenate([b1, b2], axis=-1), 2)


@jax.jit
def shufflenet_v2_forward(params, x_nchw):
    x = jnp.transpose(x_nchw, (0, 2, 3, 1)).astype(jnp.bfloat16)   # NCHW -> NHWC bf16
    x = conv3x3_bn_relu_s2(x, *params["conv1"])                    # conv1 (stride 2)
    x = maxpool3x3_s2(x)                                           # max_pool
    for stage in ("stage2", "stage3", "stage4"):
        for ui, unit in enumerate(params[stage]):
            x = shufflenet_unit_forward(x, unit, stride=2 if ui == 0 else 1)
    x = conv1x1_bn(x, *params["conv2"], relu=True)                 # conv2
    N, H, W, C = x.shape
    logits = mean_fc_apply(x.reshape(N, H * W, C), *params["fc"])  # mean([2,3]) + fc
    return logits


if __name__ == "__main__":
    key = jax.random.PRNGKey(0)
    pkey, xkey = jax.random.split(key)
    params = init_params(pkey, "0.5x", image_channels=3, num_classes=10)
    x = jax.random.normal(xkey, (2, 3, 32, 32), jnp.float32)
    logits = shufflenet_v2_forward(params, x)
    logits = jax.block_until_ready(logits)
    assert logits.shape == (2, 10)
    print("KERNEL_OK")
</pallas_src>

<mosaic_0001>
module attributes {stable_mosaic.version = 11 : i64} {
  func.func @_mm_bias_kernel(%arg0: i32, %arg1: memref<512x27xbf16, #tpu.memory_space<vmem>>, %arg2: memref<27x24xbf16, #tpu.memory_space<vmem>>, %arg3: memref<1x24xf32, #tpu.memory_space<vmem>>, %arg4: memref<512x24xbf16, #tpu.memory_space<vmem>>) attributes {dimension_semantics = [#tpu.dimension_semantics<parallel>], iteration_bounds = array<i64: 1>, scalar_prefetch = 0 : i64, scratch_operands = 0 : i64, tpu.core_type = #tpu.core_type<tc>, window_params = [{transform_indices = @transform_0, window_bounds = array<i64: 512, 27>}, {pipeline_mode = #tpu.pipeline_mode<synchronous>, transform_indices = @transform_1, window_bounds = array<i64: 27, 24>}, {pipeline_mode = #tpu.pipeline_mode<synchronous>, transform_indices = @transform_2, window_bounds = array<i64: 1, 24>}, {transform_indices = @transform_3, window_bounds = array<i64: 512, 24>}]} {
    %c0 = arith.constant 0 : index
    %c0_0 = arith.constant 0 : index
    %0 = vector.load %arg1[%c0, %c0_0] : memref<512x27xbf16, #tpu.memory_space<vmem>>, vector<512x27xbf16>
    %c0_1 = arith.constant 0 : index
    %c0_2 = arith.constant 0 : index
    %1 = vector.load %arg2[%c0_1, %c0_2] : memref<27x24xbf16, #tpu.memory_space<vmem>>, vector<27x24xbf16>
    %cst = arith.constant dense<0.000000e+00> : vector<512x24xf32>
    %2 = tpu.matmul %0, %1, %cst {dimension_numbers = #tpu.dot_dimension_numbers<[1], [0], [0], [1], [0, 0, 1, 1], [], []>} : vector<512x27xbf16>, vector<27x24xbf16>, vector<512x24xf32> -> vector<512x24xf32>
    %c0_3 = arith.constant 0 : index
    %c0_4 = arith.constant 0 : index
    %3 = vector.load %arg3[%c0_3, %c0_4] : memref<1x24xf32, #tpu.memory_space<vmem>>, vector<1x24xf32>
    %4 = vector.broadcast %3 : vector<1x24xf32> to vector<512x24xf32>
    %5 = arith.addf %2, %4 : vector<512x24xf32>
    %cst_5 = arith.constant 0.000000e+00 : f32
    %6 = vector.broadcast %cst_5 : f32 to vector<512x24xf32>
    %7 = arith.maximumf %5, %6 : vector<512x24xf32>
    %8 = arith.truncf %7 : vector<512x24xf32> to vector<512x24xbf16>
    %c0_6 = arith.constant 0 : index
    %c0_7 = arith.constant 0 : index
    %9 = vector.load %arg4[%c0_6, %c0_7] : memref<512x24xbf16, #tpu.memory_space<vmem>>, vector<512x24xbf16>
    tpu.vector_store %arg4[%c0_6, %c0_7], %8 {strides = array<i32>} : memref<512x24xbf16, #tpu.memory_space<vmem>>, vector<512x24xbf16>,
    return
  }
  func.func @transform_0(%arg0: i32) -> (i32, i32) {
    %c0_i32 = arith.constant 0 : i32
    %c0_i32_0 = arith.constant 0 : i32
    return %arg0, %c0_i32 : i32, i32
  }
  func.func @transform_1(%arg0: i32) -> (i32, i32) {
    %c0_i32 = arith.constant 0 : i32
    %c0_i32_0 = arith.constant 0 : i32
    %c0_i32_1 = arith.constant 0 : i32
    return %c0_i32, %c0_i32_0 : i32, i32
  }
  func.func @transform_2(%arg0: i32) -> (i32, i32) {
    %c0_i32 = arith.constant 0 : i32
    %c0_i32_0 = arith.constant 0 : i32
    %c0_i32_1 = arith.constant 0 : i32
    return %c0_i32, %c0_i32_0 : i32, i32
  }
  func.func @transform_3(%arg0: i32) -> (i32, i32) {
    %c0_i32 = arith.constant 0 : i32
    %c0_i32_0 = arith.constant 0 : i32
    return %arg0, %c0_i32 : i32, i32
  }
}

module attributes {stable_mosaic.version = 11 : i64} {
  func.func @_maxpool_s2_kernel(%arg0: i32, %arg1: memref<1x4x9x9x24xbf16, #tpu.memory_space<vmem>>, %arg2: memref<1x8x8x24xbf16, #tpu.memory_space<vmem>>) attributes {dimension_semantics = [#tpu.dimension_semantics<parallel>], iteration_bounds = array<i64: 2>, scalar_prefetch = 0 : i64, scratch_operands = 0 : i64, tpu.core_type = #tpu.core_type<tc>, window_params = [{transform_indices = @transform_0, window_bounds = array<i64: 1, 4, 9, 9, 24>}, {transform_indices = @transform_1, window_bounds = array<i64: 1, 8, 8, 24>}]} {
    %c0 = arith.constant 0 : index
    %c0_0 = arith.constant 0 : index
    %c0_1 = arith.constant 0 : index
    %c0_2 = arith.constant 0 : index
    %c0_3 = arith.constant 0 : index
    %0 = vector.load %arg1[%c0, %c0_0, %c0_1, %c0_2, %c0_3] : memref<1x4x9x9x24xbf16, #tpu.memory_space<vmem>>, vector<1x1x8x8x24xbf16>
    %1 = vector.shape_cast %0 : vector<1x1x8x8x24xbf16> to vector<8x8x24xbf16>
    %c0_4 = arith.constant 0 : index
    %c1 = arith.constant 1 : index
    %c0_5 = arith.constant 0 : index
    %c0_6 = arith.constant 0 : index
    %c0_7 = arith.constant 0 : index
    %2 = vector.load %arg1[%c0_4, %c1, %c0_5, %c0_6, %c0_7] : memref<1x4x9x9x24xbf16, #tpu.memory_space<vmem>>, vector<1x1x8x8x24xbf16>
    %3 = vector.shape_cast %2 : vector<1x1x8x8x24xbf16> to vector<8x8x24xbf16>
    %4 = arith.maximumf %1, %3 : vector<8x8x24xbf16>
    %c0_8 = arith.constant 0 : index
    %c0_9 = arith.constant 0 : index
    %c0_10 = arith.constant 0 : index
    %c1_11 = arith.constant 1 : index
    %c0_12 = arith.constant 0 : index
    %5 = vector.load %arg1[%c0_8, %c0_9, %c0_10, %c1_11, %c0_12] : memref<1x4x9x9x24xbf16, #tpu.memory_space<vmem>>, vector<1x1x8x8x24xbf16>
    %6 = vector.shape_cast %5 : vector<1x1x8x8x24xbf16> to vector<8x8x24xbf16>
    %7 = arith.maximumf %4, %6 : vector<8x8x24xbf16>
    %c0_13 = arith.constant 0 : index
    %c2 = arith.constant 2 : index
    %c0_14 = arith.constant 0 : index
    %c0_15 = arith.constant 0 : index
    %c0_16 = arith.constant 0 : index
    %8 = vector.load %arg1[%c0_13, %c2, %c0_14, %c0_15, %c0_16] : memref<1x4x9x9x24xbf16, #tpu.memory_space<vmem>>, vector<1x1x8x8x24xbf16>
    %9 = vector.shape_cast %8 : vector<1x1x8x8x24xbf16> to vector<8x8x24xbf16>
    %10 = arith.maximumf %7, %9 : vector<8x8x24xbf16>
    %c0_17 = arith.constant 0 : index
    %c3 = arith.constant 3 : index
    %c0_18 = arith.constant 0 : index
    %c0_19 = arith.constant 0 : index
    %c0_20 = arith.constant 0 : index
    %11 = vector.load %arg1[%c0_17, %c3, %c0_18, %c0_19, %c0_20] : memref<1x4x9x9x24xbf16, #tpu.memory_space<vmem>>, vector<1x1x8x8x24xbf16>
    %12 = vector.shape_cast %11 : vector<1x1x8x8x24xbf16> to vector<8x8x24xbf16>
    %13 = arith.maximumf %10, %12 : vector<8x8x24xbf16>
    %c0_21 = arith.constant 0 : index
    %c2_22 = arith.constant 2 : index
    %c0_23 = arith.constant 0 : index
    %c1_24 = arith.constant 1 : index
    %c0_25 = arith.constant 0 : index
    %14 = vector.load %arg1[%c0_21, %c2_22, %c0_23, %c1_24, %c0_25] : memref<1x4x9x9x24xbf16, #tpu.memory_space<vmem>>, vector<1x1x8x8x24xbf16>
    %15 = vector.shape_cast %14 : vector<1x1x8x8x24xbf16> to vector<8x8x24xbf16>
    %16 = arith.maximumf %13, %15 : vector<8x8x24xbf16>
    %c0_26 = arith.constant 0 : index
    %c0_27 = arith.constant 0 : index
    %c1_28 = arith.constant 1 : index
    %c0_29 = arith.constant 0 : index
    %c0_30 = arith.constant 0 : index
    %17 = vector.load %arg1[%c0_26, %c0_27, %c1_28, %c0_29, %c0_30] : memref<1x4x9x9x24xbf16, #tpu.memory_space<vmem>>, vector<1x1x8x8x24xbf16>
    %18 = vector.shape_cast %17 : vector<1x1x8x8x24xbf16> to vector<8x8x24xbf16>
    %19 = arith.maximumf %16, %18 : vector<8x8x24xbf16>
    %c0_31 = arith.constant 0 : index
    %c1_32 = arith.constant 1 : index
    %c1_33 = arith.constant 1 : index
    %c0_34 = arith.constant 0 : index
    %c0_35 = arith.constant 0 : index
    %20 = vector.load %arg1[%c0_31, %c1_32, %c1_33, %c0_34, %c0_35] : memref<1x4x9x9x24xbf16, #tpu.memory_space<vmem>>, vector<1x1x8x8x24xbf16>
    %21 = vector.shape_cast %20 : vector<1x1x8x8x24xbf16> to vector<8x8x24xbf16>
    %22 = arith.maximumf %19, %21 : vector<8x8x24xbf16>
    %c0_36 = arith.constant 0 : index
    %c0_37 = arith.constant 0 : index
    %c1_38 = arith.constant 1 : index
    %c1_39 = arith.constant 1 : index
    %c0_40 = arith.constant 0 : index
    %23 = vector.load %arg1[%c0_36, %c0_37, %c1_38, %c1_39, %c0_40] : memref<1x4x9x9x24xbf16, #tpu.memory_space<vmem>>, vector<1x1x8x8x24xbf16>
    %24 = vector.shape_cast %23 : vector<1x1x8x8x24xbf16> to vector<8x8x24xbf16>
    %25 = arith.maximumf %22, %24 : vector<8x8x24xbf16>
    %c0_41 = arith.constant 0 : index
    %c0_42 = arith.constant 0 : index
    %c0_43 = arith.constant 0 : index
    %c0_44 = arith.constant 0 : index
    %26 = vector.load %arg2[%c0_41, %c0_42, %c0_43, %c0_44] : memref<1x8x8x24xbf16, #tpu.memory_space<vmem>>, vector<1x8x8x24xbf16>
    %27 = vector.shape_cast %26 : vector<1x8x8x24xbf16> to vector<8x8x24xbf16>
    %28 = vector.shape_cast %25 : vector<8x8x24xbf16> to vector<1x8x8x24xbf16>
    tpu.vector_store %arg2[%c0_41, %c0_42, %c0_43, %c0_44], %28 {strides = array<i32>} : memref<1x8x8x24xbf16, #tpu.memory_space<vmem>>, vector<1x8x8x24xbf16>,
    return
  }
  func.func @transform_0(%arg0: i32) -> (i32, i32, i32, i32, i32) {
    %c0_i32 = arith.constant 0 : i32
    %c0_i32_0 = arith.constant 0 : i32
    %c0_i32_1 = arith.constant 0 : i32
    %c0_i32_2 = arith.constant 0 : i32
    %c0_i32_3 = arith.constant 0 : i32
    return %arg0, %c0_i32, %c0_i32_0, %c0_i32_1, %c0_i32_2 : i32, i32, i32, i32, i32
  }
  func.func @transform_1(%arg0: i32) -> (i32, i32, i32, i32) {
    %c0_i32 = arith.constant 0 : i32
    %c0_i32_0 = arith.constant 0 : i32
    %c0_i32_1 = arith.constant 0 : i32
    %c0_i32_2 = arith.constant 0 : i32
    return %arg0, %c0_i32, %c0_i32_0, %c0_i32_1 : i32, i32, i32, i32
  }
}

module attributes {stable_mosaic.version = 11 : i64} {
  func.func @_mm_bias_kernel(%arg0: i32, %arg1: memref<128x24xbf16, #tpu.memory_space<vmem>>, %arg2: memref<24x24xbf16, #tpu.memory_space<vmem>>, %arg3: memref<1x24xf32, #tpu.memory_space<vmem>>, %arg4: memref<128x24xbf16, #tpu.memory_space<vmem>>) attributes {dimension_semantics = [#tpu.dimension_semantics<parallel>], iteration_bounds = array<i64: 1>, scalar_prefetch = 0 : i64, scratch_operands = 0 : i64, tpu.core_type = #tpu.core_type<tc>, window_params = [{transform_indices = @transform_0, window_bounds = array<i64: 128, 24>}, {pipeline_mode = #tpu.pipeline_mode<synchronous>, transform_indices = @transform_1, window_bounds = array<i64: 24, 24>}, {pipeline_mode = #tpu.pipeline_mode<synchronous>, transform_indices = @transform_2, window_bounds = array<i64: 1, 24>}, {transform_indices = @transform_3, window_bounds = array<i64: 128, 24>}]} {
    %c0 = arith.constant 0 : index
    %c0_0 = arith.constant 0 : index
    %0 = vector.load %arg1[%c0, %c0_0] : memref<128x24xbf16, #tpu.memory_space<vmem>>, vector<128x24xbf16>
    %c0_1 = arith.constant 0 : index
    %c0_2 = arith.constant 0 : index
    %1 = vector.load %arg2[%c0_1, %c0_2] : memref<24x24xbf16, #tpu.memory_space<vmem>>, vector<24x24xbf16>
    %cst = arith.constant dense<0.000000e+00> : vector<128x24xf32>
    %2 = tpu.matmul %0, %1, %cst {dimension_numbers = #tpu.dot_dimension_numbers<[1], [0], [0], [1], [0, 0, 1, 1], [], []>} : vector<128x24xbf16>, vector<24x24xbf16>, vector<128x24xf32> -> vector<128x24xf32>
    %c0_3 = arith.constant 0 : index
    %c0_4 = arith.constant 0 : index
    %3 = vector.load %arg3[%c0_3, %c0_4] : memref<1x24xf32, #tpu.memory_space<vmem>>, vector<1x24xf32>
    %4 = vector.broadcast %3 : vector<1x24xf32> to vector<128x24xf32>
    %5 = arith.addf %2, %4 : vector<128x24xf32>
    %cst_5 = arith.constant 0.000000e+00 : f32
    %6 = vector.broadcast %cst_5 : f32 to vector<128x24xf32>
    %7 = arith.maximumf %5, %6 : vector<128x24xf32>
    %8 = arith.truncf %7 : vector<128x24xf32> to vector<128x24xbf16>
    %c0_6 = arith.constant 0 : index
    %c0_7 = arith.constant 0 : index
    %9 = vector.load %arg4[%c0_6, %c0_7] : memref<128x24xbf16, #tpu.memory_space<vmem>>, vector<128x24xbf16>
    tpu.vector_store %arg4[%c0_6, %c0_7], %8 {strides = array<i32>} : memref<128x24xbf16, #tpu.memory_space<vmem>>, vector<128x24xbf16>,
    return
  }
  func.func @transform_0(%arg0: i32) -> (i32, i32) {
    %c0_i32 = arith.constant 0 : i32
    %c0_i32_0 = arith.constant 0 : i32
    return %arg0, %c0_i32 : i32, i32
  }
  func.func @transform_1(%arg0: i32) -> (i32, i32) {
    %c0_i32 = arith.constant 0 : i32
    %c0_i32_0 = arith.constant 0 : i32
    %c0_i32_1 = arith.constant 0 : i32
    return %c0_i32, %c0_i32_0 : i32, i32
  }
  func.func @transform_2(%arg0: i32) -> (i32, i32) {
    %c0_i32 = arith.constant 0 : i32
    %c0_i32_0 = arith.constant 0 : i32
    %c0_i32_1 = arith.constant 0 : i32
    return %c0_i32, %c0_i32_0 : i32, i32
  }
  func.func @transform_3(%arg0: i32) -> (i32, i32) {
    %c0_i32 = arith.constant 0 : i32
    %c0_i32_0 = arith.constant 0 : i32
    return %arg0, %c0_i32 : i32, i32
  }
}

module attributes {stable_mosaic.version = 11 : i64} {
  func.func @_mm_bias_kernel(%arg0: i32, %arg1: memref<32x24xbf16, #tpu.memory_space<vmem>>, %arg2: memref<24x24xbf16, #tpu.memory_space<vmem>>, %arg3: memref<1x24xf32, #tpu.memory_space<vmem>>, %arg4: memref<32x24xbf16, #tpu.memory_space<vmem>>) attributes {dimension_semantics = [#tpu.dimension_semantics<parallel>], iteration_bounds = array<i64: 1>, scalar_prefetch = 0 : i64, scratch_operands = 0 : i64, tpu.core_type = #tpu.core_type<tc>, window_params = [{transform_indices = @transform_0, window_bounds = array<i64: 32, 24>}, {pipeline_mode = #tpu.pipeline_mode<synchronous>, transform_indices = @transform_1, window_bounds = array<i64: 24, 24>}, {pipeline_mode = #tpu.pipeline_mode<synchronous>, transform_indices = @transform_2, window_bounds = array<i64: 1, 24>}, {transform_indices = @transform_3, window_bounds = array<i64: 32, 24>}]} {
    %c0 = arith.constant 0 : index
    %c0_0 = arith.constant 0 : index
    %0 = vector.load %arg1[%c0, %c0_0] : memref<32x24xbf16, #tpu.memory_space<vmem>>, vector<32x24xbf16>
    %c0_1 = arith.constant 0 : index
    %c0_2 = arith.constant 0 : index
    %1 = vector.load %arg2[%c0_1, %c0_2] : memref<24x24xbf16, #tpu.memory_space<vmem>>, vector<24x24xbf16>
    %cst = arith.constant dense<0.000000e+00> : vector<32x24xf32>
    %2 = tpu.matmul %0, %1, %cst {dimension_numbers = #tpu.dot_dimension_numbers<[1], [0], [0], [1], [0, 0, 1, 1], [], []>} : vector<32x24xbf16>, vector<24x24xbf16>, vector<32x24xf32> -> vector<32x24xf32>
    %c0_3 = arith.constant 0 : index
    %c0_4 = arith.constant 0 : index
    %3 = vector.load %arg3[%c0_3, %c0_4] : memref<1x24xf32, #tpu.memory_space<vmem>>, vector<1x24xf32>
    %4 = vector.broadcast %3 : vector<1x24xf32> to vector<32x24xf32>
    %5 = arith.addf %2, %4 : vector<32x24xf32>
    %cst_5 = arith.constant 0.000000e+00 : f32
    %6 = vector.broadcast %cst_5 : f32 to vector<32x24xf32>
    %7 = arith.maximumf %5, %6 : vector<32x24xf32>
    %8 = arith.truncf %7 : vector<32x24xf32> to vector<32x24xbf16>
    %c0_6 = arith.constant 0 : index
    %c0_7 = arith.constant 0 : index
    %9 = vector.load %arg4[%c0_6, %c0_7] : memref<32x24xbf16, #tpu.memory_space<vmem>>, vector<32x24xbf16>
    tpu.vector_store %arg4[%c0_6, %c0_7], %8 {strides = array<i32>} : memref<32x24xbf16, #tpu.memory_space<vmem>>, vector<32x24xbf16>,
    return
  }
  func.func @transform_0(%arg0: i32) -> (i32, i32) {
    %c0_i32 = arith.constant 0 : i32
    %c0_i32_0 = arith.constant 0 : i32
    return %arg0, %c0_i32 : i32, i32
  }
  func.func @transform_1(%arg0: i32) -> (i32, i32) {
    %c0_i32 = arith.constant 0 : i32
    %c0_i32_0 = arith.constant 0 : i32
    %c0_i32_1 = arith.constant 0 : i32
    return %c0_i32, %c0_i32_0 : i32, i32
  }
  func.func @transform_2(%arg0: i32) -> (i32, i32) {
    %c0_i32 = arith.constant 0 : i32
    %c0_i32_0 = arith.constant 0 : i32
    %c0_i32_1 = arith.constant 0 : i32
    return %c0_i32, %c0_i32_0 : i32, i32
  }
  func.func @transform_3(%arg0: i32) -> (i32, i32) {
    %c0_i32 = arith.constant 0 : i32
    %c0_i32_0 = arith.constant 0 : i32
    return %arg0, %c0_i32 : i32, i32
  }
}

module attributes {stable_mosaic.version = 11 : i64} {
  func.func @_dw_s2_kernel(%arg0: i32, %arg1: memref<1x4x5x5x24xbf16, #tpu.memory_space<vmem>>, %arg2: memref<9x1x1x24xf32, #tpu.memory_space<vmem>>, %arg3: memref<1x1x24xf32, #tpu.memory_space<vmem>>, %arg4: memref<1x4x4x24xbf16, #tpu.memory_space<vmem>>) attributes {dimension_semantics = [#tpu.dimension_semantics<parallel>], iteration_bounds = array<i64: 2>, scalar_prefetch = 0 : i64, scratch_operands = 0 : i64, tpu.core_type = #tpu.core_type<tc>, window_params = [{transform_indices = @transform_0, window_bounds = array<i64: 1, 4, 5, 5, 24>}, {pipeline_mode = #tpu.pipeline_mode<synchronous>, transform_indices = @transform_1, window_bounds = array<i64: 9, 1, 1, 24>}, {pipeline_mode = #tpu.pipeline_mode<synchronous>, transform_indices = @transform_2, window_bounds = array<i64: 1, 1, 24>}, {transform_indices = @transform_3, window_bounds = array<i64: 1, 4, 4, 24>}]} {
    %c0 = arith.constant 0 : index
    %c0_0 = arith.constant 0 : index
    %c0_1 = arith.constant 0 : index
    %c0_2 = arith.constant 0 : index
    %c0_3 = arith.constant 0 : index
    %0 = vector.load %arg1[%c0, %c0_0, %c0_1, %c0_2, %c0_3] : memref<1x4x5x5x24xbf16, #tpu.memory_space<vmem>>, vector<1x1x4x4x24xbf16>
    %1 = vector.shape_cast %0 : vector<1x1x4x4x24xbf16> to vector<4x4x24xbf16>
    %2 = arith.extf %1 : vector<4x4x24xbf16> to vector<4x4x24xf32>
    %c0_4 = arith.constant 0 : index
    %c0_5 = arith.constant 0 : index
    %c0_6 = arith.constant 0 : index
    %c0_7 = arith.constant 0 : index
    %3 = vector.load %arg2[%c0_4, %c0_5, %c0_6, %c0_7] : memref<9x1x1x24xf32, #tpu.memory_space<vmem>>, vector<1x1x1x24xf32>
    %4 = vector.shape_cast %3 : vector<1x1x1x24xf32> to vector<1x1x24xf32>
    %5 = vector.broadcast %4 : vector<1x1x24xf32> to vector<4x4x24xf32>
    %6 = arith.mulf %2, %5 : vector<4x4x24xf32>
    %c0_8 = arith.constant 0 : index
    %c1 = arith.constant 1 : index
    %c0_9 = arith.constant 0 : index
    %c0_10 = arith.constant 0 : index
    %c0_11 = arith.constant 0 : index
    %7 = vector.load %arg1[%c0_8, %c1, %c0_9, %c0_10, %c0_11] : memref<1x4x5x5x24xbf16, #tpu.memory_space<vmem>>, vector<1x1x4x4x24xbf16>
    %8 = vector.shape_cast %7 : vector<1x1x4x4x24xbf16> to vector<4x4x24xbf16>
    %9 = arith.extf %8 : vector<4x4x24xbf16> to vector<4x4x24xf32>
    %c1_12 = arith.constant 1 : index
    %c0_13 = arith.constant 0 : index
    %c0_14 = arith.constant 0 : index
    %c0_15 = arith.constant 0 : index
    %10 = vector.load %arg2[%c1_12, %c0_13, %c0_14, %c0_15] : memref<9x1x1x24xf32, #tpu.memory_space<vmem>>, vector<1x1x1x24xf32>
    %11 = vector.shape_cast %10 : vector<1x1x1x24xf32> to vector<1x1x24xf32>
    %12 = vector.broadcast %11 : vector<1x1x24xf32> to vector<4x4x24xf32>
    %13 = arith.mulf %9, %12 : vector<4x4x24xf32>
    %c0_16 = arith.constant 0 : index
    %c0_17 = arith.constant 0 : index
    %c0_18 = arith.constant 0 : index
    %c1_19 = arith.constant 1 : index
    %c0_20 = arith.constant 0 : index
    %14 = vector.load %arg1[%c0_16, %c0_17, %c0_18, %c1_19, %c0_20] : memref<1x4x5x5x24xbf16, #tpu.memory_space<vmem>>, vector<1x1x4x4x24xbf16>
    %15 = vector.shape_cast %14 : vector<1x1x4x4x24xbf16> to vector<4x4x24xbf16>
    %16 = arith.extf %15 : vector<4x4x24xbf16> to vector<4x4x24xf32>
    %c2 = arith.constant 2 : index
    %c0_21 = arith.constant 0 : index
    %c0_22 = arith.constant 0 : index
    %c0_23 = arith.constant 0 : index
    %17 = vector.load %arg2[%c2, %c0_21, %c0_22, %c0_23] : memref<9x1x1x24xf32, #tpu.memory_space<vmem>>, vector<1x1x1x24xf32>
    %18 = vector.shape_cast %17 : vector<1x1x1x24xf32> to vector<1x1x24xf32>
    %19 = vector.broadcast %18 : vector<1x1x24xf32> to vector<4x4x24xf32>
    %20 = arith.mulf %16, %19 : vector<4x4x24xf32>
    %c0_24 = arith.constant 0 : index
    %c2_25 = arith.constant 2 : index
    %c0_26 = arith.constant 0 : index
    %c0_27 = arith.constant 0 : index
    %c0_28 = arith.constant 0 : index
    %21 = vector.load %arg1[%c0_24, %c2_25, %c0_26, %c0_27, %c0_28] : memref<1x4x5x5x24xbf16, #tpu.memory_space<vmem>>, vector<1x1x4x4x24xbf16>
    %22 = vector.shape_cast %21 : vector<1x1x4x4x24xbf16> to vector<4x4x24xbf16>
    %23 = arith.extf %22 : vector<4x4x24xbf16> to vector<4x4x24xf32>
    %c3 = arith.constant 3 : index
    %c0_29 = arith.constant 0 : index
    %c0_30 = arith.constant 0 : index
    %c0_31 = arith.constant 0 : index
    %24 = vector.load %arg2[%c3, %c0_29, %c0_30, %c0_31] : memref<9x1x1x24xf32, #tpu.memory_space<vmem>>, vector<1x1x1x24xf32>
    %25 = vector.shape_cast %24 : vector<1x1x1x24xf32> to vector<1x1x24xf32>
    %26 = vector.broadcast %25 : vector<1x1x24xf32> to vector<4x4x24xf32>
    %27 = arith.mulf %23, %26 : vector<4x4x24xf32>
    %c0_32 = arith.constant 0 : index
    %c3_33 = arith.constant 3 : index
    %c0_34 = arith.constant 0 : index
    %c0_35 = arith.constant 0 : index
    %c0_36 = arith.constant 0 : index
    %28 = vector.load %arg1[%c0_32, %c3_33, %c0_34, %c0_35, %c0_36] : memref<1x4x5x5x24xbf16, #tpu.memory_space<vmem>>, vector<1x1x4x4x24xbf16>
    %29 = vector.shape_cast %28 : vector<1x1x4x4x24xbf16> to vector<4x4x24xbf16>
    %30 = arith.extf %29 : vector<4x4x24xbf16> to vector<4x4x24xf32>
    %c4 = arith.constant 4 : index
    %c0_37 = arith.constant 0 : index
    %c0_38 = arith.constant 0 : index
    %c0_39 = arith.constant 0 : index
    %31 = vector.load %arg2[%c4, %c0_37, %c0_38, %c0_39] : memref<9x1x1x24xf32, #tpu.memory_space<vmem>>, vector<1x1x1x24xf32>
    %32 = vector.shape_cast %31 : vector<1x1x1x24xf32> to vector<1x1x24xf32>
    %33 = vector.broadcast %32 : vector<1x1x24xf32> to vector<4x4x24xf32>
    %34 = arith.mulf %30, %33 : vector<4x4x24xf32>
    %c0_40 = arith.constant 0 : index
    %c2_41 = arith.constant 2 : index
    %c0_42 = arith.constant 0 : index
    %c1_43 = arith.constant 1 : index
    %c0_44 = arith.constant 0 : index
    %35 = vector.load %arg1[%c0_40, %c2_41, %c0_42, %c1_43, %c0_44] : memref<1x4x5x5x24xbf16, #tpu.memory_space<vmem>>, vector<1x1x4x4x24xbf16>
    %36 = vector.shape_cast %35 : vector<1x1x4x4x24xbf16> to vector<4x4x24xbf16>
    %37 = arith.extf %36 : vector<4x4x24xbf16> to vector<4x4x24xf32>
    %c5 = arith.constant 5 : index
    %c0_45 = arith.constant 0 : index
    %c0_46 = arith.constant 0 : index
    %c0_47 = arith.constant 0 : index
    %38 = vector.load %arg2[%c5, %c0_45, %c0_46, %c0_47] : memref<9x1x1x24xf32, #tpu.memory_space<vmem>>, vector<1x1x1x24xf32>
    %39 = vector.shape_cast %38 : vector<1x1x1x24xf32> to vector<1x1x24xf32>
    %40 = vector.broadcast %39 : vector<1x1x24xf32> to vector<4x4x24xf32>
    %41 = arith.mulf %37, %40 : vector<4x4x24xf32>
    %c0_48 = arith.constant 0 : index
    %c0_49 = arith.constant 0 : index
    %c1_50 = arith.constant 1 : index
    %c0_51 = arith.constant 0 : index
    %c0_52 = arith.constant 0 : index
    %42 = vector.load %arg1[%c0_48, %c0_49, %c1_50, %c0_51, %c0_52] : memref<1x4x5x5x24xbf16, #tpu.memory_space<vmem>>, vector<1x1x4x4x24xbf16>
    %43 = vector.shape_cast %42 : vector<1x1x4x4x24xbf16> to vector<4x4x24xbf16>
    %44 = arith.extf %43 : vector<4x4x24xbf16> to vector<4x4x24xf32>
    %c6 = arith.constant 6 : index
    %c0_53 = arith.constant 0 : index
    %c0_54 = arith.constant 0 : index
    %c0_55 = arith.constant 0 : index
    %45 = vector.load %arg2[%c6, %c0_53, %c0_54, %c0_55] : memref<9x1x1x24xf32, #tpu.memory_space<vmem>>, vector<1x1x1x24xf32>
    %46 = vector.shape_cast %45 : vector<1x1x1x24xf32> to vector<1x1x24xf32>
    %47 = vector.broadcast %46 : vector<1x1x24xf32> to vector<4x4x24xf32>
    %48 = arith.mulf %44, %47 : vector<4x4x24xf32>
    %c0_56 = arith.constant 0 : index
    %c1_57 = arith.constant 1 : index
    %c1_58 = arith.constant 1 : index
    %c0_59 = arith.constant 0 : index
    %c0_60 = arith.constant 0 : index
    %49 = vector.load %arg1[%c0_56, %c1_57, %c1_58, %c0_59, %c0_60] : memref<1x4x5x5x24xbf16, #tpu.memory_space<vmem>>, vector<1x1x4x4x24xbf16>
    %50 = vector.shape_cast %49 : vector<1x1x4x4x24xbf16> to vector<4x4x24xbf16>
    %51 = arith.extf %50 : vector<4x4x24xbf16> to vector<4x4x24xf32>
    %c7 = arith.constant 7 : index
    %c0_61 = arith.constant 0 : index
    %c0_62 = arith.constant 0 : index
    %c0_63 = arith.constant 0 : index
    %52 = vector.load %arg2[%c7, %c0_61, %c0_62, %c0_63] : memref<9x1x1x24xf32, #tpu.memory_space<vmem>>, vector<1x1x1x24xf32>
    %53 = vector.shape_cast %52 : vector<1x1x1x24xf32> to vector<1x1x24xf32>
    %54 = vector.broadcast %53 : vector<1x1x24xf32> to vector<4x4x24xf32>
    %55 = arith.mulf %51, %54 : vector<4x4x24xf32>
    %c0_64 = arith.constant 0 : index
    %c0_65 = arith.constant 0 : index
    %c1_66 = arith.constant 1 : index
    %c1_67 = arith.constant 1 : index
    %c0_68 = arith.constant 0 : index
    %56 = vector.load %arg1[%c0_64, %c0_65, %c1_66, %c1_67, %c0_68] : memref<1x4x5x5x24xbf16, #tpu.memory_space<vmem>>, vector<1x1x4x4x24xbf16>
    %57 = vector.shape_cast %56 : vector<1x1x4x4x24xbf16> to vector<4x4x24xbf16>
    %58 = arith.extf %57 : vector<4x4x24xbf16> to vector<4x4x24xf32>
    %c8 = arith.constant 8 : index
    %c0_69 = arith.constant 0 : index
    %c0_70 = arith.constant 0 : index
    %c0_71 = arith.constant 0 : index
    %59 = vector.load %arg2[%c8, %c0_69, %c0_70, %c0_71] : memref<9x1x1x24xf32, #tpu.memory_space<vmem>>, vector<1x1x1x24xf32>
    %60 = vector.shape_cast %59 : vector<1x1x1x24xf32> to vector<1x1x24xf32>
    %61 = vector.broadcast %60 : vector<1x1x24xf32> to vector<4x4x24xf32>
    %62 = arith.mulf %58, %61 : vector<4x4x24xf32>
    %63 = arith.addf %6, %13 : vector<4x4x24xf32>
    %64 = arith.addf %20, %27 : vector<4x4x24xf32>
    %65 = arith.addf %63, %64 : vector<4x4x24xf32>
    %66 = arith.addf %34, %41 : vector<4x4x24xf32>
    %67 = arith.addf %48, %55 : vector<4x4x24xf32>
    %68 = arith.addf %66, %67 : vector<4x4x24xf32>
    %69 = arith.addf %65, %68 : vector<4x4x24xf32>
    %70 = arith.addf %69, %62 : vector<4x4x24xf32>
    %c0_72 = arith.constant 0 : index
    %c0_73 = arith.constant 0 : index
    %c0_74 = arith.constant 0 : index
    %71 = vector.load %arg3[%c0_72, %c0_73, %c0_74] : memref<1x1x24xf32, #tpu.memory_space<vmem>>, vector<1x1x24xf32>
    %72 = vector.broadcast %71 : vector<1x1x24xf32> to vector<4x4x24xf32>
    %73 = arith.addf %70, %72 : vector<4x4x24xf32>
    %74 = arith.truncf %73 : vector<4x4x24xf32> to vector<4x4x24xbf16>
    %c0_75 = arith.constant 0 : index
    %c0_76 = arith.constant 0 : index
    %c0_77 = arith.constant 0 : index
    %c0_78 = arith.constant 0 : index
    %75 = vector.load %arg4[%c0_75, %c0_76, %c0_77, %c0_78] : memref<1x4x4x24xbf16, #tpu.memory_space<vmem>>, vector<1x4x4x24xbf16>
    %76 = vector.shape_cast %75 : vector<1x4x4x24xbf16> to vector<4x4x24xbf16>
    %77 = vector.shape_cast %74 : vector<4x4x24xbf16> to vector<1x4x4x24xbf16>
    tpu.vector_store %arg4[%c0_75, %c0_76, %c0_77, %c0_78], %77 {strides = array<i32>} : memref<1x4x4x24xbf16, #tpu.memory_space<vmem>>, vector<1x4x4x24xbf16>,
    return
  }
  func.func @transform_0(%arg0: i32) -> (i32, i32, i32, i32, i32) {
    %c0_i32 = arith.constant 0 : i32
    %c0_i32_0 = arith.constant 0 : i32
    %c0_i32_1 = arith.constant 0 : i32
    %c0_i32_2 = arith.constant 0 : i32
    %c0_i32_3 = arith.constant 0 : i32
    return %arg0, %c0_i32, %c0_i32_0, %c0_i32_1, %c0_i32_2 : i32, i32, i32, i32, i32
  }
  func.func @transform_1(%arg0: i32) -> (i32, i32, i32, i32) {
    %c0_i32 = arith.constant 0 : i32
    %c0_i32_0 = arith.constant 0 : i32
    %c0_i32_1 = arith.constant 0 : i32
    %c0_i32_2 = arith.constant 0 : i32
    %c0_i32_3 = arith.constant 0 : i32
    return %c0_i32, %c0_i32_0, %c0_i32_1, %c0_i32_2 : i32, i32, i32, i32
  }
  func.func @transform_2(%arg0: i32) -> (i32, i32, i32) {
    %c0_i32 = arith.constant 0 : i32
    %c0_i32_0 = arith.constant 0 : i32
    %c0_i32_1 = arith.constant 0 : i32
    %c0_i32_2 = arith.constant 0 : i32
    return %c0_i32, %c0_i32_0, %c0_i32_1 : i32, i32, i32
  }
  func.func @transform_3(%arg0: i32) -> (i32, i32, i32, i32) {
    %c0_i32 = arith.constant 0 : i32
    %c0_i32_0 = arith.constant 0 : i32
    %c0_i32_1 = arith.constant 0 : i32
    %c0_i32_2 = arith.constant 0 : i32
    return %arg0, %c0_i32, %c0_i32_0, %c0_i32_1 : i32, i32, i32, i32
  }
}

module attributes {stable_mosaic.version = 11 : i64} {
  func.func @_dw_s1_kernel(%arg0: i32, %arg1: memref<1x6x6x24xbf16, #tpu.memory_space<vmem>>, %arg2: memref<9x1x1x24xf32, #tpu.memory_space<vmem>>, %arg3: memref<1x1x24xf32, #tpu.memory_space<vmem>>, %arg4: memref<1x4x4x24xbf16, #tpu.memory_space<vmem>>) attributes {dimension_semantics = [#tpu.dimension_semantics<parallel>], iteration_bounds = array<i64: 2>, scalar_prefetch = 0 : i64, scratch_operands = 0 : i64, tpu.core_type = #tpu.core_type<tc>, window_params = [{transform_indices = @transform_0, window_bounds = array<i64: 1, 6, 6, 24>}, {pipeline_mode = #tpu.pipeline_mode<synchronous>, transform_indices = @transform_1, window_bounds = array<i64: 9, 1, 1, 24>}, {pipeline_mode = #tpu.pipeline_mode<synchronous>, transform_indices = @transform_2, window_bounds = array<i64: 1, 1, 24>}, {transform_indices = @transform_3, window_bounds = array<i64: 1, 4, 4, 24>}]} {
    %c0 = arith.constant 0 : index
    %c0_0 = arith.constant 0 : index
    %c0_1 = arith.constant 0 : index
    %c0_2 = arith.constant 0 : index
    %0 = vector.load %arg1[%c0, %c0_0, %c0_1, %c0_2] : memref<1x6x6x24xbf16, #tpu.memory_space<vmem>>, vector<1x4x4x24xbf16>
    %1 = vector.shape_cast %0 : vector<1x4x4x24xbf16> to vector<4x4x24xbf16>
    %2 = arith.extf %1 : vector<4x4x24xbf16> to vector<4x4x24xf32>
    %c0_3 = arith.constant 0 : index
    %c0_4 = arith.constant 0 : index
    %c0_5 = arith.constant 0 : index
    %c0_6 = arith.constant 0 : index
    %3 = vector.load %arg2[%c0_3, %c0_4, %c0_5, %c0_6] : memref<9x1x1x24xf32, #tpu.memory_space<vmem>>, vector<1x1x1x24xf32>
    %4 = vector.shape_cast %3 : vector<1x1x1x24xf32> to vector<1x1x24xf32>
    %5 = vector.broadcast %4 : vector<1x1x24xf32> to vector<4x4x24xf32>
    %6 = arith.mulf %2, %5 : vector<4x4x24xf32>
    %c0_7 = arith.constant 0 : index
    %c0_8 = arith.constant 0 : index
    %c1 = arith.constant 1 : index
    %c0_9 = arith.constant 0 : index
    %7 = vector.load %arg1[%c0_7, %c0_8, %c1, %c0_9] : memref<1x6x6x24xbf16, #tpu.memory_space<vmem>>, vector<1x4x4x24xbf16>
    %8 = vector.shape_cast %7 : vector<1x4x4x24xbf16> to vector<4x4x24xbf16>
    %9 = arith.extf %8 : vector<4x4x24xbf16> to vector<4x4x24xf32>
    %c1_10 = arith.constant 1 : index
    %c0_11 = arith.constant 0 : index
    %c0_12 = arith.constant 0 : index
    %c0_13 = arith.constant 0 : index
    %10 = vector.load %arg2[%c1_10, %c0_11, %c0_12, %c0_13] : memref<9x1x1x24xf32, #tpu.memory_space<vmem>>, vector<1x1x1x24xf32>
    %11 = vector.shape_cast %10 : vector<1x1x1x24xf32> to vector<1x1x24xf32>
    %12 = vector.broadcast %11 : vector<1x1x24xf32> to vector<4x4x24xf32>
    %13 = arith.mulf %9, %12 : vector<4x4x24xf32>
    %c0_14 = arith.constant 0 : index
    %c0_15 = arith.constant 0 : index
    %c2 = arith.constant 2 : index
    %c0_16 = arith.constant 0 : index
    %14 = vector.load %arg1[%c0_14, %c0_15, %c2, %c0_16] : memref<1x6x6x24xbf16, #tpu.memory_space<vmem>>, vector<1x4x4x24xbf16>
    %15 = vector.shape_cast %14 : vector<1x4x4x24xbf16> to vector<4x4x24xbf16>
    %16 = arith.extf %15 : vector<4x4x24xbf16> to vector<4x4x24xf32>
    %c2_17 = arith.constant 2 : index
    %c0_18 = arith.constant 0 : index
    %c0_19 = arith.constant 0 : index
    %c0_20 = arith.constant 0 : index
    %17 = vector.load %arg2[%c2_17, %c0_18, %c0_19, %c0_20] : memref<9x1x1x24xf32, #tpu.memory_space<vmem>>, vector<1x1x1x24xf32>
    %18 = vector.shape_cast %17 : vector<1x1x1x24xf32> to vector<1x1x24xf32>
    %19 = vector.broadcast %18 : vector<1x1x24xf32> to vector<4x4x24xf32>
    %20 = arith.mulf %16, %19 : vector<4x4x24xf32>
    %c0_21 = arith.constant 0 : index
    %c1_22 = arith.constant 1 : index
    %c0_23 = arith.constant 0 : index
    %c0_24 = arith.constant 0 : index
    %21 = vector.load %arg1[%c0_21, %c1_22, %c0_23, %c0_24] : memref<1x6x6x24xbf16, #tpu.memory_space<vmem>>, vector<1x4x4x24xbf16>
    %22 = vector.shape_cast %21 : vector<1x4x4x24xbf16> to vector<4x4x24xbf16>
    %23 = arith.extf %22 : vector<4x4x24xbf16> to vector<4x4x24xf32>
    %c3 = arith.constant 3 : index
    %c0_25 = arith.constant 0 : index
    %c0_26 = arith.constant 0 : index
    %c0_27 = arith.constant 0 : index
    %24 = vector.load %arg2[%c3, %c0_25, %c0_26, %c0_27] : memref<9x1x1x24xf32, #tpu.memory_space<vmem>>, vector<1x1x1x24xf32>
    %25 = vector.shape_cast %24 : vector<1x1x1x24xf32> to vector<1x1x24xf32>
    %26 = vector.broadcast %25 : vector<1x1x24xf32> to vector<4x4x24xf32>
    %27 = arith.mulf %23, %26 : vector<4x4x24xf32>
    %c0_28 = arith.constant 0 : index
    %c1_29 = arith.constant 1 : index
    %c1_30 = arith.constant 1 : index
    %c0_31 = arith.constant 0 : index
    %28 = vector.load %arg1[%c0_28, %c1_29, %c1_30, %c0_31] : memref<1x6x6x24xbf16, #tpu.memory_space<vmem>>, vector<1x4x4x24xbf16>
    %29 = vector.shape_cast %28 : vector<1x4x4x24xbf16> to vector<4x4x24xbf16>
    %30 = arith.extf %29 : vector<4x4x24xbf16> to vector<4x4x24xf32>
    %c4 = arith.constant 4 : index
    %c0_32 = arith.constant 0 : index
    %c0_33 = arith.constant 0 : index
    %c0_34 = arith.constant 0 : index
    %31 = vector.load %arg2[%c4, %c0_32, %c0_33, %c0_34] : memref<9x1x1x24xf32, #tpu.memory_space<vmem>>, vector<1x1x1x24xf32>
    %32 = vector.shape_cast %31 : vector<1x1x1x24xf32> to vector<1x1x24xf32>
    %33 = vector.broadcast %32 : vector<1x1x24xf32> to vector<4x4x24xf32>
    %34 = arith.mulf %30, %33 : vector<4x4x24xf32>
    %c0_35 = arith.constant 0 : index
    %c1_36 = arith.constant 1 : index
    %c2_37 = arith.constant 2 : index
    %c0_38 = arith.constant 0 : index
    %35 = vector.load %arg1[%c0_35, %c1_36, %c2_37, %c0_38] : memref<1x6x6x24xbf16, #tpu.memory_space<vmem>>, vector<1x4x4x24xbf16>
    %36 = vector.shape_cast %35 : vector<1x4x4x24xbf16> to vector<4x4x24xbf16>
    %37 = arith.extf %36 : vector<4x4x24xbf16> to vector<4x4x24xf32>
    %c5 = arith.constant 5 : index
    %c0_39 = arith.constant 0 : index
    %c0_40 = arith.constant 0 : index
    %c0_41 = arith.constant 0 : index
    %38 = vector.load %arg2[%c5, %c0_39, %c0_40, %c0_41] : memref<9x1x1x24xf32, #tpu.memory_space<vmem>>, vector<1x1x1x24xf32>
    %39 = vector.shape_cast %38 : vector<1x1x1x24xf32> to vector<1x1x24xf32>
    %40 = vector.broadcast %39 : vector<1x1x24xf32> to vector<4x4x24xf32>
    %41 = arith.mulf %37, %40 : vector<4x4x24xf32>
    %c0_42 = arith.constant 0 : index
    %c2_43 = arith.constant 2 : index
    %c0_44 = arith.constant 0 : index
    %c0_45 = arith.constant 0 : index
    %42 = vector.load %arg1[%c0_42, %c2_43, %c0_44, %c0_45] : memref<1x6x6x24xbf16, #tpu.memory_space<vmem>>, vector<1x4x4x24xbf16>
    %43 = vector.shape_cast %42 : vector<1x4x4x24xbf16> to vector<4x4x24xbf16>
    %44 = arith.extf %43 : vector<4x4x24xbf16> to vector<4x4x24xf32>
    %c6 = arith.constant 6 : index
    %c0_46 = arith.constant 0 : index
    %c0_47 = arith.constant 0 : index
    %c0_48 = arith.constant 0 : index
    %45 = vector.load %arg2[%c6, %c0_46, %c0_47, %c0_48] : memref<9x1x1x24xf32, #tpu.memory_space<vmem>>, vector<1x1x1x24xf32>
    %46 = vector.shape_cast %45 : vector<1x1x1x24xf32> to vector<1x1x24xf32>
    %47 = vector.broadcast %46 : vector<1x1x24xf32> to vector<4x4x24xf32>
    %48 = arith.mulf %44, %47 : vector<4x4x24xf32>
    %c0_49 = arith.constant 0 : index
    %c2_50 = arith.constant 2 : index
    %c1_51 = arith.constant 1 : index
    %c0_52 = arith.constant 0 : index
    %49 = vector.load %arg1[%c0_49, %c2_50, %c1_51, %c0_52] : memref<1x6x6x24xbf16, #tpu.memory_space<vmem>>, vector<1x4x4x24xbf16>
    %50 = vector.shape_cast %49 : vector<1x4x4x24xbf16> to vector<4x4x24xbf16>
    %51 = arith.extf %50 : vector<4x4x24xbf16> to vector<4x4x24xf32>
    %c7 = arith.constant 7 : index
    %c0_53 = arith.constant 0 : index
    %c0_54 = arith.constant 0 : index
    %c0_55 = arith.constant 0 : index
    %52 = vector.load %arg2[%c7, %c0_53, %c0_54, %c0_55] : memref<9x1x1x24xf32, #tpu.memory_space<vmem>>, vector<1x1x1x24xf32>
    %53 = vector.shape_cast %52 : vector<1x1x1x24xf32> to vector<1x1x24xf32>
    %54 = vector.broadcast %53 : vector<1x1x24xf32> to vector<4x4x24xf32>
    %55 = arith.mulf %51, %54 : vector<4x4x24xf32>
    %c0_56 = arith.constant 0 : index
    %c2_57 = arith.constant 2 : index
    %c2_58 = arith.constant 2 : index
    %c0_59 = arith.constant 0 : index
    %56 = vector.load %arg1[%c0_56, %c2_57, %c2_58, %c0_59] : memref<1x6x6x24xbf16, #tpu.memory_space<vmem>>, vector<1x4x4x24xbf16>
    %57 = vector.shape_cast %56 : vector<1x4x4x24xbf16> to vector<4x4x24xbf16>
    %58 = arith.extf %57 : vector<4x4x24xbf16> to vector<4x4x24xf32>
    %c8 = arith.constant 8 : index
    %c0_60 = arith.constant 0 : index
    %c0_61 = arith.constant 0 : index
    %c0_62 = arith.constant 0 : index
    %59 = vector.load %arg2[%c8, %c0_60, %c0_61, %c0_62] : memref<9x1x1x24xf32, #tpu.memory_space<vmem>>, vector<1x1x1x24xf32>
    %60 = vector.shape_cast %59 : vector<1x1x1x24xf32> to vector<1x1x24xf32>
    %61 = vector.broadcast %60 : vector<1x1x24xf32> to vector<4x4x24xf32>
    %62 = arith.mulf %58, %61 : vector<4x4x24xf32>
    %63 = arith.addf %6, %13 : vector<4x4x24xf32>
    %64 = arith.addf %20, %27 : vector<4x4x24xf32>
    %65 = arith.addf %63, %64 : vector<4x4x24xf32>
    %66 = arith.addf %34, %41 : vector<4x4x24xf32>
    %67 = arith.addf %48, %55 : vector<4x4x24xf32>
    %68 = arith.addf %66, %67 : vector<4x4x24xf32>
    %69 = arith.addf %65, %68 : vector<4x4x24xf32>
    %70 = arith.addf %69, %62 : vector<4x4x24xf32>
    %c0_63 = arith.constant 0 : index
    %c0_64 = arith.constant 0 : index
    %c0_65 = arith.constant 0 : index
    %71 = vector.load %arg3[%c0_63, %c0_64, %c0_65] : memref<1x1x24xf32, #tpu.memory_space<vmem>>, vector<1x1x24xf32>
    %72 = vector.broadcast %71 : vector<1x1x24xf32> to vector<4x4x24xf32>
    %73 = arith.addf %70, %72 : vector<4x4x24xf32>
    %74 = arith.truncf %73 : vector<4x4x24xf32> to vector<4x4x24xbf16>
    %c0_66 = arith.constant 0 : index
    %c0_67 = arith.constant 0 : index
    %c0_68 = arith.constant 0 : index
    %c0_69 = arith.constant 0 : index
    %75 = vector.load %arg4[%c0_66, %c0_67, %c0_68, %c0_69] : memref<1x4x4x24xbf16, #tpu.memory_space<vmem>>, vector<1x4x4x24xbf16>
    %76 = vector.shape_cast %75 : vector<1x4x4x24xbf16> to vector<4x4x24xbf16>
    %77 = vector.shape_cast %74 : vector<4x4x24xbf16> to vector<1x4x4x24xbf16>
    tpu.vector_store %arg4[%c0_66, %c0_67, %c0_68, %c0_69], %77 {strides = array<i32>} : memref<1x4x4x24xbf16, #tpu.memory_space<vmem>>, vector<1x4x4x24xbf16>,
    return
  }
  func.func @transform_0(%arg0: i32) -> (i32, i32, i32, i32) {
    %c0_i32 = arith.constant 0 : i32
    %c0_i32_0 = arith.constant 0 : i32
    %c0_i32_1 = arith.constant 0 : i32
    %c0_i32_2 = arith.constant 0 : i32
    return %arg0, %c0_i32, %c0_i32_0, %c0_i32_1 : i32, i32, i32, i32
  }
  func.func @transform_1(%arg0: i32) -> (i32, i32, i32, i32) {
    %c0_i32 = arith.constant 0 : i32
    %c0_i32_0 = arith.constant 0 : i32
    %c0_i32_1 = arith.constant 0 : i32
    %c0_i32_2 = arith.constant 0 : i32
    %c0_i32_3 = arith.constant 0 : i32
    return %c0_i32, %c0_i32_0, %c0_i32_1, %c0_i32_2 : i32, i32, i32, i32
  }
  func.func @transform_2(%arg0: i32) -> (i32, i32, i32) {
    %c0_i32 = arith.constant 0 : i32
    %c0_i32_0 = arith.constant 0 : i32
    %c0_i32_1 = arith.constant 0 : i32
    %c0_i32_2 = arith.constant 0 : i32
    return %c0_i32, %c0_i32_0, %c0_i32_1 : i32, i32, i32
  }
  func.func @transform_3(%arg0: i32) -> (i32, i32, i32, i32) {
    %c0_i32 = arith.constant 0 : i32
    %c0_i32_0 = arith.constant 0 : i32
    %c0_i32_1 = arith.constant 0 : i32
    %c0_i32_2 = arith.constant 0 : i32
    return %arg0, %c0_i32, %c0_i32_0, %c0_i32_1 : i32, i32, i32, i32
  }
}

module attributes {stable_mosaic.version = 11 : i64} {
  func.func @_mm_bias_kernel(%arg0: i32, %arg1: memref<32x48xbf16, #tpu.memory_space<vmem>>, %arg2: memref<48x48xbf16, #tpu.memory_space<vmem>>, %arg3: memref<1x48xf32, #tpu.memory_space<vmem>>, %arg4: memref<32x48xbf16, #tpu.memory_space<vmem>>) attributes {dimension_semantics = [#tpu.dimension_semantics<parallel>], iteration_bounds = array<i64: 1>, scalar_prefetch = 0 : i64, scratch_operands = 0 : i64, tpu.core_type = #tpu.core_type<tc>, window_params = [{transform_indices = @transform_0, window_bounds = array<i64: 32, 48>}, {pipeline_mode = #tpu.pipeline_mode<synchronous>, transform_indices = @transform_1, window_bounds = array<i64: 48, 48>}, {pipeline_mode = #tpu.pipeline_mode<synchronous>, transform_indices = @transform_2, window_bounds = array<i64: 1, 48>}, {transform_indices = @transform_3, window_bounds = array<i64: 32, 48>}]} {
    %c0 = arith.constant 0 : index
    %c0_0 = arith.constant 0 : index
    %0 = vector.load %arg1[%c0, %c0_0] : memref<32x48xbf16, #tpu.memory_space<vmem>>, vector<32x48xbf16>
    %c0_1 = arith.constant 0 : index
    %c0_2 = arith.constant 0 : index
    %1 = vector.load %arg2[%c0_1, %c0_2] : memref<48x48xbf16, #tpu.memory_space<vmem>>, vector<48x48xbf16>
    %cst = arith.constant dense<0.000000e+00> : vector<32x48xf32>
    %2 = tpu.matmul %0, %1, %cst {dimension_numbers = #tpu.dot_dimension_numbers<[1], [0], [0], [1], [0, 0, 1, 1], [], []>} : vector<32x48xbf16>, vector<48x48xbf16>, vector<32x48xf32> -> vector<32x48xf32>
    %c0_3 = arith.constant 0 : index
    %c0_4 = arith.constant 0 : index
    %3 = vector.load %arg3[%c0_3, %c0_4] : memref<1x48xf32, #tpu.memory_space<vmem>>, vector<1x48xf32>
    %4 = vector.broadcast %3 : vector<1x48xf32> to vector<32x48xf32>
    %5 = arith.addf %2, %4 : vector<32x48xf32>
    %cst_5 = arith.constant 0.000000e+00 : f32
    %6 = vector.broadcast %cst_5 : f32 to vector<32x48xf32>
    %7 = arith.maximumf %5, %6 : vector<32x48xf32>
    %8 = arith.truncf %7 : vector<32x48xf32> to vector<32x48xbf16>
    %c0_6 = arith.constant 0 : index
    %c0_7 = arith.constant 0 : index
    %9 = vector.load %arg4[%c0_6, %c0_7] : memref<32x48xbf16, #tpu.memory_space<vmem>>, vector<32x48xbf16>
    tpu.vector_store %arg4[%c0_6, %c0_7], %8 {strides = array<i32>} : memref<32x48xbf16, #tpu.memory_space<vmem>>, vector<32x48xbf16>,
    return
  }
  func.func @transform_0(%arg0: i32) -> (i32, i32) {
    %c0_i32 = arith.constant 0 : i32
    %c0_i32_0 = arith.constant 0 : i32
    return %arg0, %c0_i32 : i32, i32
  }
  func.func @transform_1(%arg0: i32) -> (i32, i32) {
    %c0_i32 = arith.constant 0 : i32
    %c0_i32_0 = arith.constant 0 : i32
    %c0_i32_1 = arith.constant 0 : i32
    return %c0_i32, %c0_i32_0 : i32, i32
  }
  func.func @transform_2(%arg0: i32) -> (i32, i32) {
    %c0_i32 = arith.constant 0 : i32
    %c0_i32_0 = arith.constant 0 : i32
    %c0_i32_1 = arith.constant 0 : i32
    return %c0_i32, %c0_i32_0 : i32, i32
  }
  func.func @transform_3(%arg0: i32) -> (i32, i32) {
    %c0_i32 = arith.constant 0 : i32
    %c0_i32_0 = arith.constant 0 : i32
    return %arg0, %c0_i32 : i32, i32
  }
}

module attributes {stable_mosaic.version = 11 : i64} {
  func.func @_dw_s2_kernel(%arg0: i32, %arg1: memref<1x4x3x3x48xbf16, #tpu.memory_space<vmem>>, %arg2: memref<9x1x1x48xf32, #tpu.memory_space<vmem>>, %arg3: memref<1x1x48xf32, #tpu.memory_space<vmem>>, %arg4: memref<1x2x2x48xbf16, #tpu.memory_space<vmem>>) attributes {dimension_semantics = [#tpu.dimension_semantics<parallel>], iteration_bounds = array<i64: 2>, scalar_prefetch = 0 : i64, scratch_operands = 0 : i64, tpu.core_type = #tpu.core_type<tc>, window_params = [{transform_indices = @transform_0, window_bounds = array<i64: 1, 4, 3, 3, 48>}, {pipeline_mode = #tpu.pipeline_mode<synchronous>, transform_indices = @transform_1, window_bounds = array<i64: 9, 1, 1, 48>}, {pipeline_mode = #tpu.pipeline_mode<synchronous>, transform_indices = @transform_2, window_bounds = array<i64: 1, 1, 48>}, {transform_indices = @transform_3, window_bounds = array<i64: 1, 2, 2, 48>}]} {
    %c0 = arith.constant 0 : index
    %c0_0 = arith.constant 0 : index
    %c0_1 = arith.constant 0 : index
    %c0_2 = arith.constant 0 : index
    %c0_3 = arith.constant 0 : index
    %0 = vector.load %arg1[%c0, %c0_0, %c0_1, %c0_2, %c0_3] : memref<1x4x3x3x48xbf16, #tpu.memory_space<vmem>>, vector<1x1x2x2x48xbf16>
    %1 = vector.shape_cast %0 : vector<1x1x2x2x48xbf16> to vector<2x2x48xbf16>
    %2 = arith.extf %1 : vector<2x2x48xbf16> to vector<2x2x48xf32>
    %c0_4 = arith.constant 0 : index
    %c0_5 = arith.constant 0 : index
    %c0_6 = arith.constant 0 : index
    %c0_7 = arith.constant 0 : index
    %3 = vector.load %arg2[%c0_4, %c0_5, %c0_6, %c0_7] : memref<9x1x1x48xf32, #tpu.memory_space<vmem>>, vector<1x1x1x48xf32>
    %4 = vector.shape_cast %3 : vector<1x1x1x48xf32> to vector<1x1x48xf32>
    %5 = vector.broadcast %4 : vector<1x1x48xf32> to vector<2x2x48xf32>
    %6 = arith.mulf %2, %5 : vector<2x2x48xf32>
    %c0_8 = arith.constant 0 : index
    %c1 = arith.constant 1 : index
    %c0_9 = arith.constant 0 : index
    %c0_10 = arith.constant 0 : index
    %c0_11 = arith.constant 0 : index
    %7 = vector.load %arg1[%c0_8, %c1, %c0_9, %c0_10, %c0_11] : memref<1x4x3x3x48xbf16, #tpu.memory_space<vmem>>, vector<1x1x2x2x48xbf16>
    %8 = vector.shape_cast %7 : vector<1x1x2x2x48xbf16> to vector<2x2x48xbf16>
    %9 = arith.extf %8 : vector<2x2x48xbf16> to vector<2x2x48xf32>
    %c1_12 = arith.constant 1 : index
    %c0_13 = arith.constant 0 : index
    %c0_14 = arith.constant 0 : index
    %c0_15 = arith.constant 0 : index
    %10 = vector.load %arg2[%c1_12, %c0_13, %c0_14, %c0_15] : memref<9x1x1x48xf32, #tpu.memory_space<vmem>>, vector<1x1x1x48xf32>
    %11 = vector.shape_cast %10 : vector<1x1x1x48xf32> to vector<1x1x48xf32>
    %12 = vector.broadcast %11 : vector<1x1x48xf32> to vector<2x2x48xf32>
    %13 = arith.mulf %9, %12 : vector<2x2x48xf32>
    %c0_16 = arith.constant 0 : index
    %c0_17 = arith.constant 0 : index
    %c0_18 = arith.constant 0 : index
    %c1_19 = arith.constant 1 : index
    %c0_20 = arith.constant 0 : index
    %14 = vector.load %arg1[%c0_16, %c0_17, %c0_18, %c1_19, %c0_20] : memref<1x4x3x3x48xbf16, #tpu.memory_space<vmem>>, vector<1x1x2x2x48xbf16>
    %15 = vector.shape_cast %14 : vector<1x1x2x2x48xbf16> to vector<2x2x48xbf16>
    %16 = arith.extf %15 : vector<2x2x48xbf16> to vector<2x2x48xf32>
    %c2 = arith.constant 2 : index
    %c0_21 = arith.constant 0 : index
    %c0_22 = arith.constant 0 : index
    %c0_23 = arith.constant 0 : index
    %17 = vector.load %arg2[%c2, %c0_21, %c0_22, %c0_23] : memref<9x1x1x48xf32, #tpu.memory_space<vmem>>, vector<1x1x1x48xf32>
    %18 = vector.shape_cast %17 : vector<1x1x1x48xf32> to vector<1x1x48xf32>
    %19 = vector.broadcast %18 : vector<1x1x48xf32> to vector<2x2x48xf32>
    %20 = arith.mulf %16, %19 : vector<2x2x48xf32>
    %c0_24 = arith.constant 0 : index
    %c2_25 = arith.constant 2 : index
    %c0_26 = arith.constant 0 : index
    %c0_27 = arith.constant 0 : index
    %c0_28 = arith.constant 0 : index
    %21 = vector.load %arg1[%c0_24, %c2_25, %c0_26, %c0_27, %c0_28] : memref<1x4x3x3x48xbf16, #tpu.memory_space<vmem>>, vector<1x1x2x2x48xbf16>
    %22 = vector.shape_cast %21 : vector<1x1x2x2x48xbf16> to vector<2x2x48xbf16>
    %23 = arith.extf %22 : vector<2x2x48xbf16> to vector<2x2x48xf32>
    %c3 = arith.constant 3 : index
    %c0_29 = arith.constant 0 : index
    %c0_30 = arith.constant 0 : index
    %c0_31 = arith.constant 0 : index
    %24 = vector.load %arg2[%c3, %c0_29, %c0_30, %c0_31] : memref<9x1x1x48xf32, #tpu.memory_space<vmem>>, vector<1x1x1x48xf32>
    %25 = vector.shape_cast %24 : vector<1x1x1x48xf32> to vector<1x1x48xf32>
    %26 = vector.broadcast %25 : vector<1x1x48xf32> to vector<2x2x48xf32>
    %27 = arith.mulf %23, %26 : vector<2x2x48xf32>
    %c0_32 = arith.constant 0 : index
    %c3_33 = arith.constant 3 : index
    %c0_34 = arith.constant 0 : index
    %c0_35 = arith.constant 0 : index
    %c0_36 = arith.constant 0 : index
    %28 = vector.load %arg1[%c0_32, %c3_33, %c0_34, %c0_35, %c0_36] : memref<1x4x3x3x48xbf16, #tpu.memory_space<vmem>>, vector<1x1x2x2x48xbf16>
    %29 = vector.shape_cast %28 : vector<1x1x2x2x48xbf16> to vector<2x2x48xbf16>
    %30 = arith.extf %29 : vector<2x2x48xbf16> to vector<2x2x48xf32>
    %c4 = arith.constant 4 : index
    %c0_37 = arith.constant 0 : index
    %c0_38 = arith.constant 0 : index
    %c0_39 = arith.constant 0 : index
    %31 = vector.load %arg2[%c4, %c0_37, %c0_38, %c0_39] : memref<9x1x1x48xf32, #tpu.memory_space<vmem>>, vector<1x1x1x48xf32>
    %32 = vector.shape_cast %31 : vector<1x1x1x48xf32> to vector<1x1x48xf32>
    %33 = vector.broadcast %32 : vector<1x1x48xf32> to vector<2x2x48xf32>
    %34 = arith.mulf %30, %33 : vector<2x2x48xf32>
    %c0_40 = arith.constant 0 : index
    %c2_41 = arith.constant 2 : index
    %c0_42 = arith.constant 0 : index
    %c1_43 = arith.constant 1 : index
    %c0_44 = arith.constant 0 : index
    %35 = vector.load %arg1[%c0_40, %c2_41, %c0_42, %c1_43, %c0_44] : memref<1x4x3x3x48xbf16, #tpu.memory_space<vmem>>, vector<1x1x2x2x48xbf16>
    %36 = vector.shape_cast %35 : vector<1x1x2x2x48xbf16> to vector<2x2x48xbf16>
    %37 = arith.extf %36 : vector<2x2x48xbf16> to vector<2x2x48xf32>
    %c5 = arith.constant 5 : index
    %c0_45 = arith.constant 0 : index
    %c0_46 = arith.constant 0 : index
    %c0_47 = arith.constant 0 : index
    %38 = vector.load %arg2[%c5, %c0_45, %c0_46, %c0_47] : memref<9x1x1x48xf32, #tpu.memory_space<vmem>>, vector<1x1x1x48xf32>
    %39 = vector.shape_cast %38 : vector<1x1x1x48xf32> to vector<1x1x48xf32>
    %40 = vector.broadcast %39 : vector<1x1x48xf32> to vector<2x2x48xf32>
    %41 = arith.mulf %37, %40 : vector<2x2x48xf32>
    %c0_48 = arith.constant 0 : index
    %c0_49 = arith.constant 0 : index
    %c1_50 = arith.constant 1 : index
    %c0_51 = arith.constant 0 : index
    %c0_52 = arith.constant 0 : index
    %42 = vector.load %arg1[%c0_48, %c0_49, %c1_50, %c0_51, %c0_52] : memref<1x4x3x3x48xbf16, #tpu.memory_space<vmem>>, vector<1x1x2x2x48xbf16>
    %43 = vector.shape_cast %42 : vector<1x1x2x2x48xbf16> to vector<2x2x48xbf16>
    %44 = arith.extf %43 : vector<2x2x48xbf16> to vector<2x2x48xf32>
    %c6 = arith.constant 6 : index
    %c0_53 = arith.constant 0 : index
    %c0_54 = arith.constant 0 : index
    %c0_55 = arith.constant 0 : index
    %45 = vector.load %arg2[%c6, %c0_53, %c0_54, %c0_55] : memref<9x1x1x48xf32, #tpu.memory_space<vmem>>, vector<1x1x1x48xf32>
    %46 = vector.shape_cast %45 : vector<1x1x1x48xf32> to vector<1x1x48xf32>
    %47 = vector.broadcast %46 : vector<1x1x48xf32> to vector<2x2x48xf32>
    %48 = arith.mulf %44, %47 : vector<2x2x48xf32>
    %c0_56 = arith.constant 0 : index
    %c1_57 = arith.constant 1 : index
    %c1_58 = arith.constant 1 : index
    %c0_59 = arith.constant 0 : index
    %c0_60 = arith.constant 0 : index
    %49 = vector.load %arg1[%c0_56, %c1_57, %c1_58, %c0_59, %c0_60] : memref<1x4x3x3x48xbf16, #tpu.memory_space<vmem>>, vector<1x1x2x2x48xbf16>
    %50 = vector.shape_cast %49 : vector<1x1x2x2x48xbf16> to vector<2x2x48xbf16>
    %51 = arith.extf %50 : vector<2x2x48xbf16> to vector<2x2x48xf32>
    %c7 = arith.constant 7 : index
    %c0_61 = arith.constant 0 : index
    %c0_62 = arith.constant 0 : index
    %c0_63 = arith.constant 0 : index
    %52 = vector.load %arg2[%c7, %c0_61, %c0_62, %c0_63] : memref<9x1x1x48xf32, #tpu.memory_space<vmem>>, vector<1x1x1x48xf32>
    %53 = vector.shape_cast %52 : vector<1x1x1x48xf32> to vector<1x1x48xf32>
    %54 = vector.broadcast %53 : vector<1x1x48xf32> to vector<2x2x48xf32>
    %55 = arith.mulf %51, %54 : vector<2x2x48xf32>
    %c0_64 = arith.constant 0 : index
    %c0_65 = arith.constant 0 : index
    %c1_66 = arith.constant 1 : index
    %c1_67 = arith.constant 1 : index
    %c0_68 = arith.constant 0 : index
    %56 = vector.load %arg1[%c0_64, %c0_65, %c1_66, %c1_67, %c0_68] : memref<1x4x3x3x48xbf16, #tpu.memory_space<vmem>>, vector<1x1x2x2x48xbf16>
    %57 = vector.shape_cast %56 : vector<1x1x2x2x48xbf16> to vector<2x2x48xbf16>
    %58 = arith.extf %57 : vector<2x2x48xbf16> to vector<2x2x48xf32>
    %c8 = arith.constant 8 : index
    %c0_69 = arith.constant 0 : index
    %c0_70 = arith.constant 0 : index
    %c0_71 = arith.constant 0 : index
    %59 = vector.load %arg2[%c8, %c0_69, %c0_70, %c0_71] : memref<9x1x1x48xf32, #tpu.memory_space<vmem>>, vector<1x1x1x48xf32>
    %60 = vector.shape_cast %59 : vector<1x1x1x48xf32> to vector<1x1x48xf32>
    %61 = vector.broadcast %60 : vector<1x1x48xf32> to vector<2x2x48xf32>
    %62 = arith.mulf %58, %61 : vector<2x2x48xf32>
    %63 = arith.addf %6, %13 : vector<2x2x48xf32>
    %64 = arith.addf %20, %27 : vector<2x2x48xf32>
    %65 = arith.addf %63, %64 : vector<2x2x48xf32>
    %66 = arith.addf %34, %41 : vector<2x2x48xf32>
    %67 = arith.addf %48, %55 : vector<2x2x48xf32>
    %68 = arith.addf %66, %67 : vector<2x2x48xf32>
    %69 = arith.addf %65, %68 : vector<2x2x48xf32>
    %70 = arith.addf %69, %62 : vector<2x2x48xf32>
    %c0_72 = arith.constant 0 : index
    %c0_73 = arith.constant 0 : index
    %c0_74 = arith.constant 0 : index
    %71 = vector.load %arg3[%c0_72, %c0_73, %c0_74] : memref<1x1x48xf32, #tpu.memory_space<vmem>>, vector<1x1x48xf32>
    %72 = vector.broadcast %71 : vector<1x1x48xf32> to vector<2x2x48xf32>
    %73 = arith.addf %70, %72 : vector<2x2x48xf32>
    %74 = arith.truncf %73 : vector<2x2x48xf32> to vector<2x2x48xbf16>
    %c0_75 = arith.constant 0 : index
    %c0_76 = arith.constant 0 : index
    %c0_77 = arith.constant 0 : index
    %c0_78 = arith.constant 0 : index
    %75 = vector.load %arg4[%c0_75, %c0_76, %c0_77, %c0_78] : memref<1x2x2x48xbf16, #tpu.memory_space<vmem>>, vector<1x2x2x48xbf16>
    %76 = vector.shape_cast %75 : vector<1x2x2x48xbf16> to vector<2x2x48xbf16>
    %77 = vector.shape_cast %74 : vector<2x2x48xbf16> to vector<1x2x2x48xbf16>
    tpu.vector_store %arg4[%c0_75, %c0_76, %c0_77, %c0_78], %77 {strides = array<i32>} : memref<1x2x2x48xbf16, #tpu.memory_space<vmem>>, vector<1x2x2x48xbf16>,
    return
  }
  func.func @transform_0(%arg0: i32) -> (i32, i32, i32, i32, i32) {
    %c0_i32 = arith.constant 0 : i32
    %c0_i32_0 = arith.constant 0 : i32
    %c0_i32_1 = arith.constant 0 : i32
    %c0_i32_2 = arith.constant 0 : i32
    %c0_i32_3 = arith.constant 0 : i32
    return %arg0, %c0_i32, %c0_i32_0, %c0_i32_1, %c0_i32_2 : i32, i32, i32, i32, i32
  }
  func.func @transform_1(%arg0: i32) -> (i32, i32, i32, i32) {
    %c0_i32 = arith.constant 0 : i32
    %c0_i32_0 = arith.constant 0 : i32
    %c0_i32_1 = arith.constant 0 : i32
    %c0_i32_2 = arith.constant 0 : i32
    %c0_i32_3 = arith.constant 0 : i32
    return %c0_i32, %c0_i32_0, %c0_i32_1, %c0_i32_2 : i32, i32, i32, i32
  }
  func.func @transform_2(%arg0: i32) -> (i32, i32, i32) {
    %c0_i32 = arith.constant 0 : i32
    %c0_i32_0 = arith.constant 0 : i32
    %c0_i32_1 = arith.constant 0 : i32
    %c0_i32_2 = arith.constant 0 : i32
    return %c0_i32, %c0_i32_0, %c0_i32_1 : i32, i32, i32
  }
  func.func @transform_3(%arg0: i32) -> (i32, i32, i32, i32) {
    %c0_i32 = arith.constant 0 : i32
    %c0_i32_0 = arith.constant 0 : i32
    %c0_i32_1 = arith.constant 0 : i32
    %c0_i32_2 = arith.constant 0 : i32
    return %arg0, %c0_i32, %c0_i32_0, %c0_i32_1 : i32, i32, i32, i32
  }
}

module attributes {stable_mosaic.version = 11 : i64} {
  func.func @_mm_bias_kernel(%arg0: i32, %arg1: memref<8x48xbf16, #tpu.memory_space<vmem>>, %arg2: memref<48x48xbf16, #tpu.memory_space<vmem>>, %arg3: memref<1x48xf32, #tpu.memory_space<vmem>>, %arg4: memref<8x48xbf16, #tpu.memory_space<vmem>>) attributes {dimension_semantics = [#tpu.dimension_semantics<parallel>], iteration_bounds = array<i64: 1>, scalar_prefetch = 0 : i64, scratch_operands = 0 : i64, tpu.core_type = #tpu.core_type<tc>, window_params = [{transform_indices = @transform_0, window_bounds = array<i64: 8, 48>}, {pipeline_mode = #tpu.pipeline_mode<synchronous>, transform_indices = @transform_1, window_bounds = array<i64: 48, 48>}, {pipeline_mode = #tpu.pipeline_mode<synchronous>, transform_indices = @transform_2, window_bounds = array<i64: 1, 48>}, {transform_indices = @transform_3, window_bounds = array<i64: 8, 48>}]} {
    %c0 = arith.constant 0 : index
    %c0_0 = arith.constant 0 : index
    %0 = vector.load %arg1[%c0, %c0_0] : memref<8x48xbf16, #tpu.memory_space<vmem>>, vector<8x48xbf16>
    %c0_1 = arith.constant 0 : index
    %c0_2 = arith.constant 0 : index
    %1 = vector.load %arg2[%c0_1, %c0_2] : memref<48x48xbf16, #tpu.memory_space<vmem>>, vector<48x48xbf16>
    %cst = arith.constant dense<0.000000e+00> : vector<8x48xf32>
    %2 = tpu.matmul %0, %1, %cst {dimension_numbers = #tpu.dot_dimension_numbers<[1], [0], [0], [1], [0, 0, 1, 1], [], []>} : vector<8x48xbf16>, vector<48x48xbf16>, vector<8x48xf32> -> vector<8x48xf32>
    %c0_3 = arith.constant 0 : index
    %c0_4 = arith.constant 0 : index
    %3 = vector.load %arg3[%c0_3, %c0_4] : memref<1x48xf32, #tpu.memory_space<vmem>>, vector<1x48xf32>
    %4 = vector.broadcast %3 : vector<1x48xf32> to vector<8x48xf32>
    %5 = arith.addf %2, %4 : vector<8x48xf32>
    %cst_5 = arith.constant 0.000000e+00 : f32
    %6 = vector.broadcast %cst_5 : f32 to vector<8x48xf32>
    %7 = arith.maximumf %5, %6 : vector<8x48xf32>
    %8 = arith.truncf %7 : vector<8x48xf32> to vector<8x48xbf16>
    %c0_6 = arith.constant 0 : index
    %c0_7 = arith.constant 0 : index
    %9 = vector.load %arg4[%c0_6, %c0_7] : memref<8x48xbf16, #tpu.memory_space<vmem>>, vector<8x48xbf16>
    tpu.vector_store %arg4[%c0_6, %c0_7], %8 {strides = array<i32>} : memref<8x48xbf16, #tpu.memory_space<vmem>>, vector<8x48xbf16>,
    return
  }
  func.func @transform_0(%arg0: i32) -> (i32, i32) {
    %c0_i32 = arith.constant 0 : i32
    %c0_i32_0 = arith.constant 0 : i32
    return %arg0, %c0_i32 : i32, i32
  }
  func.func @transform_1(%arg0: i32) -> (i32, i32) {
    %c0_i32 = arith.constant 0 : i32
    %c0_i32_0 = arith.constant 0 : i32
    %c0_i32_1 = arith.constant 0 : i32
    return %c0_i32, %c0_i32_0 : i32, i32
  }
  func.func @transform_2(%arg0: i32) -> (i32, i32) {
    %c0_i32 = arith.constant 0 : i32
    %c0_i32_0 = arith.constant 0 : i32
    %c0_i32_1 = arith.constant 0 : i32
    return %c0_i32, %c0_i32_0 : i32, i32
  }
  func.func @transform_3(%arg0: i32) -> (i32, i32) {
    %c0_i32 = arith.constant 0 : i32
    %c0_i32_0 = arith.constant 0 : i32
    return %arg0, %c0_i32 : i32, i32
  }
}

module attributes {stable_mosaic.version = 11 : i64} {
  func.func @_dw_s1_kernel(%arg0: i32, %arg1: memref<1x4x4x48xbf16, #tpu.memory_space<vmem>>, %arg2: memref<9x1x1x48xf32, #tpu.memory_space<vmem>>, %arg3: memref<1x1x48xf32, #tpu.memory_space<vmem>>, %arg4: memref<1x2x2x48xbf16, #tpu.memory_space<vmem>>) attributes {dimension_semantics = [#tpu.dimension_semantics<parallel>], iteration_bounds = array<i64: 2>, scalar_prefetch = 0 : i64, scratch_operands = 0 : i64, tpu.core_type = #tpu.core_type<tc>, window_params = [{transform_indices = @transform_0, window_bounds = array<i64: 1, 4, 4, 48>}, {pipeline_mode = #tpu.pipeline_mode<synchronous>, transform_indices = @transform_1, window_bounds = array<i64: 9, 1, 1, 48>}, {pipeline_mode = #tpu.pipeline_mode<synchronous>, transform_indices = @transform_2, window_bounds = array<i64: 1, 1, 48>}, {transform_indices = @transform_3, window_bounds = array<i64: 1, 2, 2, 48>}]} {
    %c0 = arith.constant 0 : index
    %c0_0 = arith.constant 0 : index
    %c0_1 = arith.constant 0 : index
    %c0_2 = arith.constant 0 : index
    %0 = vector.load %arg1[%c0, %c0_0, %c0_1, %c0_2] : memref<1x4x4x48xbf16, #tpu.memory_space<vmem>>, vector<1x2x2x48xbf16>
    %1 = vector.shape_cast %0 : vector<1x2x2x48xbf16> to vector<2x2x48xbf16>
    %2 = arith.extf %1 : vector<2x2x48xbf16> to vector<2x2x48xf32>
    %c0_3 = arith.constant 0 : index
    %c0_4 = arith.constant 0 : index
    %c0_5 = arith.constant 0 : index
    %c0_6 = arith.constant 0 : index
    %3 = vector.load %arg2[%c0_3, %c0_4, %c0_5, %c0_6] : memref<9x1x1x48xf32, #tpu.memory_space<vmem>>, vector<1x1x1x48xf32>
    %4 = vector.shape_cast %3 : vector<1x1x1x48xf32> to vector<1x1x48xf32>
    %5 = vector.broadcast %4 : vector<1x1x48xf32> to vector<2x2x48xf32>
    %6 = arith.mulf %2, %5 : vector<2x2x48xf32>
    %c0_7 = arith.constant 0 : index
    %c0_8 = arith.constant 0 : index
    %c1 = arith.constant 1 : index
    %c0_9 = arith.constant 0 : index
    %7 = vector.load %arg1[%c0_7, %c0_8, %c1, %c0_9] : memref<1x4x4x48xbf16, #tpu.memory_space<vmem>>, vector<1x2x2x48xbf16>
    %8 = vector.shape_cast %7 : vector<1x2x2x48xbf16> to vector<2x2x48xbf16>
    %9 = arith.extf %8 : vector<2x2x48xbf16> to vector<2x2x48xf32>
    %c1_10 = arith.constant 1 : index
    %c0_11 = arith.constant 0 : index
    %c0_12 = arith.constant 0 : index
    %c0_13 = arith.constant 0 : index
    %10 = vector.load %arg2[%c1_10, %c0_11, %c0_12, %c0_13] : memref<9x1x1x48xf32, #tpu.memory_space<vmem>>, vector<1x1x1x48xf32>
    %11 = vector.shape_cast %10 : vector<1x1x1x48xf32> to vector<1x1x48xf32>
    %12 = vector.broadcast %11 : vector<1x1x48xf32> to vector<2x2x48xf32>
    %13 = arith.mulf %9, %12 : vector<2x2x48xf32>
    %c0_14 = arith.constant 0 : index
    %c0_15 = arith.constant 0 : index
    %c2 = arith.constant 2 : index
    %c0_16 = arith.constant 0 : index
    %14 = vector.load %arg1[%c0_14, %c0_15, %c2, %c0_16] : memref<1x4x4x48xbf16, #tpu.memory_space<vmem>>, vector<1x2x2x48xbf16>
    %15 = vector.shape_cast %14 : vector<1x2x2x48xbf16> to vector<2x2x48xbf16>
    %16 = arith.extf %15 : vector<2x2x48xbf16> to vector<2x2x48xf32>
    %c2_17 = arith.constant 2 : index
    %c0_18 = arith.constant 0 : index
    %c0_19 = arith.constant 0 : index
    %c0_20 = arith.constant 0 : index
    %17 = vector.load %arg2[%c2_17, %c0_18, %c0_19, %c0_20] : memref<9x1x1x48xf32, #tpu.memory_space<vmem>>, vector<1x1x1x48xf32>
    %18 = vector.shape_cast %17 : vector<1x1x1x48xf32> to vector<1x1x48xf32>
    %19 = vector.broadcast %18 : vector<1x1x48xf32> to vector<2x2x48xf32>
    %20 = arith.mulf %16, %19 : vector<2x2x48xf32>
    %c0_21 = arith.constant 0 : index
    %c1_22 = arith.constant 1 : index
    %c0_23 = arith.constant 0 : index
    %c0_24 = arith.constant 0 : index
    %21 = vector.load %arg1[%c0_21, %c1_22, %c0_23, %c0_24] : memref<1x4x4x48xbf16, #tpu.memory_space<vmem>>, vector<1x2x2x48xbf16>
    %22 = vector.shape_cast %21 : vector<1x2x2x48xbf16> to vector<2x2x48xbf16>
    %23 = arith.extf %22 : vector<2x2x48xbf16> to vector<2x2x48xf32>
    %c3 = arith.constant 3 : index
    %c0_25 = arith.constant 0 : index
    %c0_26 = arith.constant 0 : index
    %c0_27 = arith.constant 0 : index
    %24 = vector.load %arg2[%c3, %c0_25, %c0_26, %c0_27] : memref<9x1x1x48xf32, #tpu.memory_space<vmem>>, vector<1x1x1x48xf32>
    %25 = vector.shape_cast %24 : vector<1x1x1x48xf32> to vector<1x1x48xf32>
    %26 = vector.broadcast %25 : vector<1x1x48xf32> to vector<2x2x48xf32>
    %27 = arith.mulf %23, %26 : vector<2x2x48xf32>
    %c0_28 = arith.constant 0 : index
    %c1_29 = arith.constant 1 : index
    %c1_30 = arith.constant 1 : index
    %c0_31 = arith.constant 0 : index
    %28 = vector.load %arg1[%c0_28, %c1_29, %c1_30, %c0_31] : memref<1x4x4x48xbf16, #tpu.memory_space<vmem>>, vector<1x2x2x48xbf16>
    %29 = vector.shape_cast %28 : vector<1x2x2x48xbf16> to vector<2x2x48xbf16>
    %30 = arith.extf %29 : vector<2x2x48xbf16> to vector<2x2x48xf32>
    %c4 = arith.constant 4 : index
    %c0_32 = arith.constant 0 : index
    %c0_33 = arith.constant 0 : index
    %c0_34 = arith.constant 0 : index
    %31 = vector.load %arg2[%c4, %c0_32, %c0_33, %c0_34] : memref<9x1x1x48xf32, #tpu.memory_space<vmem>>, vector<1x1x1x48xf32>
    %32 = vector.shape_cast %31 : vector<1x1x1x48xf32> to vector<1x1x48xf32>
    %33 = vector.broadcast %32 : vector<1x1x48xf32> to vector<2x2x48xf32>
    %34 = arith.mulf %30, %33 : vector<2x2x48xf32>
    %c0_35 = arith.constant 0 : index
    %c1_36 = arith.constant 1 : index
    %c2_37 = arith.constant 2 : index
    %c0_38 = arith.constant 0 : index
    %35 = vector.load %arg1[%c0_35, %c1_36, %c2_37, %c0_38] : memref<1x4x4x48xbf16, #tpu.memory_space<vmem>>, vector<1x2x2x48xbf16>
    %36 = vector.shape_cast %35 : vector<1x2x2x48xbf16> to vector<2x2x48xbf16>
    %37 = arith.extf %36 : vector<2x2x48xbf16> to vector<2x2x48xf32>
    %c5 = arith.constant 5 : index
    %c0_39 = arith.constant 0 : index
    %c0_40 = arith.constant 0 : index
    %c0_41 = arith.constant 0 : index
    %38 = vector.load %arg2[%c5, %c0_39, %c0_40, %c0_41] : memref<9x1x1x48xf32, #tpu.memory_space<vmem>>, vector<1x1x1x48xf32>
    %39 = vector.shape_cast %38 : vector<1x1x1x48xf32> to vector<1x1x48xf32>
    %40 = vector.broadcast %39 : vector<1x1x48xf32> to vector<2x2x48xf32>
    %41 = arith.mulf %37, %40 : vector<2x2x48xf32>
    %c0_42 = arith.constant 0 : index
    %c2_43 = arith.constant 2 : index
    %c0_44 = arith.constant 0 : index
    %c0_45 = arith.constant 0 : index
    %42 = vector.load %arg1[%c0_42, %c2_43, %c0_44, %c0_45] : memref<1x4x4x48xbf16, #tpu.memory_space<vmem>>, vector<1x2x2x48xbf16>
    %43 = vector.shape_cast %42 : vector<1x2x2x48xbf16> to vector<2x2x48xbf16>
    %44 = arith.extf %43 : vector<2x2x48xbf16> to vector<2x2x48xf32>
    %c6 = arith.constant 6 : index
    %c0_46 = arith.constant 0 : index
    %c0_47 = arith.constant 0 : index
    %c0_48 = arith.constant 0 : index
    %45 = vector.load %arg2[%c6, %c0_46, %c0_47, %c0_48] : memref<9x1x1x48xf32, #tpu.memory_space<vmem>>, vector<1x1x1x48xf32>
    %46 = vector.shape_cast %45 : vector<1x1x1x48xf32> to vector<1x1x48xf32>
    %47 = vector.broadcast %46 : vector<1x1x48xf32> to vector<2x2x48xf32>
    %48 = arith.mulf %44, %47 : vector<2x2x48xf32>
    %c0_49 = arith.constant 0 : index
    %c2_50 = arith.constant 2 : index
    %c1_51 = arith.constant 1 : index
    %c0_52 = arith.constant 0 : index
    %49 = vector.load %arg1[%c0_49, %c2_50, %c1_51, %c0_52] : memref<1x4x4x48xbf16, #tpu.memory_space<vmem>>, vector<1x2x2x48xbf16>
    %50 = vector.shape_cast %49 : vector<1x2x2x48xbf16> to vector<2x2x48xbf16>
    %51 = arith.extf %50 : vector<2x2x48xbf16> to vector<2x2x48xf32>
    %c7 = arith.constant 7 : index
    %c0_53 = arith.constant 0 : index
    %c0_54 = arith.constant 0 : index
    %c0_55 = arith.constant 0 : index
    %52 = vector.load %arg2[%c7, %c0_53, %c0_54, %c0_55] : memref<9x1x1x48xf32, #tpu.memory_space<vmem>>, vector<1x1x1x48xf32>
    %53 = vector.shape_cast %52 : vector<1x1x1x48xf32> to vector<1x1x48xf32>
    %54 = vector.broadcast %53 : vector<1x1x48xf32> to vector<2x2x48xf32>
    %55 = arith.mulf %51, %54 : vector<2x2x48xf32>
    %c0_56 = arith.constant 0 : index
    %c2_57 = arith.constant 2 : index
    %c2_58 = arith.constant 2 : index
    %c0_59 = arith.constant 0 : index
    %56 = vector.load %arg1[%c0_56, %c2_57, %c2_58, %c0_59] : memref<1x4x4x48xbf16, #tpu.memory_space<vmem>>, vector<1x2x2x48xbf16>
    %57 = vector.shape_cast %56 : vector<1x2x2x48xbf16> to vector<2x2x48xbf16>
    %58 = arith.extf %57 : vector<2x2x48xbf16> to vector<2x2x48xf32>
    %c8 = arith.constant 8 : index
    %c0_60 = arith.constant 0 : index
    %c0_61 = arith.constant 0 : index
    %c0_62 = arith.constant 0 : index
    %59 = vector.load %arg2[%c8, %c0_60, %c0_61, %c0_62] : memref<9x1x1x48xf32, #tpu.memory_space<vmem>>, vector<1x1x1x48xf32>
    %60 = vector.shape_cast %59 : vector<1x1x1x48xf32> to vector<1x1x48xf32>
    %61 = vector.broadcast %60 : vector<1x1x48xf32> to vector<2x2x48xf32>
    %62 = arith.mulf %58, %61 : vector<2x2x48xf32>
    %63 = arith.addf %6, %13 : vector<2x2x48xf32>
    %64 = arith.addf %20, %27 : vector<2x2x48xf32>
    %65 = arith.addf %63, %64 : vector<2x2x48xf32>
    %66 = arith.addf %34, %41 : vector<2x2x48xf32>
    %67 = arith.addf %48, %55 : vector<2x2x48xf32>
    %68 = arith.addf %66, %67 : vector<2x2x48xf32>
    %69 = arith.addf %65, %68 : vector<2x2x48xf32>
    %70 = arith.addf %69, %62 : vector<2x2x48xf32>
    %c0_63 = arith.constant 0 : index
    %c0_64 = arith.constant 0 : index
    %c0_65 = arith.constant 0 : index
    %71 = vector.load %arg3[%c0_63, %c0_64, %c0_65] : memref<1x1x48xf32, #tpu.memory_space<vmem>>, vector<1x1x48xf32>
    %72 = vector.broadcast %71 : vector<1x1x48xf32> to vector<2x2x48xf32>
    %73 = arith.addf %70, %72 : vector<2x2x48xf32>
    %74 = arith.truncf %73 : vector<2x2x48xf32> to vector<2x2x48xbf16>
    %c0_66 = arith.constant 0 : index
    %c0_67 = arith.constant 0 : index
    %c0_68 = arith.constant 0 : index
    %c0_69 = arith.constant 0 : index
    %75 = vector.load %arg4[%c0_66, %c0_67, %c0_68, %c0_69] : memref<1x2x2x48xbf16, #tpu.memory_space<vmem>>, vector<1x2x2x48xbf16>
    %76 = vector.shape_cast %75 : vector<1x2x2x48xbf16> to vector<2x2x48xbf16>
    %77 = vector.shape_cast %74 : vector<2x2x48xbf16> to vector<1x2x2x48xbf16>
    tpu.vector_store %arg4[%c0_66, %c0_67, %c0_68, %c0_69], %77 {strides = array<i32>} : memref<1x2x2x48xbf16, #tpu.memory_space<vmem>>, vector<1x2x2x48xbf16>,
    return
  }
  func.func @transform_0(%arg0: i32) -> (i32, i32, i32, i32) {
    %c0_i32 = arith.constant 0 : i32
    %c0_i32_0 = arith.constant 0 : i32
    %c0_i32_1 = arith.constant 0 : i32
    %c0_i32_2 = arith.constant 0 : i32
    return %arg0, %c0_i32, %c0_i32_0, %c0_i32_1 : i32, i32, i32, i32
  }
  func.func @transform_1(%arg0: i32) -> (i32, i32, i32, i32) {
    %c0_i32 = arith.constant 0 : i32
    %c0_i32_0 = arith.constant 0 : i32
    %c0_i32_1 = arith.constant 0 : i32
    %c0_i32_2 = arith.constant 0 : i32
    %c0_i32_3 = arith.constant 0 : i32
    return %c0_i32, %c0_i32_0, %c0_i32_1, %c0_i32_2 : i32, i32, i32, i32
  }
  func.func @transform_2(%arg0: i32) -> (i32, i32, i32) {
    %c0_i32 = arith.constant 0 : i32
    %c0_i32_0 = arith.constant 0 : i32
    %c0_i32_1 = arith.constant 0 : i32
    %c0_i32_2 = arith.constant 0 : i32
    return %c0_i32, %c0_i32_0, %c0_i32_1 : i32, i32, i32
  }
  func.func @transform_3(%arg0: i32) -> (i32, i32, i32, i32) {
    %c0_i32 = arith.constant 0 : i32
    %c0_i32_0 = arith.constant 0 : i32
    %c0_i32_1 = arith.constant 0 : i32
    %c0_i32_2 = arith.constant 0 : i32
    return %arg0, %c0_i32, %c0_i32_0, %c0_i32_1 : i32, i32, i32, i32
  }
}

module attributes {stable_mosaic.version = 11 : i64} {
  func.func @_mm_bias_kernel(%arg0: i32, %arg1: memref<8x96xbf16, #tpu.memory_space<vmem>>, %arg2: memref<96x96xbf16, #tpu.memory_space<vmem>>, %arg3: memref<1x96xf32, #tpu.memory_space<vmem>>, %arg4: memref<8x96xbf16, #tpu.memory_space<vmem>>) attributes {dimension_semantics = [#tpu.dimension_semantics<parallel>], iteration_bounds = array<i64: 1>, scalar_prefetch = 0 : i64, scratch_operands = 0 : i64, tpu.core_type = #tpu.core_type<tc>, window_params = [{transform_indices = @transform_0, window_bounds = array<i64: 8, 96>}, {pipeline_mode = #tpu.pipeline_mode<synchronous>, transform_indices = @transform_1, window_bounds = array<i64: 96, 96>}, {pipeline_mode = #tpu.pipeline_mode<synchronous>, transform_indices = @transform_2, window_bounds = array<i64: 1, 96>}, {transform_indices = @transform_3, window_bounds = array<i64: 8, 96>}]} {
    %c0 = arith.constant 0 : index
    %c0_0 = arith.constant 0 : index
    %0 = vector.load %arg1[%c0, %c0_0] : memref<8x96xbf16, #tpu.memory_space<vmem>>, vector<8x96xbf16>
    %c0_1 = arith.constant 0 : index
    %c0_2 = arith.constant 0 : index
    %1 = vector.load %arg2[%c0_1, %c0_2] : memref<96x96xbf16, #tpu.memory_space<vmem>>, vector<96x96xbf16>
    %cst = arith.constant dense<0.000000e+00> : vector<8x96xf32>
    %2 = tpu.matmul %0, %1, %cst {dimension_numbers = #tpu.dot_dimension_numbers<[1], [0], [0], [1], [0, 0, 1, 1], [], []>} : vector<8x96xbf16>, vector<96x96xbf16>, vector<8x96xf32> -> vector<8x96xf32>
    %c0_3 = arith.constant 0 : index
    %c0_4 = arith.constant 0 : index
    %3 = vector.load %arg3[%c0_3, %c0_4] : memref<1x96xf32, #tpu.memory_space<vmem>>, vector<1x96xf32>
    %4 = vector.broadcast %3 : vector<1x96xf32> to vector<8x96xf32>
    %5 = arith.addf %2, %4 : vector<8x96xf32>
    %cst_5 = arith.constant 0.000000e+00 : f32
    %6 = vector.broadcast %cst_5 : f32 to vector<8x96xf32>
    %7 = arith.maximumf %5, %6 : vector<8x96xf32>
    %8 = arith.truncf %7 : vector<8x96xf32> to vector<8x96xbf16>
    %c0_6 = arith.constant 0 : index
    %c0_7 = arith.constant 0 : index
    %9 = vector.load %arg4[%c0_6, %c0_7] : memref<8x96xbf16, #tpu.memory_space<vmem>>, vector<8x96xbf16>
    tpu.vector_store %arg4[%c0_6, %c0_7], %8 {strides = array<i32>} : memref<8x96xbf16, #tpu.memory_space<vmem>>, vector<8x96xbf16>,
    return
  }
  func.func @transform_0(%arg0: i32) -> (i32, i32) {
    %c0_i32 = arith.constant 0 : i32
    %c0_i32_0 = arith.constant 0 : i32
    return %arg0, %c0_i32 : i32, i32
  }
  func.func @transform_1(%arg0: i32) -> (i32, i32) {
    %c0_i32 = arith.constant 0 : i32
    %c0_i32_0 = arith.constant 0 : i32
    %c0_i32_1 = arith.constant 0 : i32
    return %c0_i32, %c0_i32_0 : i32, i32
  }
  func.func @transform_2(%arg0: i32) -> (i32, i32) {
    %c0_i32 = arith.constant 0 : i32
    %c0_i32_0 = arith.constant 0 : i32
    %c0_i32_1 = arith.constant 0 : i32
    return %c0_i32, %c0_i32_0 : i32, i32
  }
  func.func @transform_3(%arg0: i32) -> (i32, i32) {
    %c0_i32 = arith.constant 0 : i32
    %c0_i32_0 = arith.constant 0 : i32
    return %arg0, %c0_i32 : i32, i32
  }
}

module attributes {stable_mosaic.version = 11 : i64} {
  func.func @_dw_s2_kernel(%arg0: i32, %arg1: memref<1x4x2x2x96xbf16, #tpu.memory_space<vmem>>, %arg2: memref<9x1x1x96xf32, #tpu.memory_space<vmem>>, %arg3: memref<1x1x96xf32, #tpu.memory_space<vmem>>, %arg4: memref<1x1x1x96xbf16, #tpu.memory_space<vmem>>) attributes {dimension_semantics = [#tpu.dimension_semantics<parallel>], iteration_bounds = array<i64: 2>, scalar_prefetch = 0 : i64, scratch_operands = 0 : i64, tpu.core_type = #tpu.core_type<tc>, window_params = [{transform_indices = @transform_0, window_bounds = array<i64: 1, 4, 2, 2, 96>}, {pipeline_mode = #tpu.pipeline_mode<synchronous>, transform_indices = @transform_1, window_bounds = array<i64: 9, 1, 1, 96>}, {pipeline_mode = #tpu.pipeline_mode<synchronous>, transform_indices = @transform_2, window_bounds = array<i64: 1, 1, 96>}, {transform_indices = @transform_3, window_bounds = array<i64: 1, 1, 1, 96>}]} {
    %c0 = arith.constant 0 : index
    %c0_0 = arith.constant 0 : index
    %c0_1 = arith.constant 0 : index
    %c0_2 = arith.constant 0 : index
    %c0_3 = arith.constant 0 : index
    %0 = vector.load %arg1[%c0, %c0_0, %c0_1, %c0_2, %c0_3] : memref<1x4x2x2x96xbf16, #tpu.memory_space<vmem>>, vector<1x1x1x1x96xbf16>
    %1 = vector.shape_cast %0 : vector<1x1x1x1x96xbf16> to vector<1x1x96xbf16>
    %2 = arith.extf %1 : vector<1x1x96xbf16> to vector<1x1x96xf32>
    %c0_4 = arith.constant 0 : index
    %c0_5 = arith.constant 0 : index
    %c0_6 = arith.constant 0 : index
    %c0_7 = arith.constant 0 : index
    %3 = vector.load %arg2[%c0_4, %c0_5, %c0_6, %c0_7] : memref<9x1x1x96xf32, #tpu.memory_space<vmem>>, vector<1x1x1x96xf32>
    %4 = vector.shape_cast %3 : vector<1x1x1x96xf32> to vector<1x1x96xf32>
    %5 = arith.mulf %2, %4 : vector<1x1x96xf32>
    %c0_8 = arith.constant 0 : index
    %c1 = arith.constant 1 : index
    %c0_9 = arith.constant 0 : index
    %c0_10 = arith.constant 0 : index
    %c0_11 = arith.constant 0 : index
    %6 = vector.load %arg1[%c0_8, %c1, %c0_9, %c0_10, %c0_11] : memref<1x4x2x2x96xbf16, #tpu.memory_space<vmem>>, vector<1x1x1x1x96xbf16>
    %7 = vector.shape_cast %6 : vector<1x1x1x1x96xbf16> to vector<1x1x96xbf16>
    %8 = arith.extf %7 : vector<1x1x96xbf16> to vector<1x1x96xf32>
    %c1_12 = arith.constant 1 : index
    %c0_13 = arith.constant 0 : index
    %c0_14 = arith.constant 0 : index
    %c0_15 = arith.constant 0 : index
    %9 = vector.load %arg2[%c1_12, %c0_13, %c0_14, %c0_15] : memref<9x1x1x96xf32, #tpu.memory_space<vmem>>, vector<1x1x1x96xf32>
    %10 = vector.shape_cast %9 : vector<1x1x1x96xf32> to vector<1x1x96xf32>
    %11 = arith.mulf %8, %10 : vector<1x1x96xf32>
    %c0_16 = arith.constant 0 : index
    %c0_17 = arith.constant 0 : index
    %c0_18 = arith.constant 0 : index
    %c1_19 = arith.constant 1 : index
    %c0_20 = arith.constant 0 : index
    %12 = vector.load %arg1[%c0_16, %c0_17, %c0_18, %c1_19, %c0_20] : memref<1x4x2x2x96xbf16, #tpu.memory_space<vmem>>, vector<1x1x1x1x96xbf16>
    %13 = vector.shape_cast %12 : vector<1x1x1x1x96xbf16> to vector<1x1x96xbf16>
    %14 = arith.extf %13 : vector<1x1x96xbf16> to vector<1x1x96xf32>
    %c2 = arith.constant 2 : index
    %c0_21 = arith.constant 0 : index
    %c0_22 = arith.constant 0 : index
    %c0_23 = arith.constant 0 : index
    %15 = vector.load %arg2[%c2, %c0_21, %c0_22, %c0_23] : memref<9x1x1x96xf32, #tpu.memory_space<vmem>>, vector<1x1x1x96xf32>
    %16 = vector.shape_cast %15 : vector<1x1x1x96xf32> to vector<1x1x96xf32>
    %17 = arith.mulf %14, %16 : vector<1x1x96xf32>
    %c0_24 = arith.constant 0 : index
    %c2_25 = arith.constant 2 : index
    %c0_26 = arith.constant 0 : index
    %c0_27 = arith.constant 0 : index
    %c0_28 = arith.constant 0 : index
    %18 = vector.load %arg1[%c0_24, %c2_25, %c0_26, %c0_27, %c0_28] : memref<1x4x2x2x96xbf16, #tpu.memory_space<vmem>>, vector<1x1x1x1x96xbf16>
    %19 = vector.shape_cast %18 : vector<1x1x1x1x96xbf16> to vector<1x1x96xbf16>
    %20 = arith.extf %19 : vector<1x1x96xbf16> to vector<1x1x96xf32>
    %c3 = arith.constant 3 : index
    %c0_29 = arith.constant 0 : index
    %c0_30 = arith.constant 0 : index
    %c0_31 = arith.constant 0 : index
    %21 = vector.load %arg2[%c3, %c0_29, %c0_30, %c0_31] : memref<9x1x1x96xf32, #tpu.memory_space<vmem>>, vector<1x1x1x96xf32>
    %22 = vector.shape_cast %21 : vector<1x1x1x96xf32> to vector<1x1x96xf32>
    %23 = arith.mulf %20, %22 : vector<1x1x96xf32>
    %c0_32 = arith.constant 0 : index
    %c3_33 = arith.constant 3 : index
    %c0_34 = arith.constant 0 : index
    %c0_35 = arith.constant 0 : index
    %c0_36 = arith.constant 0 : index
    %24 = vector.load %arg1[%c0_32, %c3_33, %c0_34, %c0_35, %c0_36] : memref<1x4x2x2x96xbf16, #tpu.memory_space<vmem>>, vector<1x1x1x1x96xbf16>
    %25 = vector.shape_cast %24 : vector<1x1x1x1x96xbf16> to vector<1x1x96xbf16>
    %26 = arith.extf %25 : vector<1x1x96xbf16> to vector<1x1x96xf32>
    %c4 = arith.constant 4 : index
    %c0_37 = arith.constant 0 : index
    %c0_38 = arith.constant 0 : index
    %c0_39 = arith.constant 0 : index
    %27 = vector.load %arg2[%c4, %c0_37, %c0_38, %c0_39] : memref<9x1x1x96xf32, #tpu.memory_space<vmem>>, vector<1x1x1x96xf32>
    %28 = vector.shape_cast %27 : vector<1x1x1x96xf32> to vector<1x1x96xf32>
    %29 = arith.mulf %26, %28 : vector<1x1x96xf32>
    %c0_40 = arith.constant 0 : index
    %c2_41 = arith.constant 2 : index
    %c0_42 = arith.constant 0 : index
    %c1_43 = arith.constant 1 : index
    %c0_44 = arith.constant 0 : index
    %30 = vector.load %arg1[%c0_40, %c2_41, %c0_42, %c1_43, %c0_44] : memref<1x4x2x2x96xbf16, #tpu.memory_space<vmem>>, vector<1x1x1x1x96xbf16>
    %31 = vector.shape_cast %30 : vector<1x1x1x1x96xbf16> to vector<1x1x96xbf16>
    %32 = arith.extf %31 : vector<1x1x96xbf16> to vector<1x1x96xf32>
    %c5 = arith.constant 5 : index
    %c0_45 = arith.constant 0 : index
    %c0_46 = arith.constant 0 : index
    %c0_47 = arith.constant 0 : index
    %33 = vector.load %arg2[%c5, %c0_45, %c0_46, %c0_47] : memref<9x1x1x96xf32, #tpu.memory_space<vmem>>, vector<1x1x1x96xf32>
    %34 = vector.shape_cast %33 : vector<1x1x1x96xf32> to vector<1x1x96xf32>
    %35 = arith.mulf %32, %34 : vector<1x1x96xf32>
    %c0_48 = arith.constant 0 : index
    %c0_49 = arith.constant 0 : index
    %c1_50 = arith.constant 1 : index
    %c0_51 = arith.constant 0 : index
    %c0_52 = arith.constant 0 : index
    %36 = vector.load %arg1[%c0_48, %c0_49, %c1_50, %c0_51, %c0_52] : memref<1x4x2x2x96xbf16, #tpu.memory_space<vmem>>, vector<1x1x1x1x96xbf16>
    %37 = vector.shape_cast %36 : vector<1x1x1x1x96xbf16> to vector<1x1x96xbf16>
    %38 = arith.extf %37 : vector<1x1x96xbf16> to vector<1x1x96xf32>
    %c6 = arith.constant 6 : index
    %c0_53 = arith.constant 0 : index
    %c0_54 = arith.constant 0 : index
    %c0_55 = arith.constant 0 : index
    %39 = vector.load %arg2[%c6, %c0_53, %c0_54, %c0_55] : memref<9x1x1x96xf32, #tpu.memory_space<vmem>>, vector<1x1x1x96xf32>
    %40 = vector.shape_cast %39 : vector<1x1x1x96xf32> to vector<1x1x96xf32>
    %41 = arith.mulf %38, %40 : vector<1x1x96xf32>
    %c0_56 = arith.constant 0 : index
    %c1_57 = arith.constant 1 : index
    %c1_58 = arith.constant 1 : index
    %c0_59 = arith.constant 0 : index
    %c0_60 = arith.constant 0 : index
    %42 = vector.load %arg1[%c0_56, %c1_57, %c1_58, %c0_59, %c0_60] : memref<1x4x2x2x96xbf16, #tpu.memory_space<vmem>>, vector<1x1x1x1x96xbf16>
    %43 = vector.shape_cast %42 : vector<1x1x1x1x96xbf16> to vector<1x1x96xbf16>
    %44 = arith.extf %43 : vector<1x1x96xbf16> to vector<1x1x96xf32>
    %c7 = arith.constant 7 : index
    %c0_61 = arith.constant 0 : index
    %c0_62 = arith.constant 0 : index
    %c0_63 = arith.constant 0 : index
    %45 = vector.load %arg2[%c7, %c0_61, %c0_62, %c0_63] : memref<9x1x1x96xf32, #tpu.memory_space<vmem>>, vector<1x1x1x96xf32>
    %46 = vector.shape_cast %45 : vector<1x1x1x96xf32> to vector<1x1x96xf32>
    %47 = arith.mulf %44, %46 : vector<1x1x96xf32>
    %c0_64 = arith.constant 0 : index
    %c0_65 = arith.constant 0 : index
    %c1_66 = arith.constant 1 : index
    %c1_67 = arith.constant 1 : index
    %c0_68 = arith.constant 0 : index
    %48 = vector.load %arg1[%c0_64, %c0_65, %c1_66, %c1_67, %c0_68] : memref<1x4x2x2x96xbf16, #tpu.memory_space<vmem>>, vector<1x1x1x1x96xbf16>
    %49 = vector.shape_cast %48 : vector<1x1x1x1x96xbf16> to vector<1x1x96xbf16>
    %50 = arith.extf %49 : vector<1x1x96xbf16> to vector<1x1x96xf32>
    %c8 = arith.constant 8 : index
    %c0_69 = arith.constant 0 : index
    %c0_70 = arith.constant 0 : index
    %c0_71 = arith.constant 0 : index
    %51 = vector.load %arg2[%c8, %c0_69, %c0_70, %c0_71] : memref<9x1x1x96xf32, #tpu.memory_space<vmem>>, vector<1x1x1x96xf32>
    %52 = vector.shape_cast %51 : vector<1x1x1x96xf32> to vector<1x1x96xf32>
    %53 = arith.mulf %50, %52 : vector<1x1x96xf32>
    %54 = arith.addf %5, %11 : vector<1x1x96xf32>
    %55 = arith.addf %17, %23 : vector<1x1x96xf32>
    %56 = arith.addf %54, %55 : vector<1x1x96xf32>
    %57 = arith.addf %29, %35 : vector<1x1x96xf32>
    %58 = arith.addf %41, %47 : vector<1x1x96xf32>
    %59 = arith.addf %57, %58 : vector<1x1x96xf32>
    %60 = arith.addf %56, %59 : vector<1x1x96xf32>
    %61 = arith.addf %60, %53 : vector<1x1x96xf32>
    %c0_72 = arith.constant 0 : index
    %c0_73 = arith.constant 0 : index
    %c0_74 = arith.constant 0 : index
    %62 = vector.load %arg3[%c0_72, %c0_73, %c0_74] : memref<1x1x96xf32, #tpu.memory_space<vmem>>, vector<1x1x96xf32>
    %63 = arith.addf %61, %62 : vector<1x1x96xf32>
    %64 = arith.truncf %63 : vector<1x1x96xf32> to vector<1x1x96xbf16>
    %c0_75 = arith.constant 0 : index
    %c0_76 = arith.constant 0 : index
    %c0_77 = arith.constant 0 : index
    %c0_78 = arith.constant 0 : index
    %65 = vector.load %arg4[%c0_75, %c0_76, %c0_77, %c0_78] : memref<1x1x1x96xbf16, #tpu.memory_space<vmem>>, vector<1x1x1x96xbf16>
    %66 = vector.shape_cast %65 : vector<1x1x1x96xbf16> to vector<1x1x96xbf16>
    %67 = vector.shape_cast %64 : vector<1x1x96xbf16> to vector<1x1x1x96xbf16>
    tpu.vector_store %arg4[%c0_75, %c0_76, %c0_77, %c0_78], %67 {strides = array<i32>} : memref<1x1x1x96xbf16, #tpu.memory_space<vmem>>, vector<1x1x1x96xbf16>,
    return
  }
  func.func @transform_0(%arg0: i32) -> (i32, i32, i32, i32, i32) {
    %c0_i32 = arith.constant 0 : i32
    %c0_i32_0 = arith.constant 0 : i32
    %c0_i32_1 = arith.constant 0 : i32
    %c0_i32_2 = arith.constant 0 : i32
    %c0_i32_3 = arith.constant 0 : i32
    return %arg0, %c0_i32, %c0_i32_0, %c0_i32_1, %c0_i32_2 : i32, i32, i32, i32, i32
  }
  func.func @transform_1(%arg0: i32) -> (i32, i32, i32, i32) {
    %c0_i32 = arith.constant 0 : i32
    %c0_i32_0 = arith.constant 0 : i32
    %c0_i32_1 = arith.constant 0 : i32
    %c0_i32_2 = arith.constant 0 : i32
    %c0_i32_3 = arith.constant 0 : i32
    return %c0_i32, %c0_i32_0, %c0_i32_1, %c0_i32_2 : i32, i32, i32, i32
  }
  func.func @transform_2(%arg0: i32) -> (i32, i32, i32) {
    %c0_i32 = arith.constant 0 : i32
    %c0_i32_0 = arith.constant 0 : i32
    %c0_i32_1 = arith.constant 0 : i32
    %c0_i32_2 = arith.constant 0 : i32
    return %c0_i32, %c0_i32_0, %c0_i32_1 : i32, i32, i32
  }
  func.func @transform_3(%arg0: i32) -> (i32, i32, i32, i32) {
    %c0_i32 = arith.constant 0 : i32
    %c0_i32_0 = arith.constant 0 : i32
    %c0_i32_1 = arith.constant 0 : i32
    %c0_i32_2 = arith.constant 0 : i32
    return %arg0, %c0_i32, %c0_i32_0, %c0_i32_1 : i32, i32, i32, i32
  }
}

module attributes {stable_mosaic.version = 11 : i64} {
  func.func @_mm_bias_kernel(%arg0: i32, %arg1: memref<2x96xbf16, #tpu.memory_space<vmem>>, %arg2: memref<96x96xbf16, #tpu.memory_space<vmem>>, %arg3: memref<1x96xf32, #tpu.memory_space<vmem>>, %arg4: memref<2x96xbf16, #tpu.memory_space<vmem>>) attributes {dimension_semantics = [#tpu.dimension_semantics<parallel>], iteration_bounds = array<i64: 1>, scalar_prefetch = 0 : i64, scratch_operands = 0 : i64, tpu.core_type = #tpu.core_type<tc>, window_params = [{transform_indices = @transform_0, window_bounds = array<i64: 2, 96>}, {pipeline_mode = #tpu.pipeline_mode<synchronous>, transform_indices = @transform_1, window_bounds = array<i64: 96, 96>}, {pipeline_mode = #tpu.pipeline_mode<synchronous>, transform_indices = @transform_2, window_bounds = array<i64: 1, 96>}, {transform_indices = @transform_3, window_bounds = array<i64: 2, 96>}]} {
    %c0 = arith.constant 0 : index
    %c0_0 = arith.constant 0 : index
    %0 = vector.load %arg1[%c0, %c0_0] : memref<2x96xbf16, #tpu.memory_space<vmem>>, vector<2x96xbf16>
    %c0_1 = arith.constant 0 : index
    %c0_2 = arith.constant 0 : index
    %1 = vector.load %arg2[%c0_1, %c0_2] : memref<96x96xbf16, #tpu.memory_space<vmem>>, vector<96x96xbf16>
    %cst = arith.constant dense<0.000000e+00> : vector<2x96xf32>
    %2 = tpu.matmul %0, %1, %cst {dimension_numbers = #tpu.dot_dimension_numbers<[1], [0], [0], [1], [0, 0, 1, 1], [], []>} : vector<2x96xbf16>, vector<96x96xbf16>, vector<2x96xf32> -> vector<2x96xf32>
    %c0_3 = arith.constant 0 : index
    %c0_4 = arith.constant 0 : index
    %3 = vector.load %arg3[%c0_3, %c0_4] : memref<1x96xf32, #tpu.memory_space<vmem>>, vector<1x96xf32>
    %4 = vector.broadcast %3 : vector<1x96xf32> to vector<2x96xf32>
    %5 = arith.addf %2, %4 : vector<2x96xf32>
    %cst_5 = arith.constant 0.000000e+00 : f32
    %6 = vector.broadcast %cst_5 : f32 to vector<2x96xf32>
    %7 = arith.maximumf %5, %6 : vector<2x96xf32>
    %8 = arith.truncf %7 : vector<2x96xf32> to vector<2x96xbf16>
    %c0_6 = arith.constant 0 : index
    %c0_7 = arith.constant 0 : index
    %9 = vector.load %arg4[%c0_6, %c0_7] : memref<2x96xbf16, #tpu.memory_space<vmem>>, vector<2x96xbf16>
    tpu.vector_store %arg4[%c0_6, %c0_7], %8 {strides = array<i32>} : memref<2x96xbf16, #tpu.memory_space<vmem>>, vector<2x96xbf16>,
    return
  }
  func.func @transform_0(%arg0: i32) -> (i32, i32) {
    %c0_i32 = arith.constant 0 : i32
    %c0_i32_0 = arith.constant 0 : i32
    return %arg0, %c0_i32 : i32, i32
  }
  func.func @transform_1(%arg0: i32) -> (i32, i32) {
    %c0_i32 = arith.constant 0 : i32
    %c0_i32_0 = arith.constant 0 : i32
    %c0_i32_1 = arith.constant 0 : i32
    return %c0_i32, %c0_i32_0 : i32, i32
  }
  func.func @transform_2(%arg0: i32) -> (i32, i32) {
    %c0_i32 = arith.constant 0 : i32
    %c0_i32_0 = arith.constant 0 : i32
    %c0_i32_1 = arith.constant 0 : i32
    return %c0_i32, %c0_i32_0 : i32, i32
  }
  func.func @transform_3(%arg0: i32) -> (i32, i32) {
    %c0_i32 = arith.constant 0 : i32
    %c0_i32_0 = arith.constant 0 : i32
    return %arg0, %c0_i32 : i32, i32
  }
}

module attributes {stable_mosaic.version = 11 : i64} {
  func.func @_dw_s1_kernel(%arg0: i32, %arg1: memref<1x3x3x96xbf16, #tpu.memory_space<vmem>>, %arg2: memref<9x1x1x96xf32, #tpu.memory_space<vmem>>, %arg3: memref<1x1x96xf32, #tpu.memory_space<vmem>>, %arg4: memref<1x1x1x96xbf16, #tpu.memory_space<vmem>>) attributes {dimension_semantics = [#tpu.dimension_semantics<parallel>], iteration_bounds = array<i64: 2>, scalar_prefetch = 0 : i64, scratch_operands = 0 : i64, tpu.core_type = #tpu.core_type<tc>, window_params = [{transform_indices = @transform_0, window_bounds = array<i64: 1, 3, 3, 96>}, {pipeline_mode = #tpu.pipeline_mode<synchronous>, transform_indices = @transform_1, window_bounds = array<i64: 9, 1, 1, 96>}, {pipeline_mode = #tpu.pipeline_mode<synchronous>, transform_indices = @transform_2, window_bounds = array<i64: 1, 1, 96>}, {transform_indices = @transform_3, window_bounds = array<i64: 1, 1, 1, 96>}]} {
    %c0 = arith.constant 0 : index
    %c0_0 = arith.constant 0 : index
    %c0_1 = arith.constant 0 : index
    %c0_2 = arith.constant 0 : index
    %0 = vector.load %arg1[%c0, %c0_0, %c0_1, %c0_2] : memref<1x3x3x96xbf16, #tpu.memory_space<vmem>>, vector<1x1x1x96xbf16>
    %1 = vector.shape_cast %0 : vector<1x1x1x96xbf16> to vector<1x1x96xbf16>
    %2 = arith.extf %1 : vector<1x1x96xbf16> to vector<1x1x96xf32>
    %c0_3 = arith.constant 0 : index
    %c0_4 = arith.constant 0 : index
    %c0_5 = arith.constant 0 : index
    %c0_6 = arith.constant 0 : index
    %3 = vector.load %arg2[%c0_3, %c0_4, %c0_5, %c0_6] : memref<9x1x1x96xf32, #tpu.memory_space<vmem>>, vector<1x1x1x96xf32>
    %4 = vector.shape_cast %3 : vector<1x1x1x96xf32> to vector<1x1x96xf32>
    %5 = arith.mulf %2, %4 : vector<1x1x96xf32>
    %c0_7 = arith.constant 0 : index
    %c0_8 = arith.constant 0 : index
    %c1 = arith.constant 1 : index
    %c0_9 = arith.constant 0 : index
    %6 = vector.load %arg1[%c0_7, %c0_8, %c1, %c0_9] : memref<1x3x3x96xbf16, #tpu.memory_space<vmem>>, vector<1x1x1x96xbf16>
    %7 = vector.shape_cast %6 : vector<1x1x1x96xbf16> to vector<1x1x96xbf16>
    %8 = arith.extf %7 : vector<1x1x96xbf16> to vector<1x1x96xf32>
    %c1_10 = arith.constant 1 : index
    %c0_11 = arith.constant 0 : index
    %c0_12 = arith.constant 0 : index
    %c0_13 = arith.constant 0 : index
    %9 = vector.load %arg2[%c1_10, %c0_11, %c0_12, %c0_13] : memref<9x1x1x96xf32, #tpu.memory_space<vmem>>, vector<1x1x1x96xf32>
    %10 = vector.shape_cast %9 : vector<1x1x1x96xf32> to vector<1x1x96xf32>
    %11 = arith.mulf %8, %10 : vector<1x1x96xf32>
    %c0_14 = arith.constant 0 : index
    %c0_15 = arith.constant 0 : index
    %c2 = arith.constant 2 : index
    %c0_16 = arith.constant 0 : index
    %12 = vector.load %arg1[%c0_14, %c0_15, %c2, %c0_16] : memref<1x3x3x96xbf16, #tpu.memory_space<vmem>>, vector<1x1x1x96xbf16>
    %13 = vector.shape_cast %12 : vector<1x1x1x96xbf16> to vector<1x1x96xbf16>
    %14 = arith.extf %13 : vector<1x1x96xbf16> to vector<1x1x96xf32>
    %c2_17 = arith.constant 2 : index
    %c0_18 = arith.constant 0 : index
    %c0_19 = arith.constant 0 : index
    %c0_20 = arith.constant 0 : index
    %15 = vector.load %arg2[%c2_17, %c0_18, %c0_19, %c0_20] : memref<9x1x1x96xf32, #tpu.memory_space<vmem>>, vector<1x1x1x96xf32>
    %16 = vector.shape_cast %15 : vector<1x1x1x96xf32> to vector<1x1x96xf32>
    %17 = arith.mulf %14, %16 : vector<1x1x96xf32>
    %c0_21 = arith.constant 0 : index
    %c1_22 = arith.constant 1 : index
    %c0_23 = arith.constant 0 : index
    %c0_24 = arith.constant 0 : index
    %18 = vector.load %arg1[%c0_21, %c1_22, %c0_23, %c0_24] : memref<1x3x3x96xbf16, #tpu.memory_space<vmem>>, vector<1x1x1x96xbf16>
    %19 = vector.shape_cast %18 : vector<1x1x1x96xbf16> to vector<1x1x96xbf16>
    %20 = arith.extf %19 : vector<1x1x96xbf16> to vector<1x1x96xf32>
    %c3 = arith.constant 3 : index
    %c0_25 = arith.constant 0 : index
    %c0_26 = arith.constant 0 : index
    %c0_27 = arith.constant 0 : index
    %21 = vector.load %arg2[%c3, %c0_25, %c0_26, %c0_27] : memref<9x1x1x96xf32, #tpu.memory_space<vmem>>, vector<1x1x1x96xf32>
    %22 = vector.shape_cast %21 : vector<1x1x1x96xf32> to vector<1x1x96xf32>
    %23 = arith.mulf %20, %22 : vector<1x1x96xf32>
    %c0_28 = arith.constant 0 : index
    %c1_29 = arith.constant 1 : index
    %c1_30 = arith.constant 1 : index
    %c0_31 = arith.constant 0 : index
    %24 = vector.load %arg1[%c0_28, %c1_29, %c1_30, %c0_31] : memref<1x3x3x96xbf16, #tpu.memory_space<vmem>>, vector<1x1x1x96xbf16>
    %25 = vector.shape_cast %24 : vector<1x1x1x96xbf16> to vector<1x1x96xbf16>
    %26 = arith.extf %25 : vector<1x1x96xbf16> to vector<1x1x96xf32>
    %c4 = arith.constant 4 : index
    %c0_32 = arith.constant 0 : index
    %c0_33 = arith.constant 0 : index
    %c0_34 = arith.constant 0 : index
    %27 = vector.load %arg2[%c4, %c0_32, %c0_33, %c0_34] : memref<9x1x1x96xf32, #tpu.memory_space<vmem>>, vector<1x1x1x96xf32>
    %28 = vector.shape_cast %27 : vector<1x1x1x96xf32> to vector<1x1x96xf32>
    %29 = arith.mulf %26, %28 : vector<1x1x96xf32>
    %c0_35 = arith.constant 0 : index
    %c1_36 = arith.constant 1 : index
    %c2_37 = arith.constant 2 : index
    %c0_38 = arith.constant 0 : index
    %30 = vector.load %arg1[%c0_35, %c1_36, %c2_37, %c0_38] : memref<1x3x3x96xbf16, #tpu.memory_space<vmem>>, vector<1x1x1x96xbf16>
    %31 = vector.shape_cast %30 : vector<1x1x1x96xbf16> to vector<1x1x96xbf16>
    %32 = arith.extf %31 : vector<1x1x96xbf16> to vector<1x1x96xf32>
    %c5 = arith.constant 5 : index
    %c0_39 = arith.constant 0 : index
    %c0_40 = arith.constant 0 : index
    %c0_41 = arith.constant 0 : index
    %33 = vector.load %arg2[%c5, %c0_39, %c0_40, %c0_41] : memref<9x1x1x96xf32, #tpu.memory_space<vmem>>, vector<1x1x1x96xf32>
    %34 = vector.shape_cast %33 : vector<1x1x1x96xf32> to vector<1x1x96xf32>
    %35 = arith.mulf %32, %34 : vector<1x1x96xf32>
    %c0_42 = arith.constant 0 : index
    %c2_43 = arith.constant 2 : index
    %c0_44 = arith.constant 0 : index
    %c0_45 = arith.constant 0 : index
    %36 = vector.load %arg1[%c0_42, %c2_43, %c0_44, %c0_45] : memref<1x3x3x96xbf16, #tpu.memory_space<vmem>>, vector<1x1x1x96xbf16>
    %37 = vector.shape_cast %36 : vector<1x1x1x96xbf16> to vector<1x1x96xbf16>
    %38 = arith.extf %37 : vector<1x1x96xbf16> to vector<1x1x96xf32>
    %c6 = arith.constant 6 : index
    %c0_46 = arith.constant 0 : index
    %c0_47 = arith.constant 0 : index
    %c0_48 = arith.constant 0 : index
    %39 = vector.load %arg2[%c6, %c0_46, %c0_47, %c0_48] : memref<9x1x1x96xf32, #tpu.memory_space<vmem>>, vector<1x1x1x96xf32>
    %40 = vector.shape_cast %39 : vector<1x1x1x96xf32> to vector<1x1x96xf32>
    %41 = arith.mulf %38, %40 : vector<1x1x96xf32>
    %c0_49 = arith.constant 0 : index
    %c2_50 = arith.constant 2 : index
    %c1_51 = arith.constant 1 : index
    %c0_52 = arith.constant 0 : index
    %42 = vector.load %arg1[%c0_49, %c2_50, %c1_51, %c0_52] : memref<1x3x3x96xbf16, #tpu.memory_space<vmem>>, vector<1x1x1x96xbf16>
    %43 = vector.shape_cast %42 : vector<1x1x1x96xbf16> to vector<1x1x96xbf16>
    %44 = arith.extf %43 : vector<1x1x96xbf16> to vector<1x1x96xf32>
    %c7 = arith.constant 7 : index
    %c0_53 = arith.constant 0 : index
    %c0_54 = arith.constant 0 : index
    %c0_55 = arith.constant 0 : index
    %45 = vector.load %arg2[%c7, %c0_53, %c0_54, %c0_55] : memref<9x1x1x96xf32, #tpu.memory_space<vmem>>, vector<1x1x1x96xf32>
    %46 = vector.shape_cast %45 : vector<1x1x1x96xf32> to vector<1x1x96xf32>
    %47 = arith.mulf %44, %46 : vector<1x1x96xf32>
    %c0_56 = arith.constant 0 : index
    %c2_57 = arith.constant 2 : index
    %c2_58 = arith.constant 2 : index
    %c0_59 = arith.constant 0 : index
    %48 = vector.load %arg1[%c0_56, %c2_57, %c2_58, %c0_59] : memref<1x3x3x96xbf16, #tpu.memory_space<vmem>>, vector<1x1x1x96xbf16>
    %49 = vector.shape_cast %48 : vector<1x1x1x96xbf16> to vector<1x1x96xbf16>
    %50 = arith.extf %49 : vector<1x1x96xbf16> to vector<1x1x96xf32>
    %c8 = arith.constant 8 : index
    %c0_60 = arith.constant 0 : index
    %c0_61 = arith.constant 0 : index
    %c0_62 = arith.constant 0 : index
    %51 = vector.load %arg2[%c8, %c0_60, %c0_61, %c0_62] : memref<9x1x1x96xf32, #tpu.memory_space<vmem>>, vector<1x1x1x96xf32>
    %52 = vector.shape_cast %51 : vector<1x1x1x96xf32> to vector<1x1x96xf32>
    %53 = arith.mulf %50, %52 : vector<1x1x96xf32>
    %54 = arith.addf %5, %11 : vector<1x1x96xf32>
    %55 = arith.addf %17, %23 : vector<1x1x96xf32>
    %56 = arith.addf %54, %55 : vector<1x1x96xf32>
    %57 = arith.addf %29, %35 : vector<1x1x96xf32>
    %58 = arith.addf %41, %47 : vector<1x1x96xf32>
    %59 = arith.addf %57, %58 : vector<1x1x96xf32>
    %60 = arith.addf %56, %59 : vector<1x1x96xf32>
    %61 = arith.addf %60, %53 : vector<1x1x96xf32>
    %c0_63 = arith.constant 0 : index
    %c0_64 = arith.constant 0 : index
    %c0_65 = arith.constant 0 : index
    %62 = vector.load %arg3[%c0_63, %c0_64, %c0_65] : memref<1x1x96xf32, #tpu.memory_space<vmem>>, vector<1x1x96xf32>
    %63 = arith.addf %61, %62 : vector<1x1x96xf32>
    %64 = arith.truncf %63 : vector<1x1x96xf32> to vector<1x1x96xbf16>
    %c0_66 = arith.constant 0 : index
    %c0_67 = arith.constant 0 : index
    %c0_68 = arith.constant 0 : index
    %c0_69 = arith.constant 0 : index
    %65 = vector.load %arg4[%c0_66, %c0_67, %c0_68, %c0_69] : memref<1x1x1x96xbf16, #tpu.memory_space<vmem>>, vector<1x1x1x96xbf16>
    %66 = vector.shape_cast %65 : vector<1x1x1x96xbf16> to vector<1x1x96xbf16>
    %67 = vector.shape_cast %64 : vector<1x1x96xbf16> to vector<1x1x1x96xbf16>
    tpu.vector_store %arg4[%c0_66, %c0_67, %c0_68, %c0_69], %67 {strides = array<i32>} : memref<1x1x1x96xbf16, #tpu.memory_space<vmem>>, vector<1x1x1x96xbf16>,
    return
  }
  func.func @transform_0(%arg0: i32) -> (i32, i32, i32, i32) {
    %c0_i32 = arith.constant 0 : i32
    %c0_i32_0 = arith.constant 0 : i32
    %c0_i32_1 = arith.constant 0 : i32
    %c0_i32_2 = arith.constant 0 : i32
    return %arg0, %c0_i32, %c0_i32_0, %c0_i32_1 : i32, i32, i32, i32
  }
  func.func @transform_1(%arg0: i32) -> (i32, i32, i32, i32) {
    %c0_i32 = arith.constant 0 : i32
    %c0_i32_0 = arith.constant 0 : i32
    %c0_i32_1 = arith.constant 0 : i32
    %c0_i32_2 = arith.constant 0 : i32
    %c0_i32_3 = arith.constant 0 : i32
    return %c0_i32, %c0_i32_0, %c0_i32_1, %c0_i32_2 : i32, i32, i32, i32
  }
  func.func @transform_2(%arg0: i32) -> (i32, i32, i32) {
    %c0_i32 = arith.constant 0 : i32
    %c0_i32_0 = arith.constant 0 : i32
    %c0_i32_1 = arith.constant 0 : i32
    %c0_i32_2 = arith.constant 0 : i32
    return %c0_i32, %c0_i32_0, %c0_i32_1 : i32, i32, i32
  }
  func.func @transform_3(%arg0: i32) -> (i32, i32, i32, i32) {
    %c0_i32 = arith.constant 0 : i32
    %c0_i32_0 = arith.constant 0 : i32
    %c0_i32_1 = arith.constant 0 : i32
    %c0_i32_2 = arith.constant 0 : i32
    return %arg0, %c0_i32, %c0_i32_0, %c0_i32_1 : i32, i32, i32, i32
  }
}

module attributes {stable_mosaic.version = 11 : i64} {
  func.func @_mm_bias_kernel(%arg0: i32, %arg1: memref<2x192xbf16, #tpu.memory_space<vmem>>, %arg2: memref<192x1024xbf16, #tpu.memory_space<vmem>>, %arg3: memref<1x1024xf32, #tpu.memory_space<vmem>>, %arg4: memref<2x1024xbf16, #tpu.memory_space<vmem>>) attributes {dimension_semantics = [#tpu.dimension_semantics<parallel>], iteration_bounds = array<i64: 1>, scalar_prefetch = 0 : i64, scratch_operands = 0 : i64, tpu.core_type = #tpu.core_type<tc>, window_params = [{transform_indices = @transform_0, window_bounds = array<i64: 2, 192>}, {pipeline_mode = #tpu.pipeline_mode<synchronous>, transform_indices = @transform_1, window_bounds = array<i64: 192, 1024>}, {pipeline_mode = #tpu.pipeline_mode<synchronous>, transform_indices = @transform_2, window_bounds = array<i64: 1, 1024>}, {transform_indices = @transform_3, window_bounds = array<i64: 2, 1024>}]} {
    %c0 = arith.constant 0 : index
    %c0_0 = arith.constant 0 : index
    %0 = vector.load %arg1[%c0, %c0_0] : memref<2x192xbf16, #tpu.memory_space<vmem>>, vector<2x192xbf16>
    %c0_1 = arith.constant 0 : index
    %c0_2 = arith.constant 0 : index
    %1 = vector.load %arg2[%c0_1, %c0_2] : memref<192x1024xbf16, #tpu.memory_space<vmem>>, vector<192x1024xbf16>
    %cst = arith.constant dense<0.000000e+00> : vector<2x1024xf32>
    %2 = tpu.matmul %0, %1, %cst {dimension_numbers = #tpu.dot_dimension_numbers<[1], [0], [0], [1], [0, 0, 1, 1], [], []>} : vector<2x192xbf16>, vector<192x1024xbf16>, vector<2x1024xf32> -> vector<2x1024xf32>
    %c0_3 = arith.constant 0 : index
    %c0_4 = arith.constant 0 : index
    %3 = vector.load %arg3[%c0_3, %c0_4] : memref<1x1024xf32, #tpu.memory_space<vmem>>, vector<1x1024xf32>
    %4 = vector.broadcast %3 : vector<1x1024xf32> to vector<2x1024xf32>
    %5 = arith.addf %2, %4 : vector<2x1024xf32>
    %cst_5 = arith.constant 0.000000e+00 : f32
    %6 = vector.broadcast %cst_5 : f32 to vector<2x1024xf32>
    %7 = arith.maximumf %5, %6 : vector<2x1024xf32>
    %8 = arith.truncf %7 : vector<2x1024xf32> to vector<2x1024xbf16>
    %c0_6 = arith.constant 0 : index
    %c0_7 = arith.constant 0 : index
    %9 = vector.load %arg4[%c0_6, %c0_7] : memref<2x1024xbf16, #tpu.memory_space<vmem>>, vector<2x1024xbf16>
    tpu.vector_store %arg4[%c0_6, %c0_7], %8 {strides = array<i32>} : memref<2x1024xbf16, #tpu.memory_space<vmem>>, vector<2x1024xbf16>,
    return
  }
  func.func @transform_0(%arg0: i32) -> (i32, i32) {
    %c0_i32 = arith.constant 0 : i32
    %c0_i32_0 = arith.constant 0 : i32
    return %arg0, %c0_i32 : i32, i32
  }
  func.func @transform_1(%arg0: i32) -> (i32, i32) {
    %c0_i32 = arith.constant 0 : i32
    %c0_i32_0 = arith.constant 0 : i32
    %c0_i32_1 = arith.constant 0 : i32
    return %c0_i32, %c0_i32_0 : i32, i32
  }
  func.func @transform_2(%arg0: i32) -> (i32, i32) {
    %c0_i32 = arith.constant 0 : i32
    %c0_i32_0 = arith.constant 0 : i32
    %c0_i32_1 = arith.constant 0 : i32
    return %c0_i32, %c0_i32_0 : i32, i32
  }
  func.func @transform_3(%arg0: i32) -> (i32, i32) {
    %c0_i32 = arith.constant 0 : i32
    %c0_i32_0 = arith.constant 0 : i32
    return %arg0, %c0_i32 : i32, i32
  }
}

module attributes {stable_mosaic.version = 11 : i64} {
  func.func @_mean_fc_kernel(%arg0: memref<2x1x1024xbf16, #tpu.memory_space<vmem>>, %arg1: memref<1024x10xbf16, #tpu.memory_space<vmem>>, %arg2: memref<1x10xf32, #tpu.memory_space<vmem>>, %arg3: memref<2x10xf32, #tpu.memory_space<vmem>>) attributes {dimension_semantics = [], scalar_prefetch = 0 : i64, scratch_operands = 0 : i64, tpu.core_type = #tpu.core_type<tc>} {
    %c0 = arith.constant 0 : index
    %c0_0 = arith.constant 0 : index
    %c0_1 = arith.constant 0 : index
    %0 = vector.load %arg0[%c0, %c0_0, %c0_1] : memref<2x1x1024xbf16, #tpu.memory_space<vmem>>, vector<2x1x1024xbf16>
    %1 = arith.extf %0 : vector<2x1x1024xbf16> to vector<2x1x1024xf32>
    %cst = arith.constant dense<0.000000e+00> : vector<2x1024xf32>
    %2 = vector.multi_reduction <add>, %1, %cst [1] : vector<2x1x1024xf32> to vector<2x1024xf32>
    %cst_2 = arith.constant 1.000000e+00 : f32
    %3 = vector.broadcast %cst_2 : f32 to vector<2x1024xf32>
    %4 = arith.mulf %2, %3 : vector<2x1024xf32>
    %5 = arith.truncf %4 : vector<2x1024xf32> to vector<2x1024xbf16>
    %c0_3 = arith.constant 0 : index
    %c0_4 = arith.constant 0 : index
    %6 = vector.load %arg1[%c0_3, %c0_4] : memref<1024x10xbf16, #tpu.memory_space<vmem>>, vector<1024x10xbf16>
    %cst_5 = arith.constant dense<0.000000e+00> : vector<2x10xf32>
    %7 = tpu.matmul %5, %6, %cst_5 {dimension_numbers = #tpu.dot_dimension_numbers<[1], [0], [0], [1], [0, 0, 1, 1], [], []>} : vector<2x1024xbf16>, vector<1024x10xbf16>, vector<2x10xf32> -> vector<2x10xf32>
    %c0_6 = arith.constant 0 : index
    %c0_7 = arith.constant 0 : index
    %8 = vector.load %arg2[%c0_6, %c0_7] : memref<1x10xf32, #tpu.memory_space<vmem>>, vector<1x10xf32>
    %9 = vector.broadcast %8 : vector<1x10xf32> to vector<2x10xf32>
    %10 = arith.addf %7, %9 : vector<2x10xf32>
    %c0_8 = arith.constant 0 : index
    %c0_9 = arith.constant 0 : index
    %11 = vector.load %arg3[%c0_8, %c0_9] : memref<2x10xf32, #tpu.memory_space<vmem>>, vector<2x10xf32>
    tpu.vector_store %arg3[%c0_8, %c0_9], %10 {strides = array<i32>} : memref<2x10xf32, #tpu.memory_space<vmem>>, vector<2x10xf32>,
    return
  }
}

</mosaic_0001>

<llo_original>
// kernel: shufflenet_v2_forward.58
$region0: #{shufflenet_v2_forward.58}
  #allocation0 [shape = 'u32[]', space=smem, size = 0x4, offset = 0x4, fixed_abs, tag = 'smem constant byte address 0x4 - core index']
  #allocation1 [shape = 'u32[72,128]{1,0:T(1,128)}', space=vmem, size = 0x9000, scoped, tag = 'internal scratch']
  %s0 = inlined_call_operand.vmem [shape: bf16[512,27], index: 0, kind: input, shape index: {}]
  %s1 = inlined_call_operand.vmem [shape: bf16[27,24], index: 1, kind: input, shape index: {}]
  %s2 = inlined_call_operand.vmem [shape: f32[1,24], index: 2, kind: input, shape index: {}]
  %s3 = inlined_call_operand.vmem [shape: bf16[512,24], index: 3, kind: output, shape index: {}]
  %s4 = sld [smem:[#allocation0]]
  $region22: #{shufflenet_v2_forward.58} parent=0
    _
  %s6 = ssub.s32 1, %s4
  %s7 = scalar_select 0, %s6, %s4
  // Predicated region
  $region2: #{shufflenet_v2_forward.58} parent=0 // pred_check
    _
  $region3: #{shufflenet_v2_forward.58} parent=0 // pred_check_branch
    %9 = sbr.rel (0) target = $region5
  $region4: #{shufflenet_v2_forward.58} parent=0 // pred_region
    _
  $region5: #{shufflenet_v2_forward.58} parent=0 // pred_fallthru
    _
  // Predicated region
  $region6: #{shufflenet_v2_forward.58} parent=0 // pred_check
    _
  $region7: #{shufflenet_v2_forward.58} parent=0 // pred_check_branch
    %11 = sbr.rel (0) target = $region9
  $region8: #{shufflenet_v2_forward.58} parent=0 // pred_region
    _
  $region9: #{shufflenet_v2_forward.58} parent=0 // pred_fallthru
    _
  // Predicated region
  $region10: #{shufflenet_v2_forward.58} parent=0 // pred_check
    _
  $region11: #{shufflenet_v2_forward.58} parent=0 // pred_check_branch
    %13 = sbr.rel (0) target = $region13
  $region12: #{shufflenet_v2_forward.58} parent=0 // pred_region
    _
  $region13: #{shufflenet_v2_forward.58} parent=0 // pred_fallthru
    _
  %v15 = vld [vmem:[%s0] sm:$0xf]
  %v16 = vld [vmem:[%s0 + $0x4] sm:$0xf]
  %v17 = vld [vmem:[%s0 + $0x8] sm:$0xf]
  %v18 = vld [vmem:[%s0 + $0xc] sm:$0xf]
  %v19 = vld [vmem:[%s0 + $0x10] sm:$0xf]
  %v20 = vld [vmem:[%s0 + $0x14] sm:$0xf]
  %v21 = vld [vmem:[%s0 + $0x18] sm:$0xf]
  %v22 = vld [vmem:[%s0 + $0x1c] sm:$0xf]
  %v23 = vld [vmem:[%s0 + $0x20] sm:$0xf]
  %v24 = vld [vmem:[%s0 + $0x24] sm:$0xf]
  %v25 = vld [vmem:[%s0 + $0x28] sm:$0xf]
  %v26 = vld [vmem:[%s0 + $0x2c] sm:$0xf]
  %v27 = vld [vmem:[%s0 + $0x30] sm:$0xf]
  %v28 = vld [vmem:[%s0 + $0x34] sm:$0xf]
  %v29 = vld [vmem:[%s0 + $0x38] sm:$0xf]
  %v30 = vld [vmem:[%s0 + $0x3c] sm:$0xf]
  %v31 = vld [vmem:[%s0 + $0x40] sm:$0xf]
  %v32 = vld [vmem:[%s0 + $0x44] sm:$0xf]
  %v33 = vld [vmem:[%s0 + $0x48] sm:$0xf]
  %v34 = vld [vmem:[%s0 + $0x4c] sm:$0xf]
  %v35 = vld [vmem:[%s0 + $0x50] sm:$0xf]
  %v36 = vld [vmem:[%s0 + $0x54] sm:$0xf]
  %v37 = vld [vmem:[%s0 + $0x58] sm:$0xf]
  %v38 = vld [vmem:[%s0 + $0x5c] sm:$0xf]
  %v39 = vld [vmem:[%s0 + $0x60] sm:$0xf]
  %v40 = vld [vmem:[%s0 + $0x64] sm:$0xf]
  %v41 = vld [vmem:[%s0 + $0x68] sm:$0xf]
  %v42 = vld [vmem:[%s0 + $0x6c] sm:$0xf]
  %v43 = vld [vmem:[%s0 + $0x70] sm:$0xf]
  %v44 = vld [vmem:[%s0 + $0x74] sm:$0xf]
  %v45 = vld [vmem:[%s0 + $0x78] sm:$0xf]
  %v46 = vld [vmem:[%s0 + $0x7c] sm:$0xf]
  %v47 = vld [vmem:[%s0 + $0x80] sm:$0xf]
  %v48 = vld [vmem:[%s0 + $0x84] sm:$0xf]
  %v49 = vld [vmem:[%s0 + $0x88] sm:$0xf]
  %v50 = vld [vmem:[%s0 + $0x8c] sm:$0xf]
  %v51 = vld [vmem:[%s0 + $0x90] sm:$0xf]
  %v52 = vld [vmem:[%s0 + $0x94] sm:$0xf]
  %v53 = vld [vmem:[%s0 + $0x98] sm:$0xf]
  %v54 = vld [vmem:[%s0 + $0x9c] sm:$0xf]
  %v55 = vld [vmem:[%s0 + $0xa0] sm:$0xf]
  %v56 = vld [vmem:[%s0 + $0xa4] sm:$0xf]
  %v57 = vld [vmem:[%s0 + $0xa8] sm:$0xf]
  %v58 = vld [vmem:[%s0 + $0xac] sm:$0xf]
  %v59 = vld [vmem:[%s0 + $0xb0] sm:$0xf]
  %v60 = vld [vmem:[%s0 + $0xb4] sm:$0xf]
  %v61 = vld [vmem:[%s0 + $0xb8] sm:$0xf]
  %v62 = vld [vmem:[%s0 + $0xbc] sm:$0xf]
  %v63 = vld [vmem:[%s0 + $0xc0] sm:$0xf]
  %v64 = vld [vmem:[%s0 + $0xc4] sm:$0xf]
  %v65 = vld [vmem:[%s0 + $0xc8] sm:$0xf]
  %v66 = vld [vmem:[%s0 + $0xcc] sm:$0xf]
  %v67 = vld [vmem:[%s0 + $0xd0] sm:$0xf]
  %v68 = vld [vmem:[%s0 + $0xd4] sm:$0xf]
  %v69 = vld [vmem:[%s0 + $0xd8] sm:$0xf]
  %v70 = vld [vmem:[%s0 + $0xdc] sm:$0xf]
  %v71 = vld [vmem:[%s0 + $0xe0] sm:$0xf]
  %v72 = vld [vmem:[%s0 + $0xe4] sm:$0xf]
  %v73 = vld [vmem:[%s0 + $0xe8] sm:$0xf]
  %v74 = vld [vmem:[%s0 + $0xec] sm:$0xf]
  %v75 = vld [vmem:[%s0 + $0xf0] sm:$0xf]
  %v76 = vld [vmem:[%s0 + $0xf4] sm:$0xf]
  %v77 = vld [vmem:[%s0 + $0xf8] sm:$0xf]
  %v78 = vld [vmem:[%s0 + $0xfc] sm:$0xf]
  %v79 = vld [vmem:[%s1] sm:$0xf]
  %v80 = vld [vmem:[%s1 + $0x4] sm:$0xf]
  %v81 = vld [vmem:[%s1 + $0x8] sm:$0xf]
  %v82 = vld [vmem:[%s1 + $0xc] sm:$0x3]
  %v83 = vld [vmem:[%s2] sm:$0x1]
  %v85 = vperm.slane %v83, 0
  %v151 = vunpack.c.l.b16 %v15
  %v152 = vunpack.c.l.b16 %v16
  %v153 = vunpack.c.l.b16 %v17
  %v154 = vunpack.c.l.b16 %v18
  %v155 = vunpack.c.l.b16 %v19
  %v156 = vunpack.c.l.b16 %v20
  %v157 = vunpack.c.l.b16 %v21
  %v158 = vunpack.c.l.b16 %v22
  %v159 = vunpack.c.l.b16 %v23
  %v160 = vunpack.c.l.b16 %v24
  %v161 = vunpack.c.l.b16 %v25
  %v162 = vunpack.c.l.b16 %v26
  %v163 = vunpack.c.l.b16 %v27
  %v164 = vunpack.c.l.b16 %v28
  %v165 = vunpack.c.l.b16 %v29
  %v166 = vunpack.c.l.b16 %v30
  %v167 = vunpack.c.l.b16 %v31
  %v168 = vunpack.c.l.b16 %v32
  %v169 = vunpack.c.l.b16 %v33
  %v170 = vunpack.c.l.b16 %v34
  %v171 = vunpack.c.l.b16 %v35
  %v172 = vunpack.c.l.b16 %v36
  %v173 = vunpack.c.l.b16 %v37
  %v174 = vunpack.c.l.b16 %v38
  %v175 = vunpack.c.l.b16 %v39
  %v176 = vunpack.c.l.b16 %v40
  %v177 = vunpack.c.l.b16 %v41
  %v178 = vunpack.c.l.b16 %v42
  %v179 = vunpack.c.l.b16 %v43
  %v180 = vunpack.c.l.b16 %v44
  %v181 = vunpack.c.l.b16 %v45
  %v182 = vunpack.c.l.b16 %v46
  %v183 = vunpack.c.l.b16 %v47
  %v184 = vunpack.c.l.b16 %v48
  %v185 = vunpack.c.l.b16 %v49
  %v186 = vunpack.c.l.b16 %v50
  %v187 = vunpack.c.l.b16 %v51
  %v188 = vunpack.c.l.b16 %v52
  %v189 = vunpack.c.l.b16 %v53
  %v190 = vunpack.c.l.b16 %v54
  %v191 = vunpack.c.l.b16 %v55
  %v192 = vunpack.c.l.b16 %v56
  %v193 = vunpack.c.l.b16 %v57
  %v194 = vunpack.c.l.b16 %v58
  %v195 = vunpack.c.l.b16 %v59
  %v196 = vunpack.c.l.b16 %v60
  %v197 = vunpack.c.l.b16 %v61
  %v198 = vunpack.c.l.b16 %v62
  %v199 = vunpack.c.l.b16 %v63
  %v200 = vunpack.c.l.b16 %v64
  %v201 = vunpack.c.l.b16 %v65
  %v202 = vunpack.c.l.b16 %v66
  %v203 = vunpack.c.l.b16 %v67
  %v204 = vunpack.c.l.b16 %v68
  %v205 = vunpack.c.l.b16 %v69
  %v206 = vunpack.c.l.b16 %v70
  %v207 = vunpack.c.l.b16 %v71
  %v208 = vunpack.c.l.b16 %v72
  %v209 = vunpack.c.l.b16 %v73
  %v210 = vunpack.c.l.b16 %v74
  %v211 = vunpack.c.l.b16 %v75
  %v212 = vunpack.c.l.b16 %v76
  %v213 = vunpack.c.l.b16 %v77
  %v214 = vunpack.c.l.b16 %v78
  %v215 = vpack.c.b16 %v152, %v151
  %v216 = vpack.c.b16 %v154, %v153
  %v217 = vpack.c.b16 %v156, %v155
  %v218 = vpack.c.b16 %v158, %v157
  %v219 = vpack.c.b16 %v160, %v159
  %v220 = vpack.c.b16 %v162, %v161
  %v221 = vpack.c.b16 %v164, %v163
  %v222 = vpack.c.b16 %v166, %v165
  %v223 = vpack.c.b16 %v168, %v167
  %v224 = vpack.c.b16 %v170, %v169
  %v225 = vpack.c.b16 %v172, %v171
  %v226 = vpack.c.b16 %v174, %v173
  %v227 = vpack.c.b16 %v176, %v175
  %v228 = vpack.c.b16 %v178, %v177
  %v229 = vpack.c.b16 %v180, %v179
  %v230 = vpack.c.b16 %v182, %v181
  %v231 = vpack.c.b16 %v184, %v183
  %v232 = vpack.c.b16 %v186, %v185
  %v233 = vpack.c.b16 %v188, %v187
  %v234 = vpack.c.b16 %v190, %v189
  %v235 = vpack.c.b16 %v192, %v191
  %v236 = vpack.c.b16 %v194, %v193
  %v237 = vpack.c.b16 %v196, %v195
  %v238 = vpack.c.b16 %v198, %v197
  %v239 = vpack.c.b16 %v200, %v199
  %v240 = vpack.c.b16 %v202, %v201
  %v241 = vpack.c.b16 %v204, %v203
  %v242 = vpack.c.b16 %v206, %v205
  %v243 = vpack.c.b16 %v208, %v207
  %v244 = vpack.c.b16 %v210, %v209
  %v245 = vpack.c.b16 %v212, %v211
  %v246 = vpack.c.b16 %v214, %v213
  %v251 = vunpack.c.l.b16 %v79
  %v252 = vunpack.c.l.b16 %v80
  %v253 = vunpack.c.l.b16 %v81
  %v254 = vunpack.c.l.b16 %v82
  %v255 = vpack.c.b16 %v252, %v251
  %v256 = vpack.c.b16 %v254, %v253
  %vm258 = vcmask 220160
  %v260 = vsel %vm258, %v215, 0
  %v263 = vsel %vm258, %v216, 0
  %v266 = vsel %vm258, %v217, 0
  %v269 = vsel %vm258, %v218, 0
  %v272 = vsel %vm258, %v219, 0
  %v275 = vsel %vm258, %v220, 0
  %v278 = vsel %vm258, %v221, 0
  %v281 = vsel %vm258, %v222, 0
  %v284 = vsel %vm258, %v223, 0
  %v287 = vsel %vm258, %v224, 0
  %v290 = vsel %vm258, %v225, 0
  %v293 = vsel %vm258, %v226, 0
  %v296 = vsel %vm258, %v227, 0
  %v299 = vsel %vm258, %v228, 0
  %v302 = vsel %vm258, %v229, 0
  %v305 = vsel %vm258, %v230, 0
  %v308 = vsel %vm258, %v231, 0
  %v311 = vsel %vm258, %v232, 0
  %v314 = vsel %vm258, %v233, 0
  %v317 = vsel %vm258, %v234, 0
  %v320 = vsel %vm258, %v235, 0
  %v323 = vsel %vm258, %v236, 0
  %v326 = vsel %vm258, %v237, 0
  %v329 = vsel %vm258, %v238, 0
  %v332 = vsel %vm258, %v239, 0
  %v335 = vsel %vm258, %v240, 0
  %v338 = vsel %vm258, %v241, 0
  %v341 = vsel %vm258, %v242, 0
  %v344 = vsel %vm258, %v243, 0
  %v347 = vsel %vm258, %v244, 0
  %v350 = vsel %vm258, %v245, 0
  %v353 = vsel %vm258, %v246, 0
  %vm355 = vcmask 1044480
  %vm356 = vcmask 1045504
  %v357 = vsel %vm355, 4294967295, 65535
  %v358 = vsel %vm356, %v357, 0
  %v360 = vand.u32 %v256, %v358
  %362 = vmatpush.bf16.msra.mxu0 0
  %363 = vmatpush.bf16.msra.mxu0 0
  %364 = vmatpush.bf16.msra.mxu0 0
  %365 = vmatpush.bf16.msra.mxu0 0
  %366 = vmatpush.bf16.msra.mxu0 0
  %367 = vmatpush.bf16.msra.mxu0 0
  %368 = vmatpush.bf16.msra.mxu0 %v360
  %369 = vmatpush.bf16.msra.mxu0 %v255
  %370 = vmatmul.bf16.gmra.mxu0 %v260
  %v371 = vpop.f32.mrf.mxu0
  %v372 = vadd.f32 %v85, %v371
  %v373 = vpop.f32.mrf.mxu0
  %v374 = vadd.f32 %v85, %v373
  %375 = vmatmul.bf16.gmra.mxu0 %v263
  %v376 = vpop.f32.mrf.mxu0
  %v377 = vadd.f32 %v85, %v376
  %v378 = vpop.f32.mrf.mxu0
  %v379 = vadd.f32 %v85, %v378
  %380 = vmatmul.bf16.gmra.mxu0 %v266
  %v381 = vpop.f32.mrf.mxu0
  %v382 = vadd.f32 %v85, %v381
  %v383 = vpop.f32.mrf.mxu0
  %v384 = vadd.f32 %v85, %v383
  %385 = vmatmul.bf16.gmra.mxu0 %v269
  %v386 = vpop.f32.mrf.mxu0
  %v387 = vadd.f32 %v85, %v386
  %v388 = vpop.f32.mrf.mxu0
  %v389 = vadd.f32 %v85, %v388
  %390 = vmatmul.bf16.gmra.mxu0 %v272
  %v391 = vpop.f32.mrf.mxu0
  %v392 = vadd.f32 %v85, %v391
  %v393 = vpop.f32.mrf.mxu0
  %v394 = vadd.f32 %v85, %v393
  %395 = vmatmul.bf16.gmra.mxu0 %v275
  %v396 = vpop.f32.mrf.mxu0
  %v397 = vadd.f32 %v85, %v396
  %v398 = vpop.f32.mrf.mxu0
  %v399 = vadd.f32 %v85, %v398
  %400 = vmatmul.bf16.gmra.mxu0 %v278
  %v401 = vpop.f32.mrf.mxu0
  %v402 = vadd.f32 %v85, %v401
  %v403 = vpop.f32.mrf.mxu0
  %v404 = vadd.f32 %v85, %v403
  %405 = vmatmul.bf16.gmra.mxu0 %v281
  %v406 = vpop.f32.mrf.mxu0
  %v407 = vadd.f32 %v85, %v406
  %v408 = vpop.f32.mrf.mxu0
  %v409 = vadd.f32 %v85, %v408
  %410 = vmatmul.bf16.gmra.mxu0 %v284
  %v411 = vpop.f32.mrf.mxu0
  %v412 = vadd.f32 %v85, %v411
  %v413 = vpop.f32.mrf.mxu0
  %v414 = vadd.f32 %v85, %v413
  %415 = vmatmul.bf16.gmra.mxu0 %v287
  %v416 = vpop.f32.mrf.mxu0
  %v417 = vadd.f32 %v85, %v416
  %v418 = vpop.f32.mrf.mxu0
  %v419 = vadd.f32 %v85, %v418
  %420 = vmatmul.bf16.gmra.mxu0 %v290
  %v421 = vpop.f32.mrf.mxu0
  %v422 = vadd.f32 %v85, %v421
  %v423 = vpop.f32.mrf.mxu0
  %v424 = vadd.f32 %v85, %v423
  %425 = vmatmul.bf16.gmra.mxu0 %v293
  %v426 = vpop.f32.mrf.mxu0
  %v427 = vadd.f32 %v85, %v426
  %v428 = vpop.f32.mrf.mxu0
  %v429 = vadd.f32 %v85, %v428
  %430 = vmatmul.bf16.gmra.mxu0 %v296
  %v431 = vpop.f32.mrf.mxu0
  %v432 = vadd.f32 %v85, %v431
  %v433 = vpop.f32.mrf.mxu0
  %v434 = vadd.f32 %v85, %v433
  %435 = vmatmul.bf16.gmra.mxu0 %v299
  %v436 = vpop.f32.mrf.mxu0
  %v437 = vadd.f32 %v85, %v436
  %v438 = vpop.f32.mrf.mxu0
  %v439 = vadd.f32 %v85, %v438
  %440 = vmatmul.bf16.gmra.mxu0 %v302
  %v441 = vpop.f32.mrf.mxu0
  %v442 = vadd.f32 %v85, %v441
  %v443 = vpop.f32.mrf.mxu0
  %v444 = vadd.f32 %v85, %v443
  %445 = vmatmul.bf16.gmra.mxu0 %v305
  %v446 = vpop.f32.mrf.mxu0
  %v447 = vadd.f32 %v85, %v446
  %v448 = vpop.f32.mrf.mxu0
  %v449 = vadd.f32 %v85, %v448
  %450 = vmatmul.bf16.gmra.mxu0 %v308
  %v451 = vpop.f32.mrf.mxu0
  %v452 = vadd.f32 %v85, %v451
  %v453 = vpop.f32.mrf.mxu0
  %v454 = vadd.f32 %v85, %v453
  %455 = vmatmul.bf16.gmra.mxu0 %v311
  %v456 = vpop.f32.mrf.mxu0
  %v457 = vadd.f32 %v85, %v456
  %v458 = vpop.f32.mrf.mxu0
  %v459 = vadd.f32 %v85, %v458
  %460 = vmatmul.bf16.gmra.mxu0 %v314
  %v461 = vpop.f32.mrf.mxu0
  %v462 = vadd.f32 %v85, %v461
  %v463 = vpop.f32.mrf.mxu0
  %v464 = vadd.f32 %v85, %v463
  %465 = vmatmul.bf16.gmra.mxu0 %v317
  %v466 = vpop.f32.mrf.mxu0
  %v467 = vadd.f32 %v85, %v466
  %v468 = vpop.f32.mrf.mxu0
  %v469 = vadd.f32 %v85, %v468
  %470 = vmatmul.bf16.gmra.mxu0 %v320
  %v471 = vpop.f32.mrf.mxu0
  %v472 = vadd.f32 %v85, %v471
  %v473 = vpop.f32.mrf.mxu0
  %v474 = vadd.f32 %v85, %v473
  %475 = vmatmul.bf16.gmra.mxu0 %v323
  %v476 = vpop.f32.mrf.mxu0
  %v477 = vadd.f32 %v85, %v476
  %v478 = vpop.f32.mrf.mxu0
  %v479 = vadd.f32 %v85, %v478
  %480 = vmatmul.bf16.gmra.mxu0 %v326
  %v481 = vpop.f32.mrf.mxu0
  %v482 = vadd.f32 %v85, %v481
  %v483 = vpop.f32.mrf.mxu0
  %v484 = vadd.f32 %v85, %v483
  %485 = vmatmul.bf16.gmra.mxu0 %v329
  %v486 = vpop.f32.mrf.mxu0
  %v487 = vadd.f32 %v85, %v486
  %v488 = vpop.f32.mrf.mxu0
  %v489 = vadd.f32 %v85, %v488
  %490 = vmatmul.bf16.gmra.mxu0 %v332
  %v491 = vpop.f32.mrf.mxu0
  %v492 = vadd.f32 %v85, %v491
  %v493 = vpop.f32.mrf.mxu0
  %v494 = vadd.f32 %v85, %v493
  %495 = vmatmul.bf16.gmra.mxu0 %v335
  %v496 = vpop.f32.mrf.mxu0
  %v497 = vadd.f32 %v85, %v496
  %v498 = vpop.f32.mrf.mxu0
  %v499 = vadd.f32 %v85, %v498
  %500 = vmatmul.bf16.gmra.mxu0 %v338
  %v501 = vpop.f32.mrf.mxu0
  %v502 = vadd.f32 %v85, %v501
  %v503 = vpop.f32.mrf.mxu0
  %v504 = vadd.f32 %v85, %v503
  %505 = vmatmul.bf16.gmra.mxu0 %v341
  %v506 = vpop.f32.mrf.mxu0
  %v507 = vadd.f32 %v85, %v506
  %v508 = vpop.f32.mrf.mxu0
  %v509 = vadd.f32 %v85, %v508
  %510 = vmatmul.bf16.gmra.mxu0 %v344
  %v511 = vpop.f32.mrf.mxu0
  %v512 = vadd.f32 %v85, %v511
  %v513 = vpop.f32.mrf.mxu0
  %v514 = vadd.f32 %v85, %v513
  %515 = vmatmul.bf16.gmra.mxu0 %v347
  %v516 = vpop.f32.mrf.mxu0
  %v517 = vadd.f32 %v85, %v516
  %v518 = vpop.f32.mrf.mxu0
  %v519 = vadd.f32 %v85, %v518
  %520 = vmatmul.bf16.gmra.mxu0 %v350
  %v521 = vpop.f32.mrf.mxu0
  %v522 = vadd.f32 %v85, %v521
  %v523 = vpop.f32.mrf.mxu0
  %v524 = vadd.f32 %v85, %v523
  %525 = vmatmul.bf16.gmra.mxu0 %v353
  %v526 = vpop.f32.mrf.mxu0
  %v527 = vadd.f32 %v85, %v526
  %v528 = vpop.f32.mrf.mxu0
  %v529 = vadd.f32 %v85, %v528
  %530 = vdwg.mxu0
  %v531 = vmax.f32 %v372, 0.0
  %v532 = vmax.f32 %v374, 0.0
  %v533 = vmax.f32 %v377, 0.0
  %v534 = vmax.f32 %v379, 0.0
  %v535 = vmax.f32 %v382, 0.0
  %v536 = vmax.f32 %v384, 0.0
  %v537 = vmax.f32 %v387, 0.0
  %v538 = vmax.f32 %v389, 0.0
  %v539 = vmax.f32 %v392, 0.0
  %v540 = vmax.f32 %v394, 0.0
  %v541 = vmax.f32 %v397, 0.0
  %v542 = vmax.f32 %v399, 0.0
  %v543 = vmax.f32 %v402, 0.0
  %v544 = vmax.f32 %v404, 0.0
  %v545 = vmax.f32 %v407, 0.0
  %v546 = vmax.f32 %v409, 0.0
  %v547 = vmax.f32 %v412, 0.0
  %v548 = vmax.f32 %v414, 0.0
  %v549 = vmax.f32 %v417, 0.0
  %v550 = vmax.f32 %v419, 0.0
  %v551 = vmax.f32 %v422, 0.0
  %v552 = vmax.f32 %v424, 0.0
  %v553 = vmax.f32 %v427, 0.0
  %v554 = vmax.f32 %v429, 0.0
  %v555 = vmax.f32 %v432, 0.0
  %v556 = vmax.f32 %v434, 0.0
  %v557 = vmax.f32 %v437, 0.0
  %v558 = vmax.f32 %v439, 0.0
  %v559 = vmax.f32 %v442, 0.0
  %v560 = vmax.f32 %v444, 0.0
  %v561 = vmax.f32 %v447, 0.0
  %v562 = vmax.f32 %v449, 0.0
  %v563 = vmax.f32 %v452, 0.0
  %v564 = vmax.f32 %v454, 0.0
  %v565 = vmax.f32 %v457, 0.0
  %v566 = vmax.f32 %v459, 0.0
  %v567 = vmax.f32 %v462, 0.0
  %v568 = vmax.f32 %v464, 0.0
  %v569 = vmax.f32 %v467, 0.0
  %v570 = vmax.f32 %v469, 0.0
  %v571 = vmax.f32 %v472, 0.0
  %v572 = vmax.f32 %v474, 0.0
  %v573 = vmax.f32 %v477, 0.0
  %v574 = vmax.f32 %v479, 0.0
  %v575 = vmax.f32 %v482, 0.0
  %v576 = vmax.f32 %v484, 0.0
  %v577 = vmax.f32 %v487, 0.0
  %v578 = vmax.f32 %v489, 0.0
  %v579 = vmax.f32 %v492, 0.0
  %v580 = vmax.f32 %v494, 0.0
  %v581 = vmax.f32 %v497, 0.0
  %v582 = vmax.f32 %v499, 0.0
  %v583 = vmax.f32 %v502, 0.0
  %v584 = vmax.f32 %v504, 0.0
  %v585 = vmax.f32 %v507, 0.0
  %v586 = vmax.f32 %v509, 0.0
  %v587 = vmax.f32 %v512, 0.0
  %v588 = vmax.f32 %v514, 0.0
  %v589 = vmax.f32 %v517, 0.0
  %v590 = vmax.f32 %v519, 0.0
  %v591 = vmax.f32 %v522, 0.0
  %v592 = vmax.f32 %v524, 0.0
  %v593 = vmax.f32 %v527, 0.0
  %v594 = vmax.f32 %v529, 0.0
  %v595 = vpack.c.bf16 %v531, %v531
  %v596 = vpack.c.bf16 %v532, %v532
  %v597 = vpack.c.bf16 %v533, %v533
  %v598 = vpack.c.bf16 %v534, %v534
  %v599 = vpack.c.bf16 %v535, %v535
  %v600 = vpack.c.bf16 %v536, %v536
  %v601 = vpack.c.bf16 %v537, %v537
  %v602 = vpack.c.bf16 %v538, %v538
  %v603 = vpack.c.bf16 %v539, %v539
  %v604 = vpack.c.bf16 %v540, %v540
  %v605 = vpack.c.bf16 %v541, %v541
  %v606 = vpack.c.bf16 %v542, %v542
  %v607 = vpack.c.bf16 %v543, %v543
  %v608 = vpack.c.bf16 %v544, %v544
  %v609 = vpack.c.bf16 %v545, %v545
  %v610 = vpack.c.bf16 %v546, %v546
  %v611 = vpack.c.bf16 %v547, %v547
  %v612 = vpack.c.bf16 %v548, %v548
  %v613 = vpack.c.bf16 %v549, %v549
  %v614 = vpack.c.bf16 %v550, %v550
  %v615 = vpack.c.bf16 %v551, %v551
  %v616 = vpack.c.bf16 %v552, %v552
  %v617 = vpack.c.bf16 %v553, %v553
  %v618 = vpack.c.bf16 %v554, %v554
  %v619 = vpack.c.bf16 %v555, %v555
  %v620 = vpack.c.bf16 %v556, %v556
  %v621 = vpack.c.bf16 %v557, %v557
  %v622 = vpack.c.bf16 %v558, %v558
  %v623 = vpack.c.bf16 %v559, %v559
  %v624 = vpack.c.bf16 %v560, %v560
  %v625 = vpack.c.bf16 %v561, %v561
  %v626 = vpack.c.bf16 %v562, %v562
  %v627 = vpack.c.bf16 %v563, %v563
  %v628 = vpack.c.bf16 %v564, %v564
  %v629 = vpack.c.bf16 %v565, %v565
  %v630 = vpack.c.bf16 %v566, %v566
  %v631 = vpack.c.bf16 %v567, %v567
  %v632 = vpack.c.bf16 %v568, %v568
  %v633 = vpack.c.bf16 %v569, %v569
  %v634 = vpack.c.bf16 %v570, %v570
  %v635 = vpack.c.bf16 %v571, %v571
  %v636 = vpack.c.bf16 %v572, %v572
  %v637 = vpack.c.bf16 %v573, %v573
  %v638 = vpack.c.bf16 %v574, %v574
  %v639 = vpack.c.bf16 %v575, %v575
  %v640 = vpack.c.bf16 %v576, %v576
  %v641 = vpack.c.bf16 %v577, %v577
  %v642 = vpack.c.bf16 %v578, %v578
  %v643 = vpack.c.bf16 %v579, %v579
  %v644 = vpack.c.bf16 %v580, %v580
  %v645 = vpack.c.bf16 %v581, %v581
  %v646 = vpack.c.bf16 %v582, %v582
  %v647 = vpack.c.bf16 %v583, %v583
  %v648 = vpack.c.bf16 %v584, %v584
  %v649 = vpack.c.bf16 %v585, %v585
  %v650 = vpack.c.bf16 %v586, %v586
  %v651 = vpack.c.bf16 %v587, %v587
  %v652 = vpack.c.bf16 %v588, %v588
  %v653 = vpack.c.bf16 %v589, %v589
  %v654 = vpack.c.bf16 %v590, %v590
  %v655 = vpack.c.bf16 %v591, %v591
  %v656 = vpack.c.bf16 %v592, %v592
  %v657 = vpack.c.bf16 %v593, %v593
  %v658 = vpack.c.bf16 %v594, %v594
  %vm659 = vcmask 191488
  %660 = vst.msk [vmem:[%s3] sm:$0xf] %vm659, %v595
  %661 = vst.msk [vmem:[%s3 + $0x4] sm:$0xf] %vm659, %v596
  %662 = vst.msk [vmem:[%s3 + $0x8] sm:$0xf] %vm659, %v597
  %663 = vst.msk [vmem:[%s3 + $0xc] sm:$0xf] %vm659, %v598
  %664 = vst.msk [vmem:[%s3 + $0x10] sm:$0xf] %vm659, %v599
  %665 = vst.msk [vmem:[%s3 + $0x14] sm:$0xf] %vm659, %v600
  %666 = vst.msk [vmem:[%s3 + $0x18] sm:$0xf] %vm659, %v601
  %667 = vst.msk [vmem:[%s3 + $0x1c] sm:$0xf] %vm659, %v602
  %668 = vst.msk [vmem:[%s3 + $0x20] sm:$0xf] %vm659, %v603
  %669 = vst.msk [vmem:[%s3 + $0x24] sm:$0xf] %vm659, %v604
  %670 = vst.msk [vmem:[%s3 + $0x28] sm:$0xf] %vm659, %v605
  %671 = vst.msk [vmem:[%s3 + $0x2c] sm:$0xf] %vm659, %v606
  %672 = vst.msk [vmem:[%s3 + $0x30] sm:$0xf] %vm659, %v607
  %673 = vst.msk [vmem:[%s3 + $0x34] sm:$0xf] %vm659, %v608
  %674 = vst.msk [vmem:[%s3 + $0x38] sm:$0xf] %vm659, %v609
  %675 = vst.msk [vmem:[%s3 + $0x3c] sm:$0xf] %vm659, %v610
  %676 = vst.msk [vmem:[%s3 + $0x40] sm:$0xf] %vm659, %v611
  %677 = vst.msk [vmem:[%s3 + $0x44] sm:$0xf] %vm659, %v612
  %678 = vst.msk [vmem:[%s3 + $0x48] sm:$0xf] %vm659, %v613
  %679 = vst.msk [vmem:[%s3 + $0x4c] sm:$0xf] %vm659, %v614
  %680 = vst.msk [vmem:[%s3 + $0x50] sm:$0xf] %vm659, %v615
  %681 = vst.msk [vmem:[%s3 + $0x54] sm:$0xf] %vm659, %v616
  %682 = vst.msk [vmem:[%s3 + $0x58] sm:$0xf] %vm659, %v617
  %683 = vst.msk [vmem:[%s3 + $0x5c] sm:$0xf] %vm659, %v618
  %684 = vst.msk [vmem:[%s3 + $0x60] sm:$0xf] %vm659, %v619
  %685 = vst.msk [vmem:[%s3 + $0x64] sm:$0xf] %vm659, %v620
  %686 = vst.msk [vmem:[%s3 + $0x68] sm:$0xf] %vm659, %v621
  %687 = vst.msk [vmem:[%s3 + $0x6c] sm:$0xf] %vm659, %v622
  %688 = vst.msk [vmem:[%s3 + $0x70] sm:$0xf] %vm659, %v623
  %689 = vst.msk [vmem:[%s3 + $0x74] sm:$0xf] %vm659, %v624
  %690 = vst.msk [vmem:[%s3 + $0x78] sm:$0xf] %vm659, %v625
  %691 = vst.msk [vmem:[%s3 + $0x7c] sm:$0xf] %vm659, %v626
  %692 = vst.msk [vmem:[%s3 + $0x80] sm:$0xf] %vm659, %v627
  %693 = vst.msk [vmem:[%s3 + $0x84] sm:$0xf] %vm659, %v628
  %694 = vst.msk [vmem:[%s3 + $0x88] sm:$0xf] %vm659, %v629
  %695 = vst.msk [vmem:[%s3 + $0x8c] sm:$0xf] %vm659, %v630
  %696 = vst.msk [vmem:[%s3 + $0x90] sm:$0xf] %vm659, %v631
  %697 = vst.msk [vmem:[%s3 + $0x94] sm:$0xf] %vm659, %v632
  %698 = vst.msk [vmem:[%s3 + $0x98] sm:$0xf] %vm659, %v633
  %699 = vst.msk [vmem:[%s3 + $0x9c] sm:$0xf] %vm659, %v634
  %700 = vst.msk [vmem:[%s3 + $0xa0] sm:$0xf] %vm659, %v635
  %701 = vst.msk [vmem:[%s3 + $0xa4] sm:$0xf] %vm659, %v636
  %702 = vst.msk [vmem:[%s3 + $0xa8] sm:$0xf] %vm659, %v637
  %703 = vst.msk [vmem:[%s3 + $0xac] sm:$0xf] %vm659, %v638
  %704 = vst.msk [vmem:[%s3 + $0xb0] sm:$0xf] %vm659, %v639
  %705 = vst.msk [vmem:[%s3 + $0xb4] sm:$0xf] %vm659, %v640
  %706 = vst.msk [vmem:[%s3 + $0xb8] sm:$0xf] %vm659, %v641
  %707 = vst.msk [vmem:[%s3 + $0xbc] sm:$0xf] %vm659, %v642
  %708 = vst.msk [vmem:[%s3 + $0xc0] sm:$0xf] %vm659, %v643
  %709 = vst.msk [vmem:[%s3 + $0xc4] sm:$0xf] %vm659, %v644
  %710 = vst.msk [vmem:[%s3 + $0xc8] sm:$0xf] %vm659, %v645
  %711 = vst.msk [vmem:[%s3 + $0xcc] sm:$0xf] %vm659, %v646
  %712 = vst.msk [vmem:[%s3 + $0xd0] sm:$0xf] %vm659, %v647
  %713 = vst.msk [vmem:[%s3 + $0xd4] sm:$0xf] %vm659, %v648
  %714 = vst.msk [vmem:[%s3 + $0xd8] sm:$0xf] %vm659, %v649
  %715 = vst.msk [vmem:[%s3 + $0xdc] sm:$0xf] %vm659, %v650
  %716 = vst.msk [vmem:[%s3 + $0xe0] sm:$0xf] %vm659, %v651
  %717 = vst.msk [vmem:[%s3 + $0xe4] sm:$0xf] %vm659, %v652
  %718 = vst.msk [vmem:[%s3 + $0xe8] sm:$0xf] %vm659, %v653
  %719 = vst.msk [vmem:[%s3 + $0xec] sm:$0xf] %vm659, %v654
  %720 = vst.msk [vmem:[%s3 + $0xf0] sm:$0xf] %vm659, %v655
  %721 = vst.msk [vmem:[%s3 + $0xf4] sm:$0xf] %vm659, %v656
  %722 = vst.msk [vmem:[%s3 + $0xf8] sm:$0xf] %vm659, %v657
  %723 = vst.msk [vmem:[%s3 + $0xfc] sm:$0xf] %vm659, %v658
  // Predicated region
  $region14: #{shufflenet_v2_forward.58} parent=0 // pred_check
    _
  $region15: #{shufflenet_v2_forward.58} parent=0 // pred_check_branch
    %725 = sbr.rel (0) target = $region17
  $region16: #{shufflenet_v2_forward.58} parent=0 // pred_region
    _
  $region17: #{shufflenet_v2_forward.58} parent=0 // pred_fallthru
    _
  // Predicated region
  $region18: #{shufflenet_v2_forward.58} parent=0 // pred_check
    _
  $region19: #{shufflenet_v2_forward.58} parent=0 // pred_check_branch
    %727 = sbr.rel (0) target = $region21
  $region20: #{shufflenet_v2_forward.58} parent=0 // pred_region
    _
  $region21: #{shufflenet_v2_forward.58} parent=0 // pred_fallthru
    _

// kernel: shufflenet_v2_forward.62
$region0: #{shufflenet_v2_forward.62}
  #allocation0 [shape = 'u32[]', space=smem, size = 0x4, offset = 0x4, fixed_abs, tag = 'smem constant byte address 0x4 - core index']
  #allocation1 [shape = 'u32[72,128]{1,0:T(1,128)}', space=vmem, size = 0x9000, scoped, tag = 'internal scratch']
  %s0 = inlined_call_operand.vmem [shape: bf16[128,24], index: 0, kind: input, shape index: {}]
  %s1 = inlined_call_operand.vmem [shape: bf16[24,24], index: 1, kind: input, shape index: {}]
  %s2 = inlined_call_operand.vmem [shape: f32[1,24], index: 2, kind: input, shape index: {}]
  %s3 = inlined_call_operand.vmem [shape: bf16[128,24], index: 3, kind: output, shape index: {}]
  %s4 = sld [smem:[#allocation0]]
  $region22: #{shufflenet_v2_forward.62} parent=0
    _
  %s6 = ssub.s32 1, %s4
  %s7 = scalar_select 0, %s6, %s4
  // Predicated region
  $region2: #{shufflenet_v2_forward.62} parent=0 // pred_check
    _
  $region3: #{shufflenet_v2_forward.62} parent=0 // pred_check_branch
    %9 = sbr.rel (0) target = $region5
  $region4: #{shufflenet_v2_forward.62} parent=0 // pred_region
    _
  $region5: #{shufflenet_v2_forward.62} parent=0 // pred_fallthru
    _
  // Predicated region
  $region6: #{shufflenet_v2_forward.62} parent=0 // pred_check
    _
  $region7: #{shufflenet_v2_forward.62} parent=0 // pred_check_branch
    %11 = sbr.rel (0) target = $region9
  $region8: #{shufflenet_v2_forward.62} parent=0 // pred_region
    _
  $region9: #{shufflenet_v2_forward.62} parent=0 // pred_fallthru
    _
  // Predicated region
  $region10: #{shufflenet_v2_forward.62} parent=0 // pred_check
    _
  $region11: #{shufflenet_v2_forward.62} parent=0 // pred_check_branch
    %13 = sbr.rel (0) target = $region13
  $region12: #{shufflenet_v2_forward.62} parent=0 // pred_region
    _
  $region13: #{shufflenet_v2_forward.62} parent=0 // pred_fallthru
    _
  %v15 = vld [vmem:[%s0] sm:$0xf]
  %v16 = vld [vmem:[%s0 + $0x4] sm:$0xf]
  %v17 = vld [vmem:[%s0 + $0x8] sm:$0xf]
  %v18 = vld [vmem:[%s0 + $0xc] sm:$0xf]
  %v19 = vld [vmem:[%s0 + $0x10] sm:$0xf]
  %v20 = vld [vmem:[%s0 + $0x14] sm:$0xf]
  %v21 = vld [vmem:[%s0 + $0x18] sm:$0xf]
  %v22 = vld [vmem:[%s0 + $0x1c] sm:$0xf]
  %v23 = vld [vmem:[%s0 + $0x20] sm:$0xf]
  %v24 = vld [vmem:[%s0 + $0x24] sm:$0xf]
  %v25 = vld [vmem:[%s0 + $0x28] sm:$0xf]
  %v26 = vld [vmem:[%s0 + $0x2c] sm:$0xf]
  %v27 = vld [vmem:[%s0 + $0x30] sm:$0xf]
  %v28 = vld [vmem:[%s0 + $0x34] sm:$0xf]
  %v29 = vld [vmem:[%s0 + $0x38] sm:$0xf]
  %v30 = vld [vmem:[%s0 + $0x3c] sm:$0xf]
  %v31 = vld [vmem:[%s1] sm:$0xf]
  %v32 = vld [vmem:[%s1 + $0x4] sm:$0xf]
  %v33 = vld [vmem:[%s1 + $0x8] sm:$0xf]
  %v34 = vld [vmem:[%s2] sm:$0x1]
  %v36 = vperm.slane %v34, 0
  %v54 = vunpack.c.l.b16 %v15
  %v55 = vunpack.c.l.b16 %v16
  %v56 = vunpack.c.l.b16 %v17
  %v57 = vunpack.c.l.b16 %v18
  %v58 = vunpack.c.l.b16 %v19
  %v59 = vunpack.c.l.b16 %v20
  %v60 = vunpack.c.l.b16 %v21
  %v61 = vunpack.c.l.b16 %v22
  %v62 = vunpack.c.l.b16 %v23
  %v63 = vunpack.c.l.b16 %v24
  %v64 = vunpack.c.l.b16 %v25
  %v65 = vunpack.c.l.b16 %v26
  %v66 = vunpack.c.l.b16 %v27
  %v67 = vunpack.c.l.b16 %v28
  %v68 = vunpack.c.l.b16 %v29
  %v69 = vunpack.c.l.b16 %v30
  %v70 = vpack.c.b16 %v55, %v54
  %v71 = vpack.c.b16 %v57, %v56
  %v72 = vpack.c.b16 %v59, %v58
  %v73 = vpack.c.b16 %v61, %v60
  %v74 = vpack.c.b16 %v63, %v62
  %v75 = vpack.c.b16 %v65, %v64
  %v76 = vpack.c.b16 %v67, %v66
  %v77 = vpack.c.b16 %v69, %v68
  %v81 = vunpack.c.l.b16 %v31
  %v82 = vunpack.c.l.b16 %v32
  %v83 = vunpack.c.l.b16 %v33
  %v84 = vpack.c.b16 %v82, %v81
  %v85 = vpack.c.b16 %v83, %v83
  %vm87 = vcmask 195584
  %v89 = vsel %vm87, %v70, 0
  %v92 = vsel %vm87, %v71, 0
  %v95 = vsel %vm87, %v72, 0
  %v98 = vsel %vm87, %v73, 0
  %v101 = vsel %vm87, %v74, 0
  %v104 = vsel %vm87, %v75, 0
  %v107 = vsel %vm87, %v76, 0
  %v110 = vsel %vm87, %v77, 0
  %vm112 = vcmask 1043456
  %v114 = vsel %vm112, %v85, 0
  %116 = vmatpush.bf16.msra.mxu0 0
  %117 = vmatpush.bf16.msra.mxu0 0
  %118 = vmatpush.bf16.msra.mxu0 0
  %119 = vmatpush.bf16.msra.mxu0 0
  %120 = vmatpush.bf16.msra.mxu0 0
  %121 = vmatpush.bf16.msra.mxu0 0
  %122 = vmatpush.bf16.msra.mxu0 %v114
  %123 = vmatpush.bf16.msra.mxu0 %v84
  %124 = vmatmul.bf16.gmra.mxu0 %v89
  %v125 = vpop.f32.mrf.mxu0
  %v126 = vadd.f32 %v36, %v125
  %v127 = vpop.f32.mrf.mxu0
  %v128 = vadd.f32 %v36, %v127
  %129 = vmatmul.bf16.gmra.mxu0 %v92
  %v130 = vpop.f32.mrf.mxu0
  %v131 = vadd.f32 %v36, %v130
  %v132 = vpop.f32.mrf.mxu0
  %v133 = vadd.f32 %v36, %v132
  %134 = vmatmul.bf16.gmra.mxu0 %v95
  %v135 = vpop.f32.mrf.mxu0
  %v136 = vadd.f32 %v36, %v135
  %v137 = vpop.f32.mrf.mxu0
  %v138 = vadd.f32 %v36, %v137
  %139 = vmatmul.bf16.gmra.mxu0 %v98
  %v140 = vpop.f32.mrf.mxu0
  %v141 = vadd.f32 %v36, %v140
  %v142 = vpop.f32.mrf.mxu0
  %v143 = vadd.f32 %v36, %v142
  %144 = vmatmul.bf16.gmra.mxu0 %v101
  %v145 = vpop.f32.mrf.mxu0
  %v146 = vadd.f32 %v36, %v145
  %v147 = vpop.f32.mrf.mxu0
  %v148 = vadd.f32 %v36, %v147
  %149 = vmatmul.bf16.gmra.mxu0 %v104
  %v150 = vpop.f32.mrf.mxu0
  %v151 = vadd.f32 %v36, %v150
  %v152 = vpop.f32.mrf.mxu0
  %v153 = vadd.f32 %v36, %v152
  %154 = vmatmul.bf16.gmra.mxu0 %v107
  %v155 = vpop.f32.mrf.mxu0
  %v156 = vadd.f32 %v36, %v155
  %v157 = vpop.f32.mrf.mxu0
  %v158 = vadd.f32 %v36, %v157
  %159 = vmatmul.bf16.gmra.mxu0 %v110
  %v160 = vpop.f32.mrf.mxu0
  %v161 = vadd.f32 %v36, %v160
  %v162 = vpop.f32.mrf.mxu0
  %v163 = vadd.f32 %v36, %v162
  %164 = vdwg.mxu0
  %v165 = vmax.f32 %v126, 0.0
  %v166 = vmax.f32 %v128, 0.0
  %v167 = vmax.f32 %v131, 0.0
  %v168 = vmax.f32 %v133, 0.0
  %v169 = vmax.f32 %v136, 0.0
  %v170 = vmax.f32 %v138, 0.0
  %v171 = vmax.f32 %v141, 0.0
  %v172 = vmax.f32 %v143, 0.0
  %v173 = vmax.f32 %v146, 0.0
  %v174 = vmax.f32 %v148, 0.0
  %v175 = vmax.f32 %v151, 0.0
  %v176 = vmax.f32 %v153, 0.0
  %v177 = vmax.f32 %v156, 0.0
  %v178 = vmax.f32 %v158, 0.0
  %v179 = vmax.f32 %v161, 0.0
  %v180 = vmax.f32 %v163, 0.0
  %v181 = vpack.c.bf16 %v165, %v165
  %v182 = vpack.c.bf16 %v166, %v166
  %v183 = vpack.c.bf16 %v167, %v167
  %v184 = vpack.c.bf16 %v168, %v168
  %v185 = vpack.c.bf16 %v169, %v169
  %v186 = vpack.c.bf16 %v170, %v170
  %v187 = vpack.c.bf16 %v171, %v171
  %v188 = vpack.c.bf16 %v172, %v172
  %v189 = vpack.c.bf16 %v173, %v173
  %v190 = vpack.c.bf16 %v174, %v174
  %v191 = vpack.c.bf16 %v175, %v175
  %v192 = vpack.c.bf16 %v176, %v176
  %v193 = vpack.c.bf16 %v177, %v177
  %v194 = vpack.c.bf16 %v178, %v178
  %v195 = vpack.c.bf16 %v179, %v179
  %v196 = vpack.c.bf16 %v180, %v180
  %vm197 = vcmask 191488
  %198 = vst.msk [vmem:[%s3] sm:$0xf] %vm197, %v181
  %199 = vst.msk [vmem:[%s3 + $0x4] sm:$0xf] %vm197, %v182
  %200 = vst.msk [vmem:[%s3 + $0x8] sm:$0xf] %vm197, %v183
  %201 = vst.msk [vmem:[%s3 + $0xc] sm:$0xf] %vm197, %v184
  %202 = vst.msk [vmem:[%s3 + $0x10] sm:$0xf] %vm197, %v185
  %203 = vst.msk [vmem:[%s3 + $0x14] sm:$0xf] %vm197, %v186
  %204 = vst.msk [vmem:[%s3 + $0x18] sm:$0xf] %vm197, %v187
  %205 = vst.msk [vmem:[%s3 + $0x1c] sm:$0xf] %vm197, %v188
  %206 = vst.msk [vmem:[%s3 + $0x20] sm:$0xf] %vm197, %v189
  %207 = vst.msk [vmem:[%s3 + $0x24] sm:$0xf] %vm197, %v190
  %208 = vst.msk [vmem:[%s3 + $0x28] sm:$0xf] %vm197, %v191
  %209 = vst.msk [vmem:[%s3 + $0x2c] sm:$0xf] %vm197, %v192
  %210 = vst.msk [vmem:[%s3 + $0x30] sm:$0xf] %vm197, %v193
  %211 = vst.msk [vmem:[%s3 + $0x34] sm:$0xf] %vm197, %v194
  %212 = vst.msk [vmem:[%s3 + $0x38] sm:$0xf] %vm197, %v195
  %213 = vst.msk [vmem:[%s3 + $0x3c] sm:$0xf] %vm197, %v196
  // Predicated region
  $region14: #{shufflenet_v2_forward.62} parent=0 // pred_check
    _
  $region15: #{shufflenet_v2_forward.62} parent=0 // pred_check_branch
    %215 = sbr.rel (0) target = $region17
  $region16: #{shufflenet_v2_forward.62} parent=0 // pred_region
    _
  $region17: #{shufflenet_v2_forward.62} parent=0 // pred_fallthru
    _
  // Predicated region
  $region18: #{shufflenet_v2_forward.62} parent=0 // pred_check
    _
  $region19: #{shufflenet_v2_forward.62} parent=0 // pred_check_branch
    %217 = sbr.rel (0) target = $region21
  $region20: #{shufflenet_v2_forward.62} parent=0 // pred_region
    _
  $region21: #{shufflenet_v2_forward.62} parent=0 // pred_fallthru
    _

// kernel: shufflenet_v2_forward.59
$region0: #{shufflenet_v2_forward.59}
  #allocation0 [shape = 'u32[]', space=smem, size = 0x4, offset = 0x4, fixed_abs, tag = 'smem constant byte address 0x4 - core index']
  #allocation1 [shape = 'u32[72,128]{1,0:T(1,128)}', space=vmem, size = 0x9000, scoped, tag = 'internal scratch']
  %s0 = inlined_call_operand.vmem [shape: bf16[2,4,9,9,24], index: 0, kind: input, shape index: {}]
  %s1 = inlined_call_operand.vmem [shape: bf16[2,8,8,24], index: 1, kind: output, shape index: {}]
  %s2 = sld [smem:[#allocation0]]
  $region37: #{shufflenet_v2_forward.59} parent=0
    _
  %s4 = ssub.s32 1, %s2
  %s5 = scalar_select 0, %s4, %s2
  loop: start=0, step=1, limit=4
  $region2: #{shufflenet_v2_forward.59} parent=0 // loop_pre_header
    _
  $region3: #{shufflenet_v2_forward.59} parent=0 // loop_header
    %s7 = sphi 0, %s11
    %p8 = scmp.ge.s32.totalorder %s7, 4
    %s17 = sphi 0, %s19
    %s20 = sphi 0, %s17
    %s21 = sphi 0, %s20
    %s37 = sphi 0, %s21
    %s43 = sphi 0, %s45
    %s46 = sphi 0, %s43
    %s47 = sphi 0, %s46
    %s63 = sphi 0, %s47
  $region4: #{shufflenet_v2_forward.59} parent=0 // loop_header_branch
    %10 = sbr.rel (%p8) target = $region8
  $region5: #{shufflenet_v2_forward.59} parent=0 // loop_body
    %s12 = ssub.s32 %s7, 1
    %s13 = ssub.s32 %s7, 2
    %s14 = sadd.s32 %s7, 1
    %s15 = ssub.s32 %s7, %s14
    %p16 = scmp.eq.s32.totalorder %s15, 0
    %s18 = sadd.s32 %s17, 1
    %s19 = scalar_select %p16, %s17, %s18
    %p22 = pneg %p16
    %p23 = scmp.eq.s32.totalorder %s7, 1
    %p24 = por %p22, %p23
    %p25 = scmp.ne.s32.totalorder %s17, %s20
    %p26 = scmp.eq.s32.totalorder %s7, 0
    %p27 = por %p25, %p26
    %p28 = scmp.ne.s32.totalorder %s17, %s20
    %p29 = scmp.eq.s32.totalorder %s12, 1
    %p30 = por %p28, %p29
    %p31 = scmp.ne.s32.totalorder %s20, %s21
    %p32 = scmp.eq.s32.totalorder %s12, 0
    %p33 = por %p31, %p32
    %p34 = scmp.ne.s32.totalorder %s20, %s21
    %p35 = scmp.eq.s32.totalorder %s13, 1
    %p36 = por %p34, %p35
    %p38 = scmp.ne.s32.totalorder %s21, %s37
    %p39 = scmp.eq.s32.totalorder %s13, 0
    %p40 = por %p38, %p39
    %s41 = ssub.s32 %s7, %s14
    %p42 = scmp.eq.s32.totalorder %s41, 0
    %s44 = sadd.s32 %s43, 1
    %s45 = scalar_select %p42, %s43, %s44
    %p48 = pneg %p42
    %p49 = scmp.eq.s32.totalorder %s7, 1
    %p50 = por %p48, %p49
    %p51 = scmp.ne.s32.totalorder %s43, %s46
    %p52 = scmp.eq.s32.totalorder %s7, 0
    %p53 = por %p51, %p52
    %p54 = scmp.ne.s32.totalorder %s43, %s46
    %p55 = scmp.eq.s32.totalorder %s12, 1
    %p56 = por %p54, %p55
    %p57 = scmp.ne.s32.totalorder %s46, %s47
    %p58 = scmp.eq.s32.totalorder %s12, 0
    %p59 = por %p57, %p58
    %p60 = scmp.ne.s32.totalorder %s46, %s47
    %p61 = scmp.eq.s32.totalorder %s13, 1
    %p62 = por %p60, %p61
    %p64 = scmp.ne.s32.totalorder %s47, %s63
    %p65 = scmp.eq.s32.totalorder %s13, 0
    %p66 = por %p64, %p65
    %p67 = scmp.le.s32.totalorder 1, %s7
    %p68 = scmp.lt.s32.totalorder %s7, 3
    %p69 = pnand %p67, %p68
    %p70 = pneg %p69
    // Predicated region
    $region9: #{shufflenet_v2_forward.59} parent=5 // pred_check
      _
    $region10: #{shufflenet_v2_forward.59} parent=5 // pred_check_branch
      %72 = sbr.rel (%p69) target = $region12
    $region11: #{shufflenet_v2_forward.59} parent=5 // pred_region
      %s73 = ssub.s32 %s7, 1
    $region12: #{shufflenet_v2_forward.59} parent=5 // pred_fallthru
      _
    %p74 = scmp.lt.s32.totalorder %s7, 2
    // Predicated region
    $region13: #{shufflenet_v2_forward.59} parent=5 // pred_check
      %p75 = pneg %p74
    $region14: #{shufflenet_v2_forward.59} parent=5 // pred_check_branch
      %77 = sbr.rel (%p75) target = $region16
    $region15: #{shufflenet_v2_forward.59} parent=5 // pred_region
      // Predicated region
      $region17: #{shufflenet_v2_forward.59} parent=15 // pred_check
        %p78 = pneg %p27
      $region18: #{shufflenet_v2_forward.59} parent=15 // pred_check_branch
        %80 = sbr.rel (%p78) target = $region20
      $region19: #{shufflenet_v2_forward.59} parent=15 // pred_region
        %p81 = scmp.lt.s32.totalorder %s7, 1
        %s82 = scalar_select %p81, %s7, 1
        %s83 = smul.addr %s82, 72
        %s84 = smul.addr %s83, 4
        %s85 = scalar_lea.vmem %s0, %s84
      $region20: #{shufflenet_v2_forward.59} parent=15 // pred_fallthru
        _
    $region16: #{shufflenet_v2_forward.59} parent=5 // pred_fallthru
      _
    %p86 = scmp.le.s32.totalorder 1, %s7
    %p87 = scmp.lt.s32.totalorder %s7, 3
    %p88 = pnand %p86, %p87
    %p89 = pneg %p88
    // Predicated region
    $region21: #{shufflenet_v2_forward.59} parent=5 // pred_check
      _
    $region22: #{shufflenet_v2_forward.59} parent=5 // pred_check_branch
      %91 = sbr.rel (%p88) target = $region24
    $region23: #{shufflenet_v2_forward.59} parent=5 // pred_region
      %s92 = ssub.s32 %s7, 1
      %p93 = scmp.lt.s32.totalorder %s12, 1
      %s94 = scalar_select %p93, %s12, 1
      %s95 = smul.addr %s94, 72
      %s96 = smul.addr %s95, 4
      %s97 = scalar_lea.vmem %s0, %s96
      %p98 = pneg %p33
      %p99 = pneg %p30
      %p100 = pneg %p59
      %p101 = pneg %p56
      %p102 = scmp.lt.s32.totalorder %s12, 1
      %s103 = scalar_select %p102, %s12, 1
      %s104 = smul.addr %s103, 8
      %s105 = smul.addr %s104, 4
      %s106 = scalar_lea.vmem %s1, %s105
      %p107 = scmp.lt.s32.totalorder %s12, 1
      %s108 = scalar_select %p107, %s12, 1
      %s109 = smul.addr %s108, 72
      %s110 = smul.addr %s109, 4
      %s111 = scalar_lea.vmem %s0, %s110
      %p112 = scmp.lt.s32.totalorder %s12, 1
      %s113 = scalar_select %p112, %s12, 1
      %s114 = smul.addr %s113, 8
      %s115 = smul.addr %s114, 4
      %s116 = scalar_lea.vmem %s1, %s115
      %v117 = vld [vmem:[%s111] sm:$0xf]
      %v118 = vld [vmem:[%s111 + $0x8] sm:$0xf]
      %v119 = vld [vmem:[%s111 + $0x10] sm:$0xf]
      %v120 = vld [vmem:[%s111 + $0x18] sm:$0xf]
      %v121 = vld [vmem:[%s111 + $0x20] sm:$0xf]
      %v122 = vld [vmem:[%s111 + $0x28] sm:$0xf]
      %v123 = vld [vmem:[%s111 + $0x30] sm:$0xf]
      %v124 = vld [vmem:[%s111 + $0x38] sm:$0xf]
      %s125 = scalar_lea.vmem %s111, 72
      %v126 = vld [vmem:[%s125] sm:$0xf]
      %v127 = vld [vmem:[%s125 + $0x8] sm:$0xf]
      %v128 = vld [vmem:[%s125 + $0x10] sm:$0xf]
      %v129 = vld [vmem:[%s125 + $0x18] sm:$0xf]
      %v130 = vld [vmem:[%s125 + $0x20] sm:$0xf]
      %v131 = vld [vmem:[%s125 + $0x28] sm:$0xf]
      %v132 = vld [vmem:[%s125 + $0x30] sm:$0xf]
      %v133 = vld [vmem:[%s125 + $0x38] sm:$0xf]
      %v134 = vunpack.c.l.bf16 %v117
      %v135 = vunpack.c.l.bf16 %v118
      %v136 = vunpack.c.l.bf16 %v119
      %v137 = vunpack.c.l.bf16 %v120
      %v138 = vunpack.c.l.bf16 %v121
      %v139 = vunpack.c.l.bf16 %v122
      %v140 = vunpack.c.l.bf16 %v123
      %v141 = vunpack.c.l.bf16 %v124
      %v142 = vunpack.c.l.bf16 %v126
      %v143 = vunpack.c.l.bf16 %v127
      %v144 = vunpack.c.l.bf16 %v128
      %v145 = vunpack.c.l.bf16 %v129
      %v146 = vunpack.c.l.bf16 %v130
      %v147 = vunpack.c.l.bf16 %v131
      %v148 = vunpack.c.l.bf16 %v132
      %v149 = vunpack.c.l.bf16 %v133
      %v150 = vmax.f32 %v134, %v142
      %v151 = vmax.f32 %v135, %v143
      %v152 = vmax.f32 %v136, %v144
      %v153 = vmax.f32 %v137, %v145
      %v154 = vmax.f32 %v138, %v146
      %v155 = vmax.f32 %v139, %v147
      %v156 = vmax.f32 %v140, %v148
      %v157 = vmax.f32 %v141, %v149
      %v158 = vpack.c.bf16 %v150, %v150
      %v159 = vpack.c.bf16 %v151, %v151
      %v160 = vpack.c.bf16 %v152, %v152
      %v161 = vpack.c.bf16 %v153, %v153
      %v162 = vpack.c.bf16 %v154, %v154
      %v163 = vpack.c.bf16 %v155, %v155
      %v164 = vpack.c.bf16 %v156, %v156
      %v165 = vpack.c.bf16 %v157, %v157
      %v166 = vld [vmem:[%s111 + $0x4] sm:$0x1]
      %v167 = vld [vmem:[%s111 + $0xc] sm:$0x1]
      %v168 = vld [vmem:[%s111 + $0x14] sm:$0x1]
      %v169 = vld [vmem:[%s111 + $0x1c] sm:$0x1]
      %v170 = vld [vmem:[%s111 + $0x24] sm:$0x1]
      %v171 = vld [vmem:[%s111 + $0x2c] sm:$0x1]
      %v172 = vld [vmem:[%s111 + $0x34] sm:$0x1]
      %v173 = vld [vmem:[%s111 + $0x3c] sm:$0x1]
      %v174 = vunpack.c.l.bf16 %v158
      %v175 = vunpack.c.l.bf16 %v159
      %v176 = vunpack.c.l.bf16 %v160
      %v177 = vunpack.c.l.bf16 %v161
      %v178 = vunpack.c.l.bf16 %v162
      %v179 = vunpack.c.l.bf16 %v163
      %v180 = vunpack.c.l.bf16 %v164
      %v181 = vunpack.c.l.bf16 %v165
      %v182 = vunpack.c.l.bf16 %v166
      %v183 = vunpack.c.l.bf16 %v167
      %v184 = vunpack.c.l.bf16 %v168
      %v185 = vunpack.c.l.bf16 %v169
      %v186 = vunpack.c.l.bf16 %v170
      %v187 = vunpack.c.l.bf16 %v171
      %v188 = vunpack.c.l.bf16 %v172
      %v189 = vunpack.c.l.bf16 %v173
      %vm206 = vcmask 1046528
      %v207 = vrot.slane %v134, 1
      %v208 = vrot.slane %v182, 1
      %v209 = vsel %vm206, %v207, %v208
      %v210 = vrot.slane %v135, 1
      %v211 = vrot.slane %v183, 1
      %v212 = vsel %vm206, %v210, %v211
      %v213 = vrot.slane %v136, 1
      %v214 = vrot.slane %v184, 1
      %v215 = vsel %vm206, %v213, %v214
      %v216 = vrot.slane %v137, 1
      %v217 = vrot.slane %v185, 1
      %v218 = vsel %vm206, %v216, %v217
      %v219 = vrot.slane %v138, 1
      %v220 = vrot.slane %v186, 1
      %v221 = vsel %vm206, %v219, %v220
      %v222 = vrot.slane %v139, 1
      %v223 = vrot.slane %v187, 1
      %v224 = vsel %vm206, %v222, %v223
      %v225 = vrot.slane %v140, 1
      %v226 = vrot.slane %v188, 1
      %v227 = vsel %vm206, %v225, %v226
      %v228 = vrot.slane %v141, 1
      %v229 = vrot.slane %v189, 1
      %v230 = vsel %vm206, %v228, %v229
      %v239 = vmax.f32 %v174, %v209
      %v240 = vmax.f32 %v175, %v212
      %v241 = vmax.f32 %v176, %v215
      %v242 = vmax.f32 %v177, %v218
      %v243 = vmax.f32 %v178, %v221
      %v244 = vmax.f32 %v179, %v224
      %v245 = vmax.f32 %v180, %v227
      %v246 = vmax.f32 %v181, %v230
      %v247 = vpack.c.bf16 %v239, %v239
      %v248 = vpack.c.bf16 %v240, %v240
      %v249 = vpack.c.bf16 %v241, %v241
      %v250 = vpack.c.bf16 %v242, %v242
      %v251 = vpack.c.bf16 %v243, %v243
      %v252 = vpack.c.bf16 %v244, %v244
      %v253 = vpack.c.bf16 %v245, %v245
      %v254 = vpack.c.bf16 %v246, %v246
      %s255 = scalar_lea.vmem %s111, 144
      %v256 = vld [vmem:[%s255] sm:$0xf]
      %v257 = vld [vmem:[%s255 + $0x8] sm:$0xf]
      %v258 = vld [vmem:[%s255 + $0x10] sm:$0xf]
      %v259 = vld [vmem:[%s255 + $0x18] sm:$0xf]
      %v260 = vld [vmem:[%s255 + $0x20] sm:$0xf]
      %v261 = vld [vmem:[%s255 + $0x28] sm:$0xf]
      %v262 = vld [vmem:[%s255 + $0x30] sm:$0xf]
      %v263 = vld [vmem:[%s255 + $0x38] sm:$0xf]
      %v264 = vunpack.c.l.bf16 %v247
      %v265 = vunpack.c.l.bf16 %v248
      %v266 = vunpack.c.l.bf16 %v249
      %v267 = vunpack.c.l.bf16 %v250
      %v268 = vunpack.c.l.bf16 %v251
      %v269 = vunpack.c.l.bf16 %v252
      %v270 = vunpack.c.l.bf16 %v253
      %v271 = vunpack.c.l.bf16 %v254
      %v272 = vunpack.c.l.bf16 %v256
      %v273 = vunpack.c.l.bf16 %v257
      %v274 = vunpack.c.l.bf16 %v258
      %v275 = vunpack.c.l.bf16 %v259
      %v276 = vunpack.c.l.bf16 %v260
      %v277 = vunpack.c.l.bf16 %v261
      %v278 = vunpack.c.l.bf16 %v262
      %v279 = vunpack.c.l.bf16 %v263
      %v280 = vmax.f32 %v264, %v272
      %v281 = vmax.f32 %v265, %v273
      %v282 = vmax.f32 %v266, %v274
      %v283 = vmax.f32 %v267, %v275
      %v284 = vmax.f32 %v268, %v276
      %v285 = vmax.f32 %v269, %v277
      %v286 = vmax.f32 %v270, %v278
      %v287 = vmax.f32 %v271, %v279
      %v288 = vpack.c.bf16 %v280, %v280
      %v289 = vpack.c.bf16 %v281, %v281
      %v290 = vpack.c.bf16 %v282, %v282
      %v291 = vpack.c.bf16 %v283, %v283
      %v292 = vpack.c.bf16 %v284, %v284
      %v293 = vpack.c.bf16 %v285, %v285
      %v294 = vpack.c.bf16 %v286, %v286
      %v295 = vpack.c.bf16 %v287, %v287
      %s296 = scalar_lea.vmem %s111, 216
      %v297 = vld [vmem:[%s296] sm:$0xf]
      %v298 = vld [vmem:[%s296 + $0x8] sm:$0xf]
      %v299 = vld [vmem:[%s296 + $0x10] sm:$0xf]
      %v300 = vld [vmem:[%s296 + $0x18] sm:$0xf]
      %v301 = vld [vmem:[%s296 + $0x20] sm:$0xf]
      %v302 = vld [vmem:[%s296 + $0x28] sm:$0xf]
      %v303 = vld [vmem:[%s296 + $0x30] sm:$0xf]
      %v304 = vld [vmem:[%s296 + $0x38] sm:$0xf]
      %v305 = vunpack.c.l.bf16 %v288
      %v306 = vunpack.c.l.bf16 %v289
      %v307 = vunpack.c.l.bf16 %v290
      %v308 = vunpack.c.l.bf16 %v291
      %v309 = vunpack.c.l.bf16 %v292
      %v310 = vunpack.c.l.bf16 %v293
      %v311 = vunpack.c.l.bf16 %v294
      %v312 = vunpack.c.l.bf16 %v295
      %v313 = vunpack.c.l.bf16 %v297
      %v314 = vunpack.c.l.bf16 %v298
      %v315 = vunpack.c.l.bf16 %v299
      %v316 = vunpack.c.l.bf16 %v300
      %v317 = vunpack.c.l.bf16 %v301
      %v318 = vunpack.c.l.bf16 %v302
      %v319 = vunpack.c.l.bf16 %v303
      %v320 = vunpack.c.l.bf16 %v304
      %v321 = vmax.f32 %v305, %v313
      %v322 = vmax.f32 %v306, %v314
      %v323 = vmax.f32 %v307, %v315
      %v324 = vmax.f32 %v308, %v316
      %v325 = vmax.f32 %v309, %v317
      %v326 = vmax.f32 %v310, %v318
      %v327 = vmax.f32 %v311, %v319
      %v328 = vmax.f32 %v312, %v320
      %v329 = vpack.c.bf16 %v321, %v321
      %v330 = vpack.c.bf16 %v322, %v322
      %v331 = vpack.c.bf16 %v323, %v323
      %v332 = vpack.c.bf16 %v324, %v324
      %v333 = vpack.c.bf16 %v325, %v325
      %v334 = vpack.c.bf16 %v326, %v326
      %v335 = vpack.c.bf16 %v327, %v327
      %v336 = vpack.c.bf16 %v328, %v328
      %v337 = vld [vmem:[%s255 + $0x4] sm:$0x1]
      %v338 = vld [vmem:[%s255 + $0xc] sm:$0x1]
      %v339 = vld [vmem:[%s255 + $0x14] sm:$0x1]
      %v340 = vld [vmem:[%s255 + $0x1c] sm:$0x1]
      %v341 = vld [vmem:[%s255 + $0x24] sm:$0x1]
      %v342 = vld [vmem:[%s255 + $0x2c] sm:$0x1]
      %v343 = vld [vmem:[%s255 + $0x34] sm:$0x1]
      %v344 = vld [vmem:[%s255 + $0x3c] sm:$0x1]
      %v345 = vunpack.c.l.bf16 %v329
      %v346 = vunpack.c.l.bf16 %v330
      %v347 = vunpack.c.l.bf16 %v331
      %v348 = vunpack.c.l.bf16 %v332
      %v349 = vunpack.c.l.bf16 %v333
      %v350 = vunpack.c.l.bf16 %v334
      %v351 = vunpack.c.l.bf16 %v335
      %v352 = vunpack.c.l.bf16 %v336
      %v353 = vunpack.c.l.bf16 %v337
      %v354 = vunpack.c.l.bf16 %v338
      %v355 = vunpack.c.l.bf16 %v339
      %v356 = vunpack.c.l.bf16 %v340
      %v357 = vunpack.c.l.bf16 %v341
      %v358 = vunpack.c.l.bf16 %v342
      %v359 = vunpack.c.l.bf16 %v343
      %v360 = vunpack.c.l.bf16 %v344
      %v377 = vrot.slane %v272, 1
      %v378 = vrot.slane %v353, 1
      %v379 = vsel %vm206, %v377, %v378
      %v380 = vrot.slane %v273, 1
      %v381 = vrot.slane %v354, 1
      %v382 = vsel %vm206, %v380, %v381
      %v383 = vrot.slane %v274, 1
      %v384 = vrot.slane %v355, 1
      %v385 = vsel %vm206, %v383, %v384
      %v386 = vrot.slane %v275, 1
      %v387 = vrot.slane %v356, 1
      %v388 = vsel %vm206, %v386, %v387
      %v389 = vrot.slane %v276, 1
      %v390 = vrot.slane %v357, 1
      %v391 = vsel %vm206, %v389, %v390
      %v392 = vrot.slane %v277, 1
      %v393 = vrot.slane %v358, 1
      %v394 = vsel %vm206, %v392, %v393
      %v395 = vrot.slane %v278, 1
      %v396 = vrot.slane %v359, 1
      %v397 = vsel %vm206, %v395, %v396
      %v398 = vrot.slane %v279, 1
      %v399 = vrot.slane %v360, 1
      %v400 = vsel %vm206, %v398, %v399
      %v409 = vmax.f32 %v345, %v379
      %v410 = vmax.f32 %v346, %v382
      %v411 = vmax.f32 %v347, %v385
      %v412 = vmax.f32 %v348, %v388
      %v413 = vmax.f32 %v349, %v391
      %v414 = vmax.f32 %v350, %v394
      %v415 = vmax.f32 %v351, %v397
      %v416 = vmax.f32 %v352, %v400
      %v417 = vpack.c.bf16 %v409, %v409
      %v418 = vpack.c.bf16 %v410, %v410
      %v419 = vpack.c.bf16 %v411, %v411
      %v420 = vpack.c.bf16 %v412, %v412
      %v421 = vpack.c.bf16 %v413, %v413
      %v422 = vpack.c.bf16 %v414, %v414
      %v423 = vpack.c.bf16 %v415, %v415
      %v424 = vpack.c.bf16 %v416, %v416
      %s425 = scalar_lea.vmem %s111, 8
      %v426 = vld [vmem:[%s425] sm:$0xf]
      %v427 = vld [vmem:[%s425 + $0x8] sm:$0xf]
      %v428 = vld [vmem:[%s425 + $0x10] sm:$0xf]
      %v429 = vld [vmem:[%s425 + $0x18] sm:$0xf]
      %v430 = vld [vmem:[%s425 + $0x20] sm:$0xf]
      %v431 = vld [vmem:[%s425 + $0x28] sm:$0xf]
      %v432 = vld [vmem:[%s425 + $0x30] sm:$0xf]
      %v433 = vld [vmem:[%s425 + $0x38] sm:$0xf]
      %v434 = vunpack.c.l.bf16 %v417
      %v435 = vunpack.c.l.bf16 %v418
      %v436 = vunpack.c.l.bf16 %v419
      %v437 = vunpack.c.l.bf16 %v420
      %v438 = vunpack.c.l.bf16 %v421
      %v439 = vunpack.c.l.bf16 %v422
      %v440 = vunpack.c.l.bf16 %v423
      %v441 = vunpack.c.l.bf16 %v424
      %v442 = vunpack.c.l.bf16 %v426
      %v443 = vunpack.c.l.bf16 %v427
      %v444 = vunpack.c.l.bf16 %v428
      %v445 = vunpack.c.l.bf16 %v429
      %v446 = vunpack.c.l.bf16 %v430
      %v447 = vunpack.c.l.bf16 %v431
      %v448 = vunpack.c.l.bf16 %v432
      %v449 = vunpack.c.l.bf16 %v433
      %v450 = vmax.f32 %v434, %v442
      %v451 = vmax.f32 %v435, %v443
      %v452 = vmax.f32 %v436, %v444
      %v453 = vmax.f32 %v437, %v445
      %v454 = vmax.f32 %v438, %v446
      %v455 = vmax.f32 %v439, %v447
      %v456 = vmax.f32 %v440, %v448
      %v457 = vmax.f32 %v441, %v449
      %v458 = vpack.c.bf16 %v450, %v450
      %v459 = vpack.c.bf16 %v451, %v451
      %v460 = vpack.c.bf16 %v452, %v452
      %v461 = vpack.c.bf16 %v453, %v453
      %v462 = vpack.c.bf16 %v454, %v454
      %v463 = vpack.c.bf16 %v455, %v455
      %v464 = vpack.c.bf16 %v456, %v456
      %v465 = vpack.c.bf16 %v457, %v457
      %s466 = scalar_lea.vmem %s111, 80
      %v467 = vld [vmem:[%s466] sm:$0xf]
      %v468 = vld [vmem:[%s466 + $0x8] sm:$0xf]
      %v469 = vld [vmem:[%s466 + $0x10] sm:$0xf]
      %v470 = vld [vmem:[%s466 + $0x18] sm:$0xf]
      %v471 = vld [vmem:[%s466 + $0x20] sm:$0xf]
      %v472 = vld [vmem:[%s466 + $0x28] sm:$0xf]
      %v473 = vld [vmem:[%s466 + $0x30] sm:$0xf]
      %v474 = vld [vmem:[%s466 + $0x38] sm:$0xf]
      %v475 = vunpack.c.l.bf16 %v458
      %v476 = vunpack.c.l.bf16 %v459
      %v477 = vunpack.c.l.bf16 %v460
      %v478 = vunpack.c.l.bf16 %v461
      %v479 = vunpack.c.l.bf16 %v462
      %v480 = vunpack.c.l.bf16 %v463
      %v481 = vunpack.c.l.bf16 %v464
      %v482 = vunpack.c.l.bf16 %v465
      %v483 = vunpack.c.l.bf16 %v467
      %v484 = vunpack.c.l.bf16 %v468
      %v485 = vunpack.c.l.bf16 %v469
      %v486 = vunpack.c.l.bf16 %v470
      %v487 = vunpack.c.l.bf16 %v471
      %v488 = vunpack.c.l.bf16 %v472
      %v489 = vunpack.c.l.bf16 %v473
      %v490 = vunpack.c.l.bf16 %v474
      %v491 = vmax.f32 %v475, %v483
      %v492 = vmax.f32 %v476, %v484
      %v493 = vmax.f32 %v477, %v485
      %v494 = vmax.f32 %v478, %v486
      %v495 = vmax.f32 %v479, %v487
      %v496 = vmax.f32 %v480, %v488
      %v497 = vmax.f32 %v481, %v489
      %v498 = vmax.f32 %v482, %v490
      %v499 = vpack.c.bf16 %v491, %v491
      %v500 = vpack.c.bf16 %v492, %v492
      %v501 = vpack.c.bf16 %v493, %v493
      %v502 = vpack.c.bf16 %v494, %v494
      %v503 = vpack.c.bf16 %v495, %v495
      %v504 = vpack.c.bf16 %v496, %v496
      %v505 = vpack.c.bf16 %v497, %v497
      %v506 = vpack.c.bf16 %v498, %v498
      %v507 = vld [vmem:[%s425 + $0x4] sm:$0x1]
      %v508 = vld [vmem:[%s425 + $0xc] sm:$0x1]
      %v509 = vld [vmem:[%s425 + $0x14] sm:$0x1]
      %v510 = vld [vmem:[%s425 + $0x1c] sm:$0x1]
      %v511 = vld [vmem:[%s425 + $0x24] sm:$0x1]
      %v512 = vld [vmem:[%s425 + $0x2c] sm:$0x1]
      %v513 = vld [vmem:[%s425 + $0x34] sm:$0x1]
      %v514 = vld [vmem:[%s425 + $0x3c] sm:$0x1]
      %v515 = vunpack.c.l.bf16 %v499
      %v516 = vunpack.c.l.bf16 %v500
      %v517 = vunpack.c.l.bf16 %v501
      %v518 = vunpack.c.l.bf16 %v502
      %v519 = vunpack.c.l.bf16 %v503
      %v520 = vunpack.c.l.bf16 %v504
      %v521 = vunpack.c.l.bf16 %v505
      %v522 = vunpack.c.l.bf16 %v506
      %v523 = vunpack.c.l.bf16 %v507
      %v524 = vunpack.c.l.bf16 %v508
      %v525 = vunpack.c.l.bf16 %v509
      %v526 = vunpack.c.l.bf16 %v510
      %v527 = vunpack.c.l.bf16 %v511
      %v528 = vunpack.c.l.bf16 %v512
      %v529 = vunpack.c.l.bf16 %v513
      %v530 = vunpack.c.l.bf16 %v514
      %v547 = vrot.slane %v442, 1
      %v548 = vrot.slane %v523, 1
      %v549 = vsel %vm206, %v547, %v548
      %v550 = vrot.slane %v443, 1
      %v551 = vrot.slane %v524, 1
      %v552 = vsel %vm206, %v550, %v551
      %v553 = vrot.slane %v444, 1
      %v554 = vrot.slane %v525, 1
      %v555 = vsel %vm206, %v553, %v554
      %v556 = vrot.slane %v445, 1
      %v557 = vrot.slane %v526, 1
      %v558 = vsel %vm206, %v556, %v557
      %v559 = vrot.slane %v446, 1
      %v560 = vrot.slane %v527, 1
      %v561 = vsel %vm206, %v559, %v560
      %v562 = vrot.slane %v447, 1
      %v563 = vrot.slane %v528, 1
      %v564 = vsel %vm206, %v562, %v563
      %v565 = vrot.slane %v448, 1
      %v566 = vrot.slane %v529, 1
      %v567 = vsel %vm206, %v565, %v566
      %v568 = vrot.slane %v449, 1
      %v569 = vrot.slane %v530, 1
      %v570 = vsel %vm206, %v568, %v569
      %v579 = vmax.f32 %v515, %v549
      %v580 = vmax.f32 %v516, %v552
      %v581 = vmax.f32 %v517, %v555
      %v582 = vmax.f32 %v518, %v558
      %v583 = vmax.f32 %v519, %v561
      %v584 = vmax.f32 %v520, %v564
      %v585 = vmax.f32 %v521, %v567
      %v586 = vmax.f32 %v522, %v570
      %v587 = vpack.c.bf16 %v579, %v579
      %v588 = vpack.c.bf16 %v580, %v580
      %v589 = vpack.c.bf16 %v581, %v581
      %v590 = vpack.c.bf16 %v582, %v582
      %v591 = vpack.c.bf16 %v583, %v583
      %v592 = vpack.c.bf16 %v584, %v584
      %v593 = vpack.c.bf16 %v585, %v585
      %v594 = vpack.c.bf16 %v586, %v586
      %vm595 = vcmask 191488
      %596 = vst.msk [vmem:[%s116] sm:$0xf] %vm595, %v587
      %597 = vst.msk [vmem:[%s116 + $0x4] sm:$0xf] %vm595, %v588
      %598 = vst.msk [vmem:[%s116 + $0x8] sm:$0xf] %vm595, %v589
      %599 = vst.msk [vmem:[%s116 + $0xc] sm:$0xf] %vm595, %v590
      %600 = vst.msk [vmem:[%s116 + $0x10] sm:$0xf] %vm595, %v591
      %601 = vst.msk [vmem:[%s116 + $0x14] sm:$0xf] %vm595, %v592
      %602 = vst.msk [vmem:[%s116 + $0x18] sm:$0xf] %vm595, %v593
      %603 = vst.msk [vmem:[%s116 + $0x1c] sm:$0xf] %vm595, %v594
      %p604 = scmp.lt.s32.totalorder %s12, 1
      %s605 = scalar_select %p604, %s12, 1
      %s606 = smul.addr %s605, 8
      %s607 = smul.addr %s606, 4
      %s608 = scalar_lea.vmem %s1, %s607
      // Predicated region
      $region25: #{shufflenet_v2_forward.59} parent=23 // pred_check
        %p609 = pneg %p56
      $region26: #{shufflenet_v2_forward.59} parent=23 // pred_check_branch
        %611 = sbr.rel (%p609) target = $region28
      $region27: #{shufflenet_v2_forward.59} parent=23 // pred_region
        _
      $region28: #{shufflenet_v2_forward.59} parent=23 // pred_fallthru
        _
    $region24: #{shufflenet_v2_forward.59} parent=5 // pred_fallthru
      _
    %p612 = scmp.le.s32.totalorder 2, %s7
    // Predicated region
    $region29: #{shufflenet_v2_forward.59} parent=5 // pred_check
      %p613 = pneg %p612
    $region30: #{shufflenet_v2_forward.59} parent=5 // pred_check_branch
      %615 = sbr.rel (%p613) target = $region32
    $region31: #{shufflenet_v2_forward.59} parent=5 // pred_region
      %s616 = ssub.s32 %s7, 2
      // Predicated region
      $region33: #{shufflenet_v2_forward.59} parent=31 // pred_check
        %p617 = pneg %p62
      $region34: #{shufflenet_v2_forward.59} parent=31 // pred_check_branch
        %619 = sbr.rel (%p617) target = $region36
      $region35: #{shufflenet_v2_forward.59} parent=31 // pred_region
        %p620 = scmp.lt.s32.totalorder %s13, 1
        %s621 = scalar_select %p620, %s13, 1
        %s622 = smul.addr %s621, 8
        %s623 = smul.addr %s622, 4
        %s624 = scalar_lea.vmem %s1, %s623
      $region36: #{shufflenet_v2_forward.59} parent=31 // pred_fallthru
        _
    $region32: #{shufflenet_v2_forward.59} parent=5 // pred_fallthru
      _
  $region6: #{shufflenet_v2_forward.59} parent=0 // loop_footer
    %s11 = sadd.s32 1, %s7
  $region7: #{shufflenet_v2_forward.59} parent=0 // loop_footer_branch
    %6 = sbr.rel target = $region3
  $region8: #{shufflenet_v2_forward.59} parent=0 // loop_exit
    _

// kernel: shufflenet_v2_forward.64
$region0: #{shufflenet_v2_forward.64}
  #allocation0 [shape = 'u32[]', space=smem, size = 0x4, offset = 0x4, fixed_abs, tag = 'smem constant byte address 0x4 - core index']
  #allocation1 [shape = 'u32[72,128]{1,0:T(1,128)}', space=vmem, size = 0x9000, scoped, tag = 'internal scratch']
  %s0 = inlined_call_operand.vmem [shape: bf16[32,24], index: 0, kind: input, shape index: {}]
  %s1 = inlined_call_operand.vmem [shape: bf16[24,24], index: 1, kind: input, shape index: {}]
  %s2 = inlined_call_operand.vmem [shape: f32[1,24], index: 2, kind: input, shape index: {}]
  %s3 = inlined_call_operand.vmem [shape: bf16[32,24], index: 3, kind: output, shape index: {}]
  %s4 = sld [smem:[#allocation0]]
  $region22: #{shufflenet_v2_forward.64} parent=0
    _
  %s6 = ssub.s32 1, %s4
  %s7 = scalar_select 0, %s6, %s4
  // Predicated region
  $region2: #{shufflenet_v2_forward.64} parent=0 // pred_check
    _
  $region3: #{shufflenet_v2_forward.64} parent=0 // pred_check_branch
    %9 = sbr.rel (0) target = $region5
  $region4: #{shufflenet_v2_forward.64} parent=0 // pred_region
    _
  $region5: #{shufflenet_v2_forward.64} parent=0 // pred_fallthru
    _
  // Predicated region
  $region6: #{shufflenet_v2_forward.64} parent=0 // pred_check
    _
  $region7: #{shufflenet_v2_forward.64} parent=0 // pred_check_branch
    %11 = sbr.rel (0) target = $region9
  $region8: #{shufflenet_v2_forward.64} parent=0 // pred_region
    _
  $region9: #{shufflenet_v2_forward.64} parent=0 // pred_fallthru
    _
  // Predicated region
  $region10: #{shufflenet_v2_forward.64} parent=0 // pred_check
    _
  $region11: #{shufflenet_v2_forward.64} parent=0 // pred_check_branch
    %13 = sbr.rel (0) target = $region13
  $region12: #{shufflenet_v2_forward.64} parent=0 // pred_region
    _
  $region13: #{shufflenet_v2_forward.64} parent=0 // pred_fallthru
    _
  %v15 = vld [vmem:[%s0] sm:$0xf]
  %v16 = vld [vmem:[%s0 + $0x4] sm:$0xf]
  %v17 = vld [vmem:[%s0 + $0x8] sm:$0xf]
  %v18 = vld [vmem:[%s0 + $0xc] sm:$0xf]
  %v19 = vld [vmem:[%s1] sm:$0xf]
  %v20 = vld [vmem:[%s1 + $0x4] sm:$0xf]
  %v21 = vld [vmem:[%s1 + $0x8] sm:$0xf]
  %v22 = vld [vmem:[%s2] sm:$0x1]
  %v24 = vperm.slane %v22, 0
  %v30 = vunpack.c.l.b16 %v15
  %v31 = vunpack.c.l.b16 %v16
  %v32 = vunpack.c.l.b16 %v17
  %v33 = vunpack.c.l.b16 %v18
  %v34 = vpack.c.b16 %v31, %v30
  %v35 = vpack.c.b16 %v33, %v32
  %v39 = vunpack.c.l.b16 %v19
  %v40 = vunpack.c.l.b16 %v20
  %v41 = vunpack.c.l.b16 %v21
  %v42 = vpack.c.b16 %v40, %v39
  %v43 = vpack.c.b16 %v41, %v41
  %vm45 = vcmask 195584
  %v47 = vsel %vm45, %v34, 0
  %v50 = vsel %vm45, %v35, 0
  %vm52 = vcmask 1043456
  %v54 = vsel %vm52, %v43, 0
  %56 = vmatpush.bf16.msra.mxu0 0
  %57 = vmatpush.bf16.msra.mxu0 0
  %58 = vmatpush.bf16.msra.mxu0 0
  %59 = vmatpush.bf16.msra.mxu0 0
  %60 = vmatpush.bf16.msra.mxu0 0
  %61 = vmatpush.bf16.msra.mxu0 0
  %62 = vmatpush.bf16.msra.mxu0 %v54
  %63 = vmatpush.bf16.msra.mxu0 %v42
  %64 = vmatmul.bf16.gmra.mxu0 %v47
  %v65 = vpop.f32.mrf.mxu0
  %v66 = vadd.f32 %v24, %v65
  %v67 = vpop.f32.mrf.mxu0
  %v68 = vadd.f32 %v24, %v67
  %69 = vmatmul.bf16.gmra.mxu0 %v50
  %v70 = vpop.f32.mrf.mxu0
  %v71 = vadd.f32 %v24, %v70
  %v72 = vpop.f32.mrf.mxu0
  %v73 = vadd.f32 %v24, %v72
  %74 = vdwg.mxu0
  %v75 = vmax.f32 %v66, 0.0
  %v76 = vmax.f32 %v68, 0.0
  %v77 = vmax.f32 %v71, 0.0
  %v78 = vmax.f32 %v73, 0.0
  %v79 = vpack.c.bf16 %v75, %v75
  %v80 = vpack.c.bf16 %v76, %v76
  %v81 = vpack.c.bf16 %v77, %v77
  %v82 = vpack.c.bf16 %v78, %v78
  %vm83 = vcmask 191488
  %84 = vst.msk [vmem:[%s3] sm:$0xf] %vm83, %v79
  %85 = vst.msk [vmem:[%s3 + $0x4] sm:$0xf] %vm83, %v80
  %86 = vst.msk [vmem:[%s3 + $0x8] sm:$0xf] %vm83, %v81
  %87 = vst.msk [vmem:[%s3 + $0xc] sm:$0xf] %vm83, %v82
  // Predicated region
  $region14: #{shufflenet_v2_forward.64} parent=0 // pred_check
    _
  $region15: #{shufflenet_v2_forward.64} parent=0 // pred_check_branch
    %89 = sbr.rel (0) target = $region17
  $region16: #{shufflenet_v2_forward.64} parent=0 // pred_region
    _
  $region17: #{shufflenet_v2_forward.64} parent=0 // pred_fallthru
    _
  // Predicated region
  $region18: #{shufflenet_v2_forward.64} parent=0 // pred_check
    _
  $region19: #{shufflenet_v2_forward.64} parent=0 // pred_check_branch
    %91 = sbr.rel (0) target = $region21
  $region20: #{shufflenet_v2_forward.64} parent=0 // pred_region
    _
  $region21: #{shufflenet_v2_forward.64} parent=0 // pred_fallthru
    _

// kernel: shufflenet_v2_forward.63
$region0: #{shufflenet_v2_forward.63}
  #allocation0 [shape = 'u32[]', space=smem, size = 0x4, offset = 0x4, fixed_abs, tag = 'smem constant byte address 0x4 - core index']
  #allocation1 [shape = 'u32[72,128]{1,0:T(1,128)}', space=vmem, size = 0x9000, scoped, tag = 'internal scratch']
  %s0 = inlined_call_operand.vmem [shape: bf16[2,4,5,5,24], index: 0, kind: input, shape index: {}]
  %s1 = inlined_call_operand.vmem [shape: f32[9,1,1,24], index: 1, kind: input, shape index: {}]
  %s2 = inlined_call_operand.vmem [shape: f32[1,1,24], index: 2, kind: input, shape index: {}]
  %s3 = inlined_call_operand.vmem [shape: bf16[2,4,4,24], index: 3, kind: output, shape index: {}]
  %s4 = sld [smem:[#allocation0]]
  $region45: #{shufflenet_v2_forward.63} parent=0
    _
  %s6 = ssub.s32 1, %s4
  %s7 = scalar_select 0, %s6, %s4
  loop: start=0, step=1, limit=4
  $region2: #{shufflenet_v2_forward.63} parent=0 // loop_pre_header
    _
  $region3: #{shufflenet_v2_forward.63} parent=0 // loop_header
    %s9 = sphi 0, %s13
    %p10 = scmp.ge.s32.totalorder %s9, 4
    %s19 = sphi 0, %s21
    %s22 = sphi 0, %s19
    %s23 = sphi 0, %s22
    %s39 = sphi 0, %s23
    %s43 = sphi 0, %s43
    %s45 = sphi 0, %s43
    %s46 = sphi 0, %s45
    %s60 = sphi 0, %s46
    %s64 = sphi 0, %s64
    %s66 = sphi 0, %s64
    %s67 = sphi 0, %s66
    %s81 = sphi 0, %s67
    %s87 = sphi 0, %s89
    %s90 = sphi 0, %s87
    %s91 = sphi 0, %s90
    %s107 = sphi 0, %s91
  $region4: #{shufflenet_v2_forward.63} parent=0 // loop_header_branch
    %12 = sbr.rel (%p10) target = $region8
  $region5: #{shufflenet_v2_forward.63} parent=0 // loop_body
    %s14 = ssub.s32 %s9, 1
    %s15 = ssub.s32 %s9, 2
    %s16 = sadd.s32 %s9, 1
    %s17 = ssub.s32 %s9, %s16
    %p18 = scmp.eq.s32.totalorder %s17, 0
    %s20 = sadd.s32 %s19, 1
    %s21 = scalar_select %p18, %s19, %s20
    %p24 = pneg %p18
    %p25 = scmp.eq.s32.totalorder %s9, 1
    %p26 = por %p24, %p25
    %p27 = scmp.ne.s32.totalorder %s19, %s22
    %p28 = scmp.eq.s32.totalorder %s9, 0
    %p29 = por %p27, %p28
    %p30 = scmp.ne.s32.totalorder %s19, %s22
    %p31 = scmp.eq.s32.totalorder %s14, 1
    %p32 = por %p30, %p31
    %p33 = scmp.ne.s32.totalorder %s22, %s23
    %p34 = scmp.eq.s32.totalorder %s14, 0
    %p35 = por %p33, %p34
    %p36 = scmp.ne.s32.totalorder %s22, %s23
    %p37 = scmp.eq.s32.totalorder %s15, 1
    %p38 = por %p36, %p37
    %p40 = scmp.ne.s32.totalorder %s23, %s39
    %p41 = scmp.eq.s32.totalorder %s15, 0
    %p42 = por %p40, %p41
    %s44 = sadd.s32 %s43, 1
    %p47 = scmp.eq.s32.totalorder %s9, 1
    %p48 = scmp.ne.s32.totalorder %s43, %s45
    %p49 = scmp.eq.s32.totalorder %s9, 0
    %p50 = por %p48, %p49
    %p51 = scmp.ne.s32.totalorder %s43, %s45
    %p52 = scmp.eq.s32.totalorder %s14, 1
    %p53 = por %p51, %p52
    %p54 = scmp.ne.s32.totalorder %s45, %s46
    %p55 = scmp.eq.s32.totalorder %s14, 0
    %p56 = por %p54, %p55
    %p57 = scmp.ne.s32.totalorder %s45, %s46
    %p58 = scmp.eq.s32.totalorder %s15, 1
    %p59 = por %p57, %p58
    %p61 = scmp.ne.s32.totalorder %s46, %s60
    %p62 = scmp.eq.s32.totalorder %s15, 0
    %p63 = por %p61, %p62
    %s65 = sadd.s32 %s64, 1
    %p68 = scmp.eq.s32.totalorder %s9, 1
    %p69 = scmp.ne.s32.totalorder %s64, %s66
    %p70 = scmp.eq.s32.totalorder %s9, 0
    %p71 = por %p69, %p70
    %p72 = scmp.ne.s32.totalorder %s64, %s66
    %p73 = scmp.eq.s32.totalorder %s14, 1
    %p74 = por %p72, %p73
    %p75 = scmp.ne.s32.totalorder %s66, %s67
    %p76 = scmp.eq.s32.totalorder %s14, 0
    %p77 = por %p75, %p76
    %p78 = scmp.ne.s32.totalorder %s66, %s67
    %p79 = scmp.eq.s32.totalorder %s15, 1
    %p80 = por %p78, %p79
    %p82 = scmp.ne.s32.totalorder %s67, %s81
    %p83 = scmp.eq.s32.totalorder %s15, 0
    %p84 = por %p82, %p83
    %s85 = ssub.s32 %s9, %s16
    %p86 = scmp.eq.s32.totalorder %s85, 0
    %s88 = sadd.s32 %s87, 1
    %s89 = scalar_select %p86, %s87, %s88
    %p92 = pneg %p86
    %p93 = scmp.eq.s32.totalorder %s9, 1
    %p94 = por %p92, %p93
    %p95 = scmp.ne.s32.totalorder %s87, %s90
    %p96 = scmp.eq.s32.totalorder %s9, 0
    %p97 = por %p95, %p96
    %p98 = scmp.ne.s32.totalorder %s87, %s90
    %p99 = scmp.eq.s32.totalorder %s14, 1
    %p100 = por %p98, %p99
    %p101 = scmp.ne.s32.totalorder %s90, %s91
    %p102 = scmp.eq.s32.totalorder %s14, 0
    %p103 = por %p101, %p102
    %p104 = scmp.ne.s32.totalorder %s90, %s91
    %p105 = scmp.eq.s32.totalorder %s15, 1
    %p106 = por %p104, %p105
    %p108 = scmp.ne.s32.totalorder %s91, %s107
    %p109 = scmp.eq.s32.totalorder %s15, 0
    %p110 = por %p108, %p109
    %p111 = scmp.le.s32.totalorder 1, %s9
    %p112 = scmp.lt.s32.totalorder %s9, 3
    %p113 = pnand %p111, %p112
    %p114 = pneg %p113
    // Predicated region
    $region9: #{shufflenet_v2_forward.63} parent=5 // pred_check
      _
    $region10: #{shufflenet_v2_forward.63} parent=5 // pred_check_branch
      %116 = sbr.rel (%p113) target = $region12
    $region11: #{shufflenet_v2_forward.63} parent=5 // pred_region
      %s117 = ssub.s32 %s9, 1
      // Predicated region
      $region13: #{shufflenet_v2_forward.63} parent=11 // pred_check
        %p118 = pneg %p56
      $region14: #{shufflenet_v2_forward.63} parent=11 // pred_check_branch
        %120 = sbr.rel (%p118) target = $region16
      $region15: #{shufflenet_v2_forward.63} parent=11 // pred_region
        _
      $region16: #{shufflenet_v2_forward.63} parent=11 // pred_fallthru
        _
      // Predicated region
      $region17: #{shufflenet_v2_forward.63} parent=11 // pred_check
        %p121 = pneg %p77
      $region18: #{shufflenet_v2_forward.63} parent=11 // pred_check_branch
        %123 = sbr.rel (%p121) target = $region20
      $region19: #{shufflenet_v2_forward.63} parent=11 // pred_region
        _
      $region20: #{shufflenet_v2_forward.63} parent=11 // pred_fallthru
        _
    $region12: #{shufflenet_v2_forward.63} parent=5 // pred_fallthru
      _
    %p124 = scmp.lt.s32.totalorder %s9, 2
    // Predicated region
    $region21: #{shufflenet_v2_forward.63} parent=5 // pred_check
      %p125 = pneg %p124
    $region22: #{shufflenet_v2_forward.63} parent=5 // pred_check_branch
      %127 = sbr.rel (%p125) target = $region24
    $region23: #{shufflenet_v2_forward.63} parent=5 // pred_region
      // Predicated region
      $region25: #{shufflenet_v2_forward.63} parent=23 // pred_check
        %p128 = pneg %p29
      $region26: #{shufflenet_v2_forward.63} parent=23 // pred_check_branch
        %130 = sbr.rel (%p128) target = $region28
      $region27: #{shufflenet_v2_forward.63} parent=23 // pred_region
        %p131 = scmp.lt.s32.totalorder %s9, 1
        %s132 = scalar_select %p131, %s9, 1
        %s133 = smul.addr %s132, 20
        %s134 = smul.addr %s133, 4
        %s135 = scalar_lea.vmem %s0, %s134
      $region28: #{shufflenet_v2_forward.63} parent=23 // pred_fallthru
        _
    $region24: #{shufflenet_v2_forward.63} parent=5 // pred_fallthru
      _
    %p136 = scmp.le.s32.totalorder 1, %s9
    %p137 = scmp.lt.s32.totalorder %s9, 3
    %p138 = pnand %p136, %p137
    %p139 = pneg %p138
    // Predicated region
    $region29: #{shufflenet_v2_forward.63} parent=5 // pred_check
      _
    $region30: #{shufflenet_v2_forward.63} parent=5 // pred_check_branch
      %141 = sbr.rel (%p138) target = $region32
    $region31: #{shufflenet_v2_forward.63} parent=5 // pred_region
      %s142 = ssub.s32 %s9, 1
      %p143 = scmp.lt.s32.totalorder %s14, 1
      %s144 = scalar_select %p143, %s14, 1
      %s145 = smul.addr %s144, 20
      %s146 = smul.addr %s145, 4
      %s147 = scalar_lea.vmem %s0, %s146
      %p148 = pneg %p35
      %p149 = pneg %p32
      %p150 = pneg %p56
      %p151 = pneg %p53
      %p152 = pneg %p77
      %p153 = pneg %p74
      %p154 = pneg %p103
      %p155 = pneg %p100
      %p156 = scmp.lt.s32.totalorder %s14, 1
      %s157 = scalar_select %p156, %s14, 1
      %s158 = smul.addr %s157, 4
      %s159 = smul.addr %s158, 2
      %s160 = scalar_lea.vmem %s3, %s159
      %p161 = scmp.lt.s32.totalorder %s14, 1
      %s162 = scalar_select %p161, %s14, 1
      %s163 = smul.addr %s162, 20
      %s164 = smul.addr %s163, 4
      %s165 = scalar_lea.vmem %s0, %s164
      %p166 = scmp.lt.s32.totalorder %s14, 1
      %s167 = scalar_select %p166, %s14, 1
      %s168 = smul.addr %s167, 4
      %s169 = smul.addr %s168, 2
      %s170 = scalar_lea.vmem %s3, %s169
      %v171 = vld [vmem:[%s165] sm:$0x3]
      %v172 = vld [vmem:[%s165 + $0x4] sm:$0x3]
      %v173 = vld [vmem:[%s165 + $0x8] sm:$0x3]
      %v174 = vld [vmem:[%s165 + $0xc] sm:$0x3]
      %v175 = vunpack.c.l.bf16 %v171
      %v176 = vunpack.c.l.bf16 %v172
      %v177 = vunpack.c.l.bf16 %v173
      %v178 = vunpack.c.l.bf16 %v174
      %v179 = vld [vmem:[%s1] sm:$0x1]
      %v181 = vperm.slane %v179, 0
      %v183 = vmul.f32 %v175, %v181
      %v184 = vmul.f32 %v176, %v181
      %v185 = vmul.f32 %v177, %v181
      %v186 = vmul.f32 %v178, %v181
      %s187 = scalar_lea.vmem %s165, 20
      %v188 = vld [vmem:[%s187] sm:$0x3]
      %v189 = vld [vmem:[%s187 + $0x4] sm:$0x3]
      %v190 = vld [vmem:[%s187 + $0x8] sm:$0x3]
      %v191 = vld [vmem:[%s187 + $0xc] sm:$0x3]
      %v192 = vunpack.c.l.bf16 %v188
      %v193 = vunpack.c.l.bf16 %v189
      %v194 = vunpack.c.l.bf16 %v190
      %v195 = vunpack.c.l.bf16 %v191
      %s196 = scalar_lea.vmem %s1, 1
      %v197 = vld [vmem:[%s196] sm:$0x1]
      %v199 = vperm.slane %v197, 0
      %v201 = vmul.f32 %v192, %v199
      %v202 = vmul.f32 %v193, %v199
      %v203 = vmul.f32 %v194, %v199
      %v204 = vmul.f32 %v195, %v199
      %v205 = vld [vmem:[%s165] sm:$0x7]
      %v206 = vld [vmem:[%s165 + $0x4] sm:$0x7]
      %v207 = vld [vmem:[%s165 + $0x8] sm:$0x7]
      %v208 = vld [vmem:[%s165 + $0xc] sm:$0x7]
      %v209 = vunpack.c.l.bf16 %v205
      %v210 = vunpack.c.l.bf16 %v206
      %v211 = vunpack.c.l.bf16 %v207
      %v212 = vunpack.c.l.bf16 %v208
      %s213 = scalar_lea.vmem %s1, 2
      %v214 = vld [vmem:[%s213] sm:$0x1]
      %v216 = vperm.slane %v214, 0
      %v218 = vmul.f32 %v209, %v216
      %v219 = vmul.f32 %v210, %v216
      %v220 = vmul.f32 %v211, %v216
      %v221 = vmul.f32 %v212, %v216
      %s222 = scalar_lea.vmem %s165, 40
      %v223 = vld [vmem:[%s222] sm:$0x3]
      %v224 = vld [vmem:[%s222 + $0x4] sm:$0x3]
      %v225 = vld [vmem:[%s222 + $0x8] sm:$0x3]
      %v226 = vld [vmem:[%s222 + $0xc] sm:$0x3]
      %v227 = vunpack.c.l.bf16 %v223
      %v228 = vunpack.c.l.bf16 %v224
      %v229 = vunpack.c.l.bf16 %v225
      %v230 = vunpack.c.l.bf16 %v226
      %s231 = scalar_lea.vmem %s1, 3
      %v232 = vld [vmem:[%s231] sm:$0x1]
      %v234 = vperm.slane %v232, 0
      %v236 = vmul.f32 %v227, %v234
      %v237 = vmul.f32 %v228, %v234
      %v238 = vmul.f32 %v229, %v234
      %v239 = vmul.f32 %v230, %v234
      %s240 = scalar_lea.vmem %s165, 60
      %v241 = vld [vmem:[%s240] sm:$0x3]
      %v242 = vld [vmem:[%s240 + $0x4] sm:$0x3]
      %v243 = vld [vmem:[%s240 + $0x8] sm:$0x3]
      %v244 = vld [vmem:[%s240 + $0xc] sm:$0x3]
      %v245 = vunpack.c.l.bf16 %v241
      %v246 = vunpack.c.l.bf16 %v242
      %v247 = vunpack.c.l.bf16 %v243
      %v248 = vunpack.c.l.bf16 %v244
      %s249 = scalar_lea.vmem %s1, 4
      %v250 = vld [vmem:[%s249] sm:$0x1]
      %v252 = vperm.slane %v250, 0
      %v254 = vmul.f32 %v245, %v252
      %v255 = vmul.f32 %v246, %v252
      %v256 = vmul.f32 %v247, %v252
      %v257 = vmul.f32 %v248, %v252
      %v258 = vld [vmem:[%s222] sm:$0x7]
      %v259 = vld [vmem:[%s222 + $0x4] sm:$0x7]
      %v260 = vld [vmem:[%s222 + $0x8] sm:$0x7]
      %v261 = vld [vmem:[%s222 + $0xc] sm:$0x7]
      %v262 = vunpack.c.l.bf16 %v258
      %v263 = vunpack.c.l.bf16 %v259
      %v264 = vunpack.c.l.bf16 %v260
      %v265 = vunpack.c.l.bf16 %v261
      %s266 = scalar_lea.vmem %s1, 5
      %v267 = vld [vmem:[%s266] sm:$0x1]
      %v269 = vperm.slane %v267, 0
      %v271 = vmul.f32 %v262, %v269
      %v272 = vmul.f32 %v263, %v269
      %v273 = vmul.f32 %v264, %v269
      %v274 = vmul.f32 %v265, %v269
      %s275 = scalar_lea.vmem %s165, 4
      %v276 = vld [vmem:[%s275] sm:$0x3]
      %v277 = vld [vmem:[%s275 + $0x4] sm:$0x3]
      %v278 = vld [vmem:[%s275 + $0x8] sm:$0x3]
      %v279 = vld [vmem:[%s275 + $0xc] sm:$0x3]
      %v280 = vunpack.c.l.bf16 %v276
      %v281 = vunpack.c.l.bf16 %v277
      %v282 = vunpack.c.l.bf16 %v278
      %v283 = vunpack.c.l.bf16 %v279
      %s284 = scalar_lea.vmem %s1, 6
      %v285 = vld [vmem:[%s284] sm:$0x1]
      %v287 = vperm.slane %v285, 0
      %v289 = vmul.f32 %v280, %v287
      %v290 = vmul.f32 %v281, %v287
      %v291 = vmul.f32 %v282, %v287
      %v292 = vmul.f32 %v283, %v287
      %s293 = scalar_lea.vmem %s165, 24
      %v294 = vld [vmem:[%s293] sm:$0x3]
      %v295 = vld [vmem:[%s293 + $0x4] sm:$0x3]
      %v296 = vld [vmem:[%s293 + $0x8] sm:$0x3]
      %v297 = vld [vmem:[%s293 + $0xc] sm:$0x3]
      %v298 = vunpack.c.l.bf16 %v294
      %v299 = vunpack.c.l.bf16 %v295
      %v300 = vunpack.c.l.bf16 %v296
      %v301 = vunpack.c.l.bf16 %v297
      %s302 = scalar_lea.vmem %s1, 7
      %v303 = vld [vmem:[%s302] sm:$0x1]
      %v305 = vperm.slane %v303, 0
      %v307 = vmul.f32 %v298, %v305
      %v308 = vmul.f32 %v299, %v305
      %v309 = vmul.f32 %v300, %v305
      %v310 = vmul.f32 %v301, %v305
      %v311 = vld [vmem:[%s275] sm:$0x7]
      %v312 = vld [vmem:[%s275 + $0x4] sm:$0x7]
      %v313 = vld [vmem:[%s275 + $0x8] sm:$0x7]
      %v314 = vld [vmem:[%s275 + $0xc] sm:$0x7]
      %v315 = vunpack.c.l.bf16 %v311
      %v316 = vunpack.c.l.bf16 %v312
      %v317 = vunpack.c.l.bf16 %v313
      %v318 = vunpack.c.l.bf16 %v314
      %s319 = scalar_lea.vmem %s1, 8
      %v320 = vld [vmem:[%s319] sm:$0x1]
      %v322 = vperm.slane %v320, 0
      %v324 = vmul.f32 %v315, %v322
      %v325 = vmul.f32 %v316, %v322
      %v326 = vmul.f32 %v317, %v322
      %v327 = vmul.f32 %v318, %v322
      %v328 = vadd.f32 %v183, %v201
      %v329 = vadd.f32 %v184, %v202
      %v330 = vadd.f32 %v185, %v203
      %v331 = vadd.f32 %v186, %v204
      %v336 = vrot.slane %v236, 7
      %v337 = vrot.slane %v237, 7
      %v338 = vrot.slane %v238, 7
      %v339 = vrot.slane %v239, 7
      %v344 = vadd.f32 %v218, %v336
      %v345 = vadd.f32 %v219, %v337
      %v346 = vadd.f32 %v220, %v338
      %v347 = vadd.f32 %v221, %v339
      %v352 = vrot.slane %v344, 1
      %v353 = vrot.slane %v345, 1
      %v354 = vrot.slane %v346, 1
      %v355 = vrot.slane %v347, 1
      %v360 = vadd.f32 %v328, %v352
      %v361 = vadd.f32 %v329, %v353
      %v362 = vadd.f32 %v330, %v354
      %v363 = vadd.f32 %v331, %v355
      %v368 = vrot.slane %v271, 1
      %v369 = vrot.slane %v272, 1
      %v370 = vrot.slane %v273, 1
      %v371 = vrot.slane %v274, 1
      %v376 = vadd.f32 %v254, %v368
      %v377 = vadd.f32 %v255, %v369
      %v378 = vadd.f32 %v256, %v370
      %v379 = vadd.f32 %v257, %v371
      %v380 = vadd.f32 %v289, %v307
      %v381 = vadd.f32 %v290, %v308
      %v382 = vadd.f32 %v291, %v309
      %v383 = vadd.f32 %v292, %v310
      %v384 = vadd.f32 %v376, %v380
      %v385 = vadd.f32 %v377, %v381
      %v386 = vadd.f32 %v378, %v382
      %v387 = vadd.f32 %v379, %v383
      %v388 = vadd.f32 %v360, %v384
      %v389 = vadd.f32 %v361, %v385
      %v390 = vadd.f32 %v362, %v386
      %v391 = vadd.f32 %v363, %v387
      %v396 = vrot.slane %v324, 1
      %v397 = vrot.slane %v325, 1
      %v398 = vrot.slane %v326, 1
      %v399 = vrot.slane %v327, 1
      %v404 = vadd.f32 %v388, %v396
      %v405 = vadd.f32 %v389, %v397
      %v406 = vadd.f32 %v390, %v398
      %v407 = vadd.f32 %v391, %v399
      %v408 = vld [vmem:[%s2] sm:$0x1]
      %v410 = vperm.slane %v408, 0
      %v412 = vadd.f32 %v404, %v410
      %v413 = vadd.f32 %v405, %v410
      %v414 = vadd.f32 %v406, %v410
      %v415 = vadd.f32 %v407, %v410
      %v416 = vpack.c.bf16 %v412, %v412
      %v417 = vpack.c.bf16 %v413, %v413
      %v418 = vpack.c.bf16 %v414, %v414
      %v419 = vpack.c.bf16 %v415, %v415
      %vm420 = vcmask 189440
      %421 = vst.msk [vmem:[%s170] sm:$0x3] %vm420, %v416
      %422 = vst.msk [vmem:[%s170 + $0x2] sm:$0x3] %vm420, %v417
      %423 = vst.msk [vmem:[%s170 + $0x4] sm:$0x3] %vm420, %v418
      %424 = vst.msk [vmem:[%s170 + $0x6] sm:$0x3] %vm420, %v419
      %p425 = scmp.lt.s32.totalorder %s14, 1
      %s426 = scalar_select %p425, %s14, 1
      %s427 = smul.addr %s426, 4
      %s428 = smul.addr %s427, 2
      %s429 = scalar_lea.vmem %s3, %s428
      // Predicated region
      $region33: #{shufflenet_v2_forward.63} parent=31 // pred_check
        %p430 = pneg %p100
      $region34: #{shufflenet_v2_forward.63} parent=31 // pred_check_branch
        %432 = sbr.rel (%p430) target = $region36
      $region35: #{shufflenet_v2_forward.63} parent=31 // pred_region
        _
      $region36: #{shufflenet_v2_forward.63} parent=31 // pred_fallthru
        _
    $region32: #{shufflenet_v2_forward.63} parent=5 // pred_fallthru
      _
    %p433 = scmp.le.s32.totalorder 2, %s9
    // Predicated region
    $region37: #{shufflenet_v2_forward.63} parent=5 // pred_check
      %p434 = pneg %p433
    $region38: #{shufflenet_v2_forward.63} parent=5 // pred_check_branch
      %436 = sbr.rel (%p434) target = $region40
    $region39: #{shufflenet_v2_forward.63} parent=5 // pred_region
      %s437 = ssub.s32 %s9, 2
      // Predicated region
      $region41: #{shufflenet_v2_forward.63} parent=39 // pred_check
        %p438 = pneg %p106
      $region42: #{shufflenet_v2_forward.63} parent=39 // pred_check_branch
        %440 = sbr.rel (%p438) target = $region44
      $region43: #{shufflenet_v2_forward.63} parent=39 // pred_region
        %p441 = scmp.lt.s32.totalorder %s15, 1
        %s442 = scalar_select %p441, %s15, 1
        %s443 = smul.addr %s442, 4
        %s444 = smul.addr %s443, 2
        %s445 = scalar_lea.vmem %s3, %s444
      $region44: #{shufflenet_v2_forward.63} parent=39 // pred_fallthru
        _
    $region40: #{shufflenet_v2_forward.63} parent=5 // pred_fallthru
      _
  $region6: #{shufflenet_v2_forward.63} parent=0 // loop_footer
    %s13 = sadd.s32 1, %s9
  $region7: #{shufflenet_v2_forward.63} parent=0 // loop_footer_branch
    %8 = sbr.rel target = $region3
  $region8: #{shufflenet_v2_forward.63} parent=0 // loop_exit
    _

// kernel: shufflenet_v2_forward.66
$region0: #{shufflenet_v2_forward.66}
  #allocation0 [shape = 'u32[]', space=smem, size = 0x4, offset = 0x4, fixed_abs, tag = 'smem constant byte address 0x4 - core index']
  #allocation1 [shape = 'u32[72,128]{1,0:T(1,128)}', space=vmem, size = 0x9000, scoped, tag = 'internal scratch']
  %s0 = inlined_call_operand.vmem [shape: bf16[2,6,6,24], index: 0, kind: input, shape index: {}]
  %s1 = inlined_call_operand.vmem [shape: f32[9,1,1,24], index: 1, kind: input, shape index: {}]
  %s2 = inlined_call_operand.vmem [shape: f32[1,1,24], index: 2, kind: input, shape index: {}]
  %s3 = inlined_call_operand.vmem [shape: bf16[2,4,4,24], index: 3, kind: output, shape index: {}]
  %s4 = sld [smem:[#allocation0]]
  $region45: #{shufflenet_v2_forward.66} parent=0
    _
  %s6 = ssub.s32 1, %s4
  %s7 = scalar_select 0, %s6, %s4
  loop: start=0, step=1, limit=4
  $region2: #{shufflenet_v2_forward.66} parent=0 // loop_pre_header
    _
  $region3: #{shufflenet_v2_forward.66} parent=0 // loop_header
    %s9 = sphi 0, %s13
    %p10 = scmp.ge.s32.totalorder %s9, 4
    %s19 = sphi 0, %s21
    %s22 = sphi 0, %s19
    %s23 = sphi 0, %s22
    %s39 = sphi 0, %s23
    %s43 = sphi 0, %s43
    %s45 = sphi 0, %s43
    %s46 = sphi 0, %s45
    %s60 = sphi 0, %s46
    %s64 = sphi 0, %s64
    %s66 = sphi 0, %s64
    %s67 = sphi 0, %s66
    %s81 = sphi 0, %s67
    %s87 = sphi 0, %s89
    %s90 = sphi 0, %s87
    %s91 = sphi 0, %s90
    %s107 = sphi 0, %s91
  $region4: #{shufflenet_v2_forward.66} parent=0 // loop_header_branch
    %12 = sbr.rel (%p10) target = $region8
  $region5: #{shufflenet_v2_forward.66} parent=0 // loop_body
    %s14 = ssub.s32 %s9, 1
    %s15 = ssub.s32 %s9, 2
    %s16 = sadd.s32 %s9, 1
    %s17 = ssub.s32 %s9, %s16
    %p18 = scmp.eq.s32.totalorder %s17, 0
    %s20 = sadd.s32 %s19, 1
    %s21 = scalar_select %p18, %s19, %s20
    %p24 = pneg %p18
    %p25 = scmp.eq.s32.totalorder %s9, 1
    %p26 = por %p24, %p25
    %p27 = scmp.ne.s32.totalorder %s19, %s22
    %p28 = scmp.eq.s32.totalorder %s9, 0
    %p29 = por %p27, %p28
    %p30 = scmp.ne.s32.totalorder %s19, %s22
    %p31 = scmp.eq.s32.totalorder %s14, 1
    %p32 = por %p30, %p31
    %p33 = scmp.ne.s32.totalorder %s22, %s23
    %p34 = scmp.eq.s32.totalorder %s14, 0
    %p35 = por %p33, %p34
    %p36 = scmp.ne.s32.totalorder %s22, %s23
    %p37 = scmp.eq.s32.totalorder %s15, 1
    %p38 = por %p36, %p37
    %p40 = scmp.ne.s32.totalorder %s23, %s39
    %p41 = scmp.eq.s32.totalorder %s15, 0
    %p42 = por %p40, %p41
    %s44 = sadd.s32 %s43, 1
    %p47 = scmp.eq.s32.totalorder %s9, 1
    %p48 = scmp.ne.s32.totalorder %s43, %s45
    %p49 = scmp.eq.s32.totalorder %s9, 0
    %p50 = por %p48, %p49
    %p51 = scmp.ne.s32.totalorder %s43, %s45
    %p52 = scmp.eq.s32.totalorder %s14, 1
    %p53 = por %p51, %p52
    %p54 = scmp.ne.s32.totalorder %s45, %s46
    %p55 = scmp.eq.s32.totalorder %s14, 0
    %p56 = por %p54, %p55
    %p57 = scmp.ne.s32.totalorder %s45, %s46
    %p58 = scmp.eq.s32.totalorder %s15, 1
    %p59 = por %p57, %p58
    %p61 = scmp.ne.s32.totalorder %s46, %s60
    %p62 = scmp.eq.s32.totalorder %s15, 0
    %p63 = por %p61, %p62
    %s65 = sadd.s32 %s64, 1
    %p68 = scmp.eq.s32.totalorder %s9, 1
    %p69 = scmp.ne.s32.totalorder %s64, %s66
    %p70 = scmp.eq.s32.totalorder %s9, 0
    %p71 = por %p69, %p70
    %p72 = scmp.ne.s32.totalorder %s64, %s66
    %p73 = scmp.eq.s32.totalorder %s14, 1
    %p74 = por %p72, %p73
    %p75 = scmp.ne.s32.totalorder %s66, %s67
    %p76 = scmp.eq.s32.totalorder %s14, 0
    %p77 = por %p75, %p76
    %p78 = scmp.ne.s32.totalorder %s66, %s67
    %p79 = scmp.eq.s32.totalorder %s15, 1
    %p80 = por %p78, %p79
    %p82 = scmp.ne.s32.totalorder %s67, %s81
    %p83 = scmp.eq.s32.totalorder %s15, 0
    %p84 = por %p82, %p83
    %s85 = ssub.s32 %s9, %s16
    %p86 = scmp.eq.s32.totalorder %s85, 0
    %s88 = sadd.s32 %s87, 1
    %s89 = scalar_select %p86, %s87, %s88
    %p92 = pneg %p86
    %p93 = scmp.eq.s32.totalorder %s9, 1
    %p94 = por %p92, %p93
    %p95 = scmp.ne.s32.totalorder %s87, %s90
    %p96 = scmp.eq.s32.totalorder %s9, 0
    %p97 = por %p95, %p96
    %p98 = scmp.ne.s32.totalorder %s87, %s90
    %p99 = scmp.eq.s32.totalorder %s14, 1
    %p100 = por %p98, %p99
    %p101 = scmp.ne.s32.totalorder %s90, %s91
    %p102 = scmp.eq.s32.totalorder %s14, 0
    %p103 = por %p101, %p102
    %p104 = scmp.ne.s32.totalorder %s90, %s91
    %p105 = scmp.eq.s32.totalorder %s15, 1
    %p106 = por %p104, %p105
    %p108 = scmp.ne.s32.totalorder %s91, %s107
    %p109 = scmp.eq.s32.totalorder %s15, 0
    %p110 = por %p108, %p109
    %p111 = scmp.le.s32.totalorder 1, %s9
    %p112 = scmp.lt.s32.totalorder %s9, 3
    %p113 = pnand %p111, %p112
    %p114 = pneg %p113
    // Predicated region
    $region9: #{shufflenet_v2_forward.66} parent=5 // pred_check
      _
    $region10: #{shufflenet_v2_forward.66} parent=5 // pred_check_branch
      %116 = sbr.rel (%p113) target = $region12
    $region11: #{shufflenet_v2_forward.66} parent=5 // pred_region
      %s117 = ssub.s32 %s9, 1
      // Predicated region
      $region13: #{shufflenet_v2_forward.66} parent=11 // pred_check
        %p118 = pneg %p56
      $region14: #{shufflenet_v2_forward.66} parent=11 // pred_check_branch
        %120 = sbr.rel (%p118) target = $region16
      $region15: #{shufflenet_v2_forward.66} parent=11 // pred_region
        _
      $region16: #{shufflenet_v2_forward.66} parent=11 // pred_fallthru
        _
      // Predicated region
      $region17: #{shufflenet_v2_forward.66} parent=11 // pred_check
        %p121 = pneg %p77
      $region18: #{shufflenet_v2_forward.66} parent=11 // pred_check_branch
        %123 = sbr.rel (%p121) target = $region20
      $region19: #{shufflenet_v2_forward.66} parent=11 // pred_region
        _
      $region20: #{shufflenet_v2_forward.66} parent=11 // pred_fallthru
        _
    $region12: #{shufflenet_v2_forward.66} parent=5 // pred_fallthru
      _
    %p124 = scmp.lt.s32.totalorder %s9, 2
    // Predicated region
    $region21: #{shufflenet_v2_forward.66} parent=5 // pred_check
      %p125 = pneg %p124
    $region22: #{shufflenet_v2_forward.66} parent=5 // pred_check_branch
      %127 = sbr.rel (%p125) target = $region24
    $region23: #{shufflenet_v2_forward.66} parent=5 // pred_region
      // Predicated region
      $region25: #{shufflenet_v2_forward.66} parent=23 // pred_check
        %p128 = pneg %p29
      $region26: #{shufflenet_v2_forward.66} parent=23 // pred_check_branch
        %130 = sbr.rel (%p128) target = $region28
      $region27: #{shufflenet_v2_forward.66} parent=23 // pred_region
        %p131 = scmp.lt.s32.totalorder %s9, 1
        %s132 = scalar_select %p131, %s9, 1
        %s133 = smul.addr %s132, 6
        %s134 = smul.addr %s133, 4
        %s135 = scalar_lea.vmem %s0, %s134
      $region28: #{shufflenet_v2_forward.66} parent=23 // pred_fallthru
        _
    $region24: #{shufflenet_v2_forward.66} parent=5 // pred_fallthru
      _
    %p136 = scmp.le.s32.totalorder 1, %s9
    %p137 = scmp.lt.s32.totalorder %s9, 3
    %p138 = pnand %p136, %p137
    %p139 = pneg %p138
    // Predicated region
    $region29: #{shufflenet_v2_forward.66} parent=5 // pred_check
      _
    $region30: #{shufflenet_v2_forward.66} parent=5 // pred_check_branch
      %141 = sbr.rel (%p138) target = $region32
    $region31: #{shufflenet_v2_forward.66} parent=5 // pred_region
      %s142 = ssub.s32 %s9, 1
      %p143 = scmp.lt.s32.totalorder %s14, 1
      %s144 = scalar_select %p143, %s14, 1
      %s145 = smul.addr %s144, 6
      %s146 = smul.addr %s145, 4
      %s147 = scalar_lea.vmem %s0, %s146
      %p148 = pneg %p35
      %p149 = pneg %p32
      %p150 = pneg %p56
      %p151 = pneg %p53
      %p152 = pneg %p77
      %p153 = pneg %p74
      %p154 = pneg %p103
      %p155 = pneg %p100
      %p156 = scmp.lt.s32.totalorder %s14, 1
      %s157 = scalar_select %p156, %s14, 1
      %s158 = smul.addr %s157, 4
      %s159 = smul.addr %s158, 2
      %s160 = scalar_lea.vmem %s3, %s159
      %p161 = scmp.lt.s32.totalorder %s14, 1
      %s162 = scalar_select %p161, %s14, 1
      %s163 = smul.addr %s162, 6
      %s164 = smul.addr %s163, 4
      %s165 = scalar_lea.vmem %s0, %s164
      %p166 = scmp.lt.s32.totalorder %s14, 1
      %s167 = scalar_select %p166, %s14, 1
      %s168 = smul.addr %s167, 4
      %s169 = smul.addr %s168, 2
      %s170 = scalar_lea.vmem %s3, %s169
      %v171 = vld [vmem:[%s165] sm:$0x3]
      %v172 = vld [vmem:[%s165 + $0x4] sm:$0x3]
      %v173 = vld [vmem:[%s165 + $0x8] sm:$0x3]
      %v174 = vld [vmem:[%s165 + $0xc] sm:$0x3]
      %v175 = vunpack.c.l.bf16 %v171
      %v176 = vunpack.c.l.bf16 %v172
      %v177 = vunpack.c.l.bf16 %v173
      %v178 = vunpack.c.l.bf16 %v174
      %v179 = vld [vmem:[%s1] sm:$0x1]
      %v181 = vperm.slane %v179, 0
      %v183 = vmul.f32 %v175, %v181
      %v184 = vmul.f32 %v176, %v181
      %v185 = vmul.f32 %v177, %v181
      %v186 = vmul.f32 %v178, %v181
      %v187 = vld [vmem:[%s165] sm:$0x7]
      %v188 = vld [vmem:[%s165 + $0x4] sm:$0x7]
      %v189 = vld [vmem:[%s165 + $0x8] sm:$0x7]
      %v190 = vld [vmem:[%s165 + $0xc] sm:$0x7]
      %v191 = vunpack.c.l.bf16 %v187
      %v192 = vunpack.c.l.bf16 %v188
      %v193 = vunpack.c.l.bf16 %v189
      %v194 = vunpack.c.l.bf16 %v190
      %s195 = scalar_lea.vmem %s1, 1
      %v196 = vld [vmem:[%s195] sm:$0x1]
      %v198 = vperm.slane %v196, 0
      %v200 = vmul.f32 %v191, %v198
      %v201 = vmul.f32 %v192, %v198
      %v202 = vmul.f32 %v193, %v198
      %v203 = vmul.f32 %v194, %v198
      %v204 = vld [vmem:[%s165] sm:$0x6]
      %v205 = vld [vmem:[%s165 + $0x4] sm:$0x6]
      %v206 = vld [vmem:[%s165 + $0x8] sm:$0x6]
      %v207 = vld [vmem:[%s165 + $0xc] sm:$0x6]
      %v208 = vunpack.c.l.bf16 %v204
      %v209 = vunpack.c.l.bf16 %v205
      %v210 = vunpack.c.l.bf16 %v206
      %v211 = vunpack.c.l.bf16 %v207
      %s212 = scalar_lea.vmem %s1, 2
      %v213 = vld [vmem:[%s212] sm:$0x1]
      %v215 = vperm.slane %v213, 0
      %v217 = vmul.f32 %v208, %v215
      %v218 = vmul.f32 %v209, %v215
      %v219 = vmul.f32 %v210, %v215
      %v220 = vmul.f32 %v211, %v215
      %s221 = scalar_lea.vmem %s165, 4
      %v222 = vld [vmem:[%s221] sm:$0x3]
      %v223 = vld [vmem:[%s221 + $0x4] sm:$0x3]
      %v224 = vld [vmem:[%s221 + $0x8] sm:$0x3]
      %v225 = vld [vmem:[%s221 + $0xc] sm:$0x3]
      %v226 = vunpack.c.l.bf16 %v222
      %v227 = vunpack.c.l.bf16 %v223
      %v228 = vunpack.c.l.bf16 %v224
      %v229 = vunpack.c.l.bf16 %v225
      %s230 = scalar_lea.vmem %s1, 3
      %v231 = vld [vmem:[%s230] sm:$0x1]
      %v233 = vperm.slane %v231, 0
      %v235 = vmul.f32 %v226, %v233
      %v236 = vmul.f32 %v227, %v233
      %v237 = vmul.f32 %v228, %v233
      %v238 = vmul.f32 %v229, %v233
      %v239 = vld [vmem:[%s221] sm:$0x7]
      %v240 = vld [vmem:[%s221 + $0x4] sm:$0x7]
      %v241 = vld [vmem:[%s221 + $0x8] sm:$0x7]
      %v242 = vld [vmem:[%s221 + $0xc] sm:$0x7]
      %v243 = vunpack.c.l.bf16 %v239
      %v244 = vunpack.c.l.bf16 %v240
      %v245 = vunpack.c.l.bf16 %v241
      %v246 = vunpack.c.l.bf16 %v242
      %s247 = scalar_lea.vmem %s1, 4
      %v248 = vld [vmem:[%s247] sm:$0x1]
      %v250 = vperm.slane %v248, 0
      %v252 = vmul.f32 %v243, %v250
      %v253 = vmul.f32 %v244, %v250
      %v254 = vmul.f32 %v245, %v250
      %v255 = vmul.f32 %v246, %v250
      %v256 = vld [vmem:[%s221] sm:$0x6]
      %v257 = vld [vmem:[%s221 + $0x4] sm:$0x6]
      %v258 = vld [vmem:[%s221 + $0x8] sm:$0x6]
      %v259 = vld [vmem:[%s221 + $0xc] sm:$0x6]
      %v260 = vunpack.c.l.bf16 %v256
      %v261 = vunpack.c.l.bf16 %v257
      %v262 = vunpack.c.l.bf16 %v258
      %v263 = vunpack.c.l.bf16 %v259
      %s264 = scalar_lea.vmem %s1, 5
      %v265 = vld [vmem:[%s264] sm:$0x1]
      %v267 = vperm.slane %v265, 0
      %v269 = vmul.f32 %v260, %v267
      %v270 = vmul.f32 %v261, %v267
      %v271 = vmul.f32 %v262, %v267
      %v272 = vmul.f32 %v263, %v267
      %s273 = scalar_lea.vmem %s165, 8
      %v274 = vld [vmem:[%s273] sm:$0x3]
      %v275 = vld [vmem:[%s273 + $0x4] sm:$0x3]
      %v276 = vld [vmem:[%s273 + $0x8] sm:$0x3]
      %v277 = vld [vmem:[%s273 + $0xc] sm:$0x3]
      %v278 = vunpack.c.l.bf16 %v274
      %v279 = vunpack.c.l.bf16 %v275
      %v280 = vunpack.c.l.bf16 %v276
      %v281 = vunpack.c.l.bf16 %v277
      %s282 = scalar_lea.vmem %s1, 6
      %v283 = vld [vmem:[%s282] sm:$0x1]
      %v285 = vperm.slane %v283, 0
      %v287 = vmul.f32 %v278, %v285
      %v288 = vmul.f32 %v279, %v285
      %v289 = vmul.f32 %v280, %v285
      %v290 = vmul.f32 %v281, %v285
      %v291 = vld [vmem:[%s273] sm:$0x7]
      %v292 = vld [vmem:[%s273 + $0x4] sm:$0x7]
      %v293 = vld [vmem:[%s273 + $0x8] sm:$0x7]
      %v294 = vld [vmem:[%s273 + $0xc] sm:$0x7]
      %v295 = vunpack.c.l.bf16 %v291
      %v296 = vunpack.c.l.bf16 %v292
      %v297 = vunpack.c.l.bf16 %v293
      %v298 = vunpack.c.l.bf16 %v294
      %s299 = scalar_lea.vmem %s1, 7
      %v300 = vld [vmem:[%s299] sm:$0x1]
      %v302 = vperm.slane %v300, 0
      %v304 = vmul.f32 %v295, %v302
      %v305 = vmul.f32 %v296, %v302
      %v306 = vmul.f32 %v297, %v302
      %v307 = vmul.f32 %v298, %v302
      %v308 = vld [vmem:[%s273] sm:$0x6]
      %v309 = vld [vmem:[%s273 + $0x4] sm:$0x6]
      %v310 = vld [vmem:[%s273 + $0x8] sm:$0x6]
      %v311 = vld [vmem:[%s273 + $0xc] sm:$0x6]
      %v312 = vunpack.c.l.bf16 %v308
      %v313 = vunpack.c.l.bf16 %v309
      %v314 = vunpack.c.l.bf16 %v310
      %v315 = vunpack.c.l.bf16 %v311
      %s316 = scalar_lea.vmem %s1, 8
      %v317 = vld [vmem:[%s316] sm:$0x1]
      %v319 = vperm.slane %v317, 0
      %v321 = vmul.f32 %v312, %v319
      %v322 = vmul.f32 %v313, %v319
      %v323 = vmul.f32 %v314, %v319
      %v324 = vmul.f32 %v315, %v319
      %v329 = vrot.slane %v200, 1
      %v330 = vrot.slane %v201, 1
      %v331 = vrot.slane %v202, 1
      %v332 = vrot.slane %v203, 1
      %v337 = vadd.f32 %v183, %v329
      %v338 = vadd.f32 %v184, %v330
      %v339 = vadd.f32 %v185, %v331
      %v340 = vadd.f32 %v186, %v332
      %v345 = vrot.slane %v235, 6
      %v346 = vrot.slane %v236, 6
      %v347 = vrot.slane %v237, 6
      %v348 = vrot.slane %v238, 6
      %v353 = vadd.f32 %v217, %v345
      %v354 = vadd.f32 %v218, %v346
      %v355 = vadd.f32 %v219, %v347
      %v356 = vadd.f32 %v220, %v348
      %v361 = vrot.slane %v353, 2
      %v362 = vrot.slane %v354, 2
      %v363 = vrot.slane %v355, 2
      %v364 = vrot.slane %v356, 2
      %v369 = vadd.f32 %v337, %v361
      %v370 = vadd.f32 %v338, %v362
      %v371 = vadd.f32 %v339, %v363
      %v372 = vadd.f32 %v340, %v364
      %v377 = vrot.slane %v269, 1
      %v378 = vrot.slane %v270, 1
      %v379 = vrot.slane %v271, 1
      %v380 = vrot.slane %v272, 1
      %v385 = vadd.f32 %v252, %v377
      %v386 = vadd.f32 %v253, %v378
      %v387 = vadd.f32 %v254, %v379
      %v388 = vadd.f32 %v255, %v380
      %v393 = vrot.slane %v304, 1
      %v394 = vrot.slane %v305, 1
      %v395 = vrot.slane %v306, 1
      %v396 = vrot.slane %v307, 1
      %v401 = vadd.f32 %v287, %v393
      %v402 = vadd.f32 %v288, %v394
      %v403 = vadd.f32 %v289, %v395
      %v404 = vadd.f32 %v290, %v396
      %v409 = vrot.slane %v401, 7
      %v410 = vrot.slane %v402, 7
      %v411 = vrot.slane %v403, 7
      %v412 = vrot.slane %v404, 7
      %v417 = vadd.f32 %v385, %v409
      %v418 = vadd.f32 %v386, %v410
      %v419 = vadd.f32 %v387, %v411
      %v420 = vadd.f32 %v388, %v412
      %v425 = vrot.slane %v417, 1
      %v426 = vrot.slane %v418, 1
      %v427 = vrot.slane %v419, 1
      %v428 = vrot.slane %v420, 1
      %v433 = vadd.f32 %v369, %v425
      %v434 = vadd.f32 %v370, %v426
      %v435 = vadd.f32 %v371, %v427
      %v436 = vadd.f32 %v372, %v428
      %v441 = vrot.slane %v321, 2
      %v442 = vrot.slane %v322, 2
      %v443 = vrot.slane %v323, 2
      %v444 = vrot.slane %v324, 2
      %v449 = vadd.f32 %v433, %v441
      %v450 = vadd.f32 %v434, %v442
      %v451 = vadd.f32 %v435, %v443
      %v452 = vadd.f32 %v436, %v444
      %v453 = vld [vmem:[%s2] sm:$0x1]
      %v455 = vperm.slane %v453, 0
      %v457 = vadd.f32 %v449, %v455
      %v458 = vadd.f32 %v450, %v455
      %v459 = vadd.f32 %v451, %v455
      %v460 = vadd.f32 %v452, %v455
      %v461 = vpack.c.bf16 %v457, %v457
      %v462 = vpack.c.bf16 %v458, %v458
      %v463 = vpack.c.bf16 %v459, %v459
      %v464 = vpack.c.bf16 %v460, %v460
      %vm465 = vcmask 189440
      %466 = vst.msk [vmem:[%s170] sm:$0x3] %vm465, %v461
      %467 = vst.msk [vmem:[%s170 + $0x2] sm:$0x3] %vm465, %v462
      %468 = vst.msk [vmem:[%s170 + $0x4] sm:$0x3] %vm465, %v463
      %469 = vst.msk [vmem:[%s170 + $0x6] sm:$0x3] %vm465, %v464
      %p470 = scmp.lt.s32.totalorder %s14, 1
      %s471 = scalar_select %p470, %s14, 1
      %s472 = smul.addr %s471, 4
      %s473 = smul.addr %s472, 2
      %s474 = scalar_lea.vmem %s3, %s473
      // Predicated region
      $region33: #{shufflenet_v2_forward.66} parent=31 // pred_check
        %p475 = pneg %p100
      $region34: #{shufflenet_v2_forward.66} parent=31 // pred_check_branch
        %477 = sbr.rel (%p475) target = $region36
      $region35: #{shufflenet_v2_forward.66} parent=31 // pred_region
        _
      $region36: #{shufflenet_v2_forward.66} parent=31 // pred_fallthru
        _
    $region32: #{shufflenet_v2_forward.66} parent=5 // pred_fallthru
      _
    %p478 = scmp.le.s32.totalorder 2, %s9
    // Predicated region
    $region37: #{shufflenet_v2_forward.66} parent=5 // pred_check
      %p479 = pneg %p478
    $region38: #{shufflenet_v2_forward.66} parent=5 // pred_check_branch
      %481 = sbr.rel (%p479) target = $region40
    $region39: #{shufflenet_v2_forward.66} parent=5 // pred_region
      %s482 = ssub.s32 %s9, 2
      // Predicated region
      $region41: #{shufflenet_v2_forward.66} parent=39 // pred_check
        %p483 = pneg %p106
      $region42: #{shufflenet_v2_forward.66} parent=39 // pred_check_branch
        %485 = sbr.rel (%p483) target = $region44
      $region43: #{shufflenet_v2_forward.66} parent=39 // pred_region
        %p486 = scmp.lt.s32.totalorder %s15, 1
        %s487 = scalar_select %p486, %s15, 1
        %s488 = smul.addr %s487, 4
        %s489 = smul.addr %s488, 2
        %s490 = scalar_lea.vmem %s3, %s489
      $region44: #{shufflenet_v2_forward.66} parent=39 // pred_fallthru
        _
    $region40: #{shufflenet_v2_forward.66} parent=5 // pred_fallthru
      _
  $region6: #{shufflenet_v2_forward.66} parent=0 // loop_footer
    %s13 = sadd.s32 1, %s9
  $region7: #{shufflenet_v2_forward.66} parent=0 // loop_footer_branch
    %8 = sbr.rel target = $region3
  $region8: #{shufflenet_v2_forward.66} parent=0 // loop_exit
    _

// kernel: shufflenet_v2_forward.76
$region0: #{shufflenet_v2_forward.76}
  #allocation0 [shape = 'u32[]', space=smem, size = 0x4, offset = 0x4, fixed_abs, tag = 'smem constant byte address 0x4 - core index']
  #allocation1 [shape = 'u32[72,128]{1,0:T(1,128)}', space=vmem, size = 0x9000, scoped, tag = 'internal scratch']
  %s0 = inlined_call_operand.vmem [shape: bf16[32,48], index: 0, kind: input, shape index: {}]
  %s1 = inlined_call_operand.vmem [shape: bf16[48,48], index: 1, kind: input, shape index: {}]
  %s2 = inlined_call_operand.vmem [shape: f32[1,48], index: 2, kind: input, shape index: {}]
  %s3 = inlined_call_operand.vmem [shape: bf16[32,48], index: 3, kind: output, shape index: {}]
  %s4 = sld [smem:[#allocation0]]
  $region22: #{shufflenet_v2_forward.76} parent=0
    _
  %s6 = ssub.s32 1, %s4
  %s7 = scalar_select 0, %s6, %s4
  // Predicated region
  $region2: #{shufflenet_v2_forward.76} parent=0 // pred_check
    _
  $region3: #{shufflenet_v2_forward.76} parent=0 // pred_check_branch
    %9 = sbr.rel (0) target = $region5
  $region4: #{shufflenet_v2_forward.76} parent=0 // pred_region
    _
  $region5: #{shufflenet_v2_forward.76} parent=0 // pred_fallthru
    _
  // Predicated region
  $region6: #{shufflenet_v2_forward.76} parent=0 // pred_check
    _
  $region7: #{shufflenet_v2_forward.76} parent=0 // pred_check_branch
    %11 = sbr.rel (0) target = $region9
  $region8: #{shufflenet_v2_forward.76} parent=0 // pred_region
    _
  $region9: #{shufflenet_v2_forward.76} parent=0 // pred_fallthru
    _
  // Predicated region
  $region10: #{shufflenet_v2_forward.76} parent=0 // pred_check
    _
  $region11: #{shufflenet_v2_forward.76} parent=0 // pred_check_branch
    %13 = sbr.rel (0) target = $region13
  $region12: #{shufflenet_v2_forward.76} parent=0 // pred_region
    _
  $region13: #{shufflenet_v2_forward.76} parent=0 // pred_fallthru
    _
  %v15 = vld [vmem:[%s0] sm:$0xf]
  %v16 = vld [vmem:[%s0 + $0x4] sm:$0xf]
  %v17 = vld [vmem:[%s0 + $0x8] sm:$0xf]
  %v18 = vld [vmem:[%s0 + $0xc] sm:$0xf]
  %v19 = vld [vmem:[%s1] sm:$0xf]
  %v20 = vld [vmem:[%s1 + $0x4] sm:$0xf]
  %v21 = vld [vmem:[%s1 + $0x8] sm:$0xf]
  %v22 = vld [vmem:[%s1 + $0xc] sm:$0xf]
  %v23 = vld [vmem:[%s1 + $0x10] sm:$0xf]
  %v24 = vld [vmem:[%s1 + $0x14] sm:$0xf]
  %v25 = vld [vmem:[%s2] sm:$0x1]
  %v27 = vperm.slane %v25, 0
  %v33 = vunpack.c.l.b16 %v15
  %v34 = vunpack.c.l.b16 %v16
  %v35 = vunpack.c.l.b16 %v17
  %v36 = vunpack.c.l.b16 %v18
  %v37 = vpack.c.b16 %v34, %v33
  %v38 = vpack.c.b16 %v36, %v35
  %v45 = vunpack.c.l.b16 %v19
  %v46 = vunpack.c.l.b16 %v20
  %v47 = vunpack.c.l.b16 %v21
  %v48 = vunpack.c.l.b16 %v22
  %v49 = vunpack.c.l.b16 %v23
  %v50 = vunpack.c.l.b16 %v24
  %v51 = vpack.c.b16 %v46, %v45
  %v52 = vpack.c.b16 %v48, %v47
  %v53 = vpack.c.b16 %v50, %v49
  %vm57 = vcmask 392192
  %v59 = vsel %vm57, %v37, 0
  %v62 = vsel %vm57, %v38, 0
  %64 = vmatpush.bf16.msra.mxu0 0
  %65 = vmatpush.bf16.msra.mxu0 0
  %66 = vmatpush.bf16.msra.mxu0 0
  %67 = vmatpush.bf16.msra.mxu0 0
  %68 = vmatpush.bf16.msra.mxu0 0
  %69 = vmatpush.bf16.msra.mxu0 %v53
  %70 = vmatpush.bf16.msra.mxu0 %v52
  %71 = vmatpush.bf16.msra.mxu0 %v51
  %72 = vmatmul.bf16.gmra.mxu0 %v59
  %v73 = vpop.f32.mrf.mxu0
  %v74 = vadd.f32 %v27, %v73
  %v75 = vpop.f32.mrf.mxu0
  %v76 = vadd.f32 %v27, %v75
  %77 = vmatmul.bf16.gmra.mxu0 %v62
  %v78 = vpop.f32.mrf.mxu0
  %v79 = vadd.f32 %v27, %v78
  %v80 = vpop.f32.mrf.mxu0
  %v81 = vadd.f32 %v27, %v80
  %82 = vdwg.mxu0
  %v83 = vmax.f32 %v74, 0.0
  %v84 = vmax.f32 %v76, 0.0
  %v85 = vmax.f32 %v79, 0.0
  %v86 = vmax.f32 %v81, 0.0
  %v87 = vpack.c.bf16 %v83, %v83
  %v88 = vpack.c.bf16 %v84, %v84
  %v89 = vpack.c.bf16 %v85, %v85
  %v90 = vpack.c.bf16 %v86, %v86
  %vm91 = vcmask 388096
  %92 = vst.msk [vmem:[%s3] sm:$0xf] %vm91, %v87
  %93 = vst.msk [vmem:[%s3 + $0x4] sm:$0xf] %vm91, %v88
  %94 = vst.msk [vmem:[%s3 + $0x8] sm:$0xf] %vm91, %v89
  %95 = vst.msk [vmem:[%s3 + $0xc] sm:$0xf] %vm91, %v90
  // Predicated region
  $region14: #{shufflenet_v2_forward.76} parent=0 // pred_check
    _
  $region15: #{shufflenet_v2_forward.76} parent=0 // pred_check_branch
    %97 = sbr.rel (0) target = $region17
  $region16: #{shufflenet_v2_forward.76} parent=0 // pred_region
    _
  $region17: #{shufflenet_v2_forward.76} parent=0 // pred_fallthru
    _
  // Predicated region
  $region18: #{shufflenet_v2_forward.76} parent=0 // pred_check
    _
  $region19: #{shufflenet_v2_forward.76} parent=0 // pred_check_branch
    %99 = sbr.rel (0) target = $region21
  $region20: #{shufflenet_v2_forward.76} parent=0 // pred_region
    _
  $region21: #{shufflenet_v2_forward.76} parent=0 // pred_fallthru
    _

// kernel: shufflenet_v2_forward.77
$region0: #{shufflenet_v2_forward.77}
  #allocation0 [shape = 'u32[]', space=smem, size = 0x4, offset = 0x4, fixed_abs, tag = 'smem constant byte address 0x4 - core index']
  #allocation1 [shape = 'u32[72,128]{1,0:T(1,128)}', space=vmem, size = 0x9000, scoped, tag = 'internal scratch']
  %s0 = inlined_call_operand.vmem [shape: bf16[2,4,3,3,48], index: 0, kind: input, shape index: {}]
  %s1 = inlined_call_operand.vmem [shape: f32[9,1,1,48], index: 1, kind: input, shape index: {}]
  %s2 = inlined_call_operand.vmem [shape: f32[1,1,48], index: 2, kind: input, shape index: {}]
  %s3 = inlined_call_operand.vmem [shape: bf16[2,2,2,48], index: 3, kind: output, shape index: {}]
  %s4 = sld [smem:[#allocation0]]
  $region45: #{shufflenet_v2_forward.77} parent=0
    _
  %s6 = ssub.s32 1, %s4
  %s7 = scalar_select 0, %s6, %s4
  loop: start=0, step=1, limit=4
  $region2: #{shufflenet_v2_forward.77} parent=0 // loop_pre_header
    _
  $region3: #{shufflenet_v2_forward.77} parent=0 // loop_header
    %s9 = sphi 0, %s13
    %p10 = scmp.ge.s32.totalorder %s9, 4
    %s19 = sphi 0, %s21
    %s22 = sphi 0, %s19
    %s23 = sphi 0, %s22
    %s39 = sphi 0, %s23
    %s43 = sphi 0, %s43
    %s45 = sphi 0, %s43
    %s46 = sphi 0, %s45
    %s60 = sphi 0, %s46
    %s64 = sphi 0, %s64
    %s66 = sphi 0, %s64
    %s67 = sphi 0, %s66
    %s81 = sphi 0, %s67
    %s87 = sphi 0, %s89
    %s90 = sphi 0, %s87
    %s91 = sphi 0, %s90
    %s107 = sphi 0, %s91
  $region4: #{shufflenet_v2_forward.77} parent=0 // loop_header_branch
    %12 = sbr.rel (%p10) target = $region8
  $region5: #{shufflenet_v2_forward.77} parent=0 // loop_body
    %s14 = ssub.s32 %s9, 1
    %s15 = ssub.s32 %s9, 2
    %s16 = sadd.s32 %s9, 1
    %s17 = ssub.s32 %s9, %s16
    %p18 = scmp.eq.s32.totalorder %s17, 0
    %s20 = sadd.s32 %s19, 1
    %s21 = scalar_select %p18, %s19, %s20
    %p24 = pneg %p18
    %p25 = scmp.eq.s32.totalorder %s9, 1
    %p26 = por %p24, %p25
    %p27 = scmp.ne.s32.totalorder %s19, %s22
    %p28 = scmp.eq.s32.totalorder %s9, 0
    %p29 = por %p27, %p28
    %p30 = scmp.ne.s32.totalorder %s19, %s22
    %p31 = scmp.eq.s32.totalorder %s14, 1
    %p32 = por %p30, %p31
    %p33 = scmp.ne.s32.totalorder %s22, %s23
    %p34 = scmp.eq.s32.totalorder %s14, 0
    %p35 = por %p33, %p34
    %p36 = scmp.ne.s32.totalorder %s22, %s23
    %p37 = scmp.eq.s32.totalorder %s15, 1
    %p38 = por %p36, %p37
    %p40 = scmp.ne.s32.totalorder %s23, %s39
    %p41 = scmp.eq.s32.totalorder %s15, 0
    %p42 = por %p40, %p41
    %s44 = sadd.s32 %s43, 1
    %p47 = scmp.eq.s32.totalorder %s9, 1
    %p48 = scmp.ne.s32.totalorder %s43, %s45
    %p49 = scmp.eq.s32.totalorder %s9, 0
    %p50 = por %p48, %p49
    %p51 = scmp.ne.s32.totalorder %s43, %s45
    %p52 = scmp.eq.s32.totalorder %s14, 1
    %p53 = por %p51, %p52
    %p54 = scmp.ne.s32.totalorder %s45, %s46
    %p55 = scmp.eq.s32.totalorder %s14, 0
    %p56 = por %p54, %p55
    %p57 = scmp.ne.s32.totalorder %s45, %s46
    %p58 = scmp.eq.s32.totalorder %s15, 1
    %p59 = por %p57, %p58
    %p61 = scmp.ne.s32.totalorder %s46, %s60
    %p62 = scmp.eq.s32.totalorder %s15, 0
    %p63 = por %p61, %p62
    %s65 = sadd.s32 %s64, 1
    %p68 = scmp.eq.s32.totalorder %s9, 1
    %p69 = scmp.ne.s32.totalorder %s64, %s66
    %p70 = scmp.eq.s32.totalorder %s9, 0
    %p71 = por %p69, %p70
    %p72 = scmp.ne.s32.totalorder %s64, %s66
    %p73 = scmp.eq.s32.totalorder %s14, 1
    %p74 = por %p72, %p73
    %p75 = scmp.ne.s32.totalorder %s66, %s67
    %p76 = scmp.eq.s32.totalorder %s14, 0
    %p77 = por %p75, %p76
    %p78 = scmp.ne.s32.totalorder %s66, %s67
    %p79 = scmp.eq.s32.totalorder %s15, 1
    %p80 = por %p78, %p79
    %p82 = scmp.ne.s32.totalorder %s67, %s81
    %p83 = scmp.eq.s32.totalorder %s15, 0
    %p84 = por %p82, %p83
    %s85 = ssub.s32 %s9, %s16
    %p86 = scmp.eq.s32.totalorder %s85, 0
    %s88 = sadd.s32 %s87, 1
    %s89 = scalar_select %p86, %s87, %s88
    %p92 = pneg %p86
    %p93 = scmp.eq.s32.totalorder %s9, 1
    %p94 = por %p92, %p93
    %p95 = scmp.ne.s32.totalorder %s87, %s90
    %p96 = scmp.eq.s32.totalorder %s9, 0
    %p97 = por %p95, %p96
    %p98 = scmp.ne.s32.totalorder %s87, %s90
    %p99 = scmp.eq.s32.totalorder %s14, 1
    %p100 = por %p98, %p99
    %p101 = scmp.ne.s32.totalorder %s90, %s91
    %p102 = scmp.eq.s32.totalorder %s14, 0
    %p103 = por %p101, %p102
    %p104 = scmp.ne.s32.totalorder %s90, %s91
    %p105 = scmp.eq.s32.totalorder %s15, 1
    %p106 = por %p104, %p105
    %p108 = scmp.ne.s32.totalorder %s91, %s107
    %p109 = scmp.eq.s32.totalorder %s15, 0
    %p110 = por %p108, %p109
    %p111 = scmp.le.s32.totalorder 1, %s9
    %p112 = scmp.lt.s32.totalorder %s9, 3
    %p113 = pnand %p111, %p112
    %p114 = pneg %p113
    // Predicated region
    $region9: #{shufflenet_v2_forward.77} parent=5 // pred_check
      _
    $region10: #{shufflenet_v2_forward.77} parent=5 // pred_check_branch
      %116 = sbr.rel (%p113) target = $region12
    $region11: #{shufflenet_v2_forward.77} parent=5 // pred_region
      %s117 = ssub.s32 %s9, 1
      // Predicated region
      $region13: #{shufflenet_v2_forward.77} parent=11 // pred_check
        %p118 = pneg %p56
      $region14: #{shufflenet_v2_forward.77} parent=11 // pred_check_branch
        %120 = sbr.rel (%p118) target = $region16
      $region15: #{shufflenet_v2_forward.77} parent=11 // pred_region
        _
      $region16: #{shufflenet_v2_forward.77} parent=11 // pred_fallthru
        _
      // Predicated region
      $region17: #{shufflenet_v2_forward.77} parent=11 // pred_check
        %p121 = pneg %p77
      $region18: #{shufflenet_v2_forward.77} parent=11 // pred_check_branch
        %123 = sbr.rel (%p121) target = $region20
      $region19: #{shufflenet_v2_forward.77} parent=11 // pred_region
        _
      $region20: #{shufflenet_v2_forward.77} parent=11 // pred_fallthru
        _
    $region12: #{shufflenet_v2_forward.77} parent=5 // pred_fallthru
      _
    %p124 = scmp.lt.s32.totalorder %s9, 2
    // Predicated region
    $region21: #{shufflenet_v2_forward.77} parent=5 // pred_check
      %p125 = pneg %p124
    $region22: #{shufflenet_v2_forward.77} parent=5 // pred_check_branch
      %127 = sbr.rel (%p125) target = $region24
    $region23: #{shufflenet_v2_forward.77} parent=5 // pred_region
      // Predicated region
      $region25: #{shufflenet_v2_forward.77} parent=23 // pred_check
        %p128 = pneg %p29
      $region26: #{shufflenet_v2_forward.77} parent=23 // pred_check_branch
        %130 = sbr.rel (%p128) target = $region28
      $region27: #{shufflenet_v2_forward.77} parent=23 // pred_region
        %p131 = scmp.lt.s32.totalorder %s9, 1
        %s132 = scalar_select %p131, %s9, 1
        %s133 = smul.addr %s132, 12
        %s134 = smul.addr %s133, 2
        %s135 = scalar_lea.vmem %s0, %s134
      $region28: #{shufflenet_v2_forward.77} parent=23 // pred_fallthru
        _
    $region24: #{shufflenet_v2_forward.77} parent=5 // pred_fallthru
      _
    %p136 = scmp.le.s32.totalorder 1, %s9
    %p137 = scmp.lt.s32.totalorder %s9, 3
    %p138 = pnand %p136, %p137
    %p139 = pneg %p138
    // Predicated region
    $region29: #{shufflenet_v2_forward.77} parent=5 // pred_check
      _
    $region30: #{shufflenet_v2_forward.77} parent=5 // pred_check_branch
      %141 = sbr.rel (%p138) target = $region32
    $region31: #{shufflenet_v2_forward.77} parent=5 // pred_region
      %s142 = ssub.s32 %s9, 1
      %p143 = scmp.lt.s32.totalorder %s14, 1
      %s144 = scalar_select %p143, %s14, 1
      %s145 = smul.addr %s144, 12
      %s146 = smul.addr %s145, 2
      %s147 = scalar_lea.vmem %s0, %s146
      %p148 = pneg %p35
      %p149 = pneg %p32
      %p150 = pneg %p56
      %p151 = pneg %p53
      %p152 = pneg %p77
      %p153 = pneg %p74
      %p154 = pneg %p103
      %p155 = pneg %p100
      %p156 = scmp.lt.s32.totalorder %s14, 1
      %s157 = scalar_select %p156, %s14, 1
      %s158 = smul.addr %s157, 2
      %s159 = scalar_lea.vmem %s3, %s158
      %p160 = scmp.lt.s32.totalorder %s14, 1
      %s161 = scalar_select %p160, %s14, 1
      %s162 = smul.addr %s161, 12
      %s163 = smul.addr %s162, 2
      %s164 = scalar_lea.vmem %s0, %s163
      %p165 = scmp.lt.s32.totalorder %s14, 1
      %s166 = scalar_select %p165, %s14, 1
      %s167 = smul.addr %s166, 2
      %s168 = scalar_lea.vmem %s3, %s167
      %v169 = vld [vmem:[%s164] sm:$0x1]
      %v170 = vld [vmem:[%s164 + $0x2] sm:$0x1]
      %v171 = vunpack.c.l.bf16 %v169
      %v172 = vunpack.c.l.bf16 %v170
      %v173 = vld [vmem:[%s1] sm:$0x1]
      %v175 = vperm.slane %v173, 0
      %v177 = vmul.f32 %v171, %v175
      %v178 = vmul.f32 %v172, %v175
      %s179 = scalar_lea.vmem %s164, 6
      %v180 = vld [vmem:[%s179] sm:$0x1]
      %v181 = vld [vmem:[%s179 + $0x2] sm:$0x1]
      %v182 = vunpack.c.l.bf16 %v180
      %v183 = vunpack.c.l.bf16 %v181
      %s184 = scalar_lea.vmem %s1, 1
      %v185 = vld [vmem:[%s184] sm:$0x1]
      %v187 = vperm.slane %v185, 0
      %v189 = vmul.f32 %v182, %v187
      %v190 = vmul.f32 %v183, %v187
      %v191 = vld [vmem:[%s164] sm:$0x3]
      %v192 = vld [vmem:[%s164 + $0x2] sm:$0x3]
      %v193 = vunpack.c.l.bf16 %v191
      %v194 = vunpack.c.l.bf16 %v192
      %s195 = scalar_lea.vmem %s1, 2
      %v196 = vld [vmem:[%s195] sm:$0x1]
      %v198 = vperm.slane %v196, 0
      %v200 = vmul.f32 %v193, %v198
      %v201 = vmul.f32 %v194, %v198
      %s202 = scalar_lea.vmem %s164, 12
      %v203 = vld [vmem:[%s202] sm:$0x1]
      %v204 = vld [vmem:[%s202 + $0x2] sm:$0x1]
      %v205 = vunpack.c.l.bf16 %v203
      %v206 = vunpack.c.l.bf16 %v204
      %s207 = scalar_lea.vmem %s1, 3
      %v208 = vld [vmem:[%s207] sm:$0x1]
      %v210 = vperm.slane %v208, 0
      %v212 = vmul.f32 %v205, %v210
      %v213 = vmul.f32 %v206, %v210
      %s214 = scalar_lea.vmem %s164, 18
      %v215 = vld [vmem:[%s214] sm:$0x1]
      %v216 = vld [vmem:[%s214 + $0x2] sm:$0x1]
      %v217 = vunpack.c.l.bf16 %v215
      %v218 = vunpack.c.l.bf16 %v216
      %s219 = scalar_lea.vmem %s1, 4
      %v220 = vld [vmem:[%s219] sm:$0x1]
      %v222 = vperm.slane %v220, 0
      %v224 = vmul.f32 %v217, %v222
      %v225 = vmul.f32 %v218, %v222
      %v226 = vld [vmem:[%s202] sm:$0x3]
      %v227 = vld [vmem:[%s202 + $0x2] sm:$0x3]
      %v228 = vunpack.c.l.bf16 %v226
      %v229 = vunpack.c.l.bf16 %v227
      %s230 = scalar_lea.vmem %s1, 5
      %v231 = vld [vmem:[%s230] sm:$0x1]
      %v233 = vperm.slane %v231, 0
      %v235 = vmul.f32 %v228, %v233
      %v236 = vmul.f32 %v229, %v233
      %s237 = scalar_lea.vmem %s164, 2
      %v238 = vld [vmem:[%s237] sm:$0x1]
      %v239 = vld [vmem:[%s237 + $0x2] sm:$0x1]
      %v240 = vunpack.c.l.bf16 %v238
      %v241 = vunpack.c.l.bf16 %v239
      %s242 = scalar_lea.vmem %s1, 6
      %v243 = vld [vmem:[%s242] sm:$0x1]
      %v245 = vperm.slane %v243, 0
      %v247 = vmul.f32 %v240, %v245
      %v248 = vmul.f32 %v241, %v245
      %s249 = scalar_lea.vmem %s164, 8
      %v250 = vld [vmem:[%s249] sm:$0x1]
      %v251 = vld [vmem:[%s249 + $0x2] sm:$0x1]
      %v252 = vunpack.c.l.bf16 %v250
      %v253 = vunpack.c.l.bf16 %v251
      %s254 = scalar_lea.vmem %s1, 7
      %v255 = vld [vmem:[%s254] sm:$0x1]
      %v257 = vperm.slane %v255, 0
      %v259 = vmul.f32 %v252, %v257
      %v260 = vmul.f32 %v253, %v257
      %v261 = vld [vmem:[%s237] sm:$0x3]
      %v262 = vld [vmem:[%s237 + $0x2] sm:$0x3]
      %v263 = vunpack.c.l.bf16 %v261
      %v264 = vunpack.c.l.bf16 %v262
      %s265 = scalar_lea.vmem %s1, 8
      %v266 = vld [vmem:[%s265] sm:$0x1]
      %v268 = vperm.slane %v266, 0
      %v270 = vmul.f32 %v263, %v268
      %v271 = vmul.f32 %v264, %v268
      %v272 = vadd.f32 %v177, %v189
      %v273 = vadd.f32 %v178, %v190
      %v276 = vrot.slane %v212, 7
      %v277 = vrot.slane %v213, 7
      %v280 = vadd.f32 %v200, %v276
      %v281 = vadd.f32 %v201, %v277
      %v284 = vrot.slane %v280, 5
      %v285 = vrot.slane %v284, 4
      %v286 = vrot.slane %v281, 5
      %v287 = vrot.slane %v286, 4
      %v290 = vadd.f32 %v272, %v285
      %v291 = vadd.f32 %v273, %v287
      %v294 = vrot.slane %v235, 5
      %v295 = vrot.slane %v294, 4
      %v296 = vrot.slane %v236, 5
      %v297 = vrot.slane %v296, 4
      %v300 = vadd.f32 %v224, %v295
      %v301 = vadd.f32 %v225, %v297
      %v302 = vadd.f32 %v247, %v259
      %v303 = vadd.f32 %v248, %v260
      %v304 = vadd.f32 %v300, %v302
      %v305 = vadd.f32 %v301, %v303
      %v306 = vadd.f32 %v290, %v304
      %v307 = vadd.f32 %v291, %v305
      %v310 = vrot.slane %v270, 5
      %v311 = vrot.slane %v310, 4
      %v312 = vrot.slane %v271, 5
      %v313 = vrot.slane %v312, 4
      %v316 = vadd.f32 %v306, %v311
      %v317 = vadd.f32 %v307, %v313
      %v318 = vld [vmem:[%s2] sm:$0x1]
      %v320 = vperm.slane %v318, 0
      %v322 = vadd.f32 %v316, %v320
      %v323 = vadd.f32 %v317, %v320
      %v324 = vpack.c.bf16 %v322, %v322
      %v325 = vpack.c.bf16 %v323, %v323
      %vm326 = vcmask 385024
      %327 = vst.msk [vmem:[%s168] sm:$0x1] %vm326, %v324
      %328 = vst.msk [vmem:[%s168 + $0x1] sm:$0x1] %vm326, %v325
      %p329 = scmp.lt.s32.totalorder %s14, 1
      %s330 = scalar_select %p329, %s14, 1
      %s331 = smul.addr %s330, 2
      %s332 = scalar_lea.vmem %s3, %s331
      // Predicated region
      $region33: #{shufflenet_v2_forward.77} parent=31 // pred_check
        %p333 = pneg %p100
      $region34: #{shufflenet_v2_forward.77} parent=31 // pred_check_branch
        %335 = sbr.rel (%p333) target = $region36
      $region35: #{shufflenet_v2_forward.77} parent=31 // pred_region
        _
      $region36: #{shufflenet_v2_forward.77} parent=31 // pred_fallthru
        _
    $region32: #{shufflenet_v2_forward.77} parent=5 // pred_fallthru
      _
    %p336 = scmp.le.s32.totalorder 2, %s9
    // Predicated region
    $region37: #{shufflenet_v2_forward.77} parent=5 // pred_check
      %p337 = pneg %p336
    $region38: #{shufflenet_v2_forward.77} parent=5 // pred_check_branch
      %339 = sbr.rel (%p337) target = $region40
    $region39: #{shufflenet_v2_forward.77} parent=5 // pred_region
      %s340 = ssub.s32 %s9, 2
      // Predicated region
      $region41: #{shufflenet_v2_forward.77} parent=39 // pred_check
        %p341 = pneg %p106
      $region42: #{shufflenet_v2_forward.77} parent=39 // pred_check_branch
        %343 = sbr.rel (%p341) target = $region44
      $region43: #{shufflenet_v2_forward.77} parent=39 // pred_region
        %p344 = scmp.lt.s32.totalorder %s15, 1
        %s345 = scalar_select %p344, %s15, 1
        %s346 = smul.addr %s345, 2
        %s347 = scalar_lea.vmem %s3, %s346
      $region44: #{shufflenet_v2_forward.77} parent=39 // pred_fallthru
        _
    $region40: #{shufflenet_v2_forward.77} parent=5 // pred_fallthru
      _
  $region6: #{shufflenet_v2_forward.77} parent=0 // loop_footer
    %s13 = sadd.s32 1, %s9
  $region7: #{shufflenet_v2_forward.77} parent=0 // loop_footer_branch
    %8 = sbr.rel target = $region3
  $region8: #{shufflenet_v2_forward.77} parent=0 // loop_exit
    _

// kernel: shufflenet_v2_forward.78
$region0: #{shufflenet_v2_forward.78}
  #allocation0 [shape = 'u32[]', space=smem, size = 0x4, offset = 0x4, fixed_abs, tag = 'smem constant byte address 0x4 - core index']
  #allocation1 [shape = 'u32[72,128]{1,0:T(1,128)}', space=vmem, size = 0x9000, scoped, tag = 'internal scratch']
  %s0 = inlined_call_operand.vmem [shape: bf16[8,48], index: 0, kind: input, shape index: {}]
  %s1 = inlined_call_operand.vmem [shape: bf16[48,48], index: 1, kind: input, shape index: {}]
  %s2 = inlined_call_operand.vmem [shape: f32[1,48], index: 2, kind: input, shape index: {}]
  %s3 = inlined_call_operand.vmem [shape: bf16[8,48], index: 3, kind: output, shape index: {}]
  %s4 = sld [smem:[#allocation0]]
  $region22: #{shufflenet_v2_forward.78} parent=0
    _
  %s6 = ssub.s32 1, %s4
  %s7 = scalar_select 0, %s6, %s4
  // Predicated region
  $region2: #{shufflenet_v2_forward.78} parent=0 // pred_check
    _
  $region3: #{shufflenet_v2_forward.78} parent=0 // pred_check_branch
    %9 = sbr.rel (0) target = $region5
  $region4: #{shufflenet_v2_forward.78} parent=0 // pred_region
    _
  $region5: #{shufflenet_v2_forward.78} parent=0 // pred_fallthru
    _
  // Predicated region
  $region6: #{shufflenet_v2_forward.78} parent=0 // pred_check
    _
  $region7: #{shufflenet_v2_forward.78} parent=0 // pred_check_branch
    %11 = sbr.rel (0) target = $region9
  $region8: #{shufflenet_v2_forward.78} parent=0 // pred_region
    _
  $region9: #{shufflenet_v2_forward.78} parent=0 // pred_fallthru
    _
  // Predicated region
  $region10: #{shufflenet_v2_forward.78} parent=0 // pred_check
    _
  $region11: #{shufflenet_v2_forward.78} parent=0 // pred_check_branch
    %13 = sbr.rel (0) target = $region13
  $region12: #{shufflenet_v2_forward.78} parent=0 // pred_region
    _
  $region13: #{shufflenet_v2_forward.78} parent=0 // pred_fallthru
    _
  %v15 = vld [vmem:[%s0] sm:$0xf]
  %v16 = vld [vmem:[%s1] sm:$0xf]
  %v17 = vld [vmem:[%s1 + $0x4] sm:$0xf]
  %v18 = vld [vmem:[%s1 + $0x8] sm:$0xf]
  %v19 = vld [vmem:[%s1 + $0xc] sm:$0xf]
  %v20 = vld [vmem:[%s1 + $0x10] sm:$0xf]
  %v21 = vld [vmem:[%s1 + $0x14] sm:$0xf]
  %v22 = vld [vmem:[%s2] sm:$0x1]
  %v24 = vperm.slane %v22, 0
  %v32 = vunpack.c.l.b16 %v16
  %v33 = vunpack.c.l.b16 %v17
  %v34 = vunpack.c.l.b16 %v18
  %v35 = vunpack.c.l.b16 %v19
  %v36 = vunpack.c.l.b16 %v20
  %v37 = vunpack.c.l.b16 %v21
  %v38 = vpack.c.b16 %v33, %v32
  %v39 = vpack.c.b16 %v35, %v34
  %v40 = vpack.c.b16 %v37, %v36
  %vm44 = vcmask 392192
  %v46 = vsel %vm44, %v15, 0
  %48 = vmatpush.bf16.msra.mxu0 0
  %49 = vmatpush.bf16.msra.mxu0 0
  %50 = vmatpush.bf16.msra.mxu0 0
  %51 = vmatpush.bf16.msra.mxu0 0
  %52 = vmatpush.bf16.msra.mxu0 0
  %53 = vmatpush.bf16.msra.mxu0 %v40
  %54 = vmatpush.bf16.msra.mxu0 %v39
  %55 = vmatpush.bf16.msra.mxu0 %v38
  %56 = vmatmul.bf16.gmra.mxu0 %v46
  %v57 = vpop.f32.mrf.mxu0
  %v58 = vadd.f32 %v24, %v57
  %v59 = vpop.f32.mrf.mxu0
  %60 = vdwg.mxu0
  %v61 = vmax.f32 %v58, 0.0
  %v62 = vpack.c.bf16 %v61, %v61
  %vm63 = vcmask 388096
  %64 = vst.msk [vmem:[%s3] sm:$0xf] %vm63, %v62
  // Predicated region
  $region14: #{shufflenet_v2_forward.78} parent=0 // pred_check
    _
  $region15: #{shufflenet_v2_forward.78} parent=0 // pred_check_branch
    %66 = sbr.rel (0) target = $region17
  $region16: #{shufflenet_v2_forward.78} parent=0 // pred_region
    _
  $region17: #{shufflenet_v2_forward.78} parent=0 // pred_fallthru
    _
  // Predicated region
  $region18: #{shufflenet_v2_forward.78} parent=0 // pred_check
    _
  $region19: #{shufflenet_v2_forward.78} parent=0 // pred_check_branch
    %68 = sbr.rel (0) target = $region21
  $region20: #{shufflenet_v2_forward.78} parent=0 // pred_region
    _
  $region21: #{shufflenet_v2_forward.78} parent=0 // pred_fallthru
    _

// kernel: shufflenet_v2_forward.80
$region0: #{shufflenet_v2_forward.80}
  #allocation0 [shape = 'u32[]', space=smem, size = 0x4, offset = 0x4, fixed_abs, tag = 'smem constant byte address 0x4 - core index']
  #allocation1 [shape = 'u32[72,128]{1,0:T(1,128)}', space=vmem, size = 0x9000, scoped, tag = 'internal scratch']
  %s0 = inlined_call_operand.vmem [shape: bf16[2,4,4,48], index: 0, kind: input, shape index: {}]
  %s1 = inlined_call_operand.vmem [shape: f32[9,1,1,48], index: 1, kind: input, shape index: {}]
  %s2 = inlined_call_operand.vmem [shape: f32[1,1,48], index: 2, kind: input, shape index: {}]
  %s3 = inlined_call_operand.vmem [shape: bf16[2,2,2,48], index: 3, kind: output, shape index: {}]
  %s4 = sld [smem:[#allocation0]]
  $region45: #{shufflenet_v2_forward.80} parent=0
    _
  %s6 = ssub.s32 1, %s4
  %s7 = scalar_select 0, %s6, %s4
  loop: start=0, step=1, limit=4
  $region2: #{shufflenet_v2_forward.80} parent=0 // loop_pre_header
    _
  $region3: #{shufflenet_v2_forward.80} parent=0 // loop_header
    %s9 = sphi 0, %s13
    %p10 = scmp.ge.s32.totalorder %s9, 4
    %s19 = sphi 0, %s21
    %s22 = sphi 0, %s19
    %s23 = sphi 0, %s22
    %s39 = sphi 0, %s23
    %s43 = sphi 0, %s43
    %s45 = sphi 0, %s43
    %s46 = sphi 0, %s45
    %s60 = sphi 0, %s46
    %s64 = sphi 0, %s64
    %s66 = sphi 0, %s64
    %s67 = sphi 0, %s66
    %s81 = sphi 0, %s67
    %s87 = sphi 0, %s89
    %s90 = sphi 0, %s87
    %s91 = sphi 0, %s90
    %s107 = sphi 0, %s91
  $region4: #{shufflenet_v2_forward.80} parent=0 // loop_header_branch
    %12 = sbr.rel (%p10) target = $region8
  $region5: #{shufflenet_v2_forward.80} parent=0 // loop_body
    %s14 = ssub.s32 %s9, 1
    %s15 = ssub.s32 %s9, 2
    %s16 = sadd.s32 %s9, 1
    %s17 = ssub.s32 %s9, %s16
    %p18 = scmp.eq.s32.totalorder %s17, 0
    %s20 = sadd.s32 %s19, 1
    %s21 = scalar_select %p18, %s19, %s20
    %p24 = pneg %p18
    %p25 = scmp.eq.s32.totalorder %s9, 1
    %p26 = por %p24, %p25
    %p27 = scmp.ne.s32.totalorder %s19, %s22
    %p28 = scmp.eq.s32.totalorder %s9, 0
    %p29 = por %p27, %p28
    %p30 = scmp.ne.s32.totalorder %s19, %s22
    %p31 = scmp.eq.s32.totalorder %s14, 1
    %p32 = por %p30, %p31
    %p33 = scmp.ne.s32.totalorder %s22, %s23
    %p34 = scmp.eq.s32.totalorder %s14, 0
    %p35 = por %p33, %p34
    %p36 = scmp.ne.s32.totalorder %s22, %s23
    %p37 = scmp.eq.s32.totalorder %s15, 1
    %p38 = por %p36, %p37
    %p40 = scmp.ne.s32.totalorder %s23, %s39
    %p41 = scmp.eq.s32.totalorder %s15, 0
    %p42 = por %p40, %p41
    %s44 = sadd.s32 %s43, 1
    %p47 = scmp.eq.s32.totalorder %s9, 1
    %p48 = scmp.ne.s32.totalorder %s43, %s45
    %p49 = scmp.eq.s32.totalorder %s9, 0
    %p50 = por %p48, %p49
    %p51 = scmp.ne.s32.totalorder %s43, %s45
    %p52 = scmp.eq.s32.totalorder %s14, 1
    %p53 = por %p51, %p52
    %p54 = scmp.ne.s32.totalorder %s45, %s46
    %p55 = scmp.eq.s32.totalorder %s14, 0
    %p56 = por %p54, %p55
    %p57 = scmp.ne.s32.totalorder %s45, %s46
    %p58 = scmp.eq.s32.totalorder %s15, 1
    %p59 = por %p57, %p58
    %p61 = scmp.ne.s32.totalorder %s46, %s60
    %p62 = scmp.eq.s32.totalorder %s15, 0
    %p63 = por %p61, %p62
    %s65 = sadd.s32 %s64, 1
    %p68 = scmp.eq.s32.totalorder %s9, 1
    %p69 = scmp.ne.s32.totalorder %s64, %s66
    %p70 = scmp.eq.s32.totalorder %s9, 0
    %p71 = por %p69, %p70
    %p72 = scmp.ne.s32.totalorder %s64, %s66
    %p73 = scmp.eq.s32.totalorder %s14, 1
    %p74 = por %p72, %p73
    %p75 = scmp.ne.s32.totalorder %s66, %s67
    %p76 = scmp.eq.s32.totalorder %s14, 0
    %p77 = por %p75, %p76
    %p78 = scmp.ne.s32.totalorder %s66, %s67
    %p79 = scmp.eq.s32.totalorder %s15, 1
    %p80 = por %p78, %p79
    %p82 = scmp.ne.s32.totalorder %s67, %s81
    %p83 = scmp.eq.s32.totalorder %s15, 0
    %p84 = por %p82, %p83
    %s85 = ssub.s32 %s9, %s16
    %p86 = scmp.eq.s32.totalorder %s85, 0
    %s88 = sadd.s32 %s87, 1
    %s89 = scalar_select %p86, %s87, %s88
    %p92 = pneg %p86
    %p93 = scmp.eq.s32.totalorder %s9, 1
    %p94 = por %p92, %p93
    %p95 = scmp.ne.s32.totalorder %s87, %s90
    %p96 = scmp.eq.s32.totalorder %s9, 0
    %p97 = por %p95, %p96
    %p98 = scmp.ne.s32.totalorder %s87, %s90
    %p99 = scmp.eq.s32.totalorder %s14, 1
    %p100 = por %p98, %p99
    %p101 = scmp.ne.s32.totalorder %s90, %s91
    %p102 = scmp.eq.s32.totalorder %s14, 0
    %p103 = por %p101, %p102
    %p104 = scmp.ne.s32.totalorder %s90, %s91
    %p105 = scmp.eq.s32.totalorder %s15, 1
    %p106 = por %p104, %p105
    %p108 = scmp.ne.s32.totalorder %s91, %s107
    %p109 = scmp.eq.s32.totalorder %s15, 0
    %p110 = por %p108, %p109
    %p111 = scmp.le.s32.totalorder 1, %s9
    %p112 = scmp.lt.s32.totalorder %s9, 3
    %p113 = pnand %p111, %p112
    %p114 = pneg %p113
    // Predicated region
    $region9: #{shufflenet_v2_forward.80} parent=5 // pred_check
      _
    $region10: #{shufflenet_v2_forward.80} parent=5 // pred_check_branch
      %116 = sbr.rel (%p113) target = $region12
    $region11: #{shufflenet_v2_forward.80} parent=5 // pred_region
      %s117 = ssub.s32 %s9, 1
      // Predicated region
      $region13: #{shufflenet_v2_forward.80} parent=11 // pred_check
        %p118 = pneg %p56
      $region14: #{shufflenet_v2_forward.80} parent=11 // pred_check_branch
        %120 = sbr.rel (%p118) target = $region16
      $region15: #{shufflenet_v2_forward.80} parent=11 // pred_region
        _
      $region16: #{shufflenet_v2_forward.80} parent=11 // pred_fallthru
        _
      // Predicated region
      $region17: #{shufflenet_v2_forward.80} parent=11 // pred_check
        %p121 = pneg %p77
      $region18: #{shufflenet_v2_forward.80} parent=11 // pred_check_branch
        %123 = sbr.rel (%p121) target = $region20
      $region19: #{shufflenet_v2_forward.80} parent=11 // pred_region
        _
      $region20: #{shufflenet_v2_forward.80} parent=11 // pred_fallthru
        _
    $region12: #{shufflenet_v2_forward.80} parent=5 // pred_fallthru
      _
    %p124 = scmp.lt.s32.totalorder %s9, 2
    // Predicated region
    $region21: #{shufflenet_v2_forward.80} parent=5 // pred_check
      %p125 = pneg %p124
    $region22: #{shufflenet_v2_forward.80} parent=5 // pred_check_branch
      %127 = sbr.rel (%p125) target = $region24
    $region23: #{shufflenet_v2_forward.80} parent=5 // pred_region
      // Predicated region
      $region25: #{shufflenet_v2_forward.80} parent=23 // pred_check
        %p128 = pneg %p29
      $region26: #{shufflenet_v2_forward.80} parent=23 // pred_check_branch
        %130 = sbr.rel (%p128) target = $region28
      $region27: #{shufflenet_v2_forward.80} parent=23 // pred_region
        %p131 = scmp.lt.s32.totalorder %s9, 1
        %s132 = scalar_select %p131, %s9, 1
        %s133 = smul.addr %s132, 4
        %s134 = smul.addr %s133, 2
        %s135 = scalar_lea.vmem %s0, %s134
      $region28: #{shufflenet_v2_forward.80} parent=23 // pred_fallthru
        _
    $region24: #{shufflenet_v2_forward.80} parent=5 // pred_fallthru
      _
    %p136 = scmp.le.s32.totalorder 1, %s9
    %p137 = scmp.lt.s32.totalorder %s9, 3
    %p138 = pnand %p136, %p137
    %p139 = pneg %p138
    // Predicated region
    $region29: #{shufflenet_v2_forward.80} parent=5 // pred_check
      _
    $region30: #{shufflenet_v2_forward.80} parent=5 // pred_check_branch
      %141 = sbr.rel (%p138) target = $region32
    $region31: #{shufflenet_v2_forward.80} parent=5 // pred_region
      %s142 = ssub.s32 %s9, 1
      %p143 = scmp.lt.s32.totalorder %s14, 1
      %s144 = scalar_select %p143, %s14, 1
      %s145 = smul.addr %s144, 4
      %s146 = smul.addr %s145, 2
      %s147 = scalar_lea.vmem %s0, %s146
      %p148 = pneg %p35
      %p149 = pneg %p32
      %p150 = pneg %p56
      %p151 = pneg %p53
      %p152 = pneg %p77
      %p153 = pneg %p74
      %p154 = pneg %p103
      %p155 = pneg %p100
      %p156 = scmp.lt.s32.totalorder %s14, 1
      %s157 = scalar_select %p156, %s14, 1
      %s158 = smul.addr %s157, 2
      %s159 = scalar_lea.vmem %s3, %s158
      %p160 = scmp.lt.s32.totalorder %s14, 1
      %s161 = scalar_select %p160, %s14, 1
      %s162 = smul.addr %s161, 4
      %s163 = smul.addr %s162, 2
      %s164 = scalar_lea.vmem %s0, %s163
      %p165 = scmp.lt.s32.totalorder %s14, 1
      %s166 = scalar_select %p165, %s14, 1
      %s167 = smul.addr %s166, 2
      %s168 = scalar_lea.vmem %s3, %s167
      %v169 = vld [vmem:[%s164] sm:$0x1]
      %v170 = vld [vmem:[%s164 + $0x2] sm:$0x1]
      %v171 = vunpack.c.l.bf16 %v169
      %v172 = vunpack.c.l.bf16 %v170
      %v173 = vld [vmem:[%s1] sm:$0x1]
      %v175 = vperm.slane %v173, 0
      %v177 = vmul.f32 %v171, %v175
      %v178 = vmul.f32 %v172, %v175
      %v179 = vld [vmem:[%s164] sm:$0x3]
      %v180 = vld [vmem:[%s164 + $0x2] sm:$0x3]
      %v181 = vunpack.c.l.bf16 %v179
      %v182 = vunpack.c.l.bf16 %v180
      %s183 = scalar_lea.vmem %s1, 1
      %v184 = vld [vmem:[%s183] sm:$0x1]
      %v186 = vperm.slane %v184, 0
      %v188 = vmul.f32 %v181, %v186
      %v189 = vmul.f32 %v182, %v186
      %v190 = vld [vmem:[%s164] sm:$0x2]
      %v191 = vld [vmem:[%s164 + $0x2] sm:$0x2]
      %v192 = vunpack.c.l.bf16 %v190
      %v193 = vunpack.c.l.bf16 %v191
      %s194 = scalar_lea.vmem %s1, 2
      %v195 = vld [vmem:[%s194] sm:$0x1]
      %v197 = vperm.slane %v195, 0
      %v199 = vmul.f32 %v192, %v197
      %v200 = vmul.f32 %v193, %v197
      %s201 = scalar_lea.vmem %s164, 2
      %v202 = vld [vmem:[%s201] sm:$0x1]
      %v203 = vld [vmem:[%s201 + $0x2] sm:$0x1]
      %v204 = vunpack.c.l.bf16 %v202
      %v205 = vunpack.c.l.bf16 %v203
      %s206 = scalar_lea.vmem %s1, 3
      %v207 = vld [vmem:[%s206] sm:$0x1]
      %v209 = vperm.slane %v207, 0
      %v211 = vmul.f32 %v204, %v209
      %v212 = vmul.f32 %v205, %v209
      %v213 = vld [vmem:[%s201] sm:$0x3]
      %v214 = vld [vmem:[%s201 + $0x2] sm:$0x3]
      %v215 = vunpack.c.l.bf16 %v213
      %v216 = vunpack.c.l.bf16 %v214
      %s217 = scalar_lea.vmem %s1, 4
      %v218 = vld [vmem:[%s217] sm:$0x1]
      %v220 = vperm.slane %v218, 0
      %v222 = vmul.f32 %v215, %v220
      %v223 = vmul.f32 %v216, %v220
      %v224 = vld [vmem:[%s201] sm:$0x2]
      %v225 = vld [vmem:[%s201 + $0x2] sm:$0x2]
      %v226 = vunpack.c.l.bf16 %v224
      %v227 = vunpack.c.l.bf16 %v225
      %s228 = scalar_lea.vmem %s1, 5
      %v229 = vld [vmem:[%s228] sm:$0x1]
      %v231 = vperm.slane %v229, 0
      %v233 = vmul.f32 %v226, %v231
      %v234 = vmul.f32 %v227, %v231
      %s235 = scalar_lea.vmem %s164, 4
      %v236 = vld [vmem:[%s235] sm:$0x1]
      %v237 = vld [vmem:[%s235 + $0x2] sm:$0x1]
      %v238 = vunpack.c.l.bf16 %v236
      %v239 = vunpack.c.l.bf16 %v237
      %s240 = scalar_lea.vmem %s1, 6
      %v241 = vld [vmem:[%s240] sm:$0x1]
      %v243 = vperm.slane %v241, 0
      %v245 = vmul.f32 %v238, %v243
      %v246 = vmul.f32 %v239, %v243
      %v247 = vld [vmem:[%s235] sm:$0x3]
      %v248 = vld [vmem:[%s235 + $0x2] sm:$0x3]
      %v249 = vunpack.c.l.bf16 %v247
      %v250 = vunpack.c.l.bf16 %v248
      %s251 = scalar_lea.vmem %s1, 7
      %v252 = vld [vmem:[%s251] sm:$0x1]
      %v254 = vperm.slane %v252, 0
      %v256 = vmul.f32 %v249, %v254
      %v257 = vmul.f32 %v250, %v254
      %v258 = vld [vmem:[%s235] sm:$0x2]
      %v259 = vld [vmem:[%s235 + $0x2] sm:$0x2]
      %v260 = vunpack.c.l.bf16 %v258
      %v261 = vunpack.c.l.bf16 %v259
      %s262 = scalar_lea.vmem %s1, 8
      %v263 = vld [vmem:[%s262] sm:$0x1]
      %v265 = vperm.slane %v263, 0
      %v267 = vmul.f32 %v260, %v265
      %v268 = vmul.f32 %v261, %v265
      %v271 = vrot.slane %v188, 5
      %v272 = vrot.slane %v271, 4
      %v273 = vrot.slane %v189, 5
      %v274 = vrot.slane %v273, 4
      %v277 = vadd.f32 %v177, %v272
      %v278 = vadd.f32 %v178, %v274
      %v281 = vrot.slane %v211, 6
      %v282 = vrot.slane %v212, 6
      %v285 = vadd.f32 %v199, %v281
      %v286 = vadd.f32 %v200, %v282
      %v289 = vrot.slane %v285, 6
      %v290 = vrot.slane %v289, 4
      %v291 = vrot.slane %v286, 6
      %v292 = vrot.slane %v291, 4
      %v295 = vadd.f32 %v277, %v290
      %v296 = vadd.f32 %v278, %v292
      %v299 = vrot.slane %v233, 5
      %v300 = vrot.slane %v299, 4
      %v301 = vrot.slane %v234, 5
      %v302 = vrot.slane %v301, 4
      %v305 = vadd.f32 %v222, %v300
      %v306 = vadd.f32 %v223, %v302
      %v309 = vrot.slane %v256, 5
      %v310 = vrot.slane %v309, 4
      %v311 = vrot.slane %v257, 5
      %v312 = vrot.slane %v311, 4
      %v315 = vadd.f32 %v245, %v310
      %v316 = vadd.f32 %v246, %v312
      %v319 = vrot.slane %v315, 7
      %v320 = vrot.slane %v316, 7
      %v323 = vadd.f32 %v305, %v319
      %v324 = vadd.f32 %v306, %v320
      %v327 = vrot.slane %v323, 5
      %v328 = vrot.slane %v327, 4
      %v329 = vrot.slane %v324, 5
      %v330 = vrot.slane %v329, 4
      %v333 = vadd.f32 %v295, %v328
      %v334 = vadd.f32 %v296, %v330
      %v337 = vrot.slane %v267, 6
      %v338 = vrot.slane %v337, 4
      %v339 = vrot.slane %v268, 6
      %v340 = vrot.slane %v339, 4
      %v343 = vadd.f32 %v333, %v338
      %v344 = vadd.f32 %v334, %v340
      %v345 = vld [vmem:[%s2] sm:$0x1]
      %v347 = vperm.slane %v345, 0
      %v349 = vadd.f32 %v343, %v347
      %v350 = vadd.f32 %v344, %v347
      %v351 = vpack.c.bf16 %v349, %v349
      %v352 = vpack.c.bf16 %v350, %v350
      %vm353 = vcmask 385024
      %354 = vst.msk [vmem:[%s168] sm:$0x1] %vm353, %v351
      %355 = vst.msk [vmem:[%s168 + $0x1] sm:$0x1] %vm353, %v352
      %p356 = scmp.lt.s32.totalorder %s14, 1
      %s357 = scalar_select %p356, %s14, 1
      %s358 = smul.addr %s357, 2
      %s359 = scalar_lea.vmem %s3, %s358
      // Predicated region
      $region33: #{shufflenet_v2_forward.80} parent=31 // pred_check
        %p360 = pneg %p100
      $region34: #{shufflenet_v2_forward.80} parent=31 // pred_check_branch
        %362 = sbr.rel (%p360) target = $region36
      $region35: #{shufflenet_v2_forward.80} parent=31 // pred_region
        _
      $region36: #{shufflenet_v2_forward.80} parent=31 // pred_fallthru
        _
    $region32: #{shufflenet_v2_forward.80} parent=5 // pred_fallthru
      _
    %p363 = scmp.le.s32.totalorder 2, %s9
    // Predicated region
    $region37: #{shufflenet_v2_forward.80} parent=5 // pred_check
      %p364 = pneg %p363
    $region38: #{shufflenet_v2_forward.80} parent=5 // pred_check_branch
      %366 = sbr.rel (%p364) target = $region40
    $region39: #{shufflenet_v2_forward.80} parent=5 // pred_region
      %s367 = ssub.s32 %s9, 2
      // Predicated region
      $region41: #{shufflenet_v2_forward.80} parent=39 // pred_check
        %p368 = pneg %p106
      $region42: #{shufflenet_v2_forward.80} parent=39 // pred_check_branch
        %370 = sbr.rel (%p368) target = $region44
      $region43: #{shufflenet_v2_forward.80} parent=39 // pred_region
        %p371 = scmp.lt.s32.totalorder %s15, 1
        %s372 = scalar_select %p371, %s15, 1
        %s373 = smul.addr %s372, 2
        %s374 = scalar_lea.vmem %s3, %s373
      $region44: #{shufflenet_v2_forward.80} parent=39 // pred_fallthru
        _
    $region40: #{shufflenet_v2_forward.80} parent=5 // pred_fallthru
      _
  $region6: #{shufflenet_v2_forward.80} parent=0 // loop_footer
    %s13 = sadd.s32 1, %s9
  $region7: #{shufflenet_v2_forward.80} parent=0 // loop_footer_branch
    %8 = sbr.rel target = $region3
  $region8: #{shufflenet_v2_forward.80} parent=0 // loop_exit
    _

// kernel: shufflenet_v2_forward.102
$region0: #{shufflenet_v2_forward.102}
  #allocation0 [shape = 'u32[]', space=smem, size = 0x4, offset = 0x4, fixed_abs, tag = 'smem constant byte address 0x4 - core index']
  #allocation1 [shape = 'u32[72,128]{1,0:T(1,128)}', space=vmem, size = 0x9000, scoped, tag = 'internal scratch']
  %s0 = inlined_call_operand.vmem [shape: bf16[8,96], index: 0, kind: input, shape index: {}]
  %s1 = inlined_call_operand.vmem [shape: bf16[96,96], index: 1, kind: input, shape index: {}]
  %s2 = inlined_call_operand.vmem [shape: f32[1,96], index: 2, kind: input, shape index: {}]
  %s3 = inlined_call_operand.vmem [shape: bf16[8,96], index: 3, kind: output, shape index: {}]
  %s4 = sld [smem:[#allocation0]]
  $region22: #{shufflenet_v2_forward.102} parent=0
    _
  %s6 = ssub.s32 1, %s4
  %s7 = scalar_select 0, %s6, %s4
  // Predicated region
  $region2: #{shufflenet_v2_forward.102} parent=0 // pred_check
    _
  $region3: #{shufflenet_v2_forward.102} parent=0 // pred_check_branch
    %9 = sbr.rel (0) target = $region5
  $region4: #{shufflenet_v2_forward.102} parent=0 // pred_region
    _
  $region5: #{shufflenet_v2_forward.102} parent=0 // pred_fallthru
    _
  // Predicated region
  $region6: #{shufflenet_v2_forward.102} parent=0 // pred_check
    _
  $region7: #{shufflenet_v2_forward.102} parent=0 // pred_check_branch
    %11 = sbr.rel (0) target = $region9
  $region8: #{shufflenet_v2_forward.102} parent=0 // pred_region
    _
  $region9: #{shufflenet_v2_forward.102} parent=0 // pred_fallthru
    _
  // Predicated region
  $region10: #{shufflenet_v2_forward.102} parent=0 // pred_check
    _
  $region11: #{shufflenet_v2_forward.102} parent=0 // pred_check_branch
    %13 = sbr.rel (0) target = $region13
  $region12: #{shufflenet_v2_forward.102} parent=0 // pred_region
    _
  $region13: #{shufflenet_v2_forward.102} parent=0 // pred_fallthru
    _
  %v15 = vld [vmem:[%s0] sm:$0xf]
  %v16 = vld [vmem:[%s1] sm:$0xf]
  %v17 = vld [vmem:[%s1 + $0x4] sm:$0xf]
  %v18 = vld [vmem:[%s1 + $0x8] sm:$0xf]
  %v19 = vld [vmem:[%s1 + $0xc] sm:$0xf]
  %v20 = vld [vmem:[%s1 + $0x10] sm:$0xf]
  %v21 = vld [vmem:[%s1 + $0x14] sm:$0xf]
  %v22 = vld [vmem:[%s1 + $0x18] sm:$0xf]
  %v23 = vld [vmem:[%s1 + $0x1c] sm:$0xf]
  %v24 = vld [vmem:[%s1 + $0x20] sm:$0xf]
  %v25 = vld [vmem:[%s1 + $0x24] sm:$0xf]
  %v26 = vld [vmem:[%s1 + $0x28] sm:$0xf]
  %v27 = vld [vmem:[%s1 + $0x2c] sm:$0xf]
  %v28 = vld [vmem:[%s2] sm:$0x1]
  %v30 = vperm.slane %v28, 0
  %v44 = vunpack.c.l.b16 %v16
  %v45 = vunpack.c.l.b16 %v17
  %v46 = vunpack.c.l.b16 %v18
  %v47 = vunpack.c.l.b16 %v19
  %v48 = vunpack.c.l.b16 %v20
  %v49 = vunpack.c.l.b16 %v21
  %v50 = vunpack.c.l.b16 %v22
  %v51 = vunpack.c.l.b16 %v23
  %v52 = vunpack.c.l.b16 %v24
  %v53 = vunpack.c.l.b16 %v25
  %v54 = vunpack.c.l.b16 %v26
  %v55 = vunpack.c.l.b16 %v27
  %v56 = vpack.c.b16 %v45, %v44
  %v57 = vpack.c.b16 %v47, %v46
  %v58 = vpack.c.b16 %v49, %v48
  %v59 = vpack.c.b16 %v51, %v50
  %v60 = vpack.c.b16 %v53, %v52
  %v61 = vpack.c.b16 %v55, %v54
  %vm68 = vcmask 785408
  %v70 = vsel %vm68, %v15, 0
  %72 = vmatpush.bf16.msra.mxu0 0
  %73 = vmatpush.bf16.msra.mxu0 0
  %74 = vmatpush.bf16.msra.mxu0 %v61
  %75 = vmatpush.bf16.msra.mxu0 %v60
  %76 = vmatpush.bf16.msra.mxu0 %v59
  %77 = vmatpush.bf16.msra.mxu0 %v58
  %78 = vmatpush.bf16.msra.mxu0 %v57
  %79 = vmatpush.bf16.msra.mxu0 %v56
  %80 = vmatmul.bf16.gmra.mxu0 %v70
  %v81 = vpop.f32.mrf.mxu0
  %v82 = vadd.f32 %v30, %v81
  %v83 = vpop.f32.mrf.mxu0
  %84 = vdwg.mxu0
  %v85 = vmax.f32 %v82, 0.0
  %v86 = vpack.c.bf16 %v85, %v85
  %vm87 = vcmask 781312
  %88 = vst.msk [vmem:[%s3] sm:$0xf] %vm87, %v86
  // Predicated region
  $region14: #{shufflenet_v2_forward.102} parent=0 // pred_check
    _
  $region15: #{shufflenet_v2_forward.102} parent=0 // pred_check_branch
    %90 = sbr.rel (0) target = $region17
  $region16: #{shufflenet_v2_forward.102} parent=0 // pred_region
    _
  $region17: #{shufflenet_v2_forward.102} parent=0 // pred_fallthru
    _
  // Predicated region
  $region18: #{shufflenet_v2_forward.102} parent=0 // pred_check
    _
  $region19: #{shufflenet_v2_forward.102} parent=0 // pred_check_branch
    %92 = sbr.rel (0) target = $region21
  $region20: #{shufflenet_v2_forward.102} parent=0 // pred_region
    _
  $region21: #{shufflenet_v2_forward.102} parent=0 // pred_fallthru
    _

// kernel: shufflenet_v2_forward.104
$region0: #{shufflenet_v2_forward.104}
  #allocation0 [shape = 'u32[]', space=smem, size = 0x4, offset = 0x4, fixed_abs, tag = 'smem constant byte address 0x4 - core index']
  #allocation1 [shape = 'u32[72,128]{1,0:T(1,128)}', space=vmem, size = 0x9000, scoped, tag = 'internal scratch']
  %s0 = inlined_call_operand.vmem [shape: bf16[2,96], index: 0, kind: input, shape index: {}]
  %s1 = inlined_call_operand.vmem [shape: bf16[96,96], index: 1, kind: input, shape index: {}]
  %s2 = inlined_call_operand.vmem [shape: f32[1,96], index: 2, kind: input, shape index: {}]
  %s3 = inlined_call_operand.vmem [shape: bf16[2,96], index: 3, kind: output, shape index: {}]
  %s4 = sld [smem:[#allocation0]]
  $region22: #{shufflenet_v2_forward.104} parent=0
    _
  %s6 = ssub.s32 1, %s4
  %s7 = scalar_select 0, %s6, %s4
  // Predicated region
  $region2: #{shufflenet_v2_forward.104} parent=0 // pred_check
    _
  $region3: #{shufflenet_v2_forward.104} parent=0 // pred_check_branch
    %9 = sbr.rel (0) target = $region5
  $region4: #{shufflenet_v2_forward.104} parent=0 // pred_region
    _
  $region5: #{shufflenet_v2_forward.104} parent=0 // pred_fallthru
    _
  // Predicated region
  $region6: #{shufflenet_v2_forward.104} parent=0 // pred_check
    _
  $region7: #{shufflenet_v2_forward.104} parent=0 // pred_check_branch
    %11 = sbr.rel (0) target = $region9
  $region8: #{shufflenet_v2_forward.104} parent=0 // pred_region
    _
  $region9: #{shufflenet_v2_forward.104} parent=0 // pred_fallthru
    _
  // Predicated region
  $region10: #{shufflenet_v2_forward.104} parent=0 // pred_check
    _
  $region11: #{shufflenet_v2_forward.104} parent=0 // pred_check_branch
    %13 = sbr.rel (0) target = $region13
  $region12: #{shufflenet_v2_forward.104} parent=0 // pred_region
    _
  $region13: #{shufflenet_v2_forward.104} parent=0 // pred_fallthru
    _
  %v15 = vld [vmem:[%s0] sm:$0x1]
  %v16 = vld [vmem:[%s1] sm:$0xf]
  %v17 = vld [vmem:[%s1 + $0x4] sm:$0xf]
  %v18 = vld [vmem:[%s1 + $0x8] sm:$0xf]
  %v19 = vld [vmem:[%s1 + $0xc] sm:$0xf]
  %v20 = vld [vmem:[%s1 + $0x10] sm:$0xf]
  %v21 = vld [vmem:[%s1 + $0x14] sm:$0xf]
  %v22 = vld [vmem:[%s1 + $0x18] sm:$0xf]
  %v23 = vld [vmem:[%s1 + $0x1c] sm:$0xf]
  %v24 = vld [vmem:[%s1 + $0x20] sm:$0xf]
  %v25 = vld [vmem:[%s1 + $0x24] sm:$0xf]
  %v26 = vld [vmem:[%s1 + $0x28] sm:$0xf]
  %v27 = vld [vmem:[%s1 + $0x2c] sm:$0xf]
  %v28 = vld [vmem:[%s2] sm:$0x1]
  %v30 = vperm.slane %v28, 0
  %v44 = vunpack.c.l.b16 %v16
  %v45 = vunpack.c.l.b16 %v17
  %v46 = vunpack.c.l.b16 %v18
  %v47 = vunpack.c.l.b16 %v19
  %v48 = vunpack.c.l.b16 %v20
  %v49 = vunpack.c.l.b16 %v21
  %v50 = vunpack.c.l.b16 %v22
  %v51 = vunpack.c.l.b16 %v23
  %v52 = vunpack.c.l.b16 %v24
  %v53 = vunpack.c.l.b16 %v25
  %v54 = vunpack.c.l.b16 %v26
  %v55 = vunpack.c.l.b16 %v27
  %v56 = vpack.c.b16 %v45, %v44
  %v57 = vpack.c.b16 %v47, %v46
  %v58 = vpack.c.b16 %v49, %v48
  %v59 = vpack.c.b16 %v51, %v50
  %v60 = vpack.c.b16 %v53, %v52
  %v61 = vpack.c.b16 %v55, %v54
  %vm68 = vcmask 785408
  %v70 = vsel %vm68, %v15, 0
  %72 = vmatpush.bf16.msra.mxu0 0
  %73 = vmatpush.bf16.msra.mxu0 0
  %74 = vmatpush.bf16.msra.mxu0 %v61
  %75 = vmatpush.bf16.msra.mxu0 %v60
  %76 = vmatpush.bf16.msra.mxu0 %v59
  %77 = vmatpush.bf16.msra.mxu0 %v58
  %78 = vmatpush.bf16.msra.mxu0 %v57
  %79 = vmatpush.bf16.msra.mxu0 %v56
  %80 = vmatmul.bf16.gmra.mxu0 %v70
  %v81 = vpop.f32.mrf.mxu0
  %v82 = vadd.f32 %v30, %v81
  %v83 = vpop.f32.mrf.mxu0
  %84 = vdwg.mxu0
  %v85 = vmax.f32 %v82, 0.0
  %v86 = vpack.c.bf16 %v85, %v85
  %vm87 = vcmask 778240
  %88 = vst.msk [vmem:[%s3] sm:$0x1] %vm87, %v86
  // Predicated region
  $region14: #{shufflenet_v2_forward.104} parent=0 // pred_check
    _
  $region15: #{shufflenet_v2_forward.104} parent=0 // pred_check_branch
    %90 = sbr.rel (0) target = $region17
  $region16: #{shufflenet_v2_forward.104} parent=0 // pred_region
    _
  $region17: #{shufflenet_v2_forward.104} parent=0 // pred_fallthru
    _
  // Predicated region
  $region18: #{shufflenet_v2_forward.104} parent=0 // pred_check
    _
  $region19: #{shufflenet_v2_forward.104} parent=0 // pred_check_branch
    %92 = sbr.rel (0) target = $region21
  $region20: #{shufflenet_v2_forward.104} parent=0 // pred_region
    _
  $region21: #{shufflenet_v2_forward.104} parent=0 // pred_fallthru
    _

// kernel: shufflenet_v2_forward.103
$region0: #{shufflenet_v2_forward.103}
  #allocation0 [shape = 'u32[]', space=smem, size = 0x4, offset = 0x4, fixed_abs, tag = 'smem constant byte address 0x4 - core index']
  #allocation1 [shape = 'u32[72,128]{1,0:T(1,128)}', space=vmem, size = 0x9000, scoped, tag = 'internal scratch']
  %s0 = inlined_call_operand.vmem [shape: bf16[2,4,2,2,96], index: 0, kind: input, shape index: {}]
  %s1 = inlined_call_operand.vmem [shape: f32[9,1,1,96], index: 1, kind: input, shape index: {}]
  %s2 = inlined_call_operand.vmem [shape: f32[1,1,96], index: 2, kind: input, shape index: {}]
  %s3 = inlined_call_operand.vmem [shape: bf16[2,1,1,96], index: 3, kind: output, shape index: {}]
  %s4 = sld [smem:[#allocation0]]
  $region45: #{shufflenet_v2_forward.103} parent=0
    _
  %s6 = ssub.s32 1, %s4
  %s7 = scalar_select 0, %s6, %s4
  loop: start=0, step=1, limit=4
  $region2: #{shufflenet_v2_forward.103} parent=0 // loop_pre_header
    _
  $region3: #{shufflenet_v2_forward.103} parent=0 // loop_header
    %s9 = sphi 0, %s13
    %p10 = scmp.ge.s32.totalorder %s9, 4
    %s19 = sphi 0, %s21
    %s22 = sphi 0, %s19
    %s23 = sphi 0, %s22
    %s39 = sphi 0, %s23
    %s43 = sphi 0, %s43
    %s45 = sphi 0, %s43
    %s46 = sphi 0, %s45
    %s60 = sphi 0, %s46
    %s64 = sphi 0, %s64
    %s66 = sphi 0, %s64
    %s67 = sphi 0, %s66
    %s81 = sphi 0, %s67
    %s87 = sphi 0, %s89
    %s90 = sphi 0, %s87
    %s91 = sphi 0, %s90
    %s107 = sphi 0, %s91
  $region4: #{shufflenet_v2_forward.103} parent=0 // loop_header_branch
    %12 = sbr.rel (%p10) target = $region8
  $region5: #{shufflenet_v2_forward.103} parent=0 // loop_body
    %s14 = ssub.s32 %s9, 1
    %s15 = ssub.s32 %s9, 2
    %s16 = sadd.s32 %s9, 1
    %s17 = ssub.s32 %s9, %s16
    %p18 = scmp.eq.s32.totalorder %s17, 0
    %s20 = sadd.s32 %s19, 1
    %s21 = scalar_select %p18, %s19, %s20
    %p24 = pneg %p18
    %p25 = scmp.eq.s32.totalorder %s9, 1
    %p26 = por %p24, %p25
    %p27 = scmp.ne.s32.totalorder %s19, %s22
    %p28 = scmp.eq.s32.totalorder %s9, 0
    %p29 = por %p27, %p28
    %p30 = scmp.ne.s32.totalorder %s19, %s22
    %p31 = scmp.eq.s32.totalorder %s14, 1
    %p32 = por %p30, %p31
    %p33 = scmp.ne.s32.totalorder %s22, %s23
    %p34 = scmp.eq.s32.totalorder %s14, 0
    %p35 = por %p33, %p34
    %p36 = scmp.ne.s32.totalorder %s22, %s23
    %p37 = scmp.eq.s32.totalorder %s15, 1
    %p38 = por %p36, %p37
    %p40 = scmp.ne.s32.totalorder %s23, %s39
    %p41 = scmp.eq.s32.totalorder %s15, 0
    %p42 = por %p40, %p41
    %s44 = sadd.s32 %s43, 1
    %p47 = scmp.eq.s32.totalorder %s9, 1
    %p48 = scmp.ne.s32.totalorder %s43, %s45
    %p49 = scmp.eq.s32.totalorder %s9, 0
    %p50 = por %p48, %p49
    %p51 = scmp.ne.s32.totalorder %s43, %s45
    %p52 = scmp.eq.s32.totalorder %s14, 1
    %p53 = por %p51, %p52
    %p54 = scmp.ne.s32.totalorder %s45, %s46
    %p55 = scmp.eq.s32.totalorder %s14, 0
    %p56 = por %p54, %p55
    %p57 = scmp.ne.s32.totalorder %s45, %s46
    %p58 = scmp.eq.s32.totalorder %s15, 1
    %p59 = por %p57, %p58
    %p61 = scmp.ne.s32.totalorder %s46, %s60
    %p62 = scmp.eq.s32.totalorder %s15, 0
    %p63 = por %p61, %p62
    %s65 = sadd.s32 %s64, 1
    %p68 = scmp.eq.s32.totalorder %s9, 1
    %p69 = scmp.ne.s32.totalorder %s64, %s66
    %p70 = scmp.eq.s32.totalorder %s9, 0
    %p71 = por %p69, %p70
    %p72 = scmp.ne.s32.totalorder %s64, %s66
    %p73 = scmp.eq.s32.totalorder %s14, 1
    %p74 = por %p72, %p73
    %p75 = scmp.ne.s32.totalorder %s66, %s67
    %p76 = scmp.eq.s32.totalorder %s14, 0
    %p77 = por %p75, %p76
    %p78 = scmp.ne.s32.totalorder %s66, %s67
    %p79 = scmp.eq.s32.totalorder %s15, 1
    %p80 = por %p78, %p79
    %p82 = scmp.ne.s32.totalorder %s67, %s81
    %p83 = scmp.eq.s32.totalorder %s15, 0
    %p84 = por %p82, %p83
    %s85 = ssub.s32 %s9, %s16
    %p86 = scmp.eq.s32.totalorder %s85, 0
    %s88 = sadd.s32 %s87, 1
    %s89 = scalar_select %p86, %s87, %s88
    %p92 = pneg %p86
    %p93 = scmp.eq.s32.totalorder %s9, 1
    %p94 = por %p92, %p93
    %p95 = scmp.ne.s32.totalorder %s87, %s90
    %p96 = scmp.eq.s32.totalorder %s9, 0
    %p97 = por %p95, %p96
    %p98 = scmp.ne.s32.totalorder %s87, %s90
    %p99 = scmp.eq.s32.totalorder %s14, 1
    %p100 = por %p98, %p99
    %p101 = scmp.ne.s32.totalorder %s90, %s91
    %p102 = scmp.eq.s32.totalorder %s14, 0
    %p103 = por %p101, %p102
    %p104 = scmp.ne.s32.totalorder %s90, %s91
    %p105 = scmp.eq.s32.totalorder %s15, 1
    %p106 = por %p104, %p105
    %p108 = scmp.ne.s32.totalorder %s91, %s107
    %p109 = scmp.eq.s32.totalorder %s15, 0
    %p110 = por %p108, %p109
    %p111 = scmp.le.s32.totalorder 1, %s9
    %p112 = scmp.lt.s32.totalorder %s9, 3
    %p113 = pnand %p111, %p112
    %p114 = pneg %p113
    // Predicated region
    $region9: #{shufflenet_v2_forward.103} parent=5 // pred_check
      _
    $region10: #{shufflenet_v2_forward.103} parent=5 // pred_check_branch
      %116 = sbr.rel (%p113) target = $region12
    $region11: #{shufflenet_v2_forward.103} parent=5 // pred_region
      %s117 = ssub.s32 %s9, 1
      // Predicated region
      $region13: #{shufflenet_v2_forward.103} parent=11 // pred_check
        %p118 = pneg %p56
      $region14: #{shufflenet_v2_forward.103} parent=11 // pred_check_branch
        %120 = sbr.rel (%p118) target = $region16
      $region15: #{shufflenet_v2_forward.103} parent=11 // pred_region
        _
      $region16: #{shufflenet_v2_forward.103} parent=11 // pred_fallthru
        _
      // Predicated region
      $region17: #{shufflenet_v2_forward.103} parent=11 // pred_check
        %p121 = pneg %p77
      $region18: #{shufflenet_v2_forward.103} parent=11 // pred_check_branch
        %123 = sbr.rel (%p121) target = $region20
      $region19: #{shufflenet_v2_forward.103} parent=11 // pred_region
        _
      $region20: #{shufflenet_v2_forward.103} parent=11 // pred_fallthru
        _
    $region12: #{shufflenet_v2_forward.103} parent=5 // pred_fallthru
      _
    %p124 = scmp.lt.s32.totalorder %s9, 2
    // Predicated region
    $region21: #{shufflenet_v2_forward.103} parent=5 // pred_check
      %p125 = pneg %p124
    $region22: #{shufflenet_v2_forward.103} parent=5 // pred_check_branch
      %127 = sbr.rel (%p125) target = $region24
    $region23: #{shufflenet_v2_forward.103} parent=5 // pred_region
      // Predicated region
      $region25: #{shufflenet_v2_forward.103} parent=23 // pred_check
        %p128 = pneg %p29
      $region26: #{shufflenet_v2_forward.103} parent=23 // pred_check_branch
        %130 = sbr.rel (%p128) target = $region28
      $region27: #{shufflenet_v2_forward.103} parent=23 // pred_region
        %p131 = scmp.lt.s32.totalorder %s9, 1
        %s132 = scalar_select %p131, %s9, 1
        %s133 = smul.addr %s132, 8
        %s134 = scalar_lea.vmem %s0, %s133
      $region28: #{shufflenet_v2_forward.103} parent=23 // pred_fallthru
        _
    $region24: #{shufflenet_v2_forward.103} parent=5 // pred_fallthru
      _
    %p135 = scmp.le.s32.totalorder 1, %s9
    %p136 = scmp.lt.s32.totalorder %s9, 3
    %p137 = pnand %p135, %p136
    %p138 = pneg %p137
    // Predicated region
    $region29: #{shufflenet_v2_forward.103} parent=5 // pred_check
      _
    $region30: #{shufflenet_v2_forward.103} parent=5 // pred_check_branch
      %140 = sbr.rel (%p137) target = $region32
    $region31: #{shufflenet_v2_forward.103} parent=5 // pred_region
      %s141 = ssub.s32 %s9, 1
      %p142 = scmp.lt.s32.totalorder %s14, 1
      %s143 = scalar_select %p142, %s14, 1
      %s144 = smul.addr %s143, 8
      %s145 = scalar_lea.vmem %s0, %s144
      %p146 = pneg %p35
      %p147 = pneg %p32
      %p148 = pneg %p56
      %p149 = pneg %p53
      %p150 = pneg %p77
      %p151 = pneg %p74
      %p152 = pneg %p103
      %p153 = pneg %p100
      %p154 = scmp.lt.s32.totalorder %s14, 1
      %s155 = scalar_select %p154, %s14, 1
      %s156 = scalar_lea.vmem %s3, %s155
      %p157 = scmp.lt.s32.totalorder %s14, 1
      %s158 = scalar_select %p157, %s14, 1
      %s159 = smul.addr %s158, 8
      %s160 = scalar_lea.vmem %s0, %s159
      %p161 = scmp.lt.s32.totalorder %s14, 1
      %s162 = scalar_select %p161, %s14, 1
      %s163 = scalar_lea.vmem %s3, %s162
      %v164 = vld [vmem:[%s160] sm:$0x1]
      %v165 = vunpack.c.l.bf16 %v164
      %v166 = vld [vmem:[%s1] sm:$0x1]
      %v167 = vmul.f32 %v165, %v166
      %s168 = scalar_lea.vmem %s160, 2
      %v169 = vld [vmem:[%s168] sm:$0x1]
      %v170 = vunpack.c.l.bf16 %v169
      %s171 = scalar_lea.vmem %s1, 1
      %v172 = vld [vmem:[%s171] sm:$0x1]
      %v173 = vmul.f32 %v170, %v172
      %s174 = scalar_lea.vmem %s1, 2
      %v175 = vld [vmem:[%s174] sm:$0x1]
      %v178 = vunpack.c.l.s4 857870592
      %v179 = vunpack.c.0.s8 %v178
      %v180 = vperm.slane %v175, %v179
      %v182 = vmul.f32 %v165, %v180
      %s183 = scalar_lea.vmem %s160, 4
      %v184 = vld [vmem:[%s183] sm:$0x1]
      %v185 = vunpack.c.l.bf16 %v184
      %s186 = scalar_lea.vmem %s1, 3
      %v187 = vld [vmem:[%s186] sm:$0x1]
      %v188 = vmul.f32 %v185, %v187
      %s189 = scalar_lea.vmem %s160, 6
      %v190 = vld [vmem:[%s189] sm:$0x1]
      %v191 = vunpack.c.l.bf16 %v190
      %s192 = scalar_lea.vmem %s1, 4
      %v193 = vld [vmem:[%s192] sm:$0x1]
      %v194 = vmul.f32 %v191, %v193
      %s195 = scalar_lea.vmem %s1, 5
      %v196 = vld [vmem:[%s195] sm:$0x1]
      %v199 = vunpack.c.l.s4 857870592
      %v200 = vunpack.c.0.s8 %v199
      %v201 = vperm.slane %v196, %v200
      %v203 = vmul.f32 %v185, %v201
      %s204 = scalar_lea.vmem %s160, 1
      %v205 = vld [vmem:[%s204] sm:$0x1]
      %v206 = vunpack.c.l.bf16 %v205
      %s207 = scalar_lea.vmem %s1, 6
      %v208 = vld [vmem:[%s207] sm:$0x1]
      %v209 = vmul.f32 %v206, %v208
      %s210 = scalar_lea.vmem %s160, 3
      %v211 = vld [vmem:[%s210] sm:$0x1]
      %v212 = vunpack.c.l.bf16 %v211
      %s213 = scalar_lea.vmem %s1, 7
      %v214 = vld [vmem:[%s213] sm:$0x1]
      %v215 = vmul.f32 %v212, %v214
      %s216 = scalar_lea.vmem %s1, 8
      %v217 = vld [vmem:[%s216] sm:$0x1]
      %v220 = vunpack.c.l.s4 857870592
      %v221 = vunpack.c.0.s8 %v220
      %v222 = vperm.slane %v217, %v221
      %v224 = vmul.f32 %v206, %v222
      %v225 = vadd.f32 %v167, %v173
      %v227 = vrot.slane %v188, 7
      %v229 = vadd.f32 %v182, %v227
      %v231 = vrot.slane %v229, 7
      %v232 = vrot.slane %v231, 2
      %v234 = vadd.f32 %v225, %v232
      %v236 = vrot.slane %v203, 7
      %v237 = vrot.slane %v236, 2
      %v239 = vadd.f32 %v194, %v237
      %v240 = vadd.f32 %v209, %v215
      %v241 = vadd.f32 %v239, %v240
      %v242 = vadd.f32 %v234, %v241
      %v244 = vrot.slane %v224, 7
      %v245 = vrot.slane %v244, 2
      %v247 = vadd.f32 %v242, %v245
      %v248 = vld [vmem:[%s2] sm:$0x1]
      %v249 = vadd.f32 %v247, %v248
      %v250 = vpack.c.bf16 %v249, %v249
      %vm251 = vcmask 778240
      %vm252 = vsmask.f32 256
      %vm253 = vmand %vm251, %vm252
      %v254 = vld [vmem:[%s163] sm:$0x1]
      %v255 = vsel %vm253, %v250, %v254
      %256 = vst [vmem:[%s163] sm:$0x1] %v255
      %p257 = scmp.lt.s32.totalorder %s14, 1
      %s258 = scalar_select %p257, %s14, 1
      %s259 = scalar_lea.vmem %s3, %s258
      // Predicated region
      $region33: #{shufflenet_v2_forward.103} parent=31 // pred_check
        %p260 = pneg %p100
      $region34: #{shufflenet_v2_forward.103} parent=31 // pred_check_branch
        %262 = sbr.rel (%p260) target = $region36
      $region35: #{shufflenet_v2_forward.103} parent=31 // pred_region
        _
      $region36: #{shufflenet_v2_forward.103} parent=31 // pred_fallthru
        _
    $region32: #{shufflenet_v2_forward.103} parent=5 // pred_fallthru
      _
    %p263 = scmp.le.s32.totalorder 2, %s9
    // Predicated region
    $region37: #{shufflenet_v2_forward.103} parent=5 // pred_check
      %p264 = pneg %p263
    $region38: #{shufflenet_v2_forward.103} parent=5 // pred_check_branch
      %266 = sbr.rel (%p264) target = $region40
    $region39: #{shufflenet_v2_forward.103} parent=5 // pred_region
      %s267 = ssub.s32 %s9, 2
      // Predicated region
      $region41: #{shufflenet_v2_forward.103} parent=39 // pred_check
        %p268 = pneg %p106
      $region42: #{shufflenet_v2_forward.103} parent=39 // pred_check_branch
        %270 = sbr.rel (%p268) target = $region44
      $region43: #{shufflenet_v2_forward.103} parent=39 // pred_region
        %p271 = scmp.lt.s32.totalorder %s15, 1
        %s272 = scalar_select %p271, %s15, 1
        %s273 = scalar_lea.vmem %s3, %s272
      $region44: #{shufflenet_v2_forward.103} parent=39 // pred_fallthru
        _
    $region40: #{shufflenet_v2_forward.103} parent=5 // pred_fallthru
      _
  $region6: #{shufflenet_v2_forward.103} parent=0 // loop_footer
    %s13 = sadd.s32 1, %s9
  $region7: #{shufflenet_v2_forward.103} parent=0 // loop_footer_branch
    %8 = sbr.rel target = $region3
  $region8: #{shufflenet_v2_forward.103} parent=0 // loop_exit
    _

// kernel: shufflenet_v2_forward.106
$region0: #{shufflenet_v2_forward.106}
  #allocation0 [shape = 'u32[]', space=smem, size = 0x4, offset = 0x4, fixed_abs, tag = 'smem constant byte address 0x4 - core index']
  #allocation1 [shape = 'u32[72,128]{1,0:T(1,128)}', space=vmem, size = 0x9000, scoped, tag = 'internal scratch']
  %s0 = inlined_call_operand.vmem [shape: bf16[2,3,3,96], index: 0, kind: input, shape index: {}]
  %s1 = inlined_call_operand.vmem [shape: f32[9,1,1,96], index: 1, kind: input, shape index: {}]
  %s2 = inlined_call_operand.vmem [shape: f32[1,1,96], index: 2, kind: input, shape index: {}]
  %s3 = inlined_call_operand.vmem [shape: bf16[2,1,1,96], index: 3, kind: output, shape index: {}]
  %s4 = sld [smem:[#allocation0]]
  $region45: #{shufflenet_v2_forward.106} parent=0
    _
  %s6 = ssub.s32 1, %s4
  %s7 = scalar_select 0, %s6, %s4
  loop: start=0, step=1, limit=4
  $region2: #{shufflenet_v2_forward.106} parent=0 // loop_pre_header
    _
  $region3: #{shufflenet_v2_forward.106} parent=0 // loop_header
    %s9 = sphi 0, %s13
    %p10 = scmp.ge.s32.totalorder %s9, 4
    %s19 = sphi 0, %s21
    %s22 = sphi 0, %s19
    %s23 = sphi 0, %s22
    %s39 = sphi 0, %s23
    %s43 = sphi 0, %s43
    %s45 = sphi 0, %s43
    %s46 = sphi 0, %s45
    %s60 = sphi 0, %s46
    %s64 = sphi 0, %s64
    %s66 = sphi 0, %s64
    %s67 = sphi 0, %s66
    %s81 = sphi 0, %s67
    %s87 = sphi 0, %s89
    %s90 = sphi 0, %s87
    %s91 = sphi 0, %s90
    %s107 = sphi 0, %s91
  $region4: #{shufflenet_v2_forward.106} parent=0 // loop_header_branch
    %12 = sbr.rel (%p10) target = $region8
  $region5: #{shufflenet_v2_forward.106} parent=0 // loop_body
    %s14 = ssub.s32 %s9, 1
    %s15 = ssub.s32 %s9, 2
    %s16 = sadd.s32 %s9, 1
    %s17 = ssub.s32 %s9, %s16
    %p18 = scmp.eq.s32.totalorder %s17, 0
    %s20 = sadd.s32 %s19, 1
    %s21 = scalar_select %p18, %s19, %s20
    %p24 = pneg %p18
    %p25 = scmp.eq.s32.totalorder %s9, 1
    %p26 = por %p24, %p25
    %p27 = scmp.ne.s32.totalorder %s19, %s22
    %p28 = scmp.eq.s32.totalorder %s9, 0
    %p29 = por %p27, %p28
    %p30 = scmp.ne.s32.totalorder %s19, %s22
    %p31 = scmp.eq.s32.totalorder %s14, 1
    %p32 = por %p30, %p31
    %p33 = scmp.ne.s32.totalorder %s22, %s23
    %p34 = scmp.eq.s32.totalorder %s14, 0
    %p35 = por %p33, %p34
    %p36 = scmp.ne.s32.totalorder %s22, %s23
    %p37 = scmp.eq.s32.totalorder %s15, 1
    %p38 = por %p36, %p37
    %p40 = scmp.ne.s32.totalorder %s23, %s39
    %p41 = scmp.eq.s32.totalorder %s15, 0
    %p42 = por %p40, %p41
    %s44 = sadd.s32 %s43, 1
    %p47 = scmp.eq.s32.totalorder %s9, 1
    %p48 = scmp.ne.s32.totalorder %s43, %s45
    %p49 = scmp.eq.s32.totalorder %s9, 0
    %p50 = por %p48, %p49
    %p51 = scmp.ne.s32.totalorder %s43, %s45
    %p52 = scmp.eq.s32.totalorder %s14, 1
    %p53 = por %p51, %p52
    %p54 = scmp.ne.s32.totalorder %s45, %s46
    %p55 = scmp.eq.s32.totalorder %s14, 0
    %p56 = por %p54, %p55
    %p57 = scmp.ne.s32.totalorder %s45, %s46
    %p58 = scmp.eq.s32.totalorder %s15, 1
    %p59 = por %p57, %p58
    %p61 = scmp.ne.s32.totalorder %s46, %s60
    %p62 = scmp.eq.s32.totalorder %s15, 0
    %p63 = por %p61, %p62
    %s65 = sadd.s32 %s64, 1
    %p68 = scmp.eq.s32.totalorder %s9, 1
    %p69 = scmp.ne.s32.totalorder %s64, %s66
    %p70 = scmp.eq.s32.totalorder %s9, 0
    %p71 = por %p69, %p70
    %p72 = scmp.ne.s32.totalorder %s64, %s66
    %p73 = scmp.eq.s32.totalorder %s14, 1
    %p74 = por %p72, %p73
    %p75 = scmp.ne.s32.totalorder %s66, %s67
    %p76 = scmp.eq.s32.totalorder %s14, 0
    %p77 = por %p75, %p76
    %p78 = scmp.ne.s32.totalorder %s66, %s67
    %p79 = scmp.eq.s32.totalorder %s15, 1
    %p80 = por %p78, %p79
    %p82 = scmp.ne.s32.totalorder %s67, %s81
    %p83 = scmp.eq.s32.totalorder %s15, 0
    %p84 = por %p82, %p83
    %s85 = ssub.s32 %s9, %s16
    %p86 = scmp.eq.s32.totalorder %s85, 0
    %s88 = sadd.s32 %s87, 1
    %s89 = scalar_select %p86, %s87, %s88
    %p92 = pneg %p86
    %p93 = scmp.eq.s32.totalorder %s9, 1
    %p94 = por %p92, %p93
    %p95 = scmp.ne.s32.totalorder %s87, %s90
    %p96 = scmp.eq.s32.totalorder %s9, 0
    %p97 = por %p95, %p96
    %p98 = scmp.ne.s32.totalorder %s87, %s90
    %p99 = scmp.eq.s32.totalorder %s14, 1
    %p100 = por %p98, %p99
    %p101 = scmp.ne.s32.totalorder %s90, %s91
    %p102 = scmp.eq.s32.totalorder %s14, 0
    %p103 = por %p101, %p102
    %p104 = scmp.ne.s32.totalorder %s90, %s91
    %p105 = scmp.eq.s32.totalorder %s15, 1
    %p106 = por %p104, %p105
    %p108 = scmp.ne.s32.totalorder %s91, %s107
    %p109 = scmp.eq.s32.totalorder %s15, 0
    %p110 = por %p108, %p109
    %p111 = scmp.le.s32.totalorder 1, %s9
    %p112 = scmp.lt.s32.totalorder %s9, 3
    %p113 = pnand %p111, %p112
    %p114 = pneg %p113
    // Predicated region
    $region9: #{shufflenet_v2_forward.106} parent=5 // pred_check
      _
    $region10: #{shufflenet_v2_forward.106} parent=5 // pred_check_branch
      %116 = sbr.rel (%p113) target = $region12
    $region11: #{shufflenet_v2_forward.106} parent=5 // pred_region
      %s117 = ssub.s32 %s9, 1
      // Predicated region
      $region13: #{shufflenet_v2_forward.106} parent=11 // pred_check
        %p118 = pneg %p56
      $region14: #{shufflenet_v2_forward.106} parent=11 // pred_check_branch
        %120 = sbr.rel (%p118) target = $region16
      $region15: #{shufflenet_v2_forward.106} parent=11 // pred_region
        _
      $region16: #{shufflenet_v2_forward.106} parent=11 // pred_fallthru
        _
      // Predicated region
      $region17: #{shufflenet_v2_forward.106} parent=11 // pred_check
        %p121 = pneg %p77
      $region18: #{shufflenet_v2_forward.106} parent=11 // pred_check_branch
        %123 = sbr.rel (%p121) target = $region20
      $region19: #{shufflenet_v2_forward.106} parent=11 // pred_region
        _
      $region20: #{shufflenet_v2_forward.106} parent=11 // pred_fallthru
        _
    $region12: #{shufflenet_v2_forward.106} parent=5 // pred_fallthru
      _
    %p124 = scmp.lt.s32.totalorder %s9, 2
    // Predicated region
    $region21: #{shufflenet_v2_forward.106} parent=5 // pred_check
      %p125 = pneg %p124
    $region22: #{shufflenet_v2_forward.106} parent=5 // pred_check_branch
      %127 = sbr.rel (%p125) target = $region24
    $region23: #{shufflenet_v2_forward.106} parent=5 // pred_region
      // Predicated region
      $region25: #{shufflenet_v2_forward.106} parent=23 // pred_check
        %p128 = pneg %p29
      $region26: #{shufflenet_v2_forward.106} parent=23 // pred_check_branch
        %130 = sbr.rel (%p128) target = $region28
      $region27: #{shufflenet_v2_forward.106} parent=23 // pred_region
        %p131 = scmp.lt.s32.totalorder %s9, 1
        %s132 = scalar_select %p131, %s9, 1
        %s133 = smul.addr %s132, 3
        %s134 = smul.addr %s133, 2
        %s135 = scalar_lea.vmem %s0, %s134
      $region28: #{shufflenet_v2_forward.106} parent=23 // pred_fallthru
        _
    $region24: #{shufflenet_v2_forward.106} parent=5 // pred_fallthru
      _
    %p136 = scmp.le.s32.totalorder 1, %s9
    %p137 = scmp.lt.s32.totalorder %s9, 3
    %p138 = pnand %p136, %p137
    %p139 = pneg %p138
    // Predicated region
    $region29: #{shufflenet_v2_forward.106} parent=5 // pred_check
      _
    $region30: #{shufflenet_v2_forward.106} parent=5 // pred_check_branch
      %141 = sbr.rel (%p138) target = $region32
    $region31: #{shufflenet_v2_forward.106} parent=5 // pred_region
      %s142 = ssub.s32 %s9, 1
      %p143 = scmp.lt.s32.totalorder %s14, 1
      %s144 = scalar_select %p143, %s14, 1
      %s145 = smul.addr %s144, 3
      %s146 = smul.addr %s145, 2
      %s147 = scalar_lea.vmem %s0, %s146
      %p148 = pneg %p35
      %p149 = pneg %p32
      %p150 = pneg %p56
      %p151 = pneg %p53
      %p152 = pneg %p77
      %p153 = pneg %p74
      %p154 = pneg %p103
      %p155 = pneg %p100
      %p156 = scmp.lt.s32.totalorder %s14, 1
      %s157 = scalar_select %p156, %s14, 1
      %s158 = scalar_lea.vmem %s3, %s157
      %p159 = scmp.lt.s32.totalorder %s14, 1
      %s160 = scalar_select %p159, %s14, 1
      %s161 = smul.addr %s160, 3
      %s162 = smul.addr %s161, 2
      %s163 = scalar_lea.vmem %s0, %s162
      %p164 = scmp.lt.s32.totalorder %s14, 1
      %s165 = scalar_select %p164, %s14, 1
      %s166 = scalar_lea.vmem %s3, %s165
      %v167 = vld [vmem:[%s163] sm:$0x1]
      %v168 = vunpack.c.l.bf16 %v167
      %v169 = vld [vmem:[%s1] sm:$0x1]
      %v170 = vmul.f32 %v168, %v169
      %s171 = scalar_lea.vmem %s1, 1
      %v172 = vld [vmem:[%s171] sm:$0x1]
      %v175 = vunpack.c.l.s4 286326784
      %v176 = vunpack.c.0.s8 %v175
      %v177 = vperm.slane %v172, %v176
      %v179 = vmul.f32 %v168, %v177
      %v180 = vld [vmem:[%s163] sm:$0x2]
      %v181 = vunpack.c.l.bf16 %v180
      %s182 = scalar_lea.vmem %s1, 2
      %v183 = vld [vmem:[%s182] sm:$0x1]
      %v186 = vunpack.c.l.s4 286326784
      %v187 = vunpack.c.0.s8 %v186
      %v188 = vperm.slane %v183, %v187
      %v190 = vmul.f32 %v181, %v188
      %s191 = scalar_lea.vmem %s163, 2
      %v192 = vld [vmem:[%s191] sm:$0x1]
      %v193 = vunpack.c.l.bf16 %v192
      %s194 = scalar_lea.vmem %s1, 3
      %v195 = vld [vmem:[%s194] sm:$0x1]
      %v196 = vmul.f32 %v193, %v195
      %s197 = scalar_lea.vmem %s1, 4
      %v198 = vld [vmem:[%s197] sm:$0x1]
      %v201 = vunpack.c.l.s4 286326784
      %v202 = vunpack.c.0.s8 %v201
      %v203 = vperm.slane %v198, %v202
      %v205 = vmul.f32 %v193, %v203
      %v206 = vld [vmem:[%s191] sm:$0x2]
      %v207 = vunpack.c.l.bf16 %v206
      %s208 = scalar_lea.vmem %s1, 5
      %v209 = vld [vmem:[%s208] sm:$0x1]
      %v212 = vunpack.c.l.s4 286326784
      %v213 = vunpack.c.0.s8 %v212
      %v214 = vperm.slane %v209, %v213
      %v216 = vmul.f32 %v207, %v214
      %s217 = scalar_lea.vmem %s163, 4
      %v218 = vld [vmem:[%s217] sm:$0x1]
      %v219 = vunpack.c.l.bf16 %v218
      %s220 = scalar_lea.vmem %s1, 6
      %v221 = vld [vmem:[%s220] sm:$0x1]
      %v222 = vmul.f32 %v219, %v221
      %s223 = scalar_lea.vmem %s1, 7
      %v224 = vld [vmem:[%s223] sm:$0x1]
      %v227 = vunpack.c.l.s4 286326784
      %v228 = vunpack.c.0.s8 %v227
      %v229 = vperm.slane %v224, %v228
      %v231 = vmul.f32 %v219, %v229
      %v232 = vld [vmem:[%s217] sm:$0x2]
      %v233 = vunpack.c.l.bf16 %v232
      %s234 = scalar_lea.vmem %s1, 8
      %v235 = vld [vmem:[%s234] sm:$0x1]
      %v238 = vunpack.c.l.s4 286326784
      %v239 = vunpack.c.0.s8 %v238
      %v240 = vperm.slane %v235, %v239
      %v242 = vmul.f32 %v233, %v240
      %v244 = vrot.slane %v179, 5
      %v245 = vrot.slane %v244, 4
      %v247 = vadd.f32 %v170, %v245
      %v249 = vrot.slane %v196, 6
      %v251 = vadd.f32 %v190, %v249
      %v253 = vrot.slane %v251, 6
      %v254 = vrot.slane %v253, 4
      %v256 = vadd.f32 %v247, %v254
      %v258 = vrot.slane %v216, 5
      %v259 = vrot.slane %v258, 4
      %v261 = vadd.f32 %v205, %v259
      %v263 = vrot.slane %v231, 5
      %v264 = vrot.slane %v263, 4
      %v266 = vadd.f32 %v222, %v264
      %v268 = vrot.slane %v266, 7
      %v270 = vadd.f32 %v261, %v268
      %v272 = vrot.slane %v270, 5
      %v273 = vrot.slane %v272, 4
      %v275 = vadd.f32 %v256, %v273
      %v277 = vrot.slane %v242, 6
      %v278 = vrot.slane %v277, 4
      %v280 = vadd.f32 %v275, %v278
      %v281 = vld [vmem:[%s2] sm:$0x1]
      %v282 = vadd.f32 %v280, %v281
      %v283 = vpack.c.bf16 %v282, %v282
      %vm284 = vcmask 778240
      %vm285 = vsmask.f32 256
      %vm286 = vmand %vm284, %vm285
      %v287 = vld [vmem:[%s166] sm:$0x1]
      %v288 = vsel %vm286, %v283, %v287
      %289 = vst [vmem:[%s166] sm:$0x1] %v288
      %p290 = scmp.lt.s32.totalorder %s14, 1
      %s291 = scalar_select %p290, %s14, 1
      %s292 = scalar_lea.vmem %s3, %s291
      // Predicated region
      $region33: #{shufflenet_v2_forward.106} parent=31 // pred_check
        %p293 = pneg %p100
      $region34: #{shufflenet_v2_forward.106} parent=31 // pred_check_branch
        %295 = sbr.rel (%p293) target = $region36
      $region35: #{shufflenet_v2_forward.106} parent=31 // pred_region
        _
      $region36: #{shufflenet_v2_forward.106} parent=31 // pred_fallthru
        _
    $region32: #{shufflenet_v2_forward.106} parent=5 // pred_fallthru
      _
    %p296 = scmp.le.s32.totalorder 2, %s9
    // Predicated region
    $region37: #{shufflenet_v2_forward.106} parent=5 // pred_check
      %p297 = pneg %p296
    $region38: #{shufflenet_v2_forward.106} parent=5 // pred_check_branch
      %299 = sbr.rel (%p297) target = $region40
    $region39: #{shufflenet_v2_forward.106} parent=5 // pred_region
      %s300 = ssub.s32 %s9, 2
      // Predicated region
      $region41: #{shufflenet_v2_forward.106} parent=39 // pred_check
        %p301 = pneg %p106
      $region42: #{shufflenet_v2_forward.106} parent=39 // pred_check_branch
        %303 = sbr.rel (%p301) target = $region44
      $region43: #{shufflenet_v2_forward.106} parent=39 // pred_region
        %p304 = scmp.lt.s32.totalorder %s15, 1
        %s305 = scalar_select %p304, %s15, 1
        %s306 = scalar_lea.vmem %s3, %s305
      $region44: #{shufflenet_v2_forward.106} parent=39 // pred_fallthru
        _
    $region40: #{shufflenet_v2_forward.106} parent=5 // pred_fallthru
      _
  $region6: #{shufflenet_v2_forward.106} parent=0 // loop_footer
    %s13 = sadd.s32 1, %s9
  $region7: #{shufflenet_v2_forward.106} parent=0 // loop_footer_branch
    %8 = sbr.rel target = $region3
  $region8: #{shufflenet_v2_forward.106} parent=0 // loop_exit
    _

// kernel: shufflenet_v2_forward.114
$region0: #{shufflenet_v2_forward.114}
  #allocation0 [shape = 'u32[]', space=smem, size = 0x4, offset = 0x4, fixed_abs, tag = 'smem constant byte address 0x4 - core index']
  #allocation1 [shape = 'u32[72,128]{1,0:T(1,128)}', space=vmem, size = 0x9000, scoped, tag = 'internal scratch']
  %s0 = inlined_call_operand.vmem [shape: bf16[2,192], index: 0, kind: input, shape index: {}]
  %s1 = inlined_call_operand.vmem [shape: bf16[192,1024], index: 1, kind: input, shape index: {}]
  %s2 = inlined_call_operand.vmem [shape: f32[1,1024], index: 2, kind: input, shape index: {}]
  %s3 = inlined_call_operand.vmem [shape: bf16[2,1024], index: 3, kind: output, shape index: {}]
  %s4 = sld [smem:[#allocation0]]
  $region22: #{shufflenet_v2_forward.114} parent=0
    _
  %s6 = ssub.s32 1, %s4
  %s7 = scalar_select 0, %s6, %s4
  // Predicated region
  $region2: #{shufflenet_v2_forward.114} parent=0 // pred_check
    _
  $region3: #{shufflenet_v2_forward.114} parent=0 // pred_check_branch
    %9 = sbr.rel (0) target = $region5
  $region4: #{shufflenet_v2_forward.114} parent=0 // pred_region
    _
  $region5: #{shufflenet_v2_forward.114} parent=0 // pred_fallthru
    _
  // Predicated region
  $region6: #{shufflenet_v2_forward.114} parent=0 // pred_check
    _
  $region7: #{shufflenet_v2_forward.114} parent=0 // pred_check_branch
    %11 = sbr.rel (0) target = $region9
  $region8: #{shufflenet_v2_forward.114} parent=0 // pred_region
    _
  $region9: #{shufflenet_v2_forward.114} parent=0 // pred_fallthru
    _
  // Predicated region
  $region10: #{shufflenet_v2_forward.114} parent=0 // pred_check
    _
  $region11: #{shufflenet_v2_forward.114} parent=0 // pred_check_branch
    %13 = sbr.rel (0) target = $region13
  $region12: #{shufflenet_v2_forward.114} parent=0 // pred_region
    _
  $region13: #{shufflenet_v2_forward.114} parent=0 // pred_fallthru
    _
  %v15 = vld [vmem:[%s0] sm:$0x3]
  %v16 = vld [vmem:[%s1] sm:$0xff]
  %v17 = vld [vmem:[%s1 + $0x8] sm:$0xff]
  %v18 = vld [vmem:[%s1 + $0x10] sm:$0xff]
  %v19 = vld [vmem:[%s1 + $0x18] sm:$0xff]
  %v20 = vld [vmem:[%s1 + $0x20] sm:$0xff]
  %v21 = vld [vmem:[%s1 + $0x28] sm:$0xff]
  %v22 = vld [vmem:[%s1 + $0x30] sm:$0xff]
  %v23 = vld [vmem:[%s1 + $0x38] sm:$0xff]
  %v24 = vld [vmem:[%s1 + $0x40] sm:$0xff]
  %v25 = vld [vmem:[%s1 + $0x48] sm:$0xff]
  %v26 = vld [vmem:[%s1 + $0x50] sm:$0xff]
  %v27 = vld [vmem:[%s1 + $0x58] sm:$0xff]
  %v28 = vld [vmem:[%s1 + $0x60] sm:$0xff]
  %v29 = vld [vmem:[%s1 + $0x68] sm:$0xff]
  %v30 = vld [vmem:[%s1 + $0x70] sm:$0xff]
  %v31 = vld [vmem:[%s1 + $0x78] sm:$0xff]
  %v32 = vld [vmem:[%s1 + $0x80] sm:$0xff]
  %v33 = vld [vmem:[%s1 + $0x88] sm:$0xff]
  %v34 = vld [vmem:[%s1 + $0x90] sm:$0xff]
  %v35 = vld [vmem:[%s1 + $0x98] sm:$0xff]
  %v36 = vld [vmem:[%s1 + $0xa0] sm:$0xff]
  %v37 = vld [vmem:[%s1 + $0xa8] sm:$0xff]
  %v38 = vld [vmem:[%s1 + $0xb0] sm:$0xff]
  %v39 = vld [vmem:[%s1 + $0xb8] sm:$0xff]
  %v40 = vld [vmem:[%s1 + $0xc0] sm:$0xff]
  %v41 = vld [vmem:[%s1 + $0xc8] sm:$0xff]
  %v42 = vld [vmem:[%s1 + $0xd0] sm:$0xff]
  %v43 = vld [vmem:[%s1 + $0xd8] sm:$0xff]
  %v44 = vld [vmem:[%s1 + $0xe0] sm:$0xff]
  %v45 = vld [vmem:[%s1 + $0xe8] sm:$0xff]
  %v46 = vld [vmem:[%s1 + $0xf0] sm:$0xff]
  %v47 = vld [vmem:[%s1 + $0xf8] sm:$0xff]
  %v48 = vld [vmem:[%s1 + $0x100] sm:$0xff]
  %v49 = vld [vmem:[%s1 + $0x108] sm:$0xff]
  %v50 = vld [vmem:[%s1 + $0x110] sm:$0xff]
  %v51 = vld [vmem:[%s1 + $0x118] sm:$0xff]
  %v52 = vld [vmem:[%s1 + $0x120] sm:$0xff]
  %v53 = vld [vmem:[%s1 + $0x128] sm:$0xff]
  %v54 = vld [vmem:[%s1 + $0x130] sm:$0xff]
  %v55 = vld [vmem:[%s1 + $0x138] sm:$0xff]
  %v56 = vld [vmem:[%s1 + $0x140] sm:$0xff]
  %v57 = vld [vmem:[%s1 + $0x148] sm:$0xff]
  %v58 = vld [vmem:[%s1 + $0x150] sm:$0xff]
  %v59 = vld [vmem:[%s1 + $0x158] sm:$0xff]
  %v60 = vld [vmem:[%s1 + $0x160] sm:$0xff]
  %v61 = vld [vmem:[%s1 + $0x168] sm:$0xff]
  %v62 = vld [vmem:[%s1 + $0x170] sm:$0xff]
  %v63 = vld [vmem:[%s1 + $0x178] sm:$0xff]
  %v64 = vld [vmem:[%s1 + $0x180] sm:$0xff]
  %v65 = vld [vmem:[%s1 + $0x188] sm:$0xff]
  %v66 = vld [vmem:[%s1 + $0x190] sm:$0xff]
  %v67 = vld [vmem:[%s1 + $0x198] sm:$0xff]
  %v68 = vld [vmem:[%s1 + $0x1a0] sm:$0xff]
  %v69 = vld [vmem:[%s1 + $0x1a8] sm:$0xff]
  %v70 = vld [vmem:[%s1 + $0x1b0] sm:$0xff]
  %v71 = vld [vmem:[%s1 + $0x1b8] sm:$0xff]
  %v72 = vld [vmem:[%s1 + $0x1c0] sm:$0xff]
  %v73 = vld [vmem:[%s1 + $0x1c8] sm:$0xff]
  %v74 = vld [vmem:[%s1 + $0x1d0] sm:$0xff]
  %v75 = vld [vmem:[%s1 + $0x1d8] sm:$0xff]
  %v76 = vld [vmem:[%s1 + $0x1e0] sm:$0xff]
  %v77 = vld [vmem:[%s1 + $0x1e8] sm:$0xff]
  %v78 = vld [vmem:[%s1 + $0x1f0] sm:$0xff]
  %v79 = vld [vmem:[%s1 + $0x1f8] sm:$0xff]
  %v80 = vld [vmem:[%s1 + $0x200] sm:$0xff]
  %v81 = vld [vmem:[%s1 + $0x208] sm:$0xff]
  %v82 = vld [vmem:[%s1 + $0x210] sm:$0xff]
  %v83 = vld [vmem:[%s1 + $0x218] sm:$0xff]
  %v84 = vld [vmem:[%s1 + $0x220] sm:$0xff]
  %v85 = vld [vmem:[%s1 + $0x228] sm:$0xff]
  %v86 = vld [vmem:[%s1 + $0x230] sm:$0xff]
  %v87 = vld [vmem:[%s1 + $0x238] sm:$0xff]
  %v88 = vld [vmem:[%s1 + $0x240] sm:$0xff]
  %v89 = vld [vmem:[%s1 + $0x248] sm:$0xff]
  %v90 = vld [vmem:[%s1 + $0x250] sm:$0xff]
  %v91 = vld [vmem:[%s1 + $0x258] sm:$0xff]
  %v92 = vld [vmem:[%s1 + $0x260] sm:$0xff]
  %v93 = vld [vmem:[%s1 + $0x268] sm:$0xff]
  %v94 = vld [vmem:[%s1 + $0x270] sm:$0xff]
  %v95 = vld [vmem:[%s1 + $0x278] sm:$0xff]
  %v96 = vld [vmem:[%s1 + $0x280] sm:$0xff]
  %v97 = vld [vmem:[%s1 + $0x288] sm:$0xff]
  %v98 = vld [vmem:[%s1 + $0x290] sm:$0xff]
  %v99 = vld [vmem:[%s1 + $0x298] sm:$0xff]
  %v100 = vld [vmem:[%s1 + $0x2a0] sm:$0xff]
  %v101 = vld [vmem:[%s1 + $0x2a8] sm:$0xff]
  %v102 = vld [vmem:[%s1 + $0x2b0] sm:$0xff]
  %v103 = vld [vmem:[%s1 + $0x2b8] sm:$0xff]
  %v104 = vld [vmem:[%s1 + $0x2c0] sm:$0xff]
  %v105 = vld [vmem:[%s1 + $0x2c8] sm:$0xff]
  %v106 = vld [vmem:[%s1 + $0x2d0] sm:$0xff]
  %v107 = vld [vmem:[%s1 + $0x2d8] sm:$0xff]
  %v108 = vld [vmem:[%s1 + $0x2e0] sm:$0xff]
  %v109 = vld [vmem:[%s1 + $0x2e8] sm:$0xff]
  %v110 = vld [vmem:[%s1 + $0x2f0] sm:$0xff]
  %v111 = vld [vmem:[%s1 + $0x2f8] sm:$0xff]
  %v112 = vld [vmem:[%s2] sm:$0xff]
  %v114 = vperm.slane %v112, 0
  %v115 = vperm.slane %v112, 1
  %v116 = vperm.slane %v112, 2
  %v117 = vperm.slane %v112, 3
  %v118 = vperm.slane %v112, 4
  %v119 = vperm.slane %v112, 5
  %v120 = vperm.slane %v112, 6
  %v121 = vperm.slane %v112, 7
  %131 = vst [vmem:[#allocation1] ss:$9 sm:$0xff] %v15
  %v132 = vld [vmem:[#allocation1] sm:$0xff]
  %v133 = vld [vmem:[#allocation1 + $0x9] sm:$0xff]
  %v231 = vunpack.c.l.b16 %v16
  %v232 = vunpack.c.h.b16 %v16
  %v233 = vunpack.c.l.b16 %v17
  %v234 = vunpack.c.h.b16 %v17
  %v235 = vunpack.c.l.b16 %v18
  %v236 = vunpack.c.h.b16 %v18
  %v237 = vunpack.c.l.b16 %v19
  %v238 = vunpack.c.h.b16 %v19
  %v239 = vunpack.c.l.b16 %v20
  %v240 = vunpack.c.h.b16 %v20
  %v241 = vunpack.c.l.b16 %v21
  %v242 = vunpack.c.h.b16 %v21
  %v243 = vunpack.c.l.b16 %v22
  %v244 = vunpack.c.h.b16 %v22
  %v245 = vunpack.c.l.b16 %v23
  %v246 = vunpack.c.h.b16 %v23
  %v247 = vunpack.c.l.b16 %v24
  %v248 = vunpack.c.h.b16 %v24
  %v249 = vunpack.c.l.b16 %v25
  %v250 = vunpack.c.h.b16 %v25
  %v251 = vunpack.c.l.b16 %v26
  %v252 = vunpack.c.h.b16 %v26
  %v253 = vunpack.c.l.b16 %v27
  %v254 = vunpack.c.h.b16 %v27
  %v255 = vunpack.c.l.b16 %v28
  %v256 = vunpack.c.h.b16 %v28
  %v257 = vunpack.c.l.b16 %v29
  %v258 = vunpack.c.h.b16 %v29
  %v259 = vunpack.c.l.b16 %v30
  %v260 = vunpack.c.h.b16 %v30
  %v261 = vunpack.c.l.b16 %v31
  %v262 = vunpack.c.h.b16 %v31
  %v263 = vunpack.c.l.b16 %v32
  %v264 = vunpack.c.h.b16 %v32
  %v265 = vunpack.c.l.b16 %v33
  %v266 = vunpack.c.h.b16 %v33
  %v267 = vunpack.c.l.b16 %v34
  %v268 = vunpack.c.h.b16 %v34
  %v269 = vunpack.c.l.b16 %v35
  %v270 = vunpack.c.h.b16 %v35
  %v271 = vunpack.c.l.b16 %v36
  %v272 = vunpack.c.h.b16 %v36
  %v273 = vunpack.c.l.b16 %v37
  %v274 = vunpack.c.h.b16 %v37
  %v275 = vunpack.c.l.b16 %v38
  %v276 = vunpack.c.h.b16 %v38
  %v277 = vunpack.c.l.b16 %v39
  %v278 = vunpack.c.h.b16 %v39
  %v279 = vunpack.c.l.b16 %v40
  %v280 = vunpack.c.h.b16 %v40
  %v281 = vunpack.c.l.b16 %v41
  %v282 = vunpack.c.h.b16 %v41
  %v283 = vunpack.c.l.b16 %v42
  %v284 = vunpack.c.h.b16 %v42
  %v285 = vunpack.c.l.b16 %v43
  %v286 = vunpack.c.h.b16 %v43
  %v287 = vunpack.c.l.b16 %v44
  %v288 = vunpack.c.h.b16 %v44
  %v289 = vunpack.c.l.b16 %v45
  %v290 = vunpack.c.h.b16 %v45
  %v291 = vunpack.c.l.b16 %v46
  %v292 = vunpack.c.h.b16 %v46
  %v293 = vunpack.c.l.b16 %v47
  %v294 = vunpack.c.h.b16 %v47
  %v295 = vunpack.c.l.b16 %v48
  %v296 = vunpack.c.h.b16 %v48
  %v297 = vunpack.c.l.b16 %v49
  %v298 = vunpack.c.h.b16 %v49
  %v299 = vunpack.c.l.b16 %v50
  %v300 = vunpack.c.h.b16 %v50
  %v301 = vunpack.c.l.b16 %v51
  %v302 = vunpack.c.h.b16 %v51
  %v303 = vunpack.c.l.b16 %v52
  %v304 = vunpack.c.h.b16 %v52
  %v305 = vunpack.c.l.b16 %v53
  %v306 = vunpack.c.h.b16 %v53
  %v307 = vunpack.c.l.b16 %v54
  %v308 = vunpack.c.h.b16 %v54
  %v309 = vunpack.c.l.b16 %v55
  %v310 = vunpack.c.h.b16 %v55
  %v311 = vunpack.c.l.b16 %v56
  %v312 = vunpack.c.h.b16 %v56
  %v313 = vunpack.c.l.b16 %v57
  %v314 = vunpack.c.h.b16 %v57
  %v315 = vunpack.c.l.b16 %v58
  %v316 = vunpack.c.h.b16 %v58
  %v317 = vunpack.c.l.b16 %v59
  %v318 = vunpack.c.h.b16 %v59
  %v319 = vunpack.c.l.b16 %v60
  %v320 = vunpack.c.h.b16 %v60
  %v321 = vunpack.c.l.b16 %v61
  %v322 = vunpack.c.h.b16 %v61
  %v323 = vunpack.c.l.b16 %v62
  %v324 = vunpack.c.h.b16 %v62
  %v325 = vunpack.c.l.b16 %v63
  %v326 = vunpack.c.h.b16 %v63
  %v327 = vunpack.c.l.b16 %v64
  %v328 = vunpack.c.h.b16 %v64
  %v329 = vunpack.c.l.b16 %v65
  %v330 = vunpack.c.h.b16 %v65
  %v331 = vunpack.c.l.b16 %v66
  %v332 = vunpack.c.h.b16 %v66
  %v333 = vunpack.c.l.b16 %v67
  %v334 = vunpack.c.h.b16 %v67
  %v335 = vunpack.c.l.b16 %v68
  %v336 = vunpack.c.h.b16 %v68
  %v337 = vunpack.c.l.b16 %v69
  %v338 = vunpack.c.h.b16 %v69
  %v339 = vunpack.c.l.b16 %v70
  %v340 = vunpack.c.h.b16 %v70
  %v341 = vunpack.c.l.b16 %v71
  %v342 = vunpack.c.h.b16 %v71
  %v343 = vunpack.c.l.b16 %v72
  %v344 = vunpack.c.h.b16 %v72
  %v345 = vunpack.c.l.b16 %v73
  %v346 = vunpack.c.h.b16 %v73
  %v347 = vunpack.c.l.b16 %v74
  %v348 = vunpack.c.h.b16 %v74
  %v349 = vunpack.c.l.b16 %v75
  %v350 = vunpack.c.h.b16 %v75
  %v351 = vunpack.c.l.b16 %v76
  %v352 = vunpack.c.h.b16 %v76
  %v353 = vunpack.c.l.b16 %v77
  %v354 = vunpack.c.h.b16 %v77
  %v355 = vunpack.c.l.b16 %v78
  %v356 = vunpack.c.h.b16 %v78
  %v357 = vunpack.c.l.b16 %v79
  %v358 = vunpack.c.h.b16 %v79
  %v359 = vunpack.c.l.b16 %v80
  %v360 = vunpack.c.h.b16 %v80
  %v361 = vunpack.c.l.b16 %v81
  %v362 = vunpack.c.h.b16 %v81
  %v363 = vunpack.c.l.b16 %v82
  %v364 = vunpack.c.h.b16 %v82
  %v365 = vunpack.c.l.b16 %v83
  %v366 = vunpack.c.h.b16 %v83
  %v367 = vunpack.c.l.b16 %v84
  %v368 = vunpack.c.h.b16 %v84
  %v369 = vunpack.c.l.b16 %v85
  %v370 = vunpack.c.h.b16 %v85
  %v371 = vunpack.c.l.b16 %v86
  %v372 = vunpack.c.h.b16 %v86
  %v373 = vunpack.c.l.b16 %v87
  %v374 = vunpack.c.h.b16 %v87
  %v375 = vunpack.c.l.b16 %v88
  %v376 = vunpack.c.h.b16 %v88
  %v377 = vunpack.c.l.b16 %v89
  %v378 = vunpack.c.h.b16 %v89
  %v379 = vunpack.c.l.b16 %v90
  %v380 = vunpack.c.h.b16 %v90
  %v381 = vunpack.c.l.b16 %v91
  %v382 = vunpack.c.h.b16 %v91
  %v383 = vunpack.c.l.b16 %v92
  %v384 = vunpack.c.h.b16 %v92
  %v385 = vunpack.c.l.b16 %v93
  %v386 = vunpack.c.h.b16 %v93
  %v387 = vunpack.c.l.b16 %v94
  %v388 = vunpack.c.h.b16 %v94
  %v389 = vunpack.c.l.b16 %v95
  %v390 = vunpack.c.h.b16 %v95
  %v391 = vunpack.c.l.b16 %v96
  %v392 = vunpack.c.h.b16 %v96
  %v393 = vunpack.c.l.b16 %v97
  %v394 = vunpack.c.h.b16 %v97
  %v395 = vunpack.c.l.b16 %v98
  %v396 = vunpack.c.h.b16 %v98
  %v397 = vunpack.c.l.b16 %v99
  %v398 = vunpack.c.h.b16 %v99
  %v399 = vunpack.c.l.b16 %v100
  %v400 = vunpack.c.h.b16 %v100
  %v401 = vunpack.c.l.b16 %v101
  %v402 = vunpack.c.h.b16 %v101
  %v403 = vunpack.c.l.b16 %v102
  %v404 = vunpack.c.h.b16 %v102
  %v405 = vunpack.c.l.b16 %v103
  %v406 = vunpack.c.h.b16 %v103
  %v407 = vunpack.c.l.b16 %v104
  %v408 = vunpack.c.h.b16 %v104
  %v409 = vunpack.c.l.b16 %v105
  %v410 = vunpack.c.h.b16 %v105
  %v411 = vunpack.c.l.b16 %v106
  %v412 = vunpack.c.h.b16 %v106
  %v413 = vunpack.c.l.b16 %v107
  %v414 = vunpack.c.h.b16 %v107
  %v415 = vunpack.c.l.b16 %v108
  %v416 = vunpack.c.h.b16 %v108
  %v417 = vunpack.c.l.b16 %v109
  %v418 = vunpack.c.h.b16 %v109
  %v419 = vunpack.c.l.b16 %v110
  %v420 = vunpack.c.h.b16 %v110
  %v421 = vunpack.c.l.b16 %v111
  %v422 = vunpack.c.h.b16 %v111
  %v423 = vpack.c.b16 %v239, %v231
  %v424 = vpack.c.b16 %v240, %v232
  %v425 = vpack.c.b16 %v241, %v233
  %v426 = vpack.c.b16 %v242, %v234
  %v427 = vpack.c.b16 %v243, %v235
  %v428 = vpack.c.b16 %v244, %v236
  %v429 = vpack.c.b16 %v245, %v237
  %v430 = vpack.c.b16 %v246, %v238
  %v431 = vpack.c.b16 %v255, %v247
  %v432 = vpack.c.b16 %v256, %v248
  %v433 = vpack.c.b16 %v257, %v249
  %v434 = vpack.c.b16 %v258, %v250
  %v435 = vpack.c.b16 %v259, %v251
  %v436 = vpack.c.b16 %v260, %v252
  %v437 = vpack.c.b16 %v261, %v253
  %v438 = vpack.c.b16 %v262, %v254
  %v439 = vpack.c.b16 %v271, %v263
  %v440 = vpack.c.b16 %v272, %v264
  %v441 = vpack.c.b16 %v273, %v265
  %v442 = vpack.c.b16 %v274, %v266
  %v443 = vpack.c.b16 %v275, %v267
  %v444 = vpack.c.b16 %v276, %v268
  %v445 = vpack.c.b16 %v277, %v269
  %v446 = vpack.c.b16 %v278, %v270
  %v447 = vpack.c.b16 %v287, %v279
  %v448 = vpack.c.b16 %v288, %v280
  %v449 = vpack.c.b16 %v289, %v281
  %v450 = vpack.c.b16 %v290, %v282
  %v451 = vpack.c.b16 %v291, %v283
  %v452 = vpack.c.b16 %v292, %v284
  %v453 = vpack.c.b16 %v293, %v285
  %v454 = vpack.c.b16 %v294, %v286
  %v455 = vpack.c.b16 %v303, %v295
  %v456 = vpack.c.b16 %v304, %v296
  %v457 = vpack.c.b16 %v305, %v297
  %v458 = vpack.c.b16 %v306, %v298
  %v459 = vpack.c.b16 %v307, %v299
  %v460 = vpack.c.b16 %v308, %v300
  %v461 = vpack.c.b16 %v309, %v301
  %v462 = vpack.c.b16 %v310, %v302
  %v463 = vpack.c.b16 %v319, %v311
  %v464 = vpack.c.b16 %v320, %v312
  %v465 = vpack.c.b16 %v321, %v313
  %v466 = vpack.c.b16 %v322, %v314
  %v467 = vpack.c.b16 %v323, %v315
  %v468 = vpack.c.b16 %v324, %v316
  %v469 = vpack.c.b16 %v325, %v317
  %v470 = vpack.c.b16 %v326, %v318
  %v471 = vpack.c.b16 %v335, %v327
  %v472 = vpack.c.b16 %v336, %v328
  %v473 = vpack.c.b16 %v337, %v329
  %v474 = vpack.c.b16 %v338, %v330
  %v475 = vpack.c.b16 %v339, %v331
  %v476 = vpack.c.b16 %v340, %v332
  %v477 = vpack.c.b16 %v341, %v333
  %v478 = vpack.c.b16 %v342, %v334
  %v479 = vpack.c.b16 %v351, %v343
  %v480 = vpack.c.b16 %v352, %v344
  %v481 = vpack.c.b16 %v353, %v345
  %v482 = vpack.c.b16 %v354, %v346
  %v483 = vpack.c.b16 %v355, %v347
  %v484 = vpack.c.b16 %v356, %v348
  %v485 = vpack.c.b16 %v357, %v349
  %v486 = vpack.c.b16 %v358, %v350
  %v487 = vpack.c.b16 %v367, %v359
  %v488 = vpack.c.b16 %v368, %v360
  %v489 = vpack.c.b16 %v369, %v361
  %v490 = vpack.c.b16 %v370, %v362
  %v491 = vpack.c.b16 %v371, %v363
  %v492 = vpack.c.b16 %v372, %v364
  %v493 = vpack.c.b16 %v373, %v365
  %v494 = vpack.c.b16 %v374, %v366
  %v495 = vpack.c.b16 %v383, %v375
  %v496 = vpack.c.b16 %v384, %v376
  %v497 = vpack.c.b16 %v385, %v377
  %v498 = vpack.c.b16 %v386, %v378
  %v499 = vpack.c.b16 %v387, %v379
  %v500 = vpack.c.b16 %v388, %v380
  %v501 = vpack.c.b16 %v389, %v381
  %v502 = vpack.c.b16 %v390, %v382
  %v503 = vpack.c.b16 %v399, %v391
  %v504 = vpack.c.b16 %v400, %v392
  %v505 = vpack.c.b16 %v401, %v393
  %v506 = vpack.c.b16 %v402, %v394
  %v507 = vpack.c.b16 %v403, %v395
  %v508 = vpack.c.b16 %v404, %v396
  %v509 = vpack.c.b16 %v405, %v397
  %v510 = vpack.c.b16 %v406, %v398
  %v511 = vpack.c.b16 %v415, %v407
  %v512 = vpack.c.b16 %v416, %v408
  %v513 = vpack.c.b16 %v417, %v409
  %v514 = vpack.c.b16 %v418, %v410
  %v515 = vpack.c.b16 %v419, %v411
  %v516 = vpack.c.b16 %v420, %v412
  %v517 = vpack.c.b16 %v421, %v413
  %v518 = vpack.c.b16 %v422, %v414
  %vm615 = vcmask 523264
  %v616 = vsel %vm615, %v133, 0
  %618 = vmatpush.bf16.msra.mxu0 %v479
  %619 = vmatpush.bf16.msra.mxu0 %v471
  %620 = vmatpush.bf16.msra.mxu0 %v463
  %621 = vmatpush.bf16.msra.mxu0 %v455
  %622 = vmatpush.bf16.msra.mxu0 %v447
  %623 = vmatpush.bf16.msra.mxu0 %v439
  %624 = vmatpush.bf16.msra.mxu0 %v431
  %625 = vmatpush.bf16.msra.mxu0 %v423
  %626 = vmatmul.bf16.gmra.mxu0 %v132
  %v627 = vpop.f32.mrf.mxu0
  %v628 = vadd.f32 %v114, %v627
  %v629 = vpop.f32.mrf.mxu0
  %630 = vdwg.mxu0
  %631 = vmatpush.bf16.msra.mxu0 0
  %632 = vmatpush.bf16.msra.mxu0 0
  %633 = vmatpush.bf16.msra.mxu0 0
  %634 = vmatpush.bf16.msra.mxu0 0
  %635 = vmatpush.bf16.msra.mxu0 %v511
  %636 = vmatpush.bf16.msra.mxu0 %v503
  %637 = vmatpush.bf16.msra.mxu0 %v495
  %638 = vmatpush.bf16.msra.mxu0 %v487
  %639 = vmatmul.bf16.gmra.mxu0 %v616
  %v640 = vpop.f32.mrf.mxu0
  %v641 = vadd.f32 %v628, %v640
  %v642 = vpop.f32.mrf.mxu0
  %643 = vdwg.mxu0
  %644 = vmatpush.bf16.msra.mxu0 %v480
  %645 = vmatpush.bf16.msra.mxu0 %v472
  %646 = vmatpush.bf16.msra.mxu0 %v464
  %647 = vmatpush.bf16.msra.mxu0 %v456
  %648 = vmatpush.bf16.msra.mxu0 %v448
  %649 = vmatpush.bf16.msra.mxu0 %v440
  %650 = vmatpush.bf16.msra.mxu0 %v432
  %651 = vmatpush.bf16.msra.mxu0 %v424
  %652 = vmatmul.bf16.gmra.mxu0 %v132
  %v653 = vpop.f32.mrf.mxu0
  %v654 = vadd.f32 %v115, %v653
  %v655 = vpop.f32.mrf.mxu0
  %656 = vdwg.mxu0
  %657 = vmatpush.bf16.msra.mxu0 0
  %658 = vmatpush.bf16.msra.mxu0 0
  %659 = vmatpush.bf16.msra.mxu0 0
  %660 = vmatpush.bf16.msra.mxu0 0
  %661 = vmatpush.bf16.msra.mxu0 %v512
  %662 = vmatpush.bf16.msra.mxu0 %v504
  %663 = vmatpush.bf16.msra.mxu0 %v496
  %664 = vmatpush.bf16.msra.mxu0 %v488
  %665 = vmatmul.bf16.gmra.mxu0 %v616
  %v666 = vpop.f32.mrf.mxu0
  %v667 = vadd.f32 %v654, %v666
  %v668 = vpop.f32.mrf.mxu0
  %669 = vdwg.mxu0
  %670 = vmatpush.bf16.msra.mxu0 %v481
  %671 = vmatpush.bf16.msra.mxu0 %v473
  %672 = vmatpush.bf16.msra.mxu0 %v465
  %673 = vmatpush.bf16.msra.mxu0 %v457
  %674 = vmatpush.bf16.msra.mxu0 %v449
  %675 = vmatpush.bf16.msra.mxu0 %v441
  %676 = vmatpush.bf16.msra.mxu0 %v433
  %677 = vmatpush.bf16.msra.mxu0 %v425
  %678 = vmatmul.bf16.gmra.mxu0 %v132
  %v679 = vpop.f32.mrf.mxu0
  %v680 = vadd.f32 %v116, %v679
  %v681 = vpop.f32.mrf.mxu0
  %682 = vdwg.mxu0
  %683 = vmatpush.bf16.msra.mxu0 0
  %684 = vmatpush.bf16.msra.mxu0 0
  %685 = vmatpush.bf16.msra.mxu0 0
  %686 = vmatpush.bf16.msra.mxu0 0
  %687 = vmatpush.bf16.msra.mxu0 %v513
  %688 = vmatpush.bf16.msra.mxu0 %v505
  %689 = vmatpush.bf16.msra.mxu0 %v497
  %690 = vmatpush.bf16.msra.mxu0 %v489
  %691 = vmatmul.bf16.gmra.mxu0 %v616
  %v692 = vpop.f32.mrf.mxu0
  %v693 = vadd.f32 %v680, %v692
  %v694 = vpop.f32.mrf.mxu0
  %695 = vdwg.mxu0
  %696 = vmatpush.bf16.msra.mxu0 %v482
  %697 = vmatpush.bf16.msra.mxu0 %v474
  %698 = vmatpush.bf16.msra.mxu0 %v466
  %699 = vmatpush.bf16.msra.mxu0 %v458
  %700 = vmatpush.bf16.msra.mxu0 %v450
  %701 = vmatpush.bf16.msra.mxu0 %v442
  %702 = vmatpush.bf16.msra.mxu0 %v434
  %703 = vmatpush.bf16.msra.mxu0 %v426
  %704 = vmatmul.bf16.gmra.mxu0 %v132
  %v705 = vpop.f32.mrf.mxu0
  %v706 = vadd.f32 %v117, %v705
  %v707 = vpop.f32.mrf.mxu0
  %708 = vdwg.mxu0
  %709 = vmatpush.bf16.msra.mxu0 0
  %710 = vmatpush.bf16.msra.mxu0 0
  %711 = vmatpush.bf16.msra.mxu0 0
  %712 = vmatpush.bf16.msra.mxu0 0
  %713 = vmatpush.bf16.msra.mxu0 %v514
  %714 = vmatpush.bf16.msra.mxu0 %v506
  %715 = vmatpush.bf16.msra.mxu0 %v498
  %716 = vmatpush.bf16.msra.mxu0 %v490
  %717 = vmatmul.bf16.gmra.mxu0 %v616
  %v718 = vpop.f32.mrf.mxu0
  %v719 = vadd.f32 %v706, %v718
  %v720 = vpop.f32.mrf.mxu0
  %721 = vdwg.mxu0
  %722 = vmatpush.bf16.msra.mxu0 %v483
  %723 = vmatpush.bf16.msra.mxu0 %v475
  %724 = vmatpush.bf16.msra.mxu0 %v467
  %725 = vmatpush.bf16.msra.mxu0 %v459
  %726 = vmatpush.bf16.msra.mxu0 %v451
  %727 = vmatpush.bf16.msra.mxu0 %v443
  %728 = vmatpush.bf16.msra.mxu0 %v435
  %729 = vmatpush.bf16.msra.mxu0 %v427
  %730 = vmatmul.bf16.gmra.mxu0 %v132
  %v731 = vpop.f32.mrf.mxu0
  %v732 = vadd.f32 %v118, %v731
  %v733 = vpop.f32.mrf.mxu0
  %734 = vdwg.mxu0
  %735 = vmatpush.bf16.msra.mxu0 0
  %736 = vmatpush.bf16.msra.mxu0 0
  %737 = vmatpush.bf16.msra.mxu0 0
  %738 = vmatpush.bf16.msra.mxu0 0
  %739 = vmatpush.bf16.msra.mxu0 %v515
  %740 = vmatpush.bf16.msra.mxu0 %v507
  %741 = vmatpush.bf16.msra.mxu0 %v499
  %742 = vmatpush.bf16.msra.mxu0 %v491
  %743 = vmatmul.bf16.gmra.mxu0 %v616
  %v744 = vpop.f32.mrf.mxu0
  %v745 = vadd.f32 %v732, %v744
  %v746 = vpop.f32.mrf.mxu0
  %747 = vdwg.mxu0
  %748 = vmatpush.bf16.msra.mxu0 %v484
  %749 = vmatpush.bf16.msra.mxu0 %v476
  %750 = vmatpush.bf16.msra.mxu0 %v468
  %751 = vmatpush.bf16.msra.mxu0 %v460
  %752 = vmatpush.bf16.msra.mxu0 %v452
  %753 = vmatpush.bf16.msra.mxu0 %v444
  %754 = vmatpush.bf16.msra.mxu0 %v436
  %755 = vmatpush.bf16.msra.mxu0 %v428
  %756 = vmatmul.bf16.gmra.mxu0 %v132
  %v757 = vpop.f32.mrf.mxu0
  %v758 = vadd.f32 %v119, %v757
  %v759 = vpop.f32.mrf.mxu0
  %760 = vdwg.mxu0
  %761 = vmatpush.bf16.msra.mxu0 0
  %762 = vmatpush.bf16.msra.mxu0 0
  %763 = vmatpush.bf16.msra.mxu0 0
  %764 = vmatpush.bf16.msra.mxu0 0
  %765 = vmatpush.bf16.msra.mxu0 %v516
  %766 = vmatpush.bf16.msra.mxu0 %v508
  %767 = vmatpush.bf16.msra.mxu0 %v500
  %768 = vmatpush.bf16.msra.mxu0 %v492
  %769 = vmatmul.bf16.gmra.mxu0 %v616
  %v770 = vpop.f32.mrf.mxu0
  %v771 = vadd.f32 %v758, %v770
  %v772 = vpop.f32.mrf.mxu0
  %773 = vdwg.mxu0
  %774 = vmatpush.bf16.msra.mxu0 %v485
  %775 = vmatpush.bf16.msra.mxu0 %v477
  %776 = vmatpush.bf16.msra.mxu0 %v469
  %777 = vmatpush.bf16.msra.mxu0 %v461
  %778 = vmatpush.bf16.msra.mxu0 %v453
  %779 = vmatpush.bf16.msra.mxu0 %v445
  %780 = vmatpush.bf16.msra.mxu0 %v437
  %781 = vmatpush.bf16.msra.mxu0 %v429
  %782 = vmatmul.bf16.gmra.mxu0 %v132
  %v783 = vpop.f32.mrf.mxu0
  %v784 = vadd.f32 %v120, %v783
  %v785 = vpop.f32.mrf.mxu0
  %786 = vdwg.mxu0
  %787 = vmatpush.bf16.msra.mxu0 0
  %788 = vmatpush.bf16.msra.mxu0 0
  %789 = vmatpush.bf16.msra.mxu0 0
  %790 = vmatpush.bf16.msra.mxu0 0
  %791 = vmatpush.bf16.msra.mxu0 %v517
  %792 = vmatpush.bf16.msra.mxu0 %v509
  %793 = vmatpush.bf16.msra.mxu0 %v501
  %794 = vmatpush.bf16.msra.mxu0 %v493
  %795 = vmatmul.bf16.gmra.mxu0 %v616
  %v796 = vpop.f32.mrf.mxu0
  %v797 = vadd.f32 %v784, %v796
  %v798 = vpop.f32.mrf.mxu0
  %799 = vdwg.mxu0
  %800 = vmatpush.bf16.msra.mxu0 %v486
  %801 = vmatpush.bf16.msra.mxu0 %v478
  %802 = vmatpush.bf16.msra.mxu0 %v470
  %803 = vmatpush.bf16.msra.mxu0 %v462
  %804 = vmatpush.bf16.msra.mxu0 %v454
  %805 = vmatpush.bf16.msra.mxu0 %v446
  %806 = vmatpush.bf16.msra.mxu0 %v438
  %807 = vmatpush.bf16.msra.mxu0 %v430
  %808 = vmatmul.bf16.gmra.mxu0 %v132
  %v809 = vpop.f32.mrf.mxu0
  %v810 = vadd.f32 %v121, %v809
  %v811 = vpop.f32.mrf.mxu0
  %812 = vdwg.mxu0
  %813 = vmatpush.bf16.msra.mxu0 0
  %814 = vmatpush.bf16.msra.mxu0 0
  %815 = vmatpush.bf16.msra.mxu0 0
  %816 = vmatpush.bf16.msra.mxu0 0
  %817 = vmatpush.bf16.msra.mxu0 %v518
  %818 = vmatpush.bf16.msra.mxu0 %v510
  %819 = vmatpush.bf16.msra.mxu0 %v502
  %820 = vmatpush.bf16.msra.mxu0 %v494
  %821 = vmatmul.bf16.gmra.mxu0 %v616
  %v822 = vpop.f32.mrf.mxu0
  %v823 = vadd.f32 %v810, %v822
  %v824 = vpop.f32.mrf.mxu0
  %825 = vdwg.mxu0
  %v826 = vmax.f32 %v641, 0.0
  %v827 = vmax.f32 %v667, 0.0
  %v828 = vmax.f32 %v693, 0.0
  %v829 = vmax.f32 %v719, 0.0
  %v830 = vmax.f32 %v745, 0.0
  %v831 = vmax.f32 %v771, 0.0
  %v832 = vmax.f32 %v797, 0.0
  %v833 = vmax.f32 %v823, 0.0
  %v834 = vpack.c.bf16 %v827, %v826
  %v835 = vpack.c.bf16 %v829, %v828
  %v836 = vpack.c.bf16 %v831, %v830
  %v837 = vpack.c.bf16 %v833, %v832
  %v842 = vrot.slane %v834, 3
  %v843 = vrot.slane %v835, 6
  %v844 = vrot.slane %v835, 1
  %v845 = vrot.slane %v836, 4
  %v846 = vrot.slane %v836, 7
  %v847 = vrot.slane %v837, 2
  %v848 = vrot.slane %v837, 5
  %vm849 = vcmask 1040384
  %v852 = vsel %vm849, %v834, %v842
  %vm853 = vcmask 1042434
  %v856 = vsel %vm853, %v843, %v844
  %vm857 = vcmask 1041408
  %v858 = vsel %vm857, %v852, %v856
  %vm859 = vcmask 1044484
  %v862 = vsel %vm859, %v845, %v846
  %vm863 = vcmask 1046534
  %v866 = vsel %vm863, %v847, %v848
  %vm867 = vcmask 1045508
  %v868 = vsel %vm867, %v862, %v866
  %vm869 = vcmask 1043456
  %v870 = vsel %vm869, %v858, %v868
  %872 = vst [vmem:[%s3] sm:$0xff] %v870
  // Predicated region
  $region14: #{shufflenet_v2_forward.114} parent=0 // pred_check
    _
  $region15: #{shufflenet_v2_forward.114} parent=0 // pred_check_branch
    %874 = sbr.rel (0) target = $region17
  $region16: #{shufflenet_v2_forward.114} parent=0 // pred_region
    _
  $region17: #{shufflenet_v2_forward.114} parent=0 // pred_fallthru
    _
  // Predicated region
  $region18: #{shufflenet_v2_forward.114} parent=0 // pred_check
    _
  $region19: #{shufflenet_v2_forward.114} parent=0 // pred_check_branch
    %876 = sbr.rel (0) target = $region21
  $region20: #{shufflenet_v2_forward.114} parent=0 // pred_region
    _
  $region21: #{shufflenet_v2_forward.114} parent=0 // pred_fallthru
    _

// kernel: shufflenet_v2_forward.115
$region0: #{shufflenet_v2_forward.115}
  #allocation0 [shape = 'u32[]', space=smem, size = 0x4, offset = 0x4, fixed_abs, tag = 'smem constant byte address 0x4 - core index']
  #allocation1 [shape = 'u32[72,128]{1,0:T(1,128)}', space=vmem, size = 0x9000, scoped, tag = 'internal scratch']
  %s0 = inlined_call_operand.vmem [shape: bf16[2,1,1024], index: 0, kind: input, shape index: {}]
  %s1 = inlined_call_operand.vmem [shape: bf16[1024,10], index: 1, kind: input, shape index: {}]
  %s2 = inlined_call_operand.vmem [shape: f32[1,10], index: 2, kind: input, shape index: {}]
  %s3 = inlined_call_operand.hbm [shape: f32[2,10], index: 3, kind: output, shape index: {}]
  %s4 = sld [smem:[#allocation0]]
  $region22: #{shufflenet_v2_forward.115} parent=0
    _
  %s6 = ssub.s32 1, %s4
  %s7 = scalar_select 0, %s6, %s4
  $region1: #{shufflenet_v2_forward.115} parent=0
    #allocation2 [shape = 'u8[1024]{0}', space=vmem, size = 0x400, scoped, tag = 'output window, operand 0, single buffered']
    #allocation3 [shape = 's32[1]{0}', space=sflag, size = 0x4, scoped, tag = 'scoped memory for shufflenet_v2_forward.115']
    %8 = vsyncpa [#allocation3], 0
    // Predicated region
    $region2: #{shufflenet_v2_forward.115} parent=1 // pred_check
      _
    $region3: #{shufflenet_v2_forward.115} parent=1 // pred_check_branch
      %10 = sbr.rel (0) target = $region5
    $region4: #{shufflenet_v2_forward.115} parent=1 // pred_region
      _
    $region5: #{shufflenet_v2_forward.115} parent=1 // pred_fallthru
      _
    // Predicated region
    $region6: #{shufflenet_v2_forward.115} parent=1 // pred_check
      _
    $region7: #{shufflenet_v2_forward.115} parent=1 // pred_check_branch
      %12 = sbr.rel (0) target = $region9
    $region8: #{shufflenet_v2_forward.115} parent=1 // pred_region
      _
    $region9: #{shufflenet_v2_forward.115} parent=1 // pred_fallthru
      _
    // Predicated region
    $region10: #{shufflenet_v2_forward.115} parent=1 // pred_check
      _
    $region11: #{shufflenet_v2_forward.115} parent=1 // pred_check_branch
      %14 = sbr.rel (0) target = $region13
    $region12: #{shufflenet_v2_forward.115} parent=1 // pred_region
      _
    $region13: #{shufflenet_v2_forward.115} parent=1 // pred_fallthru
      _
    %v15 = vld [vmem:[%s0] sm:$0xff]
    %v16 = vld [vmem:[%s0 + $0x8] sm:$0xff]
    %v17 = vunpack.c.l.bf16 %v15
    %v18 = vunpack.c.h.bf16 %v15
    %v19 = vunpack.c.l.bf16 %v16
    %v20 = vunpack.c.h.bf16 %v16
    %v21 = vadd.f32 %v17, 0.0
    %v22 = vadd.f32 %v18, 0.0
    %v23 = vadd.f32 %v19, 0.0
    %v24 = vadd.f32 %v20, 0.0
    %v29 = vperm.slane %v21, 0
    %v30 = vperm.slane %v21, 2
    %v31 = vperm.slane %v21, 4
    %v32 = vperm.slane %v21, 6
    %v33 = vperm.slane %v22, 0
    %v34 = vperm.slane %v22, 2
    %v35 = vperm.slane %v22, 4
    %v36 = vperm.slane %v22, 6
    %v37 = vperm.slane %v23, 0
    %v38 = vperm.slane %v23, 2
    %v39 = vperm.slane %v23, 4
    %v40 = vperm.slane %v23, 6
    %v41 = vperm.slane %v24, 0
    %v42 = vperm.slane %v24, 2
    %v43 = vperm.slane %v24, 4
    %v44 = vperm.slane %v24, 6
    %v61 = vpack.c.bf16 %v29, %v29
    %v62 = vpack.c.bf16 %v30, %v30
    %v63 = vpack.c.bf16 %v31, %v31
    %v64 = vpack.c.bf16 %v32, %v32
    %v65 = vpack.c.bf16 %v33, %v33
    %v66 = vpack.c.bf16 %v34, %v34
    %v67 = vpack.c.bf16 %v35, %v35
    %v68 = vpack.c.bf16 %v36, %v36
    %v69 = vpack.c.bf16 %v37, %v37
    %v70 = vpack.c.bf16 %v38, %v38
    %v71 = vpack.c.bf16 %v39, %v39
    %v72 = vpack.c.bf16 %v40, %v40
    %v73 = vpack.c.bf16 %v41, %v41
    %v74 = vpack.c.bf16 %v42, %v42
    %v75 = vpack.c.bf16 %v43, %v43
    %v76 = vpack.c.bf16 %v44, %v44
    %v77 = vld [vmem:[%s1] sm:$0xf]
    %v78 = vld [vmem:[%s1 + $0x4] sm:$0xf]
    %v79 = vld [vmem:[%s1 + $0x8] sm:$0xf]
    %v80 = vld [vmem:[%s1 + $0xc] sm:$0xf]
    %v81 = vld [vmem:[%s1 + $0x10] sm:$0xf]
    %v82 = vld [vmem:[%s1 + $0x14] sm:$0xf]
    %v83 = vld [vmem:[%s1 + $0x18] sm:$0xf]
    %v84 = vld [vmem:[%s1 + $0x1c] sm:$0xf]
    %v85 = vld [vmem:[%s1 + $0x20] sm:$0xf]
    %v86 = vld [vmem:[%s1 + $0x24] sm:$0xf]
    %v87 = vld [vmem:[%s1 + $0x28] sm:$0xf]
    %v88 = vld [vmem:[%s1 + $0x2c] sm:$0xf]
    %v89 = vld [vmem:[%s1 + $0x30] sm:$0xf]
    %v90 = vld [vmem:[%s1 + $0x34] sm:$0xf]
    %v91 = vld [vmem:[%s1 + $0x38] sm:$0xf]
    %v92 = vld [vmem:[%s1 + $0x3c] sm:$0xf]
    %v93 = vld [vmem:[%s1 + $0x40] sm:$0xf]
    %v94 = vld [vmem:[%s1 + $0x44] sm:$0xf]
    %v95 = vld [vmem:[%s1 + $0x48] sm:$0xf]
    %v96 = vld [vmem:[%s1 + $0x4c] sm:$0xf]
    %v97 = vld [vmem:[%s1 + $0x50] sm:$0xf]
    %v98 = vld [vmem:[%s1 + $0x54] sm:$0xf]
    %v99 = vld [vmem:[%s1 + $0x58] sm:$0xf]
    %v100 = vld [vmem:[%s1 + $0x5c] sm:$0xf]
    %v101 = vld [vmem:[%s1 + $0x60] sm:$0xf]
    %v102 = vld [vmem:[%s1 + $0x64] sm:$0xf]
    %v103 = vld [vmem:[%s1 + $0x68] sm:$0xf]
    %v104 = vld [vmem:[%s1 + $0x6c] sm:$0xf]
    %v105 = vld [vmem:[%s1 + $0x70] sm:$0xf]
    %v106 = vld [vmem:[%s1 + $0x74] sm:$0xf]
    %v107 = vld [vmem:[%s1 + $0x78] sm:$0xf]
    %v108 = vld [vmem:[%s1 + $0x7c] sm:$0xf]
    %v109 = vld [vmem:[%s1 + $0x80] sm:$0xf]
    %v110 = vld [vmem:[%s1 + $0x84] sm:$0xf]
    %v111 = vld [vmem:[%s1 + $0x88] sm:$0xf]
    %v112 = vld [vmem:[%s1 + $0x8c] sm:$0xf]
    %v113 = vld [vmem:[%s1 + $0x90] sm:$0xf]
    %v114 = vld [vmem:[%s1 + $0x94] sm:$0xf]
    %v115 = vld [vmem:[%s1 + $0x98] sm:$0xf]
    %v116 = vld [vmem:[%s1 + $0x9c] sm:$0xf]
    %v117 = vld [vmem:[%s1 + $0xa0] sm:$0xf]
    %v118 = vld [vmem:[%s1 + $0xa4] sm:$0xf]
    %v119 = vld [vmem:[%s1 + $0xa8] sm:$0xf]
    %v120 = vld [vmem:[%s1 + $0xac] sm:$0xf]
    %v121 = vld [vmem:[%s1 + $0xb0] sm:$0xf]
    %v122 = vld [vmem:[%s1 + $0xb4] sm:$0xf]
    %v123 = vld [vmem:[%s1 + $0xb8] sm:$0xf]
    %v124 = vld [vmem:[%s1 + $0xbc] sm:$0xf]
    %v125 = vld [vmem:[%s1 + $0xc0] sm:$0xf]
    %v126 = vld [vmem:[%s1 + $0xc4] sm:$0xf]
    %v127 = vld [vmem:[%s1 + $0xc8] sm:$0xf]
    %v128 = vld [vmem:[%s1 + $0xcc] sm:$0xf]
    %v129 = vld [vmem:[%s1 + $0xd0] sm:$0xf]
    %v130 = vld [vmem:[%s1 + $0xd4] sm:$0xf]
    %v131 = vld [vmem:[%s1 + $0xd8] sm:$0xf]
    %v132 = vld [vmem:[%s1 + $0xdc] sm:$0xf]
    %v133 = vld [vmem:[%s1 + $0xe0] sm:$0xf]
    %v134 = vld [vmem:[%s1 + $0xe4] sm:$0xf]
    %v135 = vld [vmem:[%s1 + $0xe8] sm:$0xf]
    %v136 = vld [vmem:[%s1 + $0xec] sm:$0xf]
    %v137 = vld [vmem:[%s1 + $0xf0] sm:$0xf]
    %v138 = vld [vmem:[%s1 + $0xf4] sm:$0xf]
    %v139 = vld [vmem:[%s1 + $0xf8] sm:$0xf]
    %v140 = vld [vmem:[%s1 + $0xfc] sm:$0xf]
    %v141 = vld [vmem:[%s1 + $0x100] sm:$0xf]
    %v142 = vld [vmem:[%s1 + $0x104] sm:$0xf]
    %v143 = vld [vmem:[%s1 + $0x108] sm:$0xf]
    %v144 = vld [vmem:[%s1 + $0x10c] sm:$0xf]
    %v145 = vld [vmem:[%s1 + $0x110] sm:$0xf]
    %v146 = vld [vmem:[%s1 + $0x114] sm:$0xf]
    %v147 = vld [vmem:[%s1 + $0x118] sm:$0xf]
    %v148 = vld [vmem:[%s1 + $0x11c] sm:$0xf]
    %v149 = vld [vmem:[%s1 + $0x120] sm:$0xf]
    %v150 = vld [vmem:[%s1 + $0x124] sm:$0xf]
    %v151 = vld [vmem:[%s1 + $0x128] sm:$0xf]
    %v152 = vld [vmem:[%s1 + $0x12c] sm:$0xf]
    %v153 = vld [vmem:[%s1 + $0x130] sm:$0xf]
    %v154 = vld [vmem:[%s1 + $0x134] sm:$0xf]
    %v155 = vld [vmem:[%s1 + $0x138] sm:$0xf]
    %v156 = vld [vmem:[%s1 + $0x13c] sm:$0xf]
    %v157 = vld [vmem:[%s1 + $0x140] sm:$0xf]
    %v158 = vld [vmem:[%s1 + $0x144] sm:$0xf]
    %v159 = vld [vmem:[%s1 + $0x148] sm:$0xf]
    %v160 = vld [vmem:[%s1 + $0x14c] sm:$0xf]
    %v161 = vld [vmem:[%s1 + $0x150] sm:$0xf]
    %v162 = vld [vmem:[%s1 + $0x154] sm:$0xf]
    %v163 = vld [vmem:[%s1 + $0x158] sm:$0xf]
    %v164 = vld [vmem:[%s1 + $0x15c] sm:$0xf]
    %v165 = vld [vmem:[%s1 + $0x160] sm:$0xf]
    %v166 = vld [vmem:[%s1 + $0x164] sm:$0xf]
    %v167 = vld [vmem:[%s1 + $0x168] sm:$0xf]
    %v168 = vld [vmem:[%s1 + $0x16c] sm:$0xf]
    %v169 = vld [vmem:[%s1 + $0x170] sm:$0xf]
    %v170 = vld [vmem:[%s1 + $0x174] sm:$0xf]
    %v171 = vld [vmem:[%s1 + $0x178] sm:$0xf]
    %v172 = vld [vmem:[%s1 + $0x17c] sm:$0xf]
    %v173 = vld [vmem:[%s1 + $0x180] sm:$0xf]
    %v174 = vld [vmem:[%s1 + $0x184] sm:$0xf]
    %v175 = vld [vmem:[%s1 + $0x188] sm:$0xf]
    %v176 = vld [vmem:[%s1 + $0x18c] sm:$0xf]
    %v177 = vld [vmem:[%s1 + $0x190] sm:$0xf]
    %v178 = vld [vmem:[%s1 + $0x194] sm:$0xf]
    %v179 = vld [vmem:[%s1 + $0x198] sm:$0xf]
    %v180 = vld [vmem:[%s1 + $0x19c] sm:$0xf]
    %v181 = vld [vmem:[%s1 + $0x1a0] sm:$0xf]
    %v182 = vld [vmem:[%s1 + $0x1a4] sm:$0xf]
    %v183 = vld [vmem:[%s1 + $0x1a8] sm:$0xf]
    %v184 = vld [vmem:[%s1 + $0x1ac] sm:$0xf]
    %v185 = vld [vmem:[%s1 + $0x1b0] sm:$0xf]
    %v186 = vld [vmem:[%s1 + $0x1b4] sm:$0xf]
    %v187 = vld [vmem:[%s1 + $0x1b8] sm:$0xf]
    %v188 = vld [vmem:[%s1 + $0x1bc] sm:$0xf]
    %v189 = vld [vmem:[%s1 + $0x1c0] sm:$0xf]
    %v190 = vld [vmem:[%s1 + $0x1c4] sm:$0xf]
    %v191 = vld [vmem:[%s1 + $0x1c8] sm:$0xf]
    %v192 = vld [vmem:[%s1 + $0x1cc] sm:$0xf]
    %v193 = vld [vmem:[%s1 + $0x1d0] sm:$0xf]
    %v194 = vld [vmem:[%s1 + $0x1d4] sm:$0xf]
    %v195 = vld [vmem:[%s1 + $0x1d8] sm:$0xf]
    %v196 = vld [vmem:[%s1 + $0x1dc] sm:$0xf]
    %v197 = vld [vmem:[%s1 + $0x1e0] sm:$0xf]
    %v198 = vld [vmem:[%s1 + $0x1e4] sm:$0xf]
    %v199 = vld [vmem:[%s1 + $0x1e8] sm:$0xf]
    %v200 = vld [vmem:[%s1 + $0x1ec] sm:$0xf]
    %v201 = vld [vmem:[%s1 + $0x1f0] sm:$0xf]
    %v202 = vld [vmem:[%s1 + $0x1f4] sm:$0xf]
    %v203 = vld [vmem:[%s1 + $0x1f8] sm:$0xf]
    %v204 = vld [vmem:[%s1 + $0x1fc] sm:$0xf]
    %v205 = vld [vmem:[%s2] sm:$0x1]
    %v207 = vperm.slane %v205, 0
    %v225 = vunpack.c.l.b16 %v61
    %v226 = vunpack.c.l.b16 %v62
    %v227 = vunpack.c.l.b16 %v63
    %v228 = vunpack.c.l.b16 %v64
    %v229 = vunpack.c.l.b16 %v65
    %v230 = vunpack.c.l.b16 %v66
    %v231 = vunpack.c.l.b16 %v67
    %v232 = vunpack.c.l.b16 %v68
    %v233 = vunpack.c.l.b16 %v69
    %v234 = vunpack.c.l.b16 %v70
    %v235 = vunpack.c.l.b16 %v71
    %v236 = vunpack.c.l.b16 %v72
    %v237 = vunpack.c.l.b16 %v73
    %v238 = vunpack.c.l.b16 %v74
    %v239 = vunpack.c.l.b16 %v75
    %v240 = vunpack.c.l.b16 %v76
    %v241 = vrot.slane %v233, 7
    %vm242 = vcmask 1041409
    %v243 = vsel %vm242, %v241, %v225
    %v244 = vrot.slane %v234, 7
    %v245 = vsel %vm242, %v244, %v226
    %v246 = vrot.slane %v235, 7
    %v247 = vsel %vm242, %v246, %v227
    %v248 = vrot.slane %v236, 7
    %v249 = vsel %vm242, %v248, %v228
    %v250 = vrot.slane %v237, 7
    %v251 = vsel %vm242, %v250, %v229
    %v252 = vrot.slane %v238, 7
    %v253 = vsel %vm242, %v252, %v230
    %v254 = vrot.slane %v239, 7
    %v255 = vsel %vm242, %v254, %v231
    %v256 = vrot.slane %v240, 7
    %v257 = vsel %vm242, %v256, %v232
    %v258 = vpack.c.b16 %v243, %v243
    %v259 = vpack.c.b16 %v245, %v245
    %v260 = vpack.c.b16 %v247, %v247
    %v261 = vpack.c.b16 %v249, %v249
    %v262 = vpack.c.b16 %v251, %v251
    %v263 = vpack.c.b16 %v253, %v253
    %v264 = vpack.c.b16 %v255, %v255
    %v265 = vpack.c.b16 %v257, %v257
    %v402 = vunpack.c.l.b16 %v77
    %v403 = vunpack.c.l.b16 %v78
    %v404 = vunpack.c.l.b16 %v79
    %v405 = vunpack.c.l.b16 %v80
    %v406 = vunpack.c.l.b16 %v81
    %v407 = vunpack.c.l.b16 %v82
    %v408 = vunpack.c.l.b16 %v83
    %v409 = vunpack.c.l.b16 %v84
    %v410 = vunpack.c.l.b16 %v85
    %v411 = vunpack.c.l.b16 %v86
    %v412 = vunpack.c.l.b16 %v87
    %v413 = vunpack.c.l.b16 %v88
    %v414 = vunpack.c.l.b16 %v89
    %v415 = vunpack.c.l.b16 %v90
    %v416 = vunpack.c.l.b16 %v91
    %v417 = vunpack.c.l.b16 %v92
    %v418 = vunpack.c.l.b16 %v93
    %v419 = vunpack.c.l.b16 %v94
    %v420 = vunpack.c.l.b16 %v95
    %v421 = vunpack.c.l.b16 %v96
    %v422 = vunpack.c.l.b16 %v97
    %v423 = vunpack.c.l.b16 %v98
    %v424 = vunpack.c.l.b16 %v99
    %v425 = vunpack.c.l.b16 %v100
    %v426 = vunpack.c.l.b16 %v101
    %v427 = vunpack.c.l.b16 %v102
    %v428 = vunpack.c.l.b16 %v103
    %v429 = vunpack.c.l.b16 %v104
    %v430 = vunpack.c.l.b16 %v105
    %v431 = vunpack.c.l.b16 %v106
    %v432 = vunpack.c.l.b16 %v107
    %v433 = vunpack.c.l.b16 %v108
    %v434 = vunpack.c.l.b16 %v109
    %v435 = vunpack.c.l.b16 %v110
    %v436 = vunpack.c.l.b16 %v111
    %v437 = vunpack.c.l.b16 %v112
    %v438 = vunpack.c.l.b16 %v113
    %v439 = vunpack.c.l.b16 %v114
    %v440 = vunpack.c.l.b16 %v115
    %v441 = vunpack.c.l.b16 %v116
    %v442 = vunpack.c.l.b16 %v117
    %v443 = vunpack.c.l.b16 %v118
    %v444 = vunpack.c.l.b16 %v119
    %v445 = vunpack.c.l.b16 %v120
    %v446 = vunpack.c.l.b16 %v121
    %v447 = vunpack.c.l.b16 %v122
    %v448 = vunpack.c.l.b16 %v123
    %v449 = vunpack.c.l.b16 %v124
    %v450 = vunpack.c.l.b16 %v125
    %v451 = vunpack.c.l.b16 %v126
    %v452 = vunpack.c.l.b16 %v127
    %v453 = vunpack.c.l.b16 %v128
    %v454 = vunpack.c.l.b16 %v129
    %v455 = vunpack.c.l.b16 %v130
    %v456 = vunpack.c.l.b16 %v131
    %v457 = vunpack.c.l.b16 %v132
    %v458 = vunpack.c.l.b16 %v133
    %v459 = vunpack.c.l.b16 %v134
    %v460 = vunpack.c.l.b16 %v135
    %v461 = vunpack.c.l.b16 %v136
    %v462 = vunpack.c.l.b16 %v137
    %v463 = vunpack.c.l.b16 %v138
    %v464 = vunpack.c.l.b16 %v139
    %v465 = vunpack.c.l.b16 %v140
    %v466 = vunpack.c.l.b16 %v141
    %v467 = vunpack.c.l.b16 %v142
    %v468 = vunpack.c.l.b16 %v143
    %v469 = vunpack.c.l.b16 %v144
    %v470 = vunpack.c.l.b16 %v145
    %v471 = vunpack.c.l.b16 %v146
    %v472 = vunpack.c.l.b16 %v147
    %v473 = vunpack.c.l.b16 %v148
    %v474 = vunpack.c.l.b16 %v149
    %v475 = vunpack.c.l.b16 %v150
    %v476 = vunpack.c.l.b16 %v151
    %v477 = vunpack.c.l.b16 %v152
    %v478 = vunpack.c.l.b16 %v153
    %v479 = vunpack.c.l.b16 %v154
    %v480 = vunpack.c.l.b16 %v155
    %v481 = vunpack.c.l.b16 %v156
    %v482 = vunpack.c.l.b16 %v157
    %v483 = vunpack.c.l.b16 %v158
    %v484 = vunpack.c.l.b16 %v159
    %v485 = vunpack.c.l.b16 %v160
    %v486 = vunpack.c.l.b16 %v161
    %v487 = vunpack.c.l.b16 %v162
    %v488 = vunpack.c.l.b16 %v163
    %v489 = vunpack.c.l.b16 %v164
    %v490 = vunpack.c.l.b16 %v165
    %v491 = vunpack.c.l.b16 %v166
    %v492 = vunpack.c.l.b16 %v167
    %v493 = vunpack.c.l.b16 %v168
    %v494 = vunpack.c.l.b16 %v169
    %v495 = vunpack.c.l.b16 %v170
    %v496 = vunpack.c.l.b16 %v171
    %v497 = vunpack.c.l.b16 %v172
    %v498 = vunpack.c.l.b16 %v173
    %v499 = vunpack.c.l.b16 %v174
    %v500 = vunpack.c.l.b16 %v175
    %v501 = vunpack.c.l.b16 %v176
    %v502 = vunpack.c.l.b16 %v177
    %v503 = vunpack.c.l.b16 %v178
    %v504 = vunpack.c.l.b16 %v179
    %v505 = vunpack.c.l.b16 %v180
    %v506 = vunpack.c.l.b16 %v181
    %v507 = vunpack.c.l.b16 %v182
    %v508 = vunpack.c.l.b16 %v183
    %v509 = vunpack.c.l.b16 %v184
    %v510 = vunpack.c.l.b16 %v185
    %v511 = vunpack.c.l.b16 %v186
    %v512 = vunpack.c.l.b16 %v187
    %v513 = vunpack.c.l.b16 %v188
    %v514 = vunpack.c.l.b16 %v189
    %v515 = vunpack.c.l.b16 %v190
    %v516 = vunpack.c.l.b16 %v191
    %v517 = vunpack.c.l.b16 %v192
    %v518 = vunpack.c.l.b16 %v193
    %v519 = vunpack.c.l.b16 %v194
    %v520 = vunpack.c.l.b16 %v195
    %v521 = vunpack.c.l.b16 %v196
    %v522 = vunpack.c.l.b16 %v197
    %v523 = vunpack.c.l.b16 %v198
    %v524 = vunpack.c.l.b16 %v199
    %v525 = vunpack.c.l.b16 %v200
    %v526 = vunpack.c.l.b16 %v201
    %v527 = vunpack.c.l.b16 %v202
    %v528 = vunpack.c.l.b16 %v203
    %v529 = vunpack.c.l.b16 %v204
    %v530 = vpack.c.b16 %v403, %v402
    %v531 = vpack.c.b16 %v405, %v404
    %v532 = vpack.c.b16 %v407, %v406
    %v533 = vpack.c.b16 %v409, %v408
    %v534 = vpack.c.b16 %v411, %v410
    %v535 = vpack.c.b16 %v413, %v412
    %v536 = vpack.c.b16 %v415, %v414
    %v537 = vpack.c.b16 %v417, %v416
    %v538 = vpack.c.b16 %v419, %v418
    %v539 = vpack.c.b16 %v421, %v420
    %v540 = vpack.c.b16 %v423, %v422
    %v541 = vpack.c.b16 %v425, %v424
    %v542 = vpack.c.b16 %v427, %v426
    %v543 = vpack.c.b16 %v429, %v428
    %v544 = vpack.c.b16 %v431, %v430
    %v545 = vpack.c.b16 %v433, %v432
    %v546 = vpack.c.b16 %v435, %v434
    %v547 = vpack.c.b16 %v437, %v436
    %v548 = vpack.c.b16 %v439, %v438
    %v549 = vpack.c.b16 %v441, %v440
    %v550 = vpack.c.b16 %v443, %v442
    %v551 = vpack.c.b16 %v445, %v444
    %v552 = vpack.c.b16 %v447, %v446
    %v553 = vpack.c.b16 %v449, %v448
    %v554 = vpack.c.b16 %v451, %v450
    %v555 = vpack.c.b16 %v453, %v452
    %v556 = vpack.c.b16 %v455, %v454
    %v557 = vpack.c.b16 %v457, %v456
    %v558 = vpack.c.b16 %v459, %v458
    %v559 = vpack.c.b16 %v461, %v460
    %v560 = vpack.c.b16 %v463, %v462
    %v561 = vpack.c.b16 %v465, %v464
    %v562 = vpack.c.b16 %v467, %v466
    %v563 = vpack.c.b16 %v469, %v468
    %v564 = vpack.c.b16 %v471, %v470
    %v565 = vpack.c.b16 %v473, %v472
    %v566 = vpack.c.b16 %v475, %v474
    %v567 = vpack.c.b16 %v477, %v476
    %v568 = vpack.c.b16 %v479, %v478
    %v569 = vpack.c.b16 %v481, %v480
    %v570 = vpack.c.b16 %v483, %v482
    %v571 = vpack.c.b16 %v485, %v484
    %v572 = vpack.c.b16 %v487, %v486
    %v573 = vpack.c.b16 %v489, %v488
    %v574 = vpack.c.b16 %v491, %v490
    %v575 = vpack.c.b16 %v493, %v492
    %v576 = vpack.c.b16 %v495, %v494
    %v577 = vpack.c.b16 %v497, %v496
    %v578 = vpack.c.b16 %v499, %v498
    %v579 = vpack.c.b16 %v501, %v500
    %v580 = vpack.c.b16 %v503, %v502
    %v581 = vpack.c.b16 %v505, %v504
    %v582 = vpack.c.b16 %v507, %v506
    %v583 = vpack.c.b16 %v509, %v508
    %v584 = vpack.c.b16 %v511, %v510
    %v585 = vpack.c.b16 %v513, %v512
    %v586 = vpack.c.b16 %v515, %v514
    %v587 = vpack.c.b16 %v517, %v516
    %v588 = vpack.c.b16 %v519, %v518
    %v589 = vpack.c.b16 %v521, %v520
    %v590 = vpack.c.b16 %v523, %v522
    %v591 = vpack.c.b16 %v525, %v524
    %v592 = vpack.c.b16 %v527, %v526
    %v593 = vpack.c.b16 %v529, %v528
    %658 = vmatpush.bf16.msra.mxu0 %v537
    %659 = vmatpush.bf16.msra.mxu0 %v536
    %660 = vmatpush.bf16.msra.mxu0 %v535
    %661 = vmatpush.bf16.msra.mxu0 %v534
    %662 = vmatpush.bf16.msra.mxu0 %v533
    %663 = vmatpush.bf16.msra.mxu0 %v532
    %664 = vmatpush.bf16.msra.mxu0 %v531
    %665 = vmatpush.bf16.msra.mxu0 %v530
    %666 = vmatmul.bf16.gmra.mxu0 %v258
    %v667 = vpop.f32.mrf.mxu0
    %v668 = vadd.f32 %v207, %v667
    %v669 = vpop.f32.mrf.mxu0
    %670 = vdwg.mxu0
    %671 = vmatpush.bf16.msra.mxu0 %v545
    %672 = vmatpush.bf16.msra.mxu0 %v544
    %673 = vmatpush.bf16.msra.mxu0 %v543
    %674 = vmatpush.bf16.msra.mxu0 %v542
    %675 = vmatpush.bf16.msra.mxu0 %v541
    %676 = vmatpush.bf16.msra.mxu0 %v540
    %677 = vmatpush.bf16.msra.mxu0 %v539
    %678 = vmatpush.bf16.msra.mxu0 %v538
    %679 = vmatmul.bf16.gmra.mxu0 %v259
    %v680 = vpop.f32.mrf.mxu0
    %v681 = vadd.f32 %v668, %v680
    %v682 = vpop.f32.mrf.mxu0
    %683 = vdwg.mxu0
    %684 = vmatpush.bf16.msra.mxu0 %v553
    %685 = vmatpush.bf16.msra.mxu0 %v552
    %686 = vmatpush.bf16.msra.mxu0 %v551
    %687 = vmatpush.bf16.msra.mxu0 %v550
    %688 = vmatpush.bf16.msra.mxu0 %v549
    %689 = vmatpush.bf16.msra.mxu0 %v548
    %690 = vmatpush.bf16.msra.mxu0 %v547
    %691 = vmatpush.bf16.msra.mxu0 %v546
    %692 = vmatmul.bf16.gmra.mxu0 %v260
    %v693 = vpop.f32.mrf.mxu0
    %v694 = vadd.f32 %v681, %v693
    %v695 = vpop.f32.mrf.mxu0
    %696 = vdwg.mxu0
    %697 = vmatpush.bf16.msra.mxu0 %v561
    %698 = vmatpush.bf16.msra.mxu0 %v560
    %699 = vmatpush.bf16.msra.mxu0 %v559
    %700 = vmatpush.bf16.msra.mxu0 %v558
    %701 = vmatpush.bf16.msra.mxu0 %v557
    %702 = vmatpush.bf16.msra.mxu0 %v556
    %703 = vmatpush.bf16.msra.mxu0 %v555
    %704 = vmatpush.bf16.msra.mxu0 %v554
    %705 = vmatmul.bf16.gmra.mxu0 %v261
    %v706 = vpop.f32.mrf.mxu0
    %v707 = vadd.f32 %v694, %v706
    %v708 = vpop.f32.mrf.mxu0
    %709 = vdwg.mxu0
    %710 = vmatpush.bf16.msra.mxu0 %v569
    %711 = vmatpush.bf16.msra.mxu0 %v568
    %712 = vmatpush.bf16.msra.mxu0 %v567
    %713 = vmatpush.bf16.msra.mxu0 %v566
    %714 = vmatpush.bf16.msra.mxu0 %v565
    %715 = vmatpush.bf16.msra.mxu0 %v564
    %716 = vmatpush.bf16.msra.mxu0 %v563
    %717 = vmatpush.bf16.msra.mxu0 %v562
    %718 = vmatmul.bf16.gmra.mxu0 %v262
    %v719 = vpop.f32.mrf.mxu0
    %v720 = vadd.f32 %v707, %v719
    %v721 = vpop.f32.mrf.mxu0
    %722 = vdwg.mxu0
    %723 = vmatpush.bf16.msra.mxu0 %v577
    %724 = vmatpush.bf16.msra.mxu0 %v576
    %725 = vmatpush.bf16.msra.mxu0 %v575
    %726 = vmatpush.bf16.msra.mxu0 %v574
    %727 = vmatpush.bf16.msra.mxu0 %v573
    %728 = vmatpush.bf16.msra.mxu0 %v572
    %729 = vmatpush.bf16.msra.mxu0 %v571
    %730 = vmatpush.bf16.msra.mxu0 %v570
    %731 = vmatmul.bf16.gmra.mxu0 %v263
    %v732 = vpop.f32.mrf.mxu0
    %v733 = vadd.f32 %v720, %v732
    %v734 = vpop.f32.mrf.mxu0
    %735 = vdwg.mxu0
    %736 = vmatpush.bf16.msra.mxu0 %v585
    %737 = vmatpush.bf16.msra.mxu0 %v584
    %738 = vmatpush.bf16.msra.mxu0 %v583
    %739 = vmatpush.bf16.msra.mxu0 %v582
    %740 = vmatpush.bf16.msra.mxu0 %v581
    %741 = vmatpush.bf16.msra.mxu0 %v580
    %742 = vmatpush.bf16.msra.mxu0 %v579
    %743 = vmatpush.bf16.msra.mxu0 %v578
    %744 = vmatmul.bf16.gmra.mxu0 %v264
    %v745 = vpop.f32.mrf.mxu0
    %v746 = vadd.f32 %v733, %v745
    %v747 = vpop.f32.mrf.mxu0
    %748 = vdwg.mxu0
    %749 = vmatpush.bf16.msra.mxu0 %v593
    %750 = vmatpush.bf16.msra.mxu0 %v592
    %751 = vmatpush.bf16.msra.mxu0 %v591
    %752 = vmatpush.bf16.msra.mxu0 %v590
    %753 = vmatpush.bf16.msra.mxu0 %v589
    %754 = vmatpush.bf16.msra.mxu0 %v588
    %755 = vmatpush.bf16.msra.mxu0 %v587
    %756 = vmatpush.bf16.msra.mxu0 %v586
    %757 = vmatmul.bf16.gmra.mxu0 %v265
    %v758 = vpop.f32.mrf.mxu0
    %v759 = vadd.f32 %v746, %v758
    %v760 = vpop.f32.mrf.mxu0
    %761 = vdwg.mxu0
    %vm762 = vcmask 74752
    %763 = vst.msk [vmem:[#allocation2] sm:$0x3] %vm762, %v759
    // Predicated region
    $region14: #{shufflenet_v2_forward.115} parent=1 // pred_check
      _
    $region15: #{shufflenet_v2_forward.115} parent=1 // pred_check_branch
      %765 = sbr.rel (0) target = $region17
    $region16: #{shufflenet_v2_forward.115} parent=1 // pred_region
      %767 = vsyncadd [#allocation3], 0
      %s769 = sshll.u32 [#allocation2], 4
      %s770 = int_to_ptr.vmem [resolvable:$true] %s769
      %s771 = sshll.u32 %s3, 4
      %s772 = int_to_ptr.hbm [resolvable:$true] %s771
      %774 = dma.vmem_to_hbm [thread:$0]  %s770, 32, %s772, [#allocation3]
    $region17: #{shufflenet_v2_forward.115} parent=1 // pred_fallthru
      _
    // Predicated region
    $region18: #{shufflenet_v2_forward.115} parent=1 // pred_check
      _
    $region19: #{shufflenet_v2_forward.115} parent=1 // pred_check_branch
      %776 = sbr.rel (0) target = $region21
    $region20: #{shufflenet_v2_forward.115} parent=1 // pred_region
      %778 = dma.done [#allocation3], 32
    $region21: #{shufflenet_v2_forward.115} parent=1 // pred_fallthru
      _
    %779 = vsyncpa [#allocation3], 1

</llo_original>
